<compile_context>
chip_gen: v6e
topology: v6e:2x2x1
jax: 0.10.0
libtpu: 0.0.40
codegen_flags: <defaults>
</compile_context>

<pallas_src>
import functools

import jax
import jax.numpy as jnp
from jax.experimental import pallas as pl
from jax.experimental.pallas import tpu as pltpu


def _round_up(x, m):
    return -(-x // m) * m


# ---------------------------------------------------------------------------
# In-kernel building block: 3x3 'same' conv on a VMEM-resident activation.
# ---------------------------------------------------------------------------
def _conv3x3_same(pad_ref, act_hwc, w_slab, bias_row, cin, cout, relu, H, W):
    """3x3 conv, padding=1, on an (H, W, cin) f32 value.

    pad_ref : (H+2, Wpad, Cpad) VMEM scratch; border row/col 0..W+1 already zero.
    w_slab  : (3, 3*cin, cout) ref or value; w_slab[kh, kw*cin + c, o] = w[kh, kw, c, o].
    bias_row: (1, cout) value or None.

    Only 3 sublane-shifted band slices per conv (not 9); per kh the three kw taps are
    folded into a single MXU matmul with K = 3*cin.  Accumulation stays in vregs.
    """
    pad_ref[1:H + 1, 1:W + 1, 0:cin] = act_hwc
    # The only sublane-shifted (materializing) slices: one per kw.
    bands = [pad_ref[:, kw:kw + W, 0:cin] for kw in range(3)]
    acc = None
    for kh in range(3):
        # Leading-dim slices of the bands are cheap; lane-concat builds the K=3*cin patch.
        patch = jnp.concatenate([b[kh:kh + H] for b in bands], axis=-1)   # (H, W, 3*cin)
        d = jnp.dot(patch.reshape(H * W, 3 * cin), w_slab[kh],
                    preferred_element_type=jnp.float32)
        acc = d if acc is None else acc + d
    if bias_row is not None:
        acc = acc + bias_row
    if relu:
        acc = jnp.maximum(acc, 0.0)
    return acc.reshape(H, W, cout)


# ---------------------------------------------------------------------------
# Fully fused decoder kernel: one grid step = one image.
# ---------------------------------------------------------------------------
def _decoder_kernel(x_ref, w1_ref, b1_ref, rw1_ref, rw2_ref,
                    ct1w_ref, ct1b_ref, ct2w_ref, ct2b_ref,
                    o_ref, pad_ref, *, H, W, Cin, Ch, Cr, nres, C1p, C2p):
    Hp, Wp, Cp = pad_ref.shape

    # Zero only the scratch border (interior is overwritten before every read).
    zrow = jnp.zeros((1, Wp, Cp), jnp.float32)
    zcol = jnp.zeros((Hp, 1, Cp), jnp.float32)
    pad_ref[0:1, :, :] = zrow
    pad_ref[H + 1:H + 2, :, :] = zrow
    pad_ref[:, 0:1, :] = zcol
    pad_ref[:, W + 1:W + 2, :] = zcol

    # Conv2d(Cin -> Ch, 3x3, pad=1) + bias.
    x = _conv3x3_same(pad_ref, x_ref[0], w1_ref, b1_ref[...], Cin, Ch,
                      relu=False, H=H, W=W)

    # ResidualStack: (ReLU -> 3x3(Ch->Cr, no bias) -> ReLU -> 1x1(Cr->Ch, no bias)) + skip,
    # then the stack's final ReLU.
    for i in range(nres):
        h = jnp.maximum(x, 0.0)
        h = _conv3x3_same(pad_ref, h, rw1_ref[i], None, Ch, Cr,
                          relu=True, H=H, W=W)
        h = jnp.dot(h.reshape(H * W, Cr), rw2_ref[i],
                    preferred_element_type=jnp.float32).reshape(H, W, Ch)
        x = x + h
    x = jnp.maximum(x, 0.0)

    # ConvTranspose2d(Ch -> Ch//2, 4, s=2, p=1) as a 3x3 'same' conv producing the four
    # stride-2 output phases on the channel axis, + bias + ReLU (ReLU commutes with the
    # phase interleave, which is never materialized).
    p1 = _conv3x3_same(pad_ref, x, ct1w_ref, ct1b_ref[...], Ch, C1p,
                       relu=True, H=H, W=W)

    # ConvTranspose2d(Ch//2 -> 3, 4, s=2, p=1) expressed directly on the phase-packed
    # (H, W, 4*C1) grid via the host-built packed weight: another 3x3 'same' conv.
    q = _conv3x3_same(pad_ref, p1, ct2w_ref, ct2b_ref[...], C1p, C2p,
                      relu=False, H=H, W=W)
    o_ref[...] = q.reshape(1, H, W, C2p).astype(o_ref.dtype)


# ---------------------------------------------------------------------------
# Host-side wrappers.
# ---------------------------------------------------------------------------
def _full_spec(a):
    nd = a.ndim
    return pl.BlockSpec(a.shape, lambda n, _nd=nd: (0,) * _nd)


def _fused_decoder_call(x_nhwc, w1_slab, b1, rw1_slab, rw2_stack,
                        ct1_slab, ct1_b, ct2_slab, ct2_b):
    N, H, W, Cin = x_nhwc.shape
    Ch = w1_slab.shape[-1]
    Cr = rw1_slab.shape[-1]
    nres = rw1_slab.shape[0]
    C1p = ct1_slab.shape[-1]
    C2p = ct2_slab.shape[-1]
    Wpad = _round_up(W + 2, 8)               # sublane-multiple scratch width
    Cpad = max(Cin, Ch, C1p)

    ins = [x_nhwc, w1_slab, b1, rw1_slab, rw2_stack, ct1_slab, ct1_b, ct2_slab, ct2_b]
    in_specs = [pl.BlockSpec((1, H, W, Cin), lambda n: (n, 0, 0, 0))]
    in_specs += [_full_spec(a) for a in ins[1:]]

    kernel = functools.partial(_decoder_kernel, H=H, W=W, Cin=Cin, Ch=Ch, Cr=Cr,
                               nres=nres, C1p=C1p, C2p=C2p)
    return pl.pallas_call(
        kernel,
        out_shape=jax.ShapeDtypeStruct((N, H, W, C2p), jnp.float32),
        grid=(N,),
        in_specs=in_specs,
        out_specs=pl.BlockSpec((1, H, W, C2p), lambda n: (n, 0, 0, 0)),
        scratch_shapes=[pltpu.VMEM((H + 2, Wpad, Cpad), jnp.float32)],
        compiler_params=pltpu.CompilerParams(
            dimension_semantics=("parallel",),
            vmem_limit_bytes=48 * 1024 * 1024),
    )(*ins)


def _convtranspose_as_phase_conv(w_t):
    """PyTorch ConvTranspose2d(k=4, s=2, p=1) weight (Cin, Cout, 4, 4) -> equivalent
    3x3 'same'-conv weight (3, 3, Cin, 4*Cout): output-channel block (2*di + dj) holds
    output phase y[2m+di, 2n+dj].  y[2m+di, 2n+dj] = sum_{a,b} xp[m+a, n+b] *
    W[:, :, 3+di-2a, 3+dj-2b], xp = x zero-padded by 1, kernel indices clipped to [0,3]."""
    Cin, Cout = w_t.shape[0], w_t.shape[1]
    wbig = jnp.zeros((3, 3, Cin, 2, 2, Cout), w_t.dtype)
    for a in range(3):
        for b in range(3):
            for di in range(2):
                for dj in range(2):
                    kh = 3 + di - 2 * a
                    kw = 3 + dj - 2 * b
                    if 0 <= kh <= 3 and 0 <= kw <= 3:
                        wbig = wbig.at[a, b, :, di, dj, :].set(w_t[:, :, kh, kw])
    return wbig.reshape(3, 3, Cin, 4 * Cout)


def _pack_phase_conv_input_phases(w_phase):
    """Re-express a 3x3 'same' conv acting on the interleaved (2H, 2W, Cin) image as a
    3x3 'same' conv acting on its phase-packed (H, W, 4*Cin) form.

    Packed input channel (2*di'+dj')*Cin + c holds y[2m+di', 2n+dj', c]; packed output
    channel (2*di+dj)*Cout + oc holds the original conv's output at (2m+di, 2n+dj, oc).
    For y-grid tap a at output phase di: input row 2m+di-1+a = 2(m+a'-1)+di' with
    a = 2*(a'-1) + di' - di + 1 (same for columns); zero-padding the packed grid by 1
    reproduces exactly the original zero padding of the interleaved image."""
    Cin, Cout = w_phase.shape[2], w_phase.shape[3]
    w = jnp.zeros((3, 3, 2, 2, Cin, 2, 2, Cout), w_phase.dtype)
    for a_p in range(3):
        for b_p in range(3):
            for di_p in range(2):
                for dj_p in range(2):
                    for di in range(2):
                        for dj in range(2):
                            a = 2 * (a_p - 1) + di_p - di + 1
                            b = 2 * (b_p - 1) + dj_p - dj + 1
                            if 0 <= a <= 2 and 0 <= b <= 2:
                                w = w.at[a_p, b_p, di_p, dj_p, :, di, dj, :].set(
                                    w_phase[a, b])
    return w.reshape(3, 3, 4 * Cin, 4 * Cout)


def decoder_forward(x_nchw, params):
    x = jnp.transpose(x_nchw, (0, 2, 3, 1)).astype(jnp.float32)     # NCHW -> NHWC
    N, H, W, Cin = x.shape
    Ch = params["conv1_w"].shape[-1]
    Cr = params["res"][0][0].shape[-1]
    C1 = params["ct1_w"].shape[1]
    C2 = params["ct2_w"].shape[1]

    # Weight slabs for the K=3*cin fat matmuls.
    w1_slab = params["conv1_w"].reshape(3, 3 * Cin, Ch)
    b1 = params["conv1_b"].reshape(1, Ch)
    rw1_slab = jnp.stack([w1.reshape(3, 3 * Ch, Cr) for (w1, _) in params["res"]])
    rw2_stack = jnp.stack([w2.reshape(Cr, Ch) for (_, w2) in params["res"]])

    ct1_wp = _convtranspose_as_phase_conv(params["ct1_w"])          # (3,3,Ch,4*C1)
    ct1_slab = ct1_wp.reshape(3, 3 * Ch, 4 * C1)
    ct1_b = jnp.tile(params["ct1_b"], 4).reshape(1, 4 * C1)

    ct2_wp = _convtranspose_as_phase_conv(params["ct2_w"])          # (3,3,C1,4*C2)
    ct2_packed = _pack_phase_conv_input_phases(ct2_wp)              # (3,3,4*C1,16*C2)
    ct2_slab = ct2_packed.reshape(3, 3 * 4 * C1, 16 * C2)
    ct2_b = jnp.tile(params["ct2_b"], 16).reshape(1, 16 * C2)

    # One fused pallas_call: everything stays on-chip; output is phase-packed.
    q = _fused_decoder_call(x, w1_slab, b1, rw1_slab, rw2_stack,
                            ct1_slab, ct1_b, ct2_slab, ct2_b)       # (N, H, W, 16*C2)

    # Unpack: q[m, n, ((2di+dj)*4 + 2ei+ej)*C2 + c] = out[4m+2di+ei, 4n+2dj+ej, c].
    q8 = q.reshape(N, H, W, 2, 2, 2, 2, C2)                         # (m,n,di,dj,ei,ej,c)
    y = jnp.transpose(q8, (0, 1, 3, 5, 2, 4, 6, 7)).reshape(N, 4 * H, 4 * W, C2)
    return jnp.transpose(y, (0, 3, 1, 2))                           # NHWC -> NCHW


# ---------------------------------------------------------------------------
# Decoder parameters (deterministic init).
# ---------------------------------------------------------------------------
def init_decoder_params(key, in_channels, num_hiddens,
                        num_residual_layers, num_residual_hiddens):
    n_keys = 3 + 2 * num_residual_layers
    keys = jax.random.split(key, n_keys)

    def winit(k, shape, fan_in):
        return jax.random.normal(k, shape, jnp.float32) / jnp.sqrt(float(fan_in))

    params = {}
    params["conv1_w"] = winit(keys[0], (3, 3, in_channels, num_hiddens),
                              in_channels * 9)
    params["conv1_b"] = 0.01 * jnp.arange(num_hiddens, dtype=jnp.float32)
    res = []
    for i in range(num_residual_layers):
        w1 = winit(keys[1 + 2 * i],
                   (3, 3, num_hiddens, num_residual_hiddens), num_hiddens * 9)
        w2 = winit(keys[2 + 2 * i],
                   (1, 1, num_residual_hiddens, num_hiddens), num_residual_hiddens)
        res.append((w1, w2))
    params["res"] = res
    # PyTorch ConvTranspose2d weight layout: (Cin, Cout, KH, KW)
    params["ct1_w"] = winit(keys[-2], (num_hiddens, num_hiddens // 2, 4, 4),
                            num_hiddens * 16)
    params["ct1_b"] = 0.01 * jnp.arange(num_hiddens // 2, dtype=jnp.float32)
    params["ct2_w"] = winit(keys[-1], (num_hiddens // 2, 3, 4, 4),
                            (num_hiddens // 2) * 16)
    params["ct2_b"] = 0.01 * jnp.arange(3, dtype=jnp.float32)
    return params


# ---------------------------------------------------------------------------
# Pure-JAX reference (lax convs, zero-insertion transposed conv) for correctness.
# ---------------------------------------------------------------------------
def _ref_conv(x, w, b, padding):
    out = jax.lax.conv_general_dilated(
        x, w, window_strides=(1, 1), padding=[(padding, padding)] * 2,
        dimension_numbers=("NHWC", "HWIO", "NHWC"))
    return out if b is None else out + b


def _ref_conv_transpose(x, w_t, b, stride=2, padding=1):
    KH = w_t.shape[2]
    w_conv = jnp.transpose(w_t[:, :, ::-1, ::-1], (2, 3, 0, 1))
    extra = KH - 1 - padding
    out = jax.lax.conv_general_dilated(
        x, w_conv, window_strides=(1, 1), padding=[(extra, extra)] * 2,
        lhs_dilation=(stride, stride),
        dimension_numbers=("NHWC", "HWIO", "NHWC"))
    return out + b


def decoder_forward_ref(x_nchw, params):
    x = jnp.transpose(x_nchw, (0, 2, 3, 1))
    x = _ref_conv(x, params["conv1_w"], params["conv1_b"], 1)
    for (w1, w2) in params["res"]:
        h = jax.nn.relu(x)
        h = jax.nn.relu(_ref_conv(h, w1, None, 1))
        h = _ref_conv(h, w2, None, 0)
        x = x + h
    x = jax.nn.relu(x)
    x = jax.nn.relu(_ref_conv_transpose(x, params["ct1_w"], params["ct1_b"]))
    x = _ref_conv_transpose(x, params["ct2_w"], params["ct2_b"])
    return jnp.transpose(x, (0, 3, 1, 2))


if __name__ == "__main__":
    in_channels, num_hiddens = 4, 32
    num_residual_layers, num_residual_hiddens = 2, 8
    B, H, W = 2, 16, 16

    key = jax.random.PRNGKey(0)
    kx, kp = jax.random.split(key)
    x = jax.random.normal(kx, (B, in_channels, H, W), jnp.float32)  # NCHW like PyTorch
    params = init_decoder_params(kp, in_channels, num_hiddens,
                                 num_residual_layers, num_residual_hiddens)

    fwd = jax.jit(decoder_forward)
    out = jax.block_until_ready(fwd(x, params))
    ref = jax.block_until_ready(decoder_forward_ref(x, params))

    assert out.shape == (B, 3, 4 * H, 4 * W), out.shape
    max_err = float(jnp.max(jnp.abs(out - ref)))
    assert max_err < 1e-3, f"max abs error {max_err}"
    print("KERNEL_OK")
</pallas_src>

<mosaic_0001>
module attributes {stable_mosaic.version = 11 : i64} {
  func.func @_decoder_kernel(%arg0: i32, %arg1: memref<1x16x16x4xf32, #tpu.memory_space<vmem>>, %arg2: memref<3x12x32xf32, #tpu.memory_space<vmem>>, %arg3: memref<1x32xf32, #tpu.memory_space<vmem>>, %arg4: memref<2x3x96x8xf32, #tpu.memory_space<vmem>>, %arg5: memref<2x8x32xf32, #tpu.memory_space<vmem>>, %arg6: memref<3x96x64xf32, #tpu.memory_space<vmem>>, %arg7: memref<1x64xf32, #tpu.memory_space<vmem>>, %arg8: memref<3x192x48xf32, #tpu.memory_space<vmem>>, %arg9: memref<1x48xf32, #tpu.memory_space<vmem>>, %arg10: memref<1x16x16x48xf32, #tpu.memory_space<vmem>>, %arg11: memref<18x24x64xf32, #tpu.memory_space<vmem>>) attributes {dimension_semantics = [#tpu.dimension_semantics<parallel>], iteration_bounds = array<i64: 2>, scalar_prefetch = 0 : i64, scratch_operands = 1 : i64, tpu.core_type = #tpu.core_type<tc>, window_params = [{transform_indices = @transform_0, window_bounds = array<i64: 1, 16, 16, 4>}, {pipeline_mode = #tpu.pipeline_mode<synchronous>, transform_indices = @transform_1, window_bounds = array<i64: 3, 12, 32>}, {pipeline_mode = #tpu.pipeline_mode<synchronous>, transform_indices = @transform_2, window_bounds = array<i64: 1, 32>}, {pipeline_mode = #tpu.pipeline_mode<synchronous>, transform_indices = @transform_3, window_bounds = array<i64: 2, 3, 96, 8>}, {pipeline_mode = #tpu.pipeline_mode<synchronous>, transform_indices = @transform_4, window_bounds = array<i64: 2, 8, 32>}, {pipeline_mode = #tpu.pipeline_mode<synchronous>, transform_indices = @transform_5, window_bounds = array<i64: 3, 96, 64>}, {pipeline_mode = #tpu.pipeline_mode<synchronous>, transform_indices = @transform_6, window_bounds = array<i64: 1, 64>}, {pipeline_mode = #tpu.pipeline_mode<synchronous>, transform_indices = @transform_7, window_bounds = array<i64: 3, 192, 48>}, {pipeline_mode = #tpu.pipeline_mode<synchronous>, transform_indices = @transform_8, window_bounds = array<i64: 1, 48>}, {transform_indices = @transform_9, window_bounds = array<i64: 1, 16, 16, 48>}]} {
    %cst = arith.constant 0.000000e+00 : f32
    %0 = vector.broadcast %cst : f32 to vector<1x24x64xf32>
    %cst_0 = arith.constant 0.000000e+00 : f32
    %1 = vector.broadcast %cst_0 : f32 to vector<18x1x64xf32>
    %c0 = arith.constant 0 : index
    %c0_1 = arith.constant 0 : index
    %c0_2 = arith.constant 0 : index
    %2 = vector.load %arg11[%c0, %c0_1, %c0_2] : memref<18x24x64xf32, #tpu.memory_space<vmem>>, vector<1x24x64xf32>
    tpu.vector_store %arg11[%c0, %c0_1, %c0_2], %0 {strides = array<i32>} : memref<18x24x64xf32, #tpu.memory_space<vmem>>, vector<1x24x64xf32>,
    %c17 = arith.constant 17 : index
    %c0_3 = arith.constant 0 : index
    %c0_4 = arith.constant 0 : index
    %3 = vector.load %arg11[%c17, %c0_3, %c0_4] : memref<18x24x64xf32, #tpu.memory_space<vmem>>, vector<1x24x64xf32>
    tpu.vector_store %arg11[%c17, %c0_3, %c0_4], %0 {strides = array<i32>} : memref<18x24x64xf32, #tpu.memory_space<vmem>>, vector<1x24x64xf32>,
    %c0_5 = arith.constant 0 : index
    %c0_6 = arith.constant 0 : index
    %c0_7 = arith.constant 0 : index
    %4 = vector.load %arg11[%c0_5, %c0_6, %c0_7] : memref<18x24x64xf32, #tpu.memory_space<vmem>>, vector<18x1x64xf32>
    tpu.vector_store %arg11[%c0_5, %c0_6, %c0_7], %1 {strides = array<i32>} : memref<18x24x64xf32, #tpu.memory_space<vmem>>, vector<18x1x64xf32>,
    %c0_8 = arith.constant 0 : index
    %c17_9 = arith.constant 17 : index
    %c0_10 = arith.constant 0 : index
    %5 = vector.load %arg11[%c0_8, %c17_9, %c0_10] : memref<18x24x64xf32, #tpu.memory_space<vmem>>, vector<18x1x64xf32>
    tpu.vector_store %arg11[%c0_8, %c17_9, %c0_10], %1 {strides = array<i32>} : memref<18x24x64xf32, #tpu.memory_space<vmem>>, vector<18x1x64xf32>,
    %c0_11 = arith.constant 0 : index
    %c0_12 = arith.constant 0 : index
    %c0_13 = arith.constant 0 : index
    %c0_14 = arith.constant 0 : index
    %6 = vector.load %arg1[%c0_11, %c0_12, %c0_13, %c0_14] : memref<1x16x16x4xf32, #tpu.memory_space<vmem>>, vector<1x16x16x4xf32>
    %7 = vector.shape_cast %6 : vector<1x16x16x4xf32> to vector<16x16x4xf32>
    %c0_15 = arith.constant 0 : index
    %c0_16 = arith.constant 0 : index
    %8 = vector.load %arg3[%c0_15, %c0_16] : memref<1x32xf32, #tpu.memory_space<vmem>>, vector<1x32xf32>
    %c1 = arith.constant 1 : index
    %c1_17 = arith.constant 1 : index
    %c0_18 = arith.constant 0 : index
    %9 = vector.load %arg11[%c1, %c1_17, %c0_18] : memref<18x24x64xf32, #tpu.memory_space<vmem>>, vector<16x16x4xf32>
    tpu.vector_store %arg11[%c1, %c1_17, %c0_18], %7 {strides = array<i32>} : memref<18x24x64xf32, #tpu.memory_space<vmem>>, vector<16x16x4xf32>,
    %c0_19 = arith.constant 0 : index
    %c0_20 = arith.constant 0 : index
    %c0_21 = arith.constant 0 : index
    %10 = vector.load %arg11[%c0_19, %c0_20, %c0_21] : memref<18x24x64xf32, #tpu.memory_space<vmem>>, vector<18x16x4xf32>
    %c0_22 = arith.constant 0 : index
    %c1_23 = arith.constant 1 : index
    %c0_24 = arith.constant 0 : index
    %11 = vector.load %arg11[%c0_22, %c1_23, %c0_24] : memref<18x24x64xf32, #tpu.memory_space<vmem>>, vector<18x16x4xf32>
    %c0_25 = arith.constant 0 : index
    %c2 = arith.constant 2 : index
    %c0_26 = arith.constant 0 : index
    %12 = vector.load %arg11[%c0_25, %c2, %c0_26] : memref<18x24x64xf32, #tpu.memory_space<vmem>>, vector<18x16x4xf32>
    %13 = vector.extract_strided_slice %10 {offsets = [0, 0, 0], sizes = [16, 16, 4], strides = [1, 1, 1]} : vector<18x16x4xf32> to vector<16x16x4xf32>
    %14 = vector.extract_strided_slice %11 {offsets = [0, 0, 0], sizes = [16, 16, 4], strides = [1, 1, 1]} : vector<18x16x4xf32> to vector<16x16x4xf32>
    %15 = vector.extract_strided_slice %12 {offsets = [0, 0, 0], sizes = [16, 16, 4], strides = [1, 1, 1]} : vector<18x16x4xf32> to vector<16x16x4xf32>
    %16 = tpu.concatenate %13, %14, %15 in 2 : vector<16x16x4xf32>, vector<16x16x4xf32>, vector<16x16x4xf32> -> vector<16x16x12xf32>
    %17 = vector.shape_cast %16 : vector<16x16x12xf32> to vector<256x12xf32>
    %c0_27 = arith.constant 0 : index
    %c0_28 = arith.constant 0 : index
    %c0_29 = arith.constant 0 : index
    %18 = vector.load %arg2[%c0_27, %c0_28, %c0_29] : memref<3x12x32xf32, #tpu.memory_space<vmem>>, vector<1x12x32xf32>
    %19 = vector.shape_cast %18 : vector<1x12x32xf32> to vector<12x32xf32>
    %cst_30 = arith.constant dense<0.000000e+00> : vector<256x32xf32>
    %20 = tpu.matmul %17, %19, %cst_30 {dimension_numbers = #tpu.dot_dimension_numbers<[1], [0], [0], [1], [0, 0, 1, 1], [], []>} : vector<256x12xf32>, vector<12x32xf32>, vector<256x32xf32> -> vector<256x32xf32>
    %21 = vector.extract_strided_slice %10 {offsets = [1, 0, 0], sizes = [16, 16, 4], strides = [1, 1, 1]} : vector<18x16x4xf32> to vector<16x16x4xf32>
    %22 = vector.extract_strided_slice %11 {offsets = [1, 0, 0], sizes = [16, 16, 4], strides = [1, 1, 1]} : vector<18x16x4xf32> to vector<16x16x4xf32>
    %23 = vector.extract_strided_slice %12 {offsets = [1, 0, 0], sizes = [16, 16, 4], strides = [1, 1, 1]} : vector<18x16x4xf32> to vector<16x16x4xf32>
    %24 = tpu.concatenate %21, %22, %23 in 2 : vector<16x16x4xf32>, vector<16x16x4xf32>, vector<16x16x4xf32> -> vector<16x16x12xf32>
    %25 = vector.shape_cast %24 : vector<16x16x12xf32> to vector<256x12xf32>
    %c1_31 = arith.constant 1 : index
    %c0_32 = arith.constant 0 : index
    %c0_33 = arith.constant 0 : index
    %26 = vector.load %arg2[%c1_31, %c0_32, %c0_33] : memref<3x12x32xf32, #tpu.memory_space<vmem>>, vector<1x12x32xf32>
    %27 = vector.shape_cast %26 : vector<1x12x32xf32> to vector<12x32xf32>
    %cst_34 = arith.constant dense<0.000000e+00> : vector<256x32xf32>
    %28 = tpu.matmul %25, %27, %cst_34 {dimension_numbers = #tpu.dot_dimension_numbers<[1], [0], [0], [1], [0, 0, 1, 1], [], []>} : vector<256x12xf32>, vector<12x32xf32>, vector<256x32xf32> -> vector<256x32xf32>
    %29 = arith.addf %20, %28 : vector<256x32xf32>
    %30 = vector.extract_strided_slice %10 {offsets = [2, 0, 0], sizes = [16, 16, 4], strides = [1, 1, 1]} : vector<18x16x4xf32> to vector<16x16x4xf32>
    %31 = vector.extract_strided_slice %11 {offsets = [2, 0, 0], sizes = [16, 16, 4], strides = [1, 1, 1]} : vector<18x16x4xf32> to vector<16x16x4xf32>
    %32 = vector.extract_strided_slice %12 {offsets = [2, 0, 0], sizes = [16, 16, 4], strides = [1, 1, 1]} : vector<18x16x4xf32> to vector<16x16x4xf32>
    %33 = tpu.concatenate %30, %31, %32 in 2 : vector<16x16x4xf32>, vector<16x16x4xf32>, vector<16x16x4xf32> -> vector<16x16x12xf32>
    %34 = vector.shape_cast %33 : vector<16x16x12xf32> to vector<256x12xf32>
    %c2_35 = arith.constant 2 : index
    %c0_36 = arith.constant 0 : index
    %c0_37 = arith.constant 0 : index
    %35 = vector.load %arg2[%c2_35, %c0_36, %c0_37] : memref<3x12x32xf32, #tpu.memory_space<vmem>>, vector<1x12x32xf32>
    %36 = vector.shape_cast %35 : vector<1x12x32xf32> to vector<12x32xf32>
    %cst_38 = arith.constant dense<0.000000e+00> : vector<256x32xf32>
    %37 = tpu.matmul %34, %36, %cst_38 {dimension_numbers = #tpu.dot_dimension_numbers<[1], [0], [0], [1], [0, 0, 1, 1], [], []>} : vector<256x12xf32>, vector<12x32xf32>, vector<256x32xf32> -> vector<256x32xf32>
    %38 = arith.addf %29, %37 : vector<256x32xf32>
    %39 = vector.broadcast %8 : vector<1x32xf32> to vector<256x32xf32>
    %40 = arith.addf %38, %39 : vector<256x32xf32>
    %41 = vector.shape_cast %40 : vector<256x32xf32> to vector<16x16x32xf32>
    %cst_39 = arith.constant 0.000000e+00 : f32
    %42 = vector.broadcast %cst_39 : f32 to vector<16x16x32xf32>
    %43 = arith.maximumf %41, %42 : vector<16x16x32xf32>
    %c0_40 = arith.constant 0 : index
    %c0_41 = arith.constant 0 : index
    %c0_42 = arith.constant 0 : index
    %c0_43 = arith.constant 0 : index
    %44 = vector.load %arg4[%c0_40, %c0_41, %c0_42, %c0_43] : memref<2x3x96x8xf32, #tpu.memory_space<vmem>>, vector<1x3x96x8xf32>
    %45 = vector.shape_cast %44 : vector<1x3x96x8xf32> to vector<3x96x8xf32>
    %c1_44 = arith.constant 1 : index
    %c1_45 = arith.constant 1 : index
    %c0_46 = arith.constant 0 : index
    %46 = vector.load %arg11[%c1_44, %c1_45, %c0_46] : memref<18x24x64xf32, #tpu.memory_space<vmem>>, vector<16x16x32xf32>
    tpu.vector_store %arg11[%c1_44, %c1_45, %c0_46], %43 {strides = array<i32>} : memref<18x24x64xf32, #tpu.memory_space<vmem>>, vector<16x16x32xf32>,
    %c0_47 = arith.constant 0 : index
    %c0_48 = arith.constant 0 : index
    %c0_49 = arith.constant 0 : index
    %47 = vector.load %arg11[%c0_47, %c0_48, %c0_49] : memref<18x24x64xf32, #tpu.memory_space<vmem>>, vector<18x16x32xf32>
    %c0_50 = arith.constant 0 : index
    %c1_51 = arith.constant 1 : index
    %c0_52 = arith.constant 0 : index
    %48 = vector.load %arg11[%c0_50, %c1_51, %c0_52] : memref<18x24x64xf32, #tpu.memory_space<vmem>>, vector<18x16x32xf32>
    %c0_53 = arith.constant 0 : index
    %c2_54 = arith.constant 2 : index
    %c0_55 = arith.constant 0 : index
    %49 = vector.load %arg11[%c0_53, %c2_54, %c0_55] : memref<18x24x64xf32, #tpu.memory_space<vmem>>, vector<18x16x32xf32>
    %50 = vector.extract_strided_slice %47 {offsets = [0, 0, 0], sizes = [16, 16, 32], strides = [1, 1, 1]} : vector<18x16x32xf32> to vector<16x16x32xf32>
    %51 = vector.extract_strided_slice %48 {offsets = [0, 0, 0], sizes = [16, 16, 32], strides = [1, 1, 1]} : vector<18x16x32xf32> to vector<16x16x32xf32>
    %52 = vector.extract_strided_slice %49 {offsets = [0, 0, 0], sizes = [16, 16, 32], strides = [1, 1, 1]} : vector<18x16x32xf32> to vector<16x16x32xf32>
    %53 = tpu.concatenate %50, %51, %52 in 2 : vector<16x16x32xf32>, vector<16x16x32xf32>, vector<16x16x32xf32> -> vector<16x16x96xf32>
    %54 = vector.shape_cast %53 : vector<16x16x96xf32> to vector<256x96xf32>
    %55 = vector.extract_strided_slice %45 {offsets = [0, 0, 0], sizes = [1, 96, 8], strides = [1, 1, 1]} : vector<3x96x8xf32> to vector<1x96x8xf32>
    %56 = vector.shape_cast %55 : vector<1x96x8xf32> to vector<96x8xf32>
    %cst_56 = arith.constant dense<0.000000e+00> : vector<256x8xf32>
    %57 = tpu.matmul %54, %56, %cst_56 {dimension_numbers = #tpu.dot_dimension_numbers<[1], [0], [0], [1], [0, 0, 1, 1], [], []>} : vector<256x96xf32>, vector<96x8xf32>, vector<256x8xf32> -> vector<256x8xf32>
    %58 = vector.extract_strided_slice %47 {offsets = [1, 0, 0], sizes = [16, 16, 32], strides = [1, 1, 1]} : vector<18x16x32xf32> to vector<16x16x32xf32>
    %59 = vector.extract_strided_slice %48 {offsets = [1, 0, 0], sizes = [16, 16, 32], strides = [1, 1, 1]} : vector<18x16x32xf32> to vector<16x16x32xf32>
    %60 = vector.extract_strided_slice %49 {offsets = [1, 0, 0], sizes = [16, 16, 32], strides = [1, 1, 1]} : vector<18x16x32xf32> to vector<16x16x32xf32>
    %61 = tpu.concatenate %58, %59, %60 in 2 : vector<16x16x32xf32>, vector<16x16x32xf32>, vector<16x16x32xf32> -> vector<16x16x96xf32>
    %62 = vector.shape_cast %61 : vector<16x16x96xf32> to vector<256x96xf32>
    %63 = vector.extract_strided_slice %45 {offsets = [1, 0, 0], sizes = [1, 96, 8], strides = [1, 1, 1]} : vector<3x96x8xf32> to vector<1x96x8xf32>
    %64 = vector.shape_cast %63 : vector<1x96x8xf32> to vector<96x8xf32>
    %cst_57 = arith.constant dense<0.000000e+00> : vector<256x8xf32>
    %65 = tpu.matmul %62, %64, %cst_57 {dimension_numbers = #tpu.dot_dimension_numbers<[1], [0], [0], [1], [0, 0, 1, 1], [], []>} : vector<256x96xf32>, vector<96x8xf32>, vector<256x8xf32> -> vector<256x8xf32>
    %66 = arith.addf %57, %65 : vector<256x8xf32>
    %67 = vector.extract_strided_slice %47 {offsets = [2, 0, 0], sizes = [16, 16, 32], strides = [1, 1, 1]} : vector<18x16x32xf32> to vector<16x16x32xf32>
    %68 = vector.extract_strided_slice %48 {offsets = [2, 0, 0], sizes = [16, 16, 32], strides = [1, 1, 1]} : vector<18x16x32xf32> to vector<16x16x32xf32>
    %69 = vector.extract_strided_slice %49 {offsets = [2, 0, 0], sizes = [16, 16, 32], strides = [1, 1, 1]} : vector<18x16x32xf32> to vector<16x16x32xf32>
    %70 = tpu.concatenate %67, %68, %69 in 2 : vector<16x16x32xf32>, vector<16x16x32xf32>, vector<16x16x32xf32> -> vector<16x16x96xf32>
    %71 = vector.shape_cast %70 : vector<16x16x96xf32> to vector<256x96xf32>
    %72 = vector.extract_strided_slice %45 {offsets = [2, 0, 0], sizes = [1, 96, 8], strides = [1, 1, 1]} : vector<3x96x8xf32> to vector<1x96x8xf32>
    %73 = vector.shape_cast %72 : vector<1x96x8xf32> to vector<96x8xf32>
    %cst_58 = arith.constant dense<0.000000e+00> : vector<256x8xf32>
    %74 = tpu.matmul %71, %73, %cst_58 {dimension_numbers = #tpu.dot_dimension_numbers<[1], [0], [0], [1], [0, 0, 1, 1], [], []>} : vector<256x96xf32>, vector<96x8xf32>, vector<256x8xf32> -> vector<256x8xf32>
    %75 = arith.addf %66, %74 : vector<256x8xf32>
    %cst_59 = arith.constant 0.000000e+00 : f32
    %76 = vector.broadcast %cst_59 : f32 to vector<256x8xf32>
    %77 = arith.maximumf %75, %76 : vector<256x8xf32>
    %78 = vector.shape_cast %77 : vector<256x8xf32> to vector<16x16x8xf32>
    %79 = vector.shape_cast %78 : vector<16x16x8xf32> to vector<256x8xf32>
    %c0_60 = arith.constant 0 : index
    %c0_61 = arith.constant 0 : index
    %c0_62 = arith.constant 0 : index
    %80 = vector.load %arg5[%c0_60, %c0_61, %c0_62] : memref<2x8x32xf32, #tpu.memory_space<vmem>>, vector<1x8x32xf32>
    %81 = vector.shape_cast %80 : vector<1x8x32xf32> to vector<8x32xf32>
    %cst_63 = arith.constant dense<0.000000e+00> : vector<256x32xf32>
    %82 = tpu.matmul %79, %81, %cst_63 {dimension_numbers = #tpu.dot_dimension_numbers<[1], [0], [0], [1], [0, 0, 1, 1], [], []>} : vector<256x8xf32>, vector<8x32xf32>, vector<256x32xf32> -> vector<256x32xf32>
    %83 = vector.shape_cast %82 : vector<256x32xf32> to vector<16x16x32xf32>
    %84 = arith.addf %41, %83 : vector<16x16x32xf32>
    %cst_64 = arith.constant 0.000000e+00 : f32
    %85 = vector.broadcast %cst_64 : f32 to vector<16x16x32xf32>
    %86 = arith.maximumf %84, %85 : vector<16x16x32xf32>
    %c1_65 = arith.constant 1 : index
    %c0_66 = arith.constant 0 : index
    %c0_67 = arith.constant 0 : index
    %c0_68 = arith.constant 0 : index
    %87 = vector.load %arg4[%c1_65, %c0_66, %c0_67, %c0_68] : memref<2x3x96x8xf32, #tpu.memory_space<vmem>>, vector<1x3x96x8xf32>
    %88 = vector.shape_cast %87 : vector<1x3x96x8xf32> to vector<3x96x8xf32>
    %c1_69 = arith.constant 1 : index
    %c1_70 = arith.constant 1 : index
    %c0_71 = arith.constant 0 : index
    %89 = vector.load %arg11[%c1_69, %c1_70, %c0_71] : memref<18x24x64xf32, #tpu.memory_space<vmem>>, vector<16x16x32xf32>
    tpu.vector_store %arg11[%c1_69, %c1_70, %c0_71], %86 {strides = array<i32>} : memref<18x24x64xf32, #tpu.memory_space<vmem>>, vector<16x16x32xf32>,
    %c0_72 = arith.constant 0 : index
    %c0_73 = arith.constant 0 : index
    %c0_74 = arith.constant 0 : index
    %90 = vector.load %arg11[%c0_72, %c0_73, %c0_74] : memref<18x24x64xf32, #tpu.memory_space<vmem>>, vector<18x16x32xf32>
    %c0_75 = arith.constant 0 : index
    %c1_76 = arith.constant 1 : index
    %c0_77 = arith.constant 0 : index
    %91 = vector.load %arg11[%c0_75, %c1_76, %c0_77] : memref<18x24x64xf32, #tpu.memory_space<vmem>>, vector<18x16x32xf32>
    %c0_78 = arith.constant 0 : index
    %c2_79 = arith.constant 2 : index
    %c0_80 = arith.constant 0 : index
    %92 = vector.load %arg11[%c0_78, %c2_79, %c0_80] : memref<18x24x64xf32, #tpu.memory_space<vmem>>, vector<18x16x32xf32>
    %93 = vector.extract_strided_slice %90 {offsets = [0, 0, 0], sizes = [16, 16, 32], strides = [1, 1, 1]} : vector<18x16x32xf32> to vector<16x16x32xf32>
    %94 = vector.extract_strided_slice %91 {offsets = [0, 0, 0], sizes = [16, 16, 32], strides = [1, 1, 1]} : vector<18x16x32xf32> to vector<16x16x32xf32>
    %95 = vector.extract_strided_slice %92 {offsets = [0, 0, 0], sizes = [16, 16, 32], strides = [1, 1, 1]} : vector<18x16x32xf32> to vector<16x16x32xf32>
    %96 = tpu.concatenate %93, %94, %95 in 2 : vector<16x16x32xf32>, vector<16x16x32xf32>, vector<16x16x32xf32> -> vector<16x16x96xf32>
    %97 = vector.shape_cast %96 : vector<16x16x96xf32> to vector<256x96xf32>
    %98 = vector.extract_strided_slice %88 {offsets = [0, 0, 0], sizes = [1, 96, 8], strides = [1, 1, 1]} : vector<3x96x8xf32> to vector<1x96x8xf32>
    %99 = vector.shape_cast %98 : vector<1x96x8xf32> to vector<96x8xf32>
    %cst_81 = arith.constant dense<0.000000e+00> : vector<256x8xf32>
    %100 = tpu.matmul %97, %99, %cst_81 {dimension_numbers = #tpu.dot_dimension_numbers<[1], [0], [0], [1], [0, 0, 1, 1], [], []>} : vector<256x96xf32>, vector<96x8xf32>, vector<256x8xf32> -> vector<256x8xf32>
    %101 = vector.extract_strided_slice %90 {offsets = [1, 0, 0], sizes = [16, 16, 32], strides = [1, 1, 1]} : vector<18x16x32xf32> to vector<16x16x32xf32>
    %102 = vector.extract_strided_slice %91 {offsets = [1, 0, 0], sizes = [16, 16, 32], strides = [1, 1, 1]} : vector<18x16x32xf32> to vector<16x16x32xf32>
    %103 = vector.extract_strided_slice %92 {offsets = [1, 0, 0], sizes = [16, 16, 32], strides = [1, 1, 1]} : vector<18x16x32xf32> to vector<16x16x32xf32>
    %104 = tpu.concatenate %101, %102, %103 in 2 : vector<16x16x32xf32>, vector<16x16x32xf32>, vector<16x16x32xf32> -> vector<16x16x96xf32>
    %105 = vector.shape_cast %104 : vector<16x16x96xf32> to vector<256x96xf32>
    %106 = vector.extract_strided_slice %88 {offsets = [1, 0, 0], sizes = [1, 96, 8], strides = [1, 1, 1]} : vector<3x96x8xf32> to vector<1x96x8xf32>
    %107 = vector.shape_cast %106 : vector<1x96x8xf32> to vector<96x8xf32>
    %cst_82 = arith.constant dense<0.000000e+00> : vector<256x8xf32>
    %108 = tpu.matmul %105, %107, %cst_82 {dimension_numbers = #tpu.dot_dimension_numbers<[1], [0], [0], [1], [0, 0, 1, 1], [], []>} : vector<256x96xf32>, vector<96x8xf32>, vector<256x8xf32> -> vector<256x8xf32>
    %109 = arith.addf %100, %108 : vector<256x8xf32>
    %110 = vector.extract_strided_slice %90 {offsets = [2, 0, 0], sizes = [16, 16, 32], strides = [1, 1, 1]} : vector<18x16x32xf32> to vector<16x16x32xf32>
    %111 = vector.extract_strided_slice %91 {offsets = [2, 0, 0], sizes = [16, 16, 32], strides = [1, 1, 1]} : vector<18x16x32xf32> to vector<16x16x32xf32>
    %112 = vector.extract_strided_slice %92 {offsets = [2, 0, 0], sizes = [16, 16, 32], strides = [1, 1, 1]} : vector<18x16x32xf32> to vector<16x16x32xf32>
    %113 = tpu.concatenate %110, %111, %112 in 2 : vector<16x16x32xf32>, vector<16x16x32xf32>, vector<16x16x32xf32> -> vector<16x16x96xf32>
    %114 = vector.shape_cast %113 : vector<16x16x96xf32> to vector<256x96xf32>
    %115 = vector.extract_strided_slice %88 {offsets = [2, 0, 0], sizes = [1, 96, 8], strides = [1, 1, 1]} : vector<3x96x8xf32> to vector<1x96x8xf32>
    %116 = vector.shape_cast %115 : vector<1x96x8xf32> to vector<96x8xf32>
    %cst_83 = arith.constant dense<0.000000e+00> : vector<256x8xf32>
    %117 = tpu.matmul %114, %116, %cst_83 {dimension_numbers = #tpu.dot_dimension_numbers<[1], [0], [0], [1], [0, 0, 1, 1], [], []>} : vector<256x96xf32>, vector<96x8xf32>, vector<256x8xf32> -> vector<256x8xf32>
    %118 = arith.addf %109, %117 : vector<256x8xf32>
    %cst_84 = arith.constant 0.000000e+00 : f32
    %119 = vector.broadcast %cst_84 : f32 to vector<256x8xf32>
    %120 = arith.maximumf %118, %119 : vector<256x8xf32>
    %121 = vector.shape_cast %120 : vector<256x8xf32> to vector<16x16x8xf32>
    %122 = vector.shape_cast %121 : vector<16x16x8xf32> to vector<256x8xf32>
    %c1_85 = arith.constant 1 : index
    %c0_86 = arith.constant 0 : index
    %c0_87 = arith.constant 0 : index
    %123 = vector.load %arg5[%c1_85, %c0_86, %c0_87] : memref<2x8x32xf32, #tpu.memory_space<vmem>>, vector<1x8x32xf32>
    %124 = vector.shape_cast %123 : vector<1x8x32xf32> to vector<8x32xf32>
    %cst_88 = arith.constant dense<0.000000e+00> : vector<256x32xf32>
    %125 = tpu.matmul %122, %124, %cst_88 {dimension_numbers = #tpu.dot_dimension_numbers<[1], [0], [0], [1], [0, 0, 1, 1], [], []>} : vector<256x8xf32>, vector<8x32xf32>, vector<256x32xf32> -> vector<256x32xf32>
    %126 = vector.shape_cast %125 : vector<256x32xf32> to vector<16x16x32xf32>
    %127 = arith.addf %84, %126 : vector<16x16x32xf32>
    %cst_89 = arith.constant 0.000000e+00 : f32
    %128 = vector.broadcast %cst_89 : f32 to vector<16x16x32xf32>
    %129 = arith.maximumf %127, %128 : vector<16x16x32xf32>
    %c0_90 = arith.constant 0 : index
    %c0_91 = arith.constant 0 : index
    %130 = vector.load %arg7[%c0_90, %c0_91] : memref<1x64xf32, #tpu.memory_space<vmem>>, vector<1x64xf32>
    %c1_92 = arith.constant 1 : index
    %c1_93 = arith.constant 1 : index
    %c0_94 = arith.constant 0 : index
    %131 = vector.load %arg11[%c1_92, %c1_93, %c0_94] : memref<18x24x64xf32, #tpu.memory_space<vmem>>, vector<16x16x32xf32>
    tpu.vector_store %arg11[%c1_92, %c1_93, %c0_94], %129 {strides = array<i32>} : memref<18x24x64xf32, #tpu.memory_space<vmem>>, vector<16x16x32xf32>,
    %c0_95 = arith.constant 0 : index
    %c0_96 = arith.constant 0 : index
    %c0_97 = arith.constant 0 : index
    %132 = vector.load %arg11[%c0_95, %c0_96, %c0_97] : memref<18x24x64xf32, #tpu.memory_space<vmem>>, vector<18x16x32xf32>
    %c0_98 = arith.constant 0 : index
    %c1_99 = arith.constant 1 : index
    %c0_100 = arith.constant 0 : index
    %133 = vector.load %arg11[%c0_98, %c1_99, %c0_100] : memref<18x24x64xf32, #tpu.memory_space<vmem>>, vector<18x16x32xf32>
    %c0_101 = arith.constant 0 : index
    %c2_102 = arith.constant 2 : index
    %c0_103 = arith.constant 0 : index
    %134 = vector.load %arg11[%c0_101, %c2_102, %c0_103] : memref<18x24x64xf32, #tpu.memory_space<vmem>>, vector<18x16x32xf32>
    %135 = vector.extract_strided_slice %132 {offsets = [0, 0, 0], sizes = [16, 16, 32], strides = [1, 1, 1]} : vector<18x16x32xf32> to vector<16x16x32xf32>
    %136 = vector.extract_strided_slice %133 {offsets = [0, 0, 0], sizes = [16, 16, 32], strides = [1, 1, 1]} : vector<18x16x32xf32> to vector<16x16x32xf32>
    %137 = vector.extract_strided_slice %134 {offsets = [0, 0, 0], sizes = [16, 16, 32], strides = [1, 1, 1]} : vector<18x16x32xf32> to vector<16x16x32xf32>
    %138 = tpu.concatenate %135, %136, %137 in 2 : vector<16x16x32xf32>, vector<16x16x32xf32>, vector<16x16x32xf32> -> vector<16x16x96xf32>
    %139 = vector.shape_cast %138 : vector<16x16x96xf32> to vector<256x96xf32>
    %c0_104 = arith.constant 0 : index
    %c0_105 = arith.constant 0 : index
    %c0_106 = arith.constant 0 : index
    %140 = vector.load %arg6[%c0_104, %c0_105, %c0_106] : memref<3x96x64xf32, #tpu.memory_space<vmem>>, vector<1x96x64xf32>
    %141 = vector.shape_cast %140 : vector<1x96x64xf32> to vector<96x64xf32>
    %cst_107 = arith.constant dense<0.000000e+00> : vector<256x64xf32>
    %142 = tpu.matmul %139, %141, %cst_107 {dimension_numbers = #tpu.dot_dimension_numbers<[1], [0], [0], [1], [0, 0, 1, 1], [], []>} : vector<256x96xf32>, vector<96x64xf32>, vector<256x64xf32> -> vector<256x64xf32>
    %143 = vector.extract_strided_slice %132 {offsets = [1, 0, 0], sizes = [16, 16, 32], strides = [1, 1, 1]} : vector<18x16x32xf32> to vector<16x16x32xf32>
    %144 = vector.extract_strided_slice %133 {offsets = [1, 0, 0], sizes = [16, 16, 32], strides = [1, 1, 1]} : vector<18x16x32xf32> to vector<16x16x32xf32>
    %145 = vector.extract_strided_slice %134 {offsets = [1, 0, 0], sizes = [16, 16, 32], strides = [1, 1, 1]} : vector<18x16x32xf32> to vector<16x16x32xf32>
    %146 = tpu.concatenate %143, %144, %145 in 2 : vector<16x16x32xf32>, vector<16x16x32xf32>, vector<16x16x32xf32> -> vector<16x16x96xf32>
    %147 = vector.shape_cast %146 : vector<16x16x96xf32> to vector<256x96xf32>
    %c1_108 = arith.constant 1 : index
    %c0_109 = arith.constant 0 : index
    %c0_110 = arith.constant 0 : index
    %148 = vector.load %arg6[%c1_108, %c0_109, %c0_110] : memref<3x96x64xf32, #tpu.memory_space<vmem>>, vector<1x96x64xf32>
    %149 = vector.shape_cast %148 : vector<1x96x64xf32> to vector<96x64xf32>
    %cst_111 = arith.constant dense<0.000000e+00> : vector<256x64xf32>
    %150 = tpu.matmul %147, %149, %cst_111 {dimension_numbers = #tpu.dot_dimension_numbers<[1], [0], [0], [1], [0, 0, 1, 1], [], []>} : vector<256x96xf32>, vector<96x64xf32>, vector<256x64xf32> -> vector<256x64xf32>
    %151 = arith.addf %142, %150 : vector<256x64xf32>
    %152 = vector.extract_strided_slice %132 {offsets = [2, 0, 0], sizes = [16, 16, 32], strides = [1, 1, 1]} : vector<18x16x32xf32> to vector<16x16x32xf32>
    %153 = vector.extract_strided_slice %133 {offsets = [2, 0, 0], sizes = [16, 16, 32], strides = [1, 1, 1]} : vector<18x16x32xf32> to vector<16x16x32xf32>
    %154 = vector.extract_strided_slice %134 {offsets = [2, 0, 0], sizes = [16, 16, 32], strides = [1, 1, 1]} : vector<18x16x32xf32> to vector<16x16x32xf32>
    %155 = tpu.concatenate %152, %153, %154 in 2 : vector<16x16x32xf32>, vector<16x16x32xf32>, vector<16x16x32xf32> -> vector<16x16x96xf32>
    %156 = vector.shape_cast %155 : vector<16x16x96xf32> to vector<256x96xf32>
    %c2_112 = arith.constant 2 : index
    %c0_113 = arith.constant 0 : index
    %c0_114 = arith.constant 0 : index
    %157 = vector.load %arg6[%c2_112, %c0_113, %c0_114] : memref<3x96x64xf32, #tpu.memory_space<vmem>>, vector<1x96x64xf32>
    %158 = vector.shape_cast %157 : vector<1x96x64xf32> to vector<96x64xf32>
    %cst_115 = arith.constant dense<0.000000e+00> : vector<256x64xf32>
    %159 = tpu.matmul %156, %158, %cst_115 {dimension_numbers = #tpu.dot_dimension_numbers<[1], [0], [0], [1], [0, 0, 1, 1], [], []>} : vector<256x96xf32>, vector<96x64xf32>, vector<256x64xf32> -> vector<256x64xf32>
    %160 = arith.addf %151, %159 : vector<256x64xf32>
    %161 = vector.broadcast %130 : vector<1x64xf32> to vector<256x64xf32>
    %162 = arith.addf %160, %161 : vector<256x64xf32>
    %cst_116 = arith.constant 0.000000e+00 : f32
    %163 = vector.broadcast %cst_116 : f32 to vector<256x64xf32>
    %164 = arith.maximumf %162, %163 : vector<256x64xf32>
    %165 = vector.shape_cast %164 : vector<256x64xf32> to vector<16x16x64xf32>
    %c0_117 = arith.constant 0 : index
    %c0_118 = arith.constant 0 : index
    %166 = vector.load %arg9[%c0_117, %c0_118] : memref<1x48xf32, #tpu.memory_space<vmem>>, vector<1x48xf32>
    %c1_119 = arith.constant 1 : index
    %c1_120 = arith.constant 1 : index
    %c0_121 = arith.constant 0 : index
    %167 = vector.load %arg11[%c1_119, %c1_120, %c0_121] : memref<18x24x64xf32, #tpu.memory_space<vmem>>, vector<16x16x64xf32>
    tpu.vector_store %arg11[%c1_119, %c1_120, %c0_121], %165 {strides = array<i32>} : memref<18x24x64xf32, #tpu.memory_space<vmem>>, vector<16x16x64xf32>,
    %c0_122 = arith.constant 0 : index
    %c0_123 = arith.constant 0 : index
    %c0_124 = arith.constant 0 : index
    %168 = vector.load %arg11[%c0_122, %c0_123, %c0_124] : memref<18x24x64xf32, #tpu.memory_space<vmem>>, vector<18x16x64xf32>
    %c0_125 = arith.constant 0 : index
    %c1_126 = arith.constant 1 : index
    %c0_127 = arith.constant 0 : index
    %169 = vector.load %arg11[%c0_125, %c1_126, %c0_127] : memref<18x24x64xf32, #tpu.memory_space<vmem>>, vector<18x16x64xf32>
    %c0_128 = arith.constant 0 : index
    %c2_129 = arith.constant 2 : index
    %c0_130 = arith.constant 0 : index
    %170 = vector.load %arg11[%c0_128, %c2_129, %c0_130] : memref<18x24x64xf32, #tpu.memory_space<vmem>>, vector<18x16x64xf32>
    %171 = vector.extract_strided_slice %168 {offsets = [0, 0, 0], sizes = [16, 16, 64], strides = [1, 1, 1]} : vector<18x16x64xf32> to vector<16x16x64xf32>
    %172 = vector.extract_strided_slice %169 {offsets = [0, 0, 0], sizes = [16, 16, 64], strides = [1, 1, 1]} : vector<18x16x64xf32> to vector<16x16x64xf32>
    %173 = vector.extract_strided_slice %170 {offsets = [0, 0, 0], sizes = [16, 16, 64], strides = [1, 1, 1]} : vector<18x16x64xf32> to vector<16x16x64xf32>
    %174 = tpu.concatenate %171, %172, %173 in 2 : vector<16x16x64xf32>, vector<16x16x64xf32>, vector<16x16x64xf32> -> vector<16x16x192xf32>
    %175 = vector.shape_cast %174 : vector<16x16x192xf32> to vector<256x192xf32>
    %c0_131 = arith.constant 0 : index
    %c0_132 = arith.constant 0 : index
    %c0_133 = arith.constant 0 : index
    %176 = vector.load %arg8[%c0_131, %c0_132, %c0_133] : memref<3x192x48xf32, #tpu.memory_space<vmem>>, vector<1x192x48xf32>
    %177 = vector.shape_cast %176 : vector<1x192x48xf32> to vector<192x48xf32>
    %cst_134 = arith.constant dense<0.000000e+00> : vector<256x48xf32>
    %178 = tpu.matmul %175, %177, %cst_134 {dimension_numbers = #tpu.dot_dimension_numbers<[1], [0], [0], [1], [0, 0, 1, 1], [], []>} : vector<256x192xf32>, vector<192x48xf32>, vector<256x48xf32> -> vector<256x48xf32>
    %179 = vector.extract_strided_slice %168 {offsets = [1, 0, 0], sizes = [16, 16, 64], strides = [1, 1, 1]} : vector<18x16x64xf32> to vector<16x16x64xf32>
    %180 = vector.extract_strided_slice %169 {offsets = [1, 0, 0], sizes = [16, 16, 64], strides = [1, 1, 1]} : vector<18x16x64xf32> to vector<16x16x64xf32>
    %181 = vector.extract_strided_slice %170 {offsets = [1, 0, 0], sizes = [16, 16, 64], strides = [1, 1, 1]} : vector<18x16x64xf32> to vector<16x16x64xf32>
    %182 = tpu.concatenate %179, %180, %181 in 2 : vector<16x16x64xf32>, vector<16x16x64xf32>, vector<16x16x64xf32> -> vector<16x16x192xf32>
    %183 = vector.shape_cast %182 : vector<16x16x192xf32> to vector<256x192xf32>
    %c1_135 = arith.constant 1 : index
    %c0_136 = arith.constant 0 : index
    %c0_137 = arith.constant 0 : index
    %184 = vector.load %arg8[%c1_135, %c0_136, %c0_137] : memref<3x192x48xf32, #tpu.memory_space<vmem>>, vector<1x192x48xf32>
    %185 = vector.shape_cast %184 : vector<1x192x48xf32> to vector<192x48xf32>
    %cst_138 = arith.constant dense<0.000000e+00> : vector<256x48xf32>
    %186 = tpu.matmul %183, %185, %cst_138 {dimension_numbers = #tpu.dot_dimension_numbers<[1], [0], [0], [1], [0, 0, 1, 1], [], []>} : vector<256x192xf32>, vector<192x48xf32>, vector<256x48xf32> -> vector<256x48xf32>
    %187 = arith.addf %178, %186 : vector<256x48xf32>
    %188 = vector.extract_strided_slice %168 {offsets = [2, 0, 0], sizes = [16, 16, 64], strides = [1, 1, 1]} : vector<18x16x64xf32> to vector<16x16x64xf32>
    %189 = vector.extract_strided_slice %169 {offsets = [2, 0, 0], sizes = [16, 16, 64], strides = [1, 1, 1]} : vector<18x16x64xf32> to vector<16x16x64xf32>
    %190 = vector.extract_strided_slice %170 {offsets = [2, 0, 0], sizes = [16, 16, 64], strides = [1, 1, 1]} : vector<18x16x64xf32> to vector<16x16x64xf32>
    %191 = tpu.concatenate %188, %189, %190 in 2 : vector<16x16x64xf32>, vector<16x16x64xf32>, vector<16x16x64xf32> -> vector<16x16x192xf32>
    %192 = vector.shape_cast %191 : vector<16x16x192xf32> to vector<256x192xf32>
    %c2_139 = arith.constant 2 : index
    %c0_140 = arith.constant 0 : index
    %c0_141 = arith.constant 0 : index
    %193 = vector.load %arg8[%c2_139, %c0_140, %c0_141] : memref<3x192x48xf32, #tpu.memory_space<vmem>>, vector<1x192x48xf32>
    %194 = vector.shape_cast %193 : vector<1x192x48xf32> to vector<192x48xf32>
    %cst_142 = arith.constant dense<0.000000e+00> : vector<256x48xf32>
    %195 = tpu.matmul %192, %194, %cst_142 {dimension_numbers = #tpu.dot_dimension_numbers<[1], [0], [0], [1], [0, 0, 1, 1], [], []>} : vector<256x192xf32>, vector<192x48xf32>, vector<256x48xf32> -> vector<256x48xf32>
    %196 = arith.addf %187, %195 : vector<256x48xf32>
    %197 = vector.broadcast %166 : vector<1x48xf32> to vector<256x48xf32>
    %198 = arith.addf %196, %197 : vector<256x48xf32>
    %199 = vector.shape_cast %198 : vector<256x48xf32> to vector<16x16x48xf32>
    %200 = vector.shape_cast %199 : vector<16x16x48xf32> to vector<1x16x16x48xf32>
    %c0_143 = arith.constant 0 : index
    %c0_144 = arith.constant 0 : index
    %c0_145 = arith.constant 0 : index
    %c0_146 = arith.constant 0 : index
    %201 = vector.load %arg10[%c0_143, %c0_144, %c0_145, %c0_146] : memref<1x16x16x48xf32, #tpu.memory_space<vmem>>, vector<1x16x16x48xf32>
    tpu.vector_store %arg10[%c0_143, %c0_144, %c0_145, %c0_146], %200 {strides = array<i32>} : memref<1x16x16x48xf32, #tpu.memory_space<vmem>>, vector<1x16x16x48xf32>,
    return
  }
  func.func @transform_0(%arg0: i32) -> (i32, i32, i32, i32) {
    %c0_i32 = arith.constant 0 : i32
    %c0_i32_0 = arith.constant 0 : i32
    %c0_i32_1 = arith.constant 0 : i32
    %c0_i32_2 = arith.constant 0 : i32
    return %arg0, %c0_i32, %c0_i32_0, %c0_i32_1 : i32, i32, i32, i32
  }
  func.func @transform_1(%arg0: i32) -> (i32, i32, i32) {
    %c0_i32 = arith.constant 0 : i32
    %c0_i32_0 = arith.constant 0 : i32
    %c0_i32_1 = arith.constant 0 : i32
    %c0_i32_2 = arith.constant 0 : i32
    return %c0_i32, %c0_i32_0, %c0_i32_1 : i32, i32, i32
  }
  func.func @transform_2(%arg0: i32) -> (i32, i32) {
    %c0_i32 = arith.constant 0 : i32
    %c0_i32_0 = arith.constant 0 : i32
    %c0_i32_1 = arith.constant 0 : i32
    return %c0_i32, %c0_i32_0 : i32, i32
  }
  func.func @transform_3(%arg0: i32) -> (i32, i32, i32, i32) {
    %c0_i32 = arith.constant 0 : i32
    %c0_i32_0 = arith.constant 0 : i32
    %c0_i32_1 = arith.constant 0 : i32
    %c0_i32_2 = arith.constant 0 : i32
    %c0_i32_3 = arith.constant 0 : i32
    return %c0_i32, %c0_i32_0, %c0_i32_1, %c0_i32_2 : i32, i32, i32, i32
  }
  func.func @transform_4(%arg0: i32) -> (i32, i32, i32) {
    %c0_i32 = arith.constant 0 : i32
    %c0_i32_0 = arith.constant 0 : i32
    %c0_i32_1 = arith.constant 0 : i32
    %c0_i32_2 = arith.constant 0 : i32
    return %c0_i32, %c0_i32_0, %c0_i32_1 : i32, i32, i32
  }
  func.func @transform_5(%arg0: i32) -> (i32, i32, i32) {
    %c0_i32 = arith.constant 0 : i32
    %c0_i32_0 = arith.constant 0 : i32
    %c0_i32_1 = arith.constant 0 : i32
    %c0_i32_2 = arith.constant 0 : i32
    return %c0_i32, %c0_i32_0, %c0_i32_1 : i32, i32, i32
  }
  func.func @transform_6(%arg0: i32) -> (i32, i32) {
    %c0_i32 = arith.constant 0 : i32
    %c0_i32_0 = arith.constant 0 : i32
    %c0_i32_1 = arith.constant 0 : i32
    return %c0_i32, %c0_i32_0 : i32, i32
  }
  func.func @transform_7(%arg0: i32) -> (i32, i32, i32) {
    %c0_i32 = arith.constant 0 : i32
    %c0_i32_0 = arith.constant 0 : i32
    %c0_i32_1 = arith.constant 0 : i32
    %c0_i32_2 = arith.constant 0 : i32
    return %c0_i32, %c0_i32_0, %c0_i32_1 : i32, i32, i32
  }
  func.func @transform_8(%arg0: i32) -> (i32, i32) {
    %c0_i32 = arith.constant 0 : i32
    %c0_i32_0 = arith.constant 0 : i32
    %c0_i32_1 = arith.constant 0 : i32
    return %c0_i32, %c0_i32_0 : i32, i32
  }
  func.func @transform_9(%arg0: i32) -> (i32, i32, i32, i32) {
    %c0_i32 = arith.constant 0 : i32
    %c0_i32_0 = arith.constant 0 : i32
    %c0_i32_1 = arith.constant 0 : i32
    %c0_i32_2 = arith.constant 0 : i32
    return %arg0, %c0_i32, %c0_i32_0, %c0_i32_1 : i32, i32, i32, i32
  }
}

</mosaic_0001>

<llo_original>
// kernel: tile.13
$region0: #{tile.13}
  #allocation2 [shape = 's32[1]{0}', space=sflag, size = 0x4, scoped, tag = 'scoped memory for tile.13']
  %s0 = inlined_call_operand.hbm [shape: f32[16], index: 0, kind: input, shape index: {}]
  %s1 = inlined_call_operand.vmem [shape: f32[4,16], index: 1, kind: output, shape index: {}]
  $region1: #{tile.13} parent=0
    #allocation0 [shape = 'u8[512]{0}', space=vmem, size = 0x400, scoped, tag = 'operand span for operand 0']
    #allocation1 [shape = 's32[1]{0}', space=sflag, size = 0x4, scoped, tag = 'scoped memory for tile.13']
    %2 = vsyncpa [#allocation1], 0
    // Predicated region
    $region2: #{tile.13} parent=1 // pred_check
      _
    $region3: #{tile.13} parent=1 // pred_check_branch
      %4 = sbr.rel (0) target = $region5
    $region4: #{tile.13} parent=1 // pred_region
      %s6 = ssub.s32 16, 16
      %7 = vsyncadd [#allocation1], %s6
      %s9 = sshll.u32 [#allocation0], 4
      %s10 = int_to_ptr.vmem [resolvable:$true] %s9
      %12 = dma.hbm_to_vmem [thread:$0]  %s0, 16, %s10, [#allocation1]
    $region5: #{tile.13} parent=1 // pred_fallthru
      _
    // Predicated region
    $region6: #{tile.13} parent=1 // pred_check
      _
    $region7: #{tile.13} parent=1 // pred_check_branch
      %14 = sbr.rel (0) target = $region9
    $region8: #{tile.13} parent=1 // pred_region
      %15 = dma.done [#allocation1], 16
    $region9: #{tile.13} parent=1 // pred_fallthru
      _
    %v16 = vld [vmem:[#allocation0] ss:$0 sm:$0xff]
    %17 = vst [vmem:[%s1] sm:$0xf] %v16
    %18 = vsyncpa [#allocation1], 1

// kernel: tile.18
$region0: #{tile.18}
  #allocation2 [shape = 's32[1]{0}', space=sflag, size = 0x4, scoped, tag = 'scoped memory for tile.18']
  %s0 = inlined_call_operand.hbm [shape: f32[3], index: 0, kind: input, shape index: {}]
  %s1 = inlined_call_operand.vmem [shape: f32[16,3], index: 1, kind: output, shape index: {}]
  $region1: #{tile.18} parent=0
    #allocation0 [shape = 'u8[512]{0}', space=vmem, size = 0x400, scoped, tag = 'operand span for operand 0']
    #allocation1 [shape = 's32[1]{0}', space=sflag, size = 0x4, scoped, tag = 'scoped memory for tile.18']
    %2 = vsyncpa [#allocation1], 0
    // Predicated region
    $region2: #{tile.18} parent=1 // pred_check
      _
    $region3: #{tile.18} parent=1 // pred_check_branch
      %4 = sbr.rel (0) target = $region5
    $region4: #{tile.18} parent=1 // pred_region
      %s6 = ssub.s32 16, 16
      %7 = vsyncadd [#allocation1], %s6
      %s9 = sshll.u32 [#allocation0], 4
      %s10 = int_to_ptr.vmem [resolvable:$true] %s9
      %12 = dma.hbm_to_vmem [thread:$0]  %s0, 16, %s10, [#allocation1]
    $region5: #{tile.18} parent=1 // pred_fallthru
      _
    // Predicated region
    $region6: #{tile.18} parent=1 // pred_check
      _
    $region7: #{tile.18} parent=1 // pred_check_branch
      %14 = sbr.rel (0) target = $region9
    $region8: #{tile.18} parent=1 // pred_region
      %15 = dma.done [#allocation1], 16
    $region9: #{tile.18} parent=1 // pred_fallthru
      _
    %v16 = vld [vmem:[#allocation0] ss:$0 sm:$0xff]
    %17 = vst [vmem:[%s1] sm:$0xff] %v16
    %s18 = scalar_lea.vmem %s1, 8
    %19 = vst [vmem:[%s18] sm:$0xff] %v16
    %20 = vsyncpa [#allocation1], 1

// kernel: tile.19
$region0: #{tile.19}
  %s0 = inlined_call_operand.vmem [shape: f32[16,3], index: 0, kind: input, shape index: {}]
  %s1 = inlined_call_operand.vmem [shape: f32[1,48], index: 1, kind: output, shape index: {}]
  $region1: #{tile.19} parent=0
    #allocation0 [shape = 'u8[4096]{0}', space=vmem, size = 0x1000, scoped, tag = 'scoped mem for output reshape']
    %v2 = vld [vmem:[%s0] sm:$0x1]
    %vm3 = vcmask 23552
    %4 = vst.msk [vmem:[#allocation0] sm:$0x1] %vm3, %v2
    %s5 = scalar_lea.vmem %s0, 15
    %v6 = vld [vmem:[%s5] sm:$0x1]
    %7 = vrot.lane.b32.xlu0 %v6, 45
    %v8 = vpop.permute.xlu0 %7
    %vm9 = vcmask 392552
    %10 = vst.msk [vmem:[#allocation0] sm:$0x1] %vm9, %v8
    %s11 = scalar_lea.vmem %s0, 14
    %v12 = vld [vmem:[%s11] sm:$0x1]
    %13 = vrot.lane.b32.xlu0 %v12, 42
    %v14 = vpop.permute.xlu0 %13
    %vm15 = vcmask 367952
    %16 = vst.msk [vmem:[#allocation0] sm:$0x1] %vm15, %v14
    %s17 = scalar_lea.vmem %s0, 13
    %v18 = vld [vmem:[%s17] sm:$0x1]
    %19 = vrot.lane.b32.xlu0 %v18, 39
    %v20 = vpop.permute.xlu0 %19
    %vm21 = vcmask 343352
    %22 = vst.msk [vmem:[#allocation0] sm:$0x1] %vm21, %v20
    %s23 = scalar_lea.vmem %s0, 12
    %v24 = vld [vmem:[%s23] sm:$0x1]
    %25 = vrot.lane.b32.xlu0 %v24, 36
    %v26 = vpop.permute.xlu0 %25
    %vm27 = vcmask 318752
    %28 = vst.msk [vmem:[#allocation0] sm:$0x1] %vm27, %v26
    %s29 = scalar_lea.vmem %s0, 11
    %v30 = vld [vmem:[%s29] sm:$0x1]
    %31 = vrot.lane.b32.xlu0 %v30, 33
    %v32 = vpop.permute.xlu0 %31
    %vm33 = vcmask 294152
    %34 = vst.msk [vmem:[#allocation0] sm:$0x1] %vm33, %v32
    %s35 = scalar_lea.vmem %s0, 10
    %v36 = vld [vmem:[%s35] sm:$0x1]
    %37 = vrot.lane.b32.xlu0 %v36, 30
    %v38 = vpop.permute.xlu0 %37
    %vm39 = vcmask 269552
    %40 = vst.msk [vmem:[#allocation0] sm:$0x1] %vm39, %v38
    %s41 = scalar_lea.vmem %s0, 9
    %v42 = vld [vmem:[%s41] sm:$0x1]
    %43 = vrot.lane.b32.xlu0 %v42, 27
    %v44 = vpop.permute.xlu0 %43
    %vm45 = vcmask 244952
    %46 = vst.msk [vmem:[#allocation0] sm:$0x1] %vm45, %v44
    %s47 = scalar_lea.vmem %s0, 8
    %v48 = vld [vmem:[%s47] sm:$0x1]
    %49 = vrot.lane.b32.xlu0 %v48, 24
    %v50 = vpop.permute.xlu0 %49
    %vm51 = vcmask 220352
    %52 = vst.msk [vmem:[#allocation0] sm:$0x1] %vm51, %v50
    %s53 = scalar_lea.vmem %s0, 7
    %v54 = vld [vmem:[%s53] sm:$0x1]
    %55 = vrot.lane.b32.xlu0 %v54, 21
    %v56 = vpop.permute.xlu0 %55
    %vm57 = vcmask 195752
    %58 = vst.msk [vmem:[#allocation0] sm:$0x1] %vm57, %v56
    %s59 = scalar_lea.vmem %s0, 6
    %v60 = vld [vmem:[%s59] sm:$0x1]
    %61 = vrot.lane.b32.xlu0 %v60, 18
    %v62 = vpop.permute.xlu0 %61
    %vm63 = vcmask 171152
    %64 = vst.msk [vmem:[#allocation0] sm:$0x1] %vm63, %v62
    %s65 = scalar_lea.vmem %s0, 5
    %v66 = vld [vmem:[%s65] sm:$0x1]
    %67 = vrot.lane.b32.xlu0 %v66, 15
    %v68 = vpop.permute.xlu0 %67
    %vm69 = vcmask 146552
    %70 = vst.msk [vmem:[#allocation0] sm:$0x1] %vm69, %v68
    %s71 = scalar_lea.vmem %s0, 4
    %v72 = vld [vmem:[%s71] sm:$0x1]
    %73 = vrot.lane.b32.xlu0 %v72, 12
    %v74 = vpop.permute.xlu0 %73
    %vm75 = vcmask 121952
    %76 = vst.msk [vmem:[#allocation0] sm:$0x1] %vm75, %v74
    %s77 = scalar_lea.vmem %s0, 3
    %v78 = vld [vmem:[%s77] sm:$0x1]
    %79 = vrot.lane.b32.xlu0 %v78, 9
    %v80 = vpop.permute.xlu0 %79
    %vm81 = vcmask 97352
    %82 = vst.msk [vmem:[#allocation0] sm:$0x1] %vm81, %v80
    %s83 = scalar_lea.vmem %s0, 2
    %v84 = vld [vmem:[%s83] sm:$0x1]
    %85 = vrot.lane.b32.xlu0 %v84, 6
    %v86 = vpop.permute.xlu0 %85
    %vm87 = vcmask 72752
    %88 = vst.msk [vmem:[#allocation0] sm:$0x1] %vm87, %v86
    %s89 = scalar_lea.vmem %s0, 1
    %v90 = vld [vmem:[%s89] sm:$0x1]
    %91 = vrot.lane.b32.xlu0 %v90, 3
    %v92 = vpop.permute.xlu0 %91
    %vm93 = vcmask 48152
    %94 = vst.msk [vmem:[#allocation0] sm:$0x1] %vm93, %v92
    %s96 = sshll.u32 1, 1
    %s97 = ssub.s32 %s96, 1
    %v99 = vld [vmem:[#allocation0] sm:%s97]
    %s100 = sshll.u32 1, 1
    %s101 = ssub.s32 %s100, 1
    %102 = vst [vmem:[%s1] sm:%s101] %v99

// kernel: tile.14
$region0: #{tile.14}
  %s0 = inlined_call_operand.vmem [shape: f32[4,16], index: 0, kind: input, shape index: {}]
  %s1 = inlined_call_operand.vmem [shape: f32[1,64], index: 1, kind: output, shape index: {}]
  $region1: #{tile.14} parent=0
    #allocation0 [shape = 'u8[4096]{0}', space=vmem, size = 0x1000, scoped, tag = 'scoped mem for output reshape']
    #allocation1 [shape = 'u8[4096]{0}', space=vmem, size = 0x1000, scoped, tag = 'scoped mem for input reshape']
    %s3 = sshll.u32 1, 4
    %s4 = ssub.s32 %s3, 1
    %v5 = vld [vmem:[%s0] sm:%s4]
    %6 = vst [vmem:[#allocation1] sm:%s4] %v5
    %v7 = vld [vmem:[#allocation1] sm:$0x1]
    %vm8 = vcmask 130048
    %9 = vst.msk [vmem:[#allocation0] sm:$0x1] %vm8, %v7
    %s10 = scalar_lea.vmem [#allocation1], 3
    %v11 = vld [vmem:[%s10] sm:$0x1]
    %12 = vrot.lane.b32.xlu0 %v11, 48
    %v13 = vpop.permute.xlu0 %12
    %vm14 = vcmask 523648
    %15 = vst.msk [vmem:[#allocation0] sm:$0x1] %vm14, %v13
    %s16 = scalar_lea.vmem [#allocation1], 2
    %v17 = vld [vmem:[%s16] sm:$0x1]
    %18 = vrot.lane.b32.xlu0 %v17, 32
    %v19 = vpop.permute.xlu0 %18
    %vm20 = vcmask 392448
    %21 = vst.msk [vmem:[#allocation0] sm:$0x1] %vm20, %v19
    %s22 = scalar_lea.vmem [#allocation1], 1
    %v23 = vld [vmem:[%s22] sm:$0x1]
    %24 = vrot.lane.b32.xlu0 %v23, 16
    %v25 = vpop.permute.xlu0 %24
    %vm26 = vcmask 261248
    %27 = vst.msk [vmem:[#allocation0] sm:$0x1] %vm26, %v25
    %s29 = sshll.u32 1, 1
    %s30 = ssub.s32 %s29, 1
    %v32 = vld [vmem:[#allocation0] sm:%s30]
    %s33 = sshll.u32 1, 1
    %s34 = ssub.s32 %s33, 1
    %35 = vst [vmem:[%s1] sm:%s34] %v32

// kernel: decoder_forward.1
$region0: #{decoder_forward.1}
  #allocation0 [shape = 'u32[]', space=smem, size = 0x4, offset = 0x4, fixed_abs, tag = 'smem constant byte address 0x4 - core index']
  #allocation1 [shape = 'u32[144,128]{1,0:T(1,128)}', space=vmem, size = 0x12000, scoped, tag = 'internal scratch']
  #allocation2 [shape = 'f32[18,24,64]{2,1,0:T(8,128)}', space=vmem, size = 0x36000, scoped, tag = 'scratch operand']
  %s0 = inlined_call_operand.vmem [shape: f32[2,16,16,4], index: 0, kind: input, shape index: {}]
  %s1 = inlined_call_operand.vmem [shape: f32[3,12,32], index: 1, kind: input, shape index: {}]
  %s2 = inlined_call_operand.vmem [shape: f32[1,32], index: 2, kind: input, shape index: {}]
  %s3 = inlined_call_operand.vmem [shape: f32[2,3,96,8], index: 3, kind: input, shape index: {}]
  %s4 = inlined_call_operand.vmem [shape: f32[2,8,32], index: 4, kind: input, shape index: {}]
  %s5 = inlined_call_operand.vmem [shape: f32[3,96,64], index: 5, kind: input, shape index: {}]
  %s6 = inlined_call_operand.vmem [shape: f32[1,64], index: 6, kind: input, shape index: {}]
  %s7 = inlined_call_operand.vmem [shape: f32[3,192,48], index: 7, kind: input, shape index: {}]
  %s8 = inlined_call_operand.vmem [shape: f32[1,48], index: 8, kind: input, shape index: {}]
  %s9 = inlined_call_operand.vmem [shape: f32[2,16,16,48], index: 9, kind: output, shape index: {}]
  %s10 = sld [smem:[#allocation0]]
  $region69: #{decoder_forward.1} parent=0
    _
  %s12 = ssub.s32 1, %s10
  %s13 = scalar_select 0, %s12, %s10
  loop: start=0, step=1, limit=4
  $region2: #{decoder_forward.1} parent=0 // loop_pre_header
    _
  $region3: #{decoder_forward.1} parent=0 // loop_header
    %s15 = sphi 0, %s19
    %p16 = scmp.ge.s32.totalorder %s15, 4
    %s25 = sphi 0, %s27
    %s28 = sphi 0, %s25
    %s29 = sphi 0, %s28
    %s45 = sphi 0, %s29
    %s49 = sphi 0, %s49
    %s51 = sphi 0, %s49
    %s52 = sphi 0, %s51
    %s66 = sphi 0, %s52
    %s70 = sphi 0, %s70
    %s72 = sphi 0, %s70
    %s73 = sphi 0, %s72
    %s87 = sphi 0, %s73
    %s91 = sphi 0, %s91
    %s93 = sphi 0, %s91
    %s94 = sphi 0, %s93
    %s108 = sphi 0, %s94
    %s112 = sphi 0, %s112
    %s114 = sphi 0, %s112
    %s115 = sphi 0, %s114
    %s129 = sphi 0, %s115
    %s133 = sphi 0, %s133
    %s135 = sphi 0, %s133
    %s136 = sphi 0, %s135
    %s150 = sphi 0, %s136
    %s154 = sphi 0, %s154
    %s156 = sphi 0, %s154
    %s157 = sphi 0, %s156
    %s171 = sphi 0, %s157
    %s175 = sphi 0, %s175
    %s177 = sphi 0, %s175
    %s178 = sphi 0, %s177
    %s192 = sphi 0, %s178
    %s196 = sphi 0, %s196
    %s198 = sphi 0, %s196
    %s199 = sphi 0, %s198
    %s213 = sphi 0, %s199
    %s219 = sphi 0, %s221
    %s222 = sphi 0, %s219
    %s223 = sphi 0, %s222
    %s239 = sphi 0, %s223
  $region4: #{decoder_forward.1} parent=0 // loop_header_branch
    %18 = sbr.rel (%p16) target = $region8
  $region5: #{decoder_forward.1} parent=0 // loop_body
    %s20 = ssub.s32 %s15, 1
    %s21 = ssub.s32 %s15, 2
    %s22 = sadd.s32 %s15, 1
    %s23 = ssub.s32 %s15, %s22
    %p24 = scmp.eq.s32.totalorder %s23, 0
    %s26 = sadd.s32 %s25, 1
    %s27 = scalar_select %p24, %s25, %s26
    %p30 = pneg %p24
    %p31 = scmp.eq.s32.totalorder %s15, 1
    %p32 = por %p30, %p31
    %p33 = scmp.ne.s32.totalorder %s25, %s28
    %p34 = scmp.eq.s32.totalorder %s15, 0
    %p35 = por %p33, %p34
    %p36 = scmp.ne.s32.totalorder %s25, %s28
    %p37 = scmp.eq.s32.totalorder %s20, 1
    %p38 = por %p36, %p37
    %p39 = scmp.ne.s32.totalorder %s28, %s29
    %p40 = scmp.eq.s32.totalorder %s20, 0
    %p41 = por %p39, %p40
    %p42 = scmp.ne.s32.totalorder %s28, %s29
    %p43 = scmp.eq.s32.totalorder %s21, 1
    %p44 = por %p42, %p43
    %p46 = scmp.ne.s32.totalorder %s29, %s45
    %p47 = scmp.eq.s32.totalorder %s21, 0
    %p48 = por %p46, %p47
    %s50 = sadd.s32 %s49, 1
    %p53 = scmp.eq.s32.totalorder %s15, 1
    %p54 = scmp.ne.s32.totalorder %s49, %s51
    %p55 = scmp.eq.s32.totalorder %s15, 0
    %p56 = por %p54, %p55
    %p57 = scmp.ne.s32.totalorder %s49, %s51
    %p58 = scmp.eq.s32.totalorder %s20, 1
    %p59 = por %p57, %p58
    %p60 = scmp.ne.s32.totalorder %s51, %s52
    %p61 = scmp.eq.s32.totalorder %s20, 0
    %p62 = por %p60, %p61
    %p63 = scmp.ne.s32.totalorder %s51, %s52
    %p64 = scmp.eq.s32.totalorder %s21, 1
    %p65 = por %p63, %p64
    %p67 = scmp.ne.s32.totalorder %s52, %s66
    %p68 = scmp.eq.s32.totalorder %s21, 0
    %p69 = por %p67, %p68
    %s71 = sadd.s32 %s70, 1
    %p74 = scmp.eq.s32.totalorder %s15, 1
    %p75 = scmp.ne.s32.totalorder %s70, %s72
    %p76 = scmp.eq.s32.totalorder %s15, 0
    %p77 = por %p75, %p76
    %p78 = scmp.ne.s32.totalorder %s70, %s72
    %p79 = scmp.eq.s32.totalorder %s20, 1
    %p80 = por %p78, %p79
    %p81 = scmp.ne.s32.totalorder %s72, %s73
    %p82 = scmp.eq.s32.totalorder %s20, 0
    %p83 = por %p81, %p82
    %p84 = scmp.ne.s32.totalorder %s72, %s73
    %p85 = scmp.eq.s32.totalorder %s21, 1
    %p86 = por %p84, %p85
    %p88 = scmp.ne.s32.totalorder %s73, %s87
    %p89 = scmp.eq.s32.totalorder %s21, 0
    %p90 = por %p88, %p89
    %s92 = sadd.s32 %s91, 1
    %p95 = scmp.eq.s32.totalorder %s15, 1
    %p96 = scmp.ne.s32.totalorder %s91, %s93
    %p97 = scmp.eq.s32.totalorder %s15, 0
    %p98 = por %p96, %p97
    %p99 = scmp.ne.s32.totalorder %s91, %s93
    %p100 = scmp.eq.s32.totalorder %s20, 1
    %p101 = por %p99, %p100
    %p102 = scmp.ne.s32.totalorder %s93, %s94
    %p103 = scmp.eq.s32.totalorder %s20, 0
    %p104 = por %p102, %p103
    %p105 = scmp.ne.s32.totalorder %s93, %s94
    %p106 = scmp.eq.s32.totalorder %s21, 1
    %p107 = por %p105, %p106
    %p109 = scmp.ne.s32.totalorder %s94, %s108
    %p110 = scmp.eq.s32.totalorder %s21, 0
    %p111 = por %p109, %p110
    %s113 = sadd.s32 %s112, 1
    %p116 = scmp.eq.s32.totalorder %s15, 1
    %p117 = scmp.ne.s32.totalorder %s112, %s114
    %p118 = scmp.eq.s32.totalorder %s15, 0
    %p119 = por %p117, %p118
    %p120 = scmp.ne.s32.totalorder %s112, %s114
    %p121 = scmp.eq.s32.totalorder %s20, 1
    %p122 = por %p120, %p121
    %p123 = scmp.ne.s32.totalorder %s114, %s115
    %p124 = scmp.eq.s32.totalorder %s20, 0
    %p125 = por %p123, %p124
    %p126 = scmp.ne.s32.totalorder %s114, %s115
    %p127 = scmp.eq.s32.totalorder %s21, 1
    %p128 = por %p126, %p127
    %p130 = scmp.ne.s32.totalorder %s115, %s129
    %p131 = scmp.eq.s32.totalorder %s21, 0
    %p132 = por %p130, %p131
    %s134 = sadd.s32 %s133, 1
    %p137 = scmp.eq.s32.totalorder %s15, 1
    %p138 = scmp.ne.s32.totalorder %s133, %s135
    %p139 = scmp.eq.s32.totalorder %s15, 0
    %p140 = por %p138, %p139
    %p141 = scmp.ne.s32.totalorder %s133, %s135
    %p142 = scmp.eq.s32.totalorder %s20, 1
    %p143 = por %p141, %p142
    %p144 = scmp.ne.s32.totalorder %s135, %s136
    %p145 = scmp.eq.s32.totalorder %s20, 0
    %p146 = por %p144, %p145
    %p147 = scmp.ne.s32.totalorder %s135, %s136
    %p148 = scmp.eq.s32.totalorder %s21, 1
    %p149 = por %p147, %p148
    %p151 = scmp.ne.s32.totalorder %s136, %s150
    %p152 = scmp.eq.s32.totalorder %s21, 0
    %p153 = por %p151, %p152
    %s155 = sadd.s32 %s154, 1
    %p158 = scmp.eq.s32.totalorder %s15, 1
    %p159 = scmp.ne.s32.totalorder %s154, %s156
    %p160 = scmp.eq.s32.totalorder %s15, 0
    %p161 = por %p159, %p160
    %p162 = scmp.ne.s32.totalorder %s154, %s156
    %p163 = scmp.eq.s32.totalorder %s20, 1
    %p164 = por %p162, %p163
    %p165 = scmp.ne.s32.totalorder %s156, %s157
    %p166 = scmp.eq.s32.totalorder %s20, 0
    %p167 = por %p165, %p166
    %p168 = scmp.ne.s32.totalorder %s156, %s157
    %p169 = scmp.eq.s32.totalorder %s21, 1
    %p170 = por %p168, %p169
    %p172 = scmp.ne.s32.totalorder %s157, %s171
    %p173 = scmp.eq.s32.totalorder %s21, 0
    %p174 = por %p172, %p173
    %s176 = sadd.s32 %s175, 1
    %p179 = scmp.eq.s32.totalorder %s15, 1
    %p180 = scmp.ne.s32.totalorder %s175, %s177
    %p181 = scmp.eq.s32.totalorder %s15, 0
    %p182 = por %p180, %p181
    %p183 = scmp.ne.s32.totalorder %s175, %s177
    %p184 = scmp.eq.s32.totalorder %s20, 1
    %p185 = por %p183, %p184
    %p186 = scmp.ne.s32.totalorder %s177, %s178
    %p187 = scmp.eq.s32.totalorder %s20, 0
    %p188 = por %p186, %p187
    %p189 = scmp.ne.s32.totalorder %s177, %s178
    %p190 = scmp.eq.s32.totalorder %s21, 1
    %p191 = por %p189, %p190
    %p193 = scmp.ne.s32.totalorder %s178, %s192
    %p194 = scmp.eq.s32.totalorder %s21, 0
    %p195 = por %p193, %p194
    %s197 = sadd.s32 %s196, 1
    %p200 = scmp.eq.s32.totalorder %s15, 1
    %p201 = scmp.ne.s32.totalorder %s196, %s198
    %p202 = scmp.eq.s32.totalorder %s15, 0
    %p203 = por %p201, %p202
    %p204 = scmp.ne.s32.totalorder %s196, %s198
    %p205 = scmp.eq.s32.totalorder %s20, 1
    %p206 = por %p204, %p205
    %p207 = scmp.ne.s32.totalorder %s198, %s199
    %p208 = scmp.eq.s32.totalorder %s20, 0
    %p209 = por %p207, %p208
    %p210 = scmp.ne.s32.totalorder %s198, %s199
    %p211 = scmp.eq.s32.totalorder %s21, 1
    %p212 = por %p210, %p211
    %p214 = scmp.ne.s32.totalorder %s199, %s213
    %p215 = scmp.eq.s32.totalorder %s21, 0
    %p216 = por %p214, %p215
    %s217 = ssub.s32 %s15, %s22
    %p218 = scmp.eq.s32.totalorder %s217, 0
    %s220 = sadd.s32 %s219, 1
    %s221 = scalar_select %p218, %s219, %s220
    %p224 = pneg %p218
    %p225 = scmp.eq.s32.totalorder %s15, 1
    %p226 = por %p224, %p225
    %p227 = scmp.ne.s32.totalorder %s219, %s222
    %p228 = scmp.eq.s32.totalorder %s15, 0
    %p229 = por %p227, %p228
    %p230 = scmp.ne.s32.totalorder %s219, %s222
    %p231 = scmp.eq.s32.totalorder %s20, 1
    %p232 = por %p230, %p231
    %p233 = scmp.ne.s32.totalorder %s222, %s223
    %p234 = scmp.eq.s32.totalorder %s20, 0
    %p235 = por %p233, %p234
    %p236 = scmp.ne.s32.totalorder %s222, %s223
    %p237 = scmp.eq.s32.totalorder %s21, 1
    %p238 = por %p236, %p237
    %p240 = scmp.ne.s32.totalorder %s223, %s239
    %p241 = scmp.eq.s32.totalorder %s21, 0
    %p242 = por %p240, %p241
    %p243 = scmp.le.s32.totalorder 1, %s15
    %p244 = scmp.lt.s32.totalorder %s15, 3
    %p245 = pnand %p243, %p244
    %p246 = pneg %p245
    // Predicated region
    $region9: #{decoder_forward.1} parent=5 // pred_check
      _
    $region10: #{decoder_forward.1} parent=5 // pred_check_branch
      %248 = sbr.rel (%p245) target = $region12
    $region11: #{decoder_forward.1} parent=5 // pred_region
      %s249 = ssub.s32 %s15, 1
      // Predicated region
      $region13: #{decoder_forward.1} parent=11 // pred_check
        %p250 = pneg %p62
      $region14: #{decoder_forward.1} parent=11 // pred_check_branch
        %252 = sbr.rel (%p250) target = $region16
      $region15: #{decoder_forward.1} parent=11 // pred_region
        _
      $region16: #{decoder_forward.1} parent=11 // pred_fallthru
        _
      // Predicated region
      $region17: #{decoder_forward.1} parent=11 // pred_check
        %p253 = pneg %p83
      $region18: #{decoder_forward.1} parent=11 // pred_check_branch
        %255 = sbr.rel (%p253) target = $region20
      $region19: #{decoder_forward.1} parent=11 // pred_region
        _
      $region20: #{decoder_forward.1} parent=11 // pred_fallthru
        _
      // Predicated region
      $region21: #{decoder_forward.1} parent=11 // pred_check
        %p256 = pneg %p104
      $region22: #{decoder_forward.1} parent=11 // pred_check_branch
        %258 = sbr.rel (%p256) target = $region24
      $region23: #{decoder_forward.1} parent=11 // pred_region
        _
      $region24: #{decoder_forward.1} parent=11 // pred_fallthru
        _
      // Predicated region
      $region25: #{decoder_forward.1} parent=11 // pred_check
        %p259 = pneg %p125
      $region26: #{decoder_forward.1} parent=11 // pred_check_branch
        %261 = sbr.rel (%p259) target = $region28
      $region27: #{decoder_forward.1} parent=11 // pred_region
        _
      $region28: #{decoder_forward.1} parent=11 // pred_fallthru
        _
      // Predicated region
      $region29: #{decoder_forward.1} parent=11 // pred_check
        %p262 = pneg %p146
      $region30: #{decoder_forward.1} parent=11 // pred_check_branch
        %264 = sbr.rel (%p262) target = $region32
      $region31: #{decoder_forward.1} parent=11 // pred_region
        _
      $region32: #{decoder_forward.1} parent=11 // pred_fallthru
        _
      // Predicated region
      $region33: #{decoder_forward.1} parent=11 // pred_check
        %p265 = pneg %p167
      $region34: #{decoder_forward.1} parent=11 // pred_check_branch
        %267 = sbr.rel (%p265) target = $region36
      $region35: #{decoder_forward.1} parent=11 // pred_region
        _
      $region36: #{decoder_forward.1} parent=11 // pred_fallthru
        _
      // Predicated region
      $region37: #{decoder_forward.1} parent=11 // pred_check
        %p268 = pneg %p188
      $region38: #{decoder_forward.1} parent=11 // pred_check_branch
        %270 = sbr.rel (%p268) target = $region40
      $region39: #{decoder_forward.1} parent=11 // pred_region
        _
      $region40: #{decoder_forward.1} parent=11 // pred_fallthru
        _
      // Predicated region
      $region41: #{decoder_forward.1} parent=11 // pred_check
        %p271 = pneg %p209
      $region42: #{decoder_forward.1} parent=11 // pred_check_branch
        %273 = sbr.rel (%p271) target = $region44
      $region43: #{decoder_forward.1} parent=11 // pred_region
        _
      $region44: #{decoder_forward.1} parent=11 // pred_fallthru
        _
    $region12: #{decoder_forward.1} parent=5 // pred_fallthru
      _
    %p274 = scmp.lt.s32.totalorder %s15, 2
    // Predicated region
    $region45: #{decoder_forward.1} parent=5 // pred_check
      %p275 = pneg %p274
    $region46: #{decoder_forward.1} parent=5 // pred_check_branch
      %277 = sbr.rel (%p275) target = $region48
    $region47: #{decoder_forward.1} parent=5 // pred_region
      // Predicated region
      $region49: #{decoder_forward.1} parent=47 // pred_check
        %p278 = pneg %p35
      $region50: #{decoder_forward.1} parent=47 // pred_check_branch
        %280 = sbr.rel (%p278) target = $region52
      $region51: #{decoder_forward.1} parent=47 // pred_region
        %p281 = scmp.lt.s32.totalorder %s15, 1
        %s282 = scalar_select %p281, %s15, 1
        %s283 = smul.addr %s282, 32
        %s284 = smul.addr %s283, 8
        %s285 = scalar_lea.vmem %s0, %s284
      $region52: #{decoder_forward.1} parent=47 // pred_fallthru
        _
    $region48: #{decoder_forward.1} parent=5 // pred_fallthru
      _
    %p286 = scmp.le.s32.totalorder 1, %s15
    %p287 = scmp.lt.s32.totalorder %s15, 3
    %p288 = pnand %p286, %p287
    %p289 = pneg %p288
    // Predicated region
    $region53: #{decoder_forward.1} parent=5 // pred_check
      _
    $region54: #{decoder_forward.1} parent=5 // pred_check_branch
      %291 = sbr.rel (%p288) target = $region56
    $region55: #{decoder_forward.1} parent=5 // pred_region
      %s292 = ssub.s32 %s15, 1
      %p293 = scmp.lt.s32.totalorder %s20, 1
      %s294 = scalar_select %p293, %s20, 1
      %s295 = smul.addr %s294, 32
      %s296 = smul.addr %s295, 8
      %s297 = scalar_lea.vmem %s0, %s296
      %p298 = pneg %p41
      %p299 = pneg %p38
      %p300 = pneg %p62
      %p301 = pneg %p59
      %p302 = pneg %p83
      %p303 = pneg %p80
      %p304 = pneg %p104
      %p305 = pneg %p101
      %p306 = pneg %p125
      %p307 = pneg %p122
      %p308 = pneg %p146
      %p309 = pneg %p143
      %p310 = pneg %p167
      %p311 = pneg %p164
      %p312 = pneg %p188
      %p313 = pneg %p185
      %p314 = pneg %p209
      %p315 = pneg %p206
      %p316 = pneg %p235
      %p317 = pneg %p232
      %p318 = scmp.lt.s32.totalorder %s20, 1
      %s319 = scalar_select %p318, %s20, 1
      %s320 = smul.addr %s319, 32
      %s321 = smul.addr %s320, 8
      %s322 = scalar_lea.vmem %s9, %s321
      %p323 = scmp.lt.s32.totalorder %s20, 1
      %s324 = scalar_select %p323, %s20, 1
      %s325 = smul.addr %s324, 32
      %s326 = smul.addr %s325, 8
      %s327 = scalar_lea.vmem %s0, %s326
      %p328 = scmp.lt.s32.totalorder %s20, 1
      %s329 = scalar_select %p328, %s20, 1
      %s330 = smul.addr %s329, 32
      %s331 = smul.addr %s330, 8
      %s332 = scalar_lea.vmem %s9, %s331
      %vm333 = vcmask 523264
      %334 = vst.msk [vmem:[#allocation2] sm:$0xff] %vm333, 0.0
      %335 = vst.msk [vmem:[#allocation2 + $0x8] sm:$0xff] %vm333, 0.0
      %336 = vst.msk [vmem:[#allocation2 + $0x10] sm:$0xff] %vm333, 0.0
      %s337 = scalar_lea.vmem [#allocation2], 408
      %338 = vst.msk [vmem:[%s337] sm:$0xff] %vm333, 0.0
      %339 = vst.msk [vmem:[%s337 + $0x8] sm:$0xff] %vm333, 0.0
      %340 = vst.msk [vmem:[%s337 + $0x10] sm:$0xff] %vm333, 0.0
      %vm341 = vcmask 516096
      %342 = vst.msk [vmem:[#allocation2] sm:$0x1] %vm341, 0.0
      %343 = vst.msk [vmem:[#allocation2 + $0x18] sm:$0x1] %vm341, 0.0
      %344 = vst.msk [vmem:[#allocation2 + $0x30] sm:$0x1] %vm341, 0.0
      %345 = vst.msk [vmem:[#allocation2 + $0x48] sm:$0x1] %vm341, 0.0
      %346 = vst.msk [vmem:[#allocation2 + $0x60] sm:$0x1] %vm341, 0.0
      %347 = vst.msk [vmem:[#allocation2 + $0x78] sm:$0x1] %vm341, 0.0
      %348 = vst.msk [vmem:[#allocation2 + $0x90] sm:$0x1] %vm341, 0.0
      %349 = vst.msk [vmem:[#allocation2 + $0xa8] sm:$0x1] %vm341, 0.0
      %350 = vst.msk [vmem:[#allocation2 + $0xc0] sm:$0x1] %vm341, 0.0
      %351 = vst.msk [vmem:[#allocation2 + $0xd8] sm:$0x1] %vm341, 0.0
      %352 = vst.msk [vmem:[#allocation2 + $0xf0] sm:$0x1] %vm341, 0.0
      %353 = vst.msk [vmem:[#allocation2 + $0x108] sm:$0x1] %vm341, 0.0
      %354 = vst.msk [vmem:[#allocation2 + $0x120] sm:$0x1] %vm341, 0.0
      %355 = vst.msk [vmem:[#allocation2 + $0x138] sm:$0x1] %vm341, 0.0
      %356 = vst.msk [vmem:[#allocation2 + $0x150] sm:$0x1] %vm341, 0.0
      %357 = vst.msk [vmem:[#allocation2 + $0x168] sm:$0x1] %vm341, 0.0
      %358 = vst.msk [vmem:[#allocation2 + $0x180] sm:$0x1] %vm341, 0.0
      %359 = vst.msk [vmem:[#allocation2 + $0x198] sm:$0x1] %vm341, 0.0
      %360 = vst.msk [vmem:[#allocation2 + $0x11] sm:$0x1] %vm341, 0.0
      %361 = vst.msk [vmem:[#allocation2 + $0x29] sm:$0x1] %vm341, 0.0
      %362 = vst.msk [vmem:[#allocation2 + $0x41] sm:$0x1] %vm341, 0.0
      %363 = vst.msk [vmem:[#allocation2 + $0x59] sm:$0x1] %vm341, 0.0
      %364 = vst.msk [vmem:[#allocation2 + $0x71] sm:$0x1] %vm341, 0.0
      %365 = vst.msk [vmem:[#allocation2 + $0x89] sm:$0x1] %vm341, 0.0
      %366 = vst.msk [vmem:[#allocation2 + $0xa1] sm:$0x1] %vm341, 0.0
      %367 = vst.msk [vmem:[#allocation2 + $0xb9] sm:$0x1] %vm341, 0.0
      %368 = vst.msk [vmem:[#allocation2 + $0xd1] sm:$0x1] %vm341, 0.0
      %369 = vst.msk [vmem:[#allocation2 + $0xe9] sm:$0x1] %vm341, 0.0
      %370 = vst.msk [vmem:[#allocation2 + $0x101] sm:$0x1] %vm341, 0.0
      %371 = vst.msk [vmem:[#allocation2 + $0x119] sm:$0x1] %vm341, 0.0
      %372 = vst.msk [vmem:[#allocation2 + $0x131] sm:$0x1] %vm341, 0.0
      %373 = vst.msk [vmem:[#allocation2 + $0x149] sm:$0x1] %vm341, 0.0
      %374 = vst.msk [vmem:[#allocation2 + $0x161] sm:$0x1] %vm341, 0.0
      %375 = vst.msk [vmem:[#allocation2 + $0x179] sm:$0x1] %vm341, 0.0
      %376 = vst.msk [vmem:[#allocation2 + $0x191] sm:$0x1] %vm341, 0.0
      %377 = vst.msk [vmem:[#allocation2 + $0x1a9] sm:$0x1] %vm341, 0.0
      %v378 = vld [vmem:[%s327] sm:$0xff]
      %v379 = vld [vmem:[%s327 + $0x8] sm:$0xff]
      %v380 = vld [vmem:[%s327 + $0x10] sm:$0xff]
      %v381 = vld [vmem:[%s327 + $0x18] sm:$0xff]
      %v382 = vld [vmem:[%s327 + $0x20] sm:$0xff]
      %v383 = vld [vmem:[%s327 + $0x28] sm:$0xff]
      %v384 = vld [vmem:[%s327 + $0x30] sm:$0xff]
      %v385 = vld [vmem:[%s327 + $0x38] sm:$0xff]
      %v386 = vld [vmem:[%s327 + $0x40] sm:$0xff]
      %v387 = vld [vmem:[%s327 + $0x48] sm:$0xff]
      %v388 = vld [vmem:[%s327 + $0x50] sm:$0xff]
      %v389 = vld [vmem:[%s327 + $0x58] sm:$0xff]
      %v390 = vld [vmem:[%s327 + $0x60] sm:$0xff]
      %v391 = vld [vmem:[%s327 + $0x68] sm:$0xff]
      %v392 = vld [vmem:[%s327 + $0x70] sm:$0xff]
      %v393 = vld [vmem:[%s327 + $0x78] sm:$0xff]
      %v394 = vld [vmem:[%s327 + $0x80] sm:$0xff]
      %v395 = vld [vmem:[%s327 + $0x88] sm:$0xff]
      %v396 = vld [vmem:[%s327 + $0x90] sm:$0xff]
      %v397 = vld [vmem:[%s327 + $0x98] sm:$0xff]
      %v398 = vld [vmem:[%s327 + $0xa0] sm:$0xff]
      %v399 = vld [vmem:[%s327 + $0xa8] sm:$0xff]
      %v400 = vld [vmem:[%s327 + $0xb0] sm:$0xff]
      %v401 = vld [vmem:[%s327 + $0xb8] sm:$0xff]
      %v402 = vld [vmem:[%s327 + $0xc0] sm:$0xff]
      %v403 = vld [vmem:[%s327 + $0xc8] sm:$0xff]
      %v404 = vld [vmem:[%s327 + $0xd0] sm:$0xff]
      %v405 = vld [vmem:[%s327 + $0xd8] sm:$0xff]
      %v406 = vld [vmem:[%s327 + $0xe0] sm:$0xff]
      %v407 = vld [vmem:[%s327 + $0xe8] sm:$0xff]
      %v408 = vld [vmem:[%s327 + $0xf0] sm:$0xff]
      %v409 = vld [vmem:[%s327 + $0xf8] sm:$0xff]
      %v410 = vld [vmem:[%s2] sm:$0x1]
      %s411 = scalar_lea.vmem [#allocation2], 24
      %vm412 = vcmask 31744
      %413 = vst.msk [vmem:[%s411 + $0x1] sm:$0xff] %vm412, %v378
      %414 = vst.msk [vmem:[%s411 + $0x9] sm:$0xff] %vm412, %v379
      %415 = vst.msk [vmem:[%s411 + $0x19] sm:$0xff] %vm412, %v380
      %416 = vst.msk [vmem:[%s411 + $0x21] sm:$0xff] %vm412, %v381
      %417 = vst.msk [vmem:[%s411 + $0x31] sm:$0xff] %vm412, %v382
      %418 = vst.msk [vmem:[%s411 + $0x39] sm:$0xff] %vm412, %v383
      %419 = vst.msk [vmem:[%s411 + $0x49] sm:$0xff] %vm412, %v384
      %420 = vst.msk [vmem:[%s411 + $0x51] sm:$0xff] %vm412, %v385
      %421 = vst.msk [vmem:[%s411 + $0x61] sm:$0xff] %vm412, %v386
      %422 = vst.msk [vmem:[%s411 + $0x69] sm:$0xff] %vm412, %v387
      %423 = vst.msk [vmem:[%s411 + $0x79] sm:$0xff] %vm412, %v388
      %424 = vst.msk [vmem:[%s411 + $0x81] sm:$0xff] %vm412, %v389
      %425 = vst.msk [vmem:[%s411 + $0x91] sm:$0xff] %vm412, %v390
      %426 = vst.msk [vmem:[%s411 + $0x99] sm:$0xff] %vm412, %v391
      %427 = vst.msk [vmem:[%s411 + $0xa9] sm:$0xff] %vm412, %v392
      %428 = vst.msk [vmem:[%s411 + $0xb1] sm:$0xff] %vm412, %v393
      %429 = vst.msk [vmem:[%s411 + $0xc1] sm:$0xff] %vm412, %v394
      %430 = vst.msk [vmem:[%s411 + $0xc9] sm:$0xff] %vm412, %v395
      %431 = vst.msk [vmem:[%s411 + $0xd9] sm:$0xff] %vm412, %v396
      %432 = vst.msk [vmem:[%s411 + $0xe1] sm:$0xff] %vm412, %v397
      %433 = vst.msk [vmem:[%s411 + $0xf1] sm:$0xff] %vm412, %v398
      %434 = vst.msk [vmem:[%s411 + $0xf9] sm:$0xff] %vm412, %v399
      %435 = vst.msk [vmem:[%s411 + $0x109] sm:$0xff] %vm412, %v400
      %436 = vst.msk [vmem:[%s411 + $0x111] sm:$0xff] %vm412, %v401
      %437 = vst.msk [vmem:[%s411 + $0x121] sm:$0xff] %vm412, %v402
      %438 = vst.msk [vmem:[%s411 + $0x129] sm:$0xff] %vm412, %v403
      %439 = vst.msk [vmem:[%s411 + $0x139] sm:$0xff] %vm412, %v404
      %440 = vst.msk [vmem:[%s411 + $0x141] sm:$0xff] %vm412, %v405
      %441 = vst.msk [vmem:[%s411 + $0x151] sm:$0xff] %vm412, %v406
      %442 = vst.msk [vmem:[%s411 + $0x159] sm:$0xff] %vm412, %v407
      %443 = vst.msk [vmem:[%s411 + $0x169] sm:$0xff] %vm412, %v408
      %444 = vst.msk [vmem:[%s411 + $0x171] sm:$0xff] %vm412, %v409
      %v445 = vld [vmem:[#allocation2] sm:$0xff]
      %v446 = vld [vmem:[#allocation2 + $0x8] sm:$0xff]
      %v447 = vld [vmem:[#allocation2 + $0x18] sm:$0xff]
      %v448 = vld [vmem:[#allocation2 + $0x20] sm:$0xff]
      %v449 = vld [vmem:[#allocation2 + $0x30] sm:$0xff]
      %v450 = vld [vmem:[#allocation2 + $0x38] sm:$0xff]
      %v451 = vld [vmem:[#allocation2 + $0x48] sm:$0xff]
      %v452 = vld [vmem:[#allocation2 + $0x50] sm:$0xff]
      %v453 = vld [vmem:[#allocation2 + $0x60] sm:$0xff]
      %v454 = vld [vmem:[#allocation2 + $0x68] sm:$0xff]
      %v455 = vld [vmem:[#allocation2 + $0x78] sm:$0xff]
      %v456 = vld [vmem:[#allocation2 + $0x80] sm:$0xff]
      %v457 = vld [vmem:[#allocation2 + $0x90] sm:$0xff]
      %v458 = vld [vmem:[#allocation2 + $0x98] sm:$0xff]
      %v459 = vld [vmem:[#allocation2 + $0xa8] sm:$0xff]
      %v460 = vld [vmem:[#allocation2 + $0xb0] sm:$0xff]
      %v461 = vld [vmem:[#allocation2 + $0xc0] sm:$0xff]
      %v462 = vld [vmem:[#allocation2 + $0xc8] sm:$0xff]
      %v463 = vld [vmem:[#allocation2 + $0xd8] sm:$0xff]
      %v464 = vld [vmem:[#allocation2 + $0xe0] sm:$0xff]
      %v465 = vld [vmem:[#allocation2 + $0xf0] sm:$0xff]
      %v466 = vld [vmem:[#allocation2 + $0xf8] sm:$0xff]
      %v467 = vld [vmem:[#allocation2 + $0x108] sm:$0xff]
      %v468 = vld [vmem:[#allocation2 + $0x110] sm:$0xff]
      %v469 = vld [vmem:[#allocation2 + $0x120] sm:$0xff]
      %v470 = vld [vmem:[#allocation2 + $0x128] sm:$0xff]
      %v471 = vld [vmem:[#allocation2 + $0x138] sm:$0xff]
      %v472 = vld [vmem:[#allocation2 + $0x140] sm:$0xff]
      %v473 = vld [vmem:[#allocation2 + $0x150] sm:$0xff]
      %v474 = vld [vmem:[#allocation2 + $0x158] sm:$0xff]
      %v475 = vld [vmem:[#allocation2 + $0x168] sm:$0xff]
      %v476 = vld [vmem:[#allocation2 + $0x170] sm:$0xff]
      %v477 = vld [vmem:[#allocation2 + $0x180] sm:$0xff]
      %v478 = vld [vmem:[#allocation2 + $0x188] sm:$0xff]
      %v479 = vld [vmem:[#allocation2 + $0x198] sm:$0xff]
      %v480 = vld [vmem:[#allocation2 + $0x1a0] sm:$0xff]
      %v481 = vld [vmem:[#allocation2 + $0x1] sm:$0xff]
      %v482 = vld [vmem:[#allocation2 + $0x9] sm:$0xff]
      %v483 = vld [vmem:[#allocation2 + $0x19] sm:$0xff]
      %v484 = vld [vmem:[#allocation2 + $0x21] sm:$0xff]
      %v485 = vld [vmem:[#allocation2 + $0x31] sm:$0xff]
      %v486 = vld [vmem:[#allocation2 + $0x39] sm:$0xff]
      %v487 = vld [vmem:[#allocation2 + $0x49] sm:$0xff]
      %v488 = vld [vmem:[#allocation2 + $0x51] sm:$0xff]
      %v489 = vld [vmem:[#allocation2 + $0x61] sm:$0xff]
      %v490 = vld [vmem:[#allocation2 + $0x69] sm:$0xff]
      %v491 = vld [vmem:[#allocation2 + $0x79] sm:$0xff]
      %v492 = vld [vmem:[#allocation2 + $0x81] sm:$0xff]
      %v493 = vld [vmem:[#allocation2 + $0x91] sm:$0xff]
      %v494 = vld [vmem:[#allocation2 + $0x99] sm:$0xff]
      %v495 = vld [vmem:[#allocation2 + $0xa9] sm:$0xff]
      %v496 = vld [vmem:[#allocation2 + $0xb1] sm:$0xff]
      %v497 = vld [vmem:[#allocation2 + $0xc1] sm:$0xff]
      %v498 = vld [vmem:[#allocation2 + $0xc9] sm:$0xff]
      %v499 = vld [vmem:[#allocation2 + $0xd9] sm:$0xff]
      %v500 = vld [vmem:[#allocation2 + $0xe1] sm:$0xff]
      %v501 = vld [vmem:[#allocation2 + $0xf1] sm:$0xff]
      %v502 = vld [vmem:[#allocation2 + $0xf9] sm:$0xff]
      %v503 = vld [vmem:[#allocation2 + $0x109] sm:$0xff]
      %v504 = vld [vmem:[#allocation2 + $0x111] sm:$0xff]
      %v505 = vld [vmem:[#allocation2 + $0x121] sm:$0xff]
      %v506 = vld [vmem:[#allocation2 + $0x129] sm:$0xff]
      %v507 = vld [vmem:[#allocation2 + $0x139] sm:$0xff]
      %v508 = vld [vmem:[#allocation2 + $0x141] sm:$0xff]
      %v509 = vld [vmem:[#allocation2 + $0x151] sm:$0xff]
      %v510 = vld [vmem:[#allocation2 + $0x159] sm:$0xff]
      %v511 = vld [vmem:[#allocation2 + $0x169] sm:$0xff]
      %v512 = vld [vmem:[#allocation2 + $0x171] sm:$0xff]
      %v513 = vld [vmem:[#allocation2 + $0x181] sm:$0xff]
      %v514 = vld [vmem:[#allocation2 + $0x189] sm:$0xff]
      %v515 = vld [vmem:[#allocation2 + $0x199] sm:$0xff]
      %v516 = vld [vmem:[#allocation2 + $0x1a1] sm:$0xff]
      %v517 = vld [vmem:[#allocation2 + $0x2] sm:$0xff]
      %v518 = vld [vmem:[#allocation2 + $0xa] sm:$0xff]
      %v519 = vld [vmem:[#allocation2 + $0x1a] sm:$0xff]
      %v520 = vld [vmem:[#allocation2 + $0x22] sm:$0xff]
      %v521 = vld [vmem:[#allocation2 + $0x32] sm:$0xff]
      %v522 = vld [vmem:[#allocation2 + $0x3a] sm:$0xff]
      %v523 = vld [vmem:[#allocation2 + $0x4a] sm:$0xff]
      %v524 = vld [vmem:[#allocation2 + $0x52] sm:$0xff]
      %v525 = vld [vmem:[#allocation2 + $0x62] sm:$0xff]
      %v526 = vld [vmem:[#allocation2 + $0x6a] sm:$0xff]
      %v527 = vld [vmem:[#allocation2 + $0x7a] sm:$0xff]
      %v528 = vld [vmem:[#allocation2 + $0x82] sm:$0xff]
      %v529 = vld [vmem:[#allocation2 + $0x92] sm:$0xff]
      %v530 = vld [vmem:[#allocation2 + $0x9a] sm:$0xff]
      %v531 = vld [vmem:[#allocation2 + $0xaa] sm:$0xff]
      %v532 = vld [vmem:[#allocation2 + $0xb2] sm:$0xff]
      %v533 = vld [vmem:[#allocation2 + $0xc2] sm:$0xff]
      %v534 = vld [vmem:[#allocation2 + $0xca] sm:$0xff]
      %v535 = vld [vmem:[#allocation2 + $0xda] sm:$0xff]
      %v536 = vld [vmem:[#allocation2 + $0xe2] sm:$0xff]
      %v537 = vld [vmem:[#allocation2 + $0xf2] sm:$0xff]
      %v538 = vld [vmem:[#allocation2 + $0xfa] sm:$0xff]
      %v539 = vld [vmem:[#allocation2 + $0x10a] sm:$0xff]
      %v540 = vld [vmem:[#allocation2 + $0x112] sm:$0xff]
      %v541 = vld [vmem:[#allocation2 + $0x122] sm:$0xff]
      %v542 = vld [vmem:[#allocation2 + $0x12a] sm:$0xff]
      %v543 = vld [vmem:[#allocation2 + $0x13a] sm:$0xff]
      %v544 = vld [vmem:[#allocation2 + $0x142] sm:$0xff]
      %v545 = vld [vmem:[#allocation2 + $0x152] sm:$0xff]
      %v546 = vld [vmem:[#allocation2 + $0x15a] sm:$0xff]
      %v547 = vld [vmem:[#allocation2 + $0x16a] sm:$0xff]
      %v548 = vld [vmem:[#allocation2 + $0x172] sm:$0xff]
      %v549 = vld [vmem:[#allocation2 + $0x182] sm:$0xff]
      %v550 = vld [vmem:[#allocation2 + $0x18a] sm:$0xff]
      %v551 = vld [vmem:[#allocation2 + $0x19a] sm:$0xff]
      %v552 = vld [vmem:[#allocation2 + $0x1a2] sm:$0xff]
      %585 = vrot.lane.b32.xlu0 %v481, 4
      %v586 = vpop.permute.xlu0 %585
      %587 = vrot.lane.b32.xlu0 %v482, 4
      %v588 = vpop.permute.xlu0 %587
      %589 = vrot.lane.b32.xlu0 %v483, 4
      %v590 = vpop.permute.xlu0 %589
      %591 = vrot.lane.b32.xlu0 %v484, 4
      %v592 = vpop.permute.xlu0 %591
      %593 = vrot.lane.b32.xlu0 %v485, 4
      %v594 = vpop.permute.xlu0 %593
      %595 = vrot.lane.b32.xlu0 %v486, 4
      %v596 = vpop.permute.xlu0 %595
      %597 = vrot.lane.b32.xlu0 %v487, 4
      %v598 = vpop.permute.xlu0 %597
      %599 = vrot.lane.b32.xlu0 %v488, 4
      %v600 = vpop.permute.xlu0 %599
      %601 = vrot.lane.b32.xlu0 %v489, 4
      %v602 = vpop.permute.xlu0 %601
      %603 = vrot.lane.b32.xlu0 %v490, 4
      %v604 = vpop.permute.xlu0 %603
      %605 = vrot.lane.b32.xlu0 %v491, 4
      %v606 = vpop.permute.xlu0 %605
      %607 = vrot.lane.b32.xlu0 %v492, 4
      %v608 = vpop.permute.xlu0 %607
      %609 = vrot.lane.b32.xlu0 %v493, 4
      %v610 = vpop.permute.xlu0 %609
      %611 = vrot.lane.b32.xlu0 %v494, 4
      %v612 = vpop.permute.xlu0 %611
      %613 = vrot.lane.b32.xlu0 %v495, 4
      %v614 = vpop.permute.xlu0 %613
      %615 = vrot.lane.b32.xlu0 %v496, 4
      %v616 = vpop.permute.xlu0 %615
      %617 = vrot.lane.b32.xlu0 %v497, 4
      %v618 = vpop.permute.xlu0 %617
      %619 = vrot.lane.b32.xlu0 %v498, 4
      %v620 = vpop.permute.xlu0 %619
      %621 = vrot.lane.b32.xlu0 %v499, 4
      %v622 = vpop.permute.xlu0 %621
      %623 = vrot.lane.b32.xlu0 %v500, 4
      %v624 = vpop.permute.xlu0 %623
      %625 = vrot.lane.b32.xlu0 %v501, 4
      %v626 = vpop.permute.xlu0 %625
      %627 = vrot.lane.b32.xlu0 %v502, 4
      %v628 = vpop.permute.xlu0 %627
      %629 = vrot.lane.b32.xlu0 %v503, 4
      %v630 = vpop.permute.xlu0 %629
      %631 = vrot.lane.b32.xlu0 %v504, 4
      %v632 = vpop.permute.xlu0 %631
      %633 = vrot.lane.b32.xlu0 %v505, 4
      %v634 = vpop.permute.xlu0 %633
      %635 = vrot.lane.b32.xlu0 %v506, 4
      %v636 = vpop.permute.xlu0 %635
      %637 = vrot.lane.b32.xlu0 %v507, 4
      %v638 = vpop.permute.xlu0 %637
      %639 = vrot.lane.b32.xlu0 %v508, 4
      %v640 = vpop.permute.xlu0 %639
      %641 = vrot.lane.b32.xlu0 %v509, 4
      %v642 = vpop.permute.xlu0 %641
      %643 = vrot.lane.b32.xlu0 %v510, 4
      %v644 = vpop.permute.xlu0 %643
      %645 = vrot.lane.b32.xlu0 %v511, 4
      %v646 = vpop.permute.xlu0 %645
      %647 = vrot.lane.b32.xlu0 %v512, 4
      %v648 = vpop.permute.xlu0 %647
      %713 = vrot.lane.b32.xlu0 %v517, 8
      %v714 = vpop.permute.xlu0 %713
      %715 = vrot.lane.b32.xlu0 %v518, 8
      %v716 = vpop.permute.xlu0 %715
      %717 = vrot.lane.b32.xlu0 %v519, 8
      %v718 = vpop.permute.xlu0 %717
      %719 = vrot.lane.b32.xlu0 %v520, 8
      %v720 = vpop.permute.xlu0 %719
      %721 = vrot.lane.b32.xlu0 %v521, 8
      %v722 = vpop.permute.xlu0 %721
      %723 = vrot.lane.b32.xlu0 %v522, 8
      %v724 = vpop.permute.xlu0 %723
      %725 = vrot.lane.b32.xlu0 %v523, 8
      %v726 = vpop.permute.xlu0 %725
      %727 = vrot.lane.b32.xlu0 %v524, 8
      %v728 = vpop.permute.xlu0 %727
      %729 = vrot.lane.b32.xlu0 %v525, 8
      %v730 = vpop.permute.xlu0 %729
      %731 = vrot.lane.b32.xlu0 %v526, 8
      %v732 = vpop.permute.xlu0 %731
      %733 = vrot.lane.b32.xlu0 %v527, 8
      %v734 = vpop.permute.xlu0 %733
      %735 = vrot.lane.b32.xlu0 %v528, 8
      %v736 = vpop.permute.xlu0 %735
      %737 = vrot.lane.b32.xlu0 %v529, 8
      %v738 = vpop.permute.xlu0 %737
      %739 = vrot.lane.b32.xlu0 %v530, 8
      %v740 = vpop.permute.xlu0 %739
      %741 = vrot.lane.b32.xlu0 %v531, 8
      %v742 = vpop.permute.xlu0 %741
      %743 = vrot.lane.b32.xlu0 %v532, 8
      %v744 = vpop.permute.xlu0 %743
      %745 = vrot.lane.b32.xlu0 %v533, 8
      %v746 = vpop.permute.xlu0 %745
      %747 = vrot.lane.b32.xlu0 %v534, 8
      %v748 = vpop.permute.xlu0 %747
      %749 = vrot.lane.b32.xlu0 %v535, 8
      %v750 = vpop.permute.xlu0 %749
      %751 = vrot.lane.b32.xlu0 %v536, 8
      %v752 = vpop.permute.xlu0 %751
      %753 = vrot.lane.b32.xlu0 %v537, 8
      %v754 = vpop.permute.xlu0 %753
      %755 = vrot.lane.b32.xlu0 %v538, 8
      %v756 = vpop.permute.xlu0 %755
      %757 = vrot.lane.b32.xlu0 %v539, 8
      %v758 = vpop.permute.xlu0 %757
      %759 = vrot.lane.b32.xlu0 %v540, 8
      %v760 = vpop.permute.xlu0 %759
      %761 = vrot.lane.b32.xlu0 %v541, 8
      %v762 = vpop.permute.xlu0 %761
      %763 = vrot.lane.b32.xlu0 %v542, 8
      %v764 = vpop.permute.xlu0 %763
      %765 = vrot.lane.b32.xlu0 %v543, 8
      %v766 = vpop.permute.xlu0 %765
      %767 = vrot.lane.b32.xlu0 %v544, 8
      %v768 = vpop.permute.xlu0 %767
      %769 = vrot.lane.b32.xlu0 %v545, 8
      %v770 = vpop.permute.xlu0 %769
      %771 = vrot.lane.b32.xlu0 %v546, 8
      %v772 = vpop.permute.xlu0 %771
      %773 = vrot.lane.b32.xlu0 %v547, 8
      %v774 = vpop.permute.xlu0 %773
      %775 = vrot.lane.b32.xlu0 %v548, 8
      %v776 = vpop.permute.xlu0 %775
      %v809 = vsel %vm412, %v445, %v586
      %v810 = vsel %vm412, %v446, %v588
      %v811 = vsel %vm412, %v447, %v590
      %v812 = vsel %vm412, %v448, %v592
      %v813 = vsel %vm412, %v449, %v594
      %v814 = vsel %vm412, %v450, %v596
      %v815 = vsel %vm412, %v451, %v598
      %v816 = vsel %vm412, %v452, %v600
      %v817 = vsel %vm412, %v453, %v602
      %v818 = vsel %vm412, %v454, %v604
      %v819 = vsel %vm412, %v455, %v606
      %v820 = vsel %vm412, %v456, %v608
      %v821 = vsel %vm412, %v457, %v610
      %v822 = vsel %vm412, %v458, %v612
      %v823 = vsel %vm412, %v459, %v614
      %v824 = vsel %vm412, %v460, %v616
      %v825 = vsel %vm412, %v461, %v618
      %v826 = vsel %vm412, %v462, %v620
      %v827 = vsel %vm412, %v463, %v622
      %v828 = vsel %vm412, %v464, %v624
      %v829 = vsel %vm412, %v465, %v626
      %v830 = vsel %vm412, %v466, %v628
      %v831 = vsel %vm412, %v467, %v630
      %v832 = vsel %vm412, %v468, %v632
      %v833 = vsel %vm412, %v469, %v634
      %v834 = vsel %vm412, %v470, %v636
      %v835 = vsel %vm412, %v471, %v638
      %v836 = vsel %vm412, %v472, %v640
      %v837 = vsel %vm412, %v473, %v642
      %v838 = vsel %vm412, %v474, %v644
      %v839 = vsel %vm412, %v475, %v646
      %v840 = vsel %vm412, %v476, %v648
      %vm841 = vcmask 64512
      %v842 = vsel %vm841, %v809, %v714
      %v843 = vsel %vm841, %v810, %v716
      %v844 = vsel %vm841, %v811, %v718
      %v845 = vsel %vm841, %v812, %v720
      %v846 = vsel %vm841, %v813, %v722
      %v847 = vsel %vm841, %v814, %v724
      %v848 = vsel %vm841, %v815, %v726
      %v849 = vsel %vm841, %v816, %v728
      %v850 = vsel %vm841, %v817, %v730
      %v851 = vsel %vm841, %v818, %v732
      %v852 = vsel %vm841, %v819, %v734
      %v853 = vsel %vm841, %v820, %v736
      %v854 = vsel %vm841, %v821, %v738
      %v855 = vsel %vm841, %v822, %v740
      %v856 = vsel %vm841, %v823, %v742
      %v857 = vsel %vm841, %v824, %v744
      %v858 = vsel %vm841, %v825, %v746
      %v859 = vsel %vm841, %v826, %v748
      %v860 = vsel %vm841, %v827, %v750
      %v861 = vsel %vm841, %v828, %v752
      %v862 = vsel %vm841, %v829, %v754
      %v863 = vsel %vm841, %v830, %v756
      %v864 = vsel %vm841, %v831, %v758
      %v865 = vsel %vm841, %v832, %v760
      %v866 = vsel %vm841, %v833, %v762
      %v867 = vsel %vm841, %v834, %v764
      %v868 = vsel %vm841, %v835, %v766
      %v869 = vsel %vm841, %v836, %v768
      %v870 = vsel %vm841, %v837, %v770
      %v871 = vsel %vm841, %v838, %v772
      %v872 = vsel %vm841, %v839, %v774
      %v873 = vsel %vm841, %v840, %v776
      %v874 = vld [vmem:[%s1] sm:$0xff]
      %v875 = vld [vmem:[%s1 + $0x8] sm:$0xf]
      %878 = vrot.lane.b32.xlu0 %v513, 4
      %v879 = vpop.permute.xlu0 %878
      %880 = vrot.lane.b32.xlu0 %v514, 4
      %v881 = vpop.permute.xlu0 %880
      %886 = vrot.lane.b32.xlu0 %v549, 8
      %v887 = vpop.permute.xlu0 %886
      %888 = vrot.lane.b32.xlu0 %v550, 8
      %v889 = vpop.permute.xlu0 %888
      %v892 = vsel %vm412, %v477, %v879
      %v893 = vsel %vm412, %v478, %v881
      %v894 = vsel %vm841, %v892, %v887
      %v895 = vsel %vm841, %v893, %v889
      %s896 = scalar_lea.vmem %s1, 16
      %v897 = vld [vmem:[%s896] sm:$0xff]
      %v898 = vld [vmem:[%s896 + $0x8] sm:$0xf]
      %vm899 = vcmask 97280
      %v901 = vsel %vm899, %v844, 0
      %v904 = vsel %vm899, %v845, 0
      %v907 = vsel %vm899, %v846, 0
      %v910 = vsel %vm899, %v847, 0
      %v913 = vsel %vm899, %v848, 0
      %v916 = vsel %vm899, %v849, 0
      %v919 = vsel %vm899, %v850, 0
      %v922 = vsel %vm899, %v851, 0
      %v925 = vsel %vm899, %v852, 0
      %v928 = vsel %vm899, %v853, 0
      %v931 = vsel %vm899, %v854, 0
      %v934 = vsel %vm899, %v855, 0
      %v937 = vsel %vm899, %v856, 0
      %v940 = vsel %vm899, %v857, 0
      %v943 = vsel %vm899, %v858, 0
      %v946 = vsel %vm899, %v859, 0
      %v949 = vsel %vm899, %v860, 0
      %v952 = vsel %vm899, %v861, 0
      %v955 = vsel %vm899, %v862, 0
      %v958 = vsel %vm899, %v863, 0
      %v961 = vsel %vm899, %v864, 0
      %v964 = vsel %vm899, %v865, 0
      %v967 = vsel %vm899, %v866, 0
      %v970 = vsel %vm899, %v867, 0
      %v973 = vsel %vm899, %v868, 0
      %v976 = vsel %vm899, %v869, 0
      %v979 = vsel %vm899, %v870, 0
      %v982 = vsel %vm899, %v871, 0
      %v985 = vsel %vm899, %v872, 0
      %v988 = vsel %vm899, %v873, 0
      %v991 = vsel %vm899, %v894, 0
      %v994 = vsel %vm899, %v895, 0
      %vm996 = vcmask 1043456
      %v998 = vsel %vm996, %v898, 0
      %1000 = vmatprep.subr.mxu0 0.0
      %1001 = vmatpush1.msra.mxu0 0.0
      %1002 = vmatprep.subr.mxu0 0.0
      %1003 = vmatpush1.msra.mxu0 0.0
      %1004 = vmatprep.subr.mxu0 0.0
      %1005 = vmatpush1.msra.mxu0 0.0
      %1006 = vmatprep.subr.mxu0 0.0
      %1007 = vmatpush1.msra.mxu0 0.0
      %1008 = vmatprep.subr.mxu0 0.0
      %1009 = vmatpush1.msra.mxu0 0.0
      %1010 = vmatprep.subr.mxu0 0.0
      %1011 = vmatpush1.msra.mxu0 0.0
      %1012 = vmatprep.subr.mxu0 0.0
      %1013 = vmatpush1.msra.mxu0 0.0
      %1014 = vmatprep.subr.mxu0 0.0
      %1015 = vmatpush1.msra.mxu0 0.0
      %1016 = vmatprep.subr.mxu0 0.0
      %1017 = vmatpush1.msra.mxu0 0.0
      %1018 = vmatprep.subr.mxu0 0.0
      %1019 = vmatpush1.msra.mxu0 0.0
      %1020 = vmatprep.subr.mxu0 0.0
      %1021 = vmatpush1.msra.mxu0 0.0
      %1022 = vmatprep.subr.mxu0 0.0
      %1023 = vmatpush1.msra.mxu0 0.0
      %1024 = vmatprep.subr.mxu0 0.0
      %1025 = vmatpush1.msra.mxu0 0.0
      %1026 = vmatprep.subr.mxu0 0.0
      %1027 = vmatpush1.msra.mxu0 0.0
      %1028 = vmatprep.subr.mxu0 0.0
      %1029 = vmatpush1.msra.mxu0 %v998
      %1030 = vmatprep.subr.mxu0 0.0
      %1031 = vmatpush1.msra.mxu0 %v897
      %1032 = vmatprep.subr.mxu0 0.0
      %1033 = vmatpush2.msra.mxu0 0.0
      %1034 = vmatprep.subr.mxu0 0.0
      %1035 = vmatpush2.msra.mxu0 0.0
      %1036 = vmatprep.subr.mxu0 0.0
      %1037 = vmatpush2.msra.mxu0 0.0
      %1038 = vmatprep.subr.mxu0 0.0
      %1039 = vmatpush2.msra.mxu0 0.0
      %1040 = vmatprep.subr.mxu0 0.0
      %1041 = vmatpush2.msra.mxu0 0.0
      %1042 = vmatprep.subr.mxu0 0.0
      %1043 = vmatpush2.msra.mxu0 0.0
      %1044 = vmatprep.subr.mxu0 0.0
      %1045 = vmatpush2.msra.mxu0 0.0
      %1046 = vmatprep.subr.mxu0 0.0
      %1047 = vmatpush2.msra.mxu0 0.0
      %1048 = vmatprep.subr.mxu0 0.0
      %1049 = vmatpush2.msra.mxu0 0.0
      %1050 = vmatprep.subr.mxu0 0.0
      %1051 = vmatpush2.msra.mxu0 0.0
      %1052 = vmatprep.subr.mxu0 0.0
      %1053 = vmatpush2.msra.mxu0 0.0
      %1054 = vmatprep.subr.mxu0 0.0
      %1055 = vmatpush2.msra.mxu0 0.0
      %1056 = vmatprep.subr.mxu0 0.0
      %1057 = vmatpush2.msra.mxu0 0.0
      %1058 = vmatprep.subr.mxu0 0.0
      %1059 = vmatpush2.msra.mxu0 0.0
      %1060 = vmatprep.subr.mxu0 0.0
      %1061 = vmatpush2.msra.mxu0 0.0
      %1062 = vmatprep.subr.mxu0 0.0
      %1063 = vmatpush2.msra.mxu0 0.0
      %1064 = vmatprep.mubr.f32.mxu0 0.0
      %1065 = vmatmul.mubr.f32.gmra.mxu0 %v901
      %v1066 = vpop.f32.mrf.mxu0
      %v1067 = vadd.f32 0.0, %v1066
      %v1068 = vpop.f32.mrf.mxu0
      %1069 = vmatprep.mubr.f32.mxu0 0.0
      %1070 = vmatmul.mubr.f32.gmra.mxu0 %v904
      %v1071 = vpop.f32.mrf.mxu0
      %v1072 = vadd.f32 0.0, %v1071
      %v1073 = vpop.f32.mrf.mxu0
      %1074 = vmatprep.mubr.f32.mxu0 0.0
      %1075 = vmatmul.mubr.f32.gmra.mxu0 %v907
      %v1076 = vpop.f32.mrf.mxu0
      %v1077 = vadd.f32 0.0, %v1076
      %v1078 = vpop.f32.mrf.mxu0
      %1079 = vmatprep.mubr.f32.mxu0 0.0
      %1080 = vmatmul.mubr.f32.gmra.mxu0 %v910
      %v1081 = vpop.f32.mrf.mxu0
      %v1082 = vadd.f32 0.0, %v1081
      %v1083 = vpop.f32.mrf.mxu0
      %1084 = vmatprep.mubr.f32.mxu0 0.0
      %1085 = vmatmul.mubr.f32.gmra.mxu0 %v913
      %v1086 = vpop.f32.mrf.mxu0
      %v1087 = vadd.f32 0.0, %v1086
      %v1088 = vpop.f32.mrf.mxu0
      %1089 = vmatprep.mubr.f32.mxu0 0.0
      %1090 = vmatmul.mubr.f32.gmra.mxu0 %v916
      %v1091 = vpop.f32.mrf.mxu0
      %v1092 = vadd.f32 0.0, %v1091
      %v1093 = vpop.f32.mrf.mxu0
      %1094 = vmatprep.mubr.f32.mxu0 0.0
      %1095 = vmatmul.mubr.f32.gmra.mxu0 %v919
      %v1096 = vpop.f32.mrf.mxu0
      %v1097 = vadd.f32 0.0, %v1096
      %v1098 = vpop.f32.mrf.mxu0
      %1099 = vmatprep.mubr.f32.mxu0 0.0
      %1100 = vmatmul.mubr.f32.gmra.mxu0 %v922
      %v1101 = vpop.f32.mrf.mxu0
      %v1102 = vadd.f32 0.0, %v1101
      %v1103 = vpop.f32.mrf.mxu0
      %1104 = vmatprep.mubr.f32.mxu0 0.0
      %1105 = vmatmul.mubr.f32.gmra.mxu0 %v925
      %v1106 = vpop.f32.mrf.mxu0
      %v1107 = vadd.f32 0.0, %v1106
      %v1108 = vpop.f32.mrf.mxu0
      %1109 = vmatprep.mubr.f32.mxu0 0.0
      %1110 = vmatmul.mubr.f32.gmra.mxu0 %v928
      %v1111 = vpop.f32.mrf.mxu0
      %v1112 = vadd.f32 0.0, %v1111
      %v1113 = vpop.f32.mrf.mxu0
      %1114 = vmatprep.mubr.f32.mxu0 0.0
      %1115 = vmatmul.mubr.f32.gmra.mxu0 %v931
      %v1116 = vpop.f32.mrf.mxu0
      %v1117 = vadd.f32 0.0, %v1116
      %v1118 = vpop.f32.mrf.mxu0
      %1119 = vmatprep.mubr.f32.mxu0 0.0
      %1120 = vmatmul.mubr.f32.gmra.mxu0 %v934
      %v1121 = vpop.f32.mrf.mxu0
      %v1122 = vadd.f32 0.0, %v1121
      %v1123 = vpop.f32.mrf.mxu0
      %1124 = vmatprep.mubr.f32.mxu0 0.0
      %1125 = vmatmul.mubr.f32.gmra.mxu0 %v937
      %v1126 = vpop.f32.mrf.mxu0
      %v1127 = vadd.f32 0.0, %v1126
      %v1128 = vpop.f32.mrf.mxu0
      %1129 = vmatprep.mubr.f32.mxu0 0.0
      %1130 = vmatmul.mubr.f32.gmra.mxu0 %v940
      %v1131 = vpop.f32.mrf.mxu0
      %v1132 = vadd.f32 0.0, %v1131
      %v1133 = vpop.f32.mrf.mxu0
      %1134 = vmatprep.mubr.f32.mxu0 0.0
      %1135 = vmatmul.mubr.f32.gmra.mxu0 %v943
      %v1136 = vpop.f32.mrf.mxu0
      %v1137 = vadd.f32 0.0, %v1136
      %v1138 = vpop.f32.mrf.mxu0
      %1139 = vmatprep.mubr.f32.mxu0 0.0
      %1140 = vmatmul.mubr.f32.gmra.mxu0 %v946
      %v1141 = vpop.f32.mrf.mxu0
      %v1142 = vadd.f32 0.0, %v1141
      %v1143 = vpop.f32.mrf.mxu0
      %1144 = vmatprep.mubr.f32.mxu0 0.0
      %1145 = vmatmul.mubr.f32.gmra.mxu0 %v949
      %v1146 = vpop.f32.mrf.mxu0
      %v1147 = vadd.f32 0.0, %v1146
      %v1148 = vpop.f32.mrf.mxu0
      %1149 = vmatprep.mubr.f32.mxu0 0.0
      %1150 = vmatmul.mubr.f32.gmra.mxu0 %v952
      %v1151 = vpop.f32.mrf.mxu0
      %v1152 = vadd.f32 0.0, %v1151
      %v1153 = vpop.f32.mrf.mxu0
      %1154 = vmatprep.mubr.f32.mxu0 0.0
      %1155 = vmatmul.mubr.f32.gmra.mxu0 %v955
      %v1156 = vpop.f32.mrf.mxu0
      %v1157 = vadd.f32 0.0, %v1156
      %v1158 = vpop.f32.mrf.mxu0
      %1159 = vmatprep.mubr.f32.mxu0 0.0
      %1160 = vmatmul.mubr.f32.gmra.mxu0 %v958
      %v1161 = vpop.f32.mrf.mxu0
      %v1162 = vadd.f32 0.0, %v1161
      %v1163 = vpop.f32.mrf.mxu0
      %1164 = vmatprep.mubr.f32.mxu0 0.0
      %1165 = vmatmul.mubr.f32.gmra.mxu0 %v961
      %v1166 = vpop.f32.mrf.mxu0
      %v1167 = vadd.f32 0.0, %v1166
      %v1168 = vpop.f32.mrf.mxu0
      %1169 = vmatprep.mubr.f32.mxu0 0.0
      %1170 = vmatmul.mubr.f32.gmra.mxu0 %v964
      %v1171 = vpop.f32.mrf.mxu0
      %v1172 = vadd.f32 0.0, %v1171
      %v1173 = vpop.f32.mrf.mxu0
      %1174 = vmatprep.mubr.f32.mxu0 0.0
      %1175 = vmatmul.mubr.f32.gmra.mxu0 %v967
      %v1176 = vpop.f32.mrf.mxu0
      %v1177 = vadd.f32 0.0, %v1176
      %v1178 = vpop.f32.mrf.mxu0
      %1179 = vmatprep.mubr.f32.mxu0 0.0
      %1180 = vmatmul.mubr.f32.gmra.mxu0 %v970
      %v1181 = vpop.f32.mrf.mxu0
      %v1182 = vadd.f32 0.0, %v1181
      %v1183 = vpop.f32.mrf.mxu0
      %1184 = vmatprep.mubr.f32.mxu0 0.0
      %1185 = vmatmul.mubr.f32.gmra.mxu0 %v973
      %v1186 = vpop.f32.mrf.mxu0
      %v1187 = vadd.f32 0.0, %v1186
      %v1188 = vpop.f32.mrf.mxu0
      %1189 = vmatprep.mubr.f32.mxu0 0.0
      %1190 = vmatmul.mubr.f32.gmra.mxu0 %v976
      %v1191 = vpop.f32.mrf.mxu0
      %v1192 = vadd.f32 0.0, %v1191
      %v1193 = vpop.f32.mrf.mxu0
      %1194 = vmatprep.mubr.f32.mxu0 0.0
      %1195 = vmatmul.mubr.f32.gmra.mxu0 %v979
      %v1196 = vpop.f32.mrf.mxu0
      %v1197 = vadd.f32 0.0, %v1196
      %v1198 = vpop.f32.mrf.mxu0
      %1199 = vmatprep.mubr.f32.mxu0 0.0
      %1200 = vmatmul.mubr.f32.gmra.mxu0 %v982
      %v1201 = vpop.f32.mrf.mxu0
      %v1202 = vadd.f32 0.0, %v1201
      %v1203 = vpop.f32.mrf.mxu0
      %1204 = vmatprep.mubr.f32.mxu0 0.0
      %1205 = vmatmul.mubr.f32.gmra.mxu0 %v985
      %v1206 = vpop.f32.mrf.mxu0
      %v1207 = vadd.f32 0.0, %v1206
      %v1208 = vpop.f32.mrf.mxu0
      %1209 = vmatprep.mubr.f32.mxu0 0.0
      %1210 = vmatmul.mubr.f32.gmra.mxu0 %v988
      %v1211 = vpop.f32.mrf.mxu0
      %v1212 = vadd.f32 0.0, %v1211
      %v1213 = vpop.f32.mrf.mxu0
      %1214 = vmatprep.mubr.f32.mxu0 0.0
      %1215 = vmatmul.mubr.f32.gmra.mxu0 %v991
      %v1216 = vpop.f32.mrf.mxu0
      %v1217 = vadd.f32 0.0, %v1216
      %v1218 = vpop.f32.mrf.mxu0
      %1219 = vmatprep.mubr.f32.mxu0 0.0
      %1220 = vmatmul.mubr.f32.gmra.mxu0 %v994
      %v1221 = vpop.f32.mrf.mxu0
      %v1222 = vadd.f32 0.0, %v1221
      %v1223 = vpop.f32.mrf.mxu0
      %1224 = vdwg.mxu0
      %v1226 = vsel %vm899, %v842, 0
      %v1229 = vsel %vm899, %v843, 0
      %v1232 = vsel %vm996, %v875, 0
      %1234 = vmatprep.subr.mxu0 0.0
      %1235 = vmatpush1.msra.mxu0 0.0
      %1236 = vmatprep.subr.mxu0 0.0
      %1237 = vmatpush1.msra.mxu0 0.0
      %1238 = vmatprep.subr.mxu0 0.0
      %1239 = vmatpush1.msra.mxu0 0.0
      %1240 = vmatprep.subr.mxu0 0.0
      %1241 = vmatpush1.msra.mxu0 0.0
      %1242 = vmatprep.subr.mxu0 0.0
      %1243 = vmatpush1.msra.mxu0 0.0
      %1244 = vmatprep.subr.mxu0 0.0
      %1245 = vmatpush1.msra.mxu0 0.0
      %1246 = vmatprep.subr.mxu0 0.0
      %1247 = vmatpush1.msra.mxu0 0.0
      %1248 = vmatprep.subr.mxu0 0.0
      %1249 = vmatpush1.msra.mxu0 0.0
      %1250 = vmatprep.subr.mxu0 0.0
      %1251 = vmatpush1.msra.mxu0 0.0
      %1252 = vmatprep.subr.mxu0 0.0
      %1253 = vmatpush1.msra.mxu0 0.0
      %1254 = vmatprep.subr.mxu0 0.0
      %1255 = vmatpush1.msra.mxu0 0.0
      %1256 = vmatprep.subr.mxu0 0.0
      %1257 = vmatpush1.msra.mxu0 0.0
      %1258 = vmatprep.subr.mxu0 0.0
      %1259 = vmatpush1.msra.mxu0 0.0
      %1260 = vmatprep.subr.mxu0 0.0
      %1261 = vmatpush1.msra.mxu0 0.0
      %1262 = vmatprep.subr.mxu0 0.0
      %1263 = vmatpush1.msra.mxu0 %v1232
      %1264 = vmatprep.subr.mxu0 0.0
      %1265 = vmatpush1.msra.mxu0 %v874
      %1266 = vmatprep.subr.mxu0 0.0
      %1267 = vmatpush2.msra.mxu0 0.0
      %1268 = vmatprep.subr.mxu0 0.0
      %1269 = vmatpush2.msra.mxu0 0.0
      %1270 = vmatprep.subr.mxu0 0.0
      %1271 = vmatpush2.msra.mxu0 0.0
      %1272 = vmatprep.subr.mxu0 0.0
      %1273 = vmatpush2.msra.mxu0 0.0
      %1274 = vmatprep.subr.mxu0 0.0
      %1275 = vmatpush2.msra.mxu0 0.0
      %1276 = vmatprep.subr.mxu0 0.0
      %1277 = vmatpush2.msra.mxu0 0.0
      %1278 = vmatprep.subr.mxu0 0.0
      %1279 = vmatpush2.msra.mxu0 0.0
      %1280 = vmatprep.subr.mxu0 0.0
      %1281 = vmatpush2.msra.mxu0 0.0
      %1282 = vmatprep.subr.mxu0 0.0
      %1283 = vmatpush2.msra.mxu0 0.0
      %1284 = vmatprep.subr.mxu0 0.0
      %1285 = vmatpush2.msra.mxu0 0.0
      %1286 = vmatprep.subr.mxu0 0.0
      %1287 = vmatpush2.msra.mxu0 0.0
      %1288 = vmatprep.subr.mxu0 0.0
      %1289 = vmatpush2.msra.mxu0 0.0
      %1290 = vmatprep.subr.mxu0 0.0
      %1291 = vmatpush2.msra.mxu0 0.0
      %1292 = vmatprep.subr.mxu0 0.0
      %1293 = vmatpush2.msra.mxu0 0.0
      %1294 = vmatprep.subr.mxu0 0.0
      %1295 = vmatpush2.msra.mxu0 0.0
      %1296 = vmatprep.subr.mxu0 0.0
      %1297 = vmatpush2.msra.mxu0 0.0
      %1298 = vmatprep.mubr.f32.mxu0 0.0
      %1299 = vmatmul.mubr.f32.gmra.mxu0 %v1226
      %v1300 = vpop.f32.mrf.mxu0
      %v1301 = vadd.f32 %v1067, %v1300
      %v1302 = vpop.f32.mrf.mxu0
      %1303 = vmatprep.mubr.f32.mxu0 0.0
      %1304 = vmatmul.mubr.f32.gmra.mxu0 %v1229
      %v1305 = vpop.f32.mrf.mxu0
      %v1306 = vadd.f32 %v1072, %v1305
      %v1307 = vpop.f32.mrf.mxu0
      %1308 = vmatprep.mubr.f32.mxu0 0.0
      %1309 = vmatmul.mubr.f32.gmra.mxu0 %v901
      %v1310 = vpop.f32.mrf.mxu0
      %v1311 = vadd.f32 %v1077, %v1310
      %v1312 = vpop.f32.mrf.mxu0
      %1313 = vmatprep.mubr.f32.mxu0 0.0
      %1314 = vmatmul.mubr.f32.gmra.mxu0 %v904
      %v1315 = vpop.f32.mrf.mxu0
      %v1316 = vadd.f32 %v1082, %v1315
      %v1317 = vpop.f32.mrf.mxu0
      %1318 = vmatprep.mubr.f32.mxu0 0.0
      %1319 = vmatmul.mubr.f32.gmra.mxu0 %v907
      %v1320 = vpop.f32.mrf.mxu0
      %v1321 = vadd.f32 %v1087, %v1320
      %v1322 = vpop.f32.mrf.mxu0
      %1323 = vmatprep.mubr.f32.mxu0 0.0
      %1324 = vmatmul.mubr.f32.gmra.mxu0 %v910
      %v1325 = vpop.f32.mrf.mxu0
      %v1326 = vadd.f32 %v1092, %v1325
      %v1327 = vpop.f32.mrf.mxu0
      %1328 = vmatprep.mubr.f32.mxu0 0.0
      %1329 = vmatmul.mubr.f32.gmra.mxu0 %v913
      %v1330 = vpop.f32.mrf.mxu0
      %v1331 = vadd.f32 %v1097, %v1330
      %v1332 = vpop.f32.mrf.mxu0
      %1333 = vmatprep.mubr.f32.mxu0 0.0
      %1334 = vmatmul.mubr.f32.gmra.mxu0 %v916
      %v1335 = vpop.f32.mrf.mxu0
      %v1336 = vadd.f32 %v1102, %v1335
      %v1337 = vpop.f32.mrf.mxu0
      %1338 = vmatprep.mubr.f32.mxu0 0.0
      %1339 = vmatmul.mubr.f32.gmra.mxu0 %v919
      %v1340 = vpop.f32.mrf.mxu0
      %v1341 = vadd.f32 %v1107, %v1340
      %v1342 = vpop.f32.mrf.mxu0
      %1343 = vmatprep.mubr.f32.mxu0 0.0
      %1344 = vmatmul.mubr.f32.gmra.mxu0 %v922
      %v1345 = vpop.f32.mrf.mxu0
      %v1346 = vadd.f32 %v1112, %v1345
      %v1347 = vpop.f32.mrf.mxu0
      %1348 = vmatprep.mubr.f32.mxu0 0.0
      %1349 = vmatmul.mubr.f32.gmra.mxu0 %v925
      %v1350 = vpop.f32.mrf.mxu0
      %v1351 = vadd.f32 %v1117, %v1350
      %v1352 = vpop.f32.mrf.mxu0
      %1353 = vmatprep.mubr.f32.mxu0 0.0
      %1354 = vmatmul.mubr.f32.gmra.mxu0 %v928
      %v1355 = vpop.f32.mrf.mxu0
      %v1356 = vadd.f32 %v1122, %v1355
      %v1357 = vpop.f32.mrf.mxu0
      %1358 = vmatprep.mubr.f32.mxu0 0.0
      %1359 = vmatmul.mubr.f32.gmra.mxu0 %v931
      %v1360 = vpop.f32.mrf.mxu0
      %v1361 = vadd.f32 %v1127, %v1360
      %v1362 = vpop.f32.mrf.mxu0
      %1363 = vmatprep.mubr.f32.mxu0 0.0
      %1364 = vmatmul.mubr.f32.gmra.mxu0 %v934
      %v1365 = vpop.f32.mrf.mxu0
      %v1366 = vadd.f32 %v1132, %v1365
      %v1367 = vpop.f32.mrf.mxu0
      %1368 = vmatprep.mubr.f32.mxu0 0.0
      %1369 = vmatmul.mubr.f32.gmra.mxu0 %v937
      %v1370 = vpop.f32.mrf.mxu0
      %v1371 = vadd.f32 %v1137, %v1370
      %v1372 = vpop.f32.mrf.mxu0
      %1373 = vmatprep.mubr.f32.mxu0 0.0
      %1374 = vmatmul.mubr.f32.gmra.mxu0 %v940
      %v1375 = vpop.f32.mrf.mxu0
      %v1376 = vadd.f32 %v1142, %v1375
      %v1377 = vpop.f32.mrf.mxu0
      %1378 = vmatprep.mubr.f32.mxu0 0.0
      %1379 = vmatmul.mubr.f32.gmra.mxu0 %v943
      %v1380 = vpop.f32.mrf.mxu0
      %v1381 = vadd.f32 %v1147, %v1380
      %v1382 = vpop.f32.mrf.mxu0
      %1383 = vmatprep.mubr.f32.mxu0 0.0
      %1384 = vmatmul.mubr.f32.gmra.mxu0 %v946
      %v1385 = vpop.f32.mrf.mxu0
      %v1386 = vadd.f32 %v1152, %v1385
      %v1387 = vpop.f32.mrf.mxu0
      %1388 = vmatprep.mubr.f32.mxu0 0.0
      %1389 = vmatmul.mubr.f32.gmra.mxu0 %v949
      %v1390 = vpop.f32.mrf.mxu0
      %v1391 = vadd.f32 %v1157, %v1390
      %v1392 = vpop.f32.mrf.mxu0
      %1393 = vmatprep.mubr.f32.mxu0 0.0
      %1394 = vmatmul.mubr.f32.gmra.mxu0 %v952
      %v1395 = vpop.f32.mrf.mxu0
      %v1396 = vadd.f32 %v1162, %v1395
      %v1397 = vpop.f32.mrf.mxu0
      %1398 = vmatprep.mubr.f32.mxu0 0.0
      %1399 = vmatmul.mubr.f32.gmra.mxu0 %v955
      %v1400 = vpop.f32.mrf.mxu0
      %v1401 = vadd.f32 %v1167, %v1400
      %v1402 = vpop.f32.mrf.mxu0
      %1403 = vmatprep.mubr.f32.mxu0 0.0
      %1404 = vmatmul.mubr.f32.gmra.mxu0 %v958
      %v1405 = vpop.f32.mrf.mxu0
      %v1406 = vadd.f32 %v1172, %v1405
      %v1407 = vpop.f32.mrf.mxu0
      %1408 = vmatprep.mubr.f32.mxu0 0.0
      %1409 = vmatmul.mubr.f32.gmra.mxu0 %v961
      %v1410 = vpop.f32.mrf.mxu0
      %v1411 = vadd.f32 %v1177, %v1410
      %v1412 = vpop.f32.mrf.mxu0
      %1413 = vmatprep.mubr.f32.mxu0 0.0
      %1414 = vmatmul.mubr.f32.gmra.mxu0 %v964
      %v1415 = vpop.f32.mrf.mxu0
      %v1416 = vadd.f32 %v1182, %v1415
      %v1417 = vpop.f32.mrf.mxu0
      %1418 = vmatprep.mubr.f32.mxu0 0.0
      %1419 = vmatmul.mubr.f32.gmra.mxu0 %v967
      %v1420 = vpop.f32.mrf.mxu0
      %v1421 = vadd.f32 %v1187, %v1420
      %v1422 = vpop.f32.mrf.mxu0
      %1423 = vmatprep.mubr.f32.mxu0 0.0
      %1424 = vmatmul.mubr.f32.gmra.mxu0 %v970
      %v1425 = vpop.f32.mrf.mxu0
      %v1426 = vadd.f32 %v1192, %v1425
      %v1427 = vpop.f32.mrf.mxu0
      %1428 = vmatprep.mubr.f32.mxu0 0.0
      %1429 = vmatmul.mubr.f32.gmra.mxu0 %v973
      %v1430 = vpop.f32.mrf.mxu0
      %v1431 = vadd.f32 %v1197, %v1430
      %v1432 = vpop.f32.mrf.mxu0
      %1433 = vmatprep.mubr.f32.mxu0 0.0
      %1434 = vmatmul.mubr.f32.gmra.mxu0 %v976
      %v1435 = vpop.f32.mrf.mxu0
      %v1436 = vadd.f32 %v1202, %v1435
      %v1437 = vpop.f32.mrf.mxu0
      %1438 = vmatprep.mubr.f32.mxu0 0.0
      %1439 = vmatmul.mubr.f32.gmra.mxu0 %v979
      %v1440 = vpop.f32.mrf.mxu0
      %v1441 = vadd.f32 %v1207, %v1440
      %v1442 = vpop.f32.mrf.mxu0
      %1443 = vmatprep.mubr.f32.mxu0 0.0
      %1444 = vmatmul.mubr.f32.gmra.mxu0 %v982
      %v1445 = vpop.f32.mrf.mxu0
      %v1446 = vadd.f32 %v1212, %v1445
      %v1447 = vpop.f32.mrf.mxu0
      %1448 = vmatprep.mubr.f32.mxu0 0.0
      %1449 = vmatmul.mubr.f32.gmra.mxu0 %v985
      %v1450 = vpop.f32.mrf.mxu0
      %v1451 = vadd.f32 %v1217, %v1450
      %v1452 = vpop.f32.mrf.mxu0
      %1453 = vmatprep.mubr.f32.mxu0 0.0
      %1454 = vmatmul.mubr.f32.gmra.mxu0 %v988
      %v1455 = vpop.f32.mrf.mxu0
      %v1456 = vadd.f32 %v1222, %v1455
      %v1457 = vpop.f32.mrf.mxu0
      %1458 = vdwg.mxu0
      %1461 = vrot.lane.b32.xlu0 %v515, 4
      %v1462 = vpop.permute.xlu0 %1461
      %1463 = vrot.lane.b32.xlu0 %v516, 4
      %v1464 = vpop.permute.xlu0 %1463
      %1469 = vrot.lane.b32.xlu0 %v551, 8
      %v1470 = vpop.permute.xlu0 %1469
      %1471 = vrot.lane.b32.xlu0 %v552, 8
      %v1472 = vpop.permute.xlu0 %1471
      %v1475 = vsel %vm412, %v479, %v1462
      %v1476 = vsel %vm412, %v480, %v1464
      %v1477 = vsel %vm841, %v1475, %v1470
      %v1478 = vsel %vm841, %v1476, %v1472
      %s1479 = scalar_lea.vmem %s1, 32
      %v1480 = vld [vmem:[%s1479] sm:$0xff]
      %v1481 = vld [vmem:[%s1479 + $0x8] sm:$0xf]
      %v1483 = vsel %vm899, %v1477, 0
      %v1486 = vsel %vm899, %v1478, 0
      %v1489 = vsel %vm996, %v1481, 0
      %1491 = vmatprep.subr.mxu0 0.0
      %1492 = vmatpush1.msra.mxu0 0.0
      %1493 = vmatprep.subr.mxu0 0.0
      %1494 = vmatpush1.msra.mxu0 0.0
      %1495 = vmatprep.subr.mxu0 0.0
      %1496 = vmatpush1.msra.mxu0 0.0
      %1497 = vmatprep.subr.mxu0 0.0
      %1498 = vmatpush1.msra.mxu0 0.0
      %1499 = vmatprep.subr.mxu0 0.0
      %1500 = vmatpush1.msra.mxu0 0.0
      %1501 = vmatprep.subr.mxu0 0.0
      %1502 = vmatpush1.msra.mxu0 0.0
      %1503 = vmatprep.subr.mxu0 0.0
      %1504 = vmatpush1.msra.mxu0 0.0
      %1505 = vmatprep.subr.mxu0 0.0
      %1506 = vmatpush1.msra.mxu0 0.0
      %1507 = vmatprep.subr.mxu0 0.0
      %1508 = vmatpush1.msra.mxu0 0.0
      %1509 = vmatprep.subr.mxu0 0.0
      %1510 = vmatpush1.msra.mxu0 0.0
      %1511 = vmatprep.subr.mxu0 0.0
      %1512 = vmatpush1.msra.mxu0 0.0
      %1513 = vmatprep.subr.mxu0 0.0
      %1514 = vmatpush1.msra.mxu0 0.0
      %1515 = vmatprep.subr.mxu0 0.0
      %1516 = vmatpush1.msra.mxu0 0.0
      %1517 = vmatprep.subr.mxu0 0.0
      %1518 = vmatpush1.msra.mxu0 0.0
      %1519 = vmatprep.subr.mxu0 0.0
      %1520 = vmatpush1.msra.mxu0 %v1489
      %1521 = vmatprep.subr.mxu0 0.0
      %1522 = vmatpush1.msra.mxu0 %v1480
      %1523 = vmatprep.subr.mxu0 0.0
      %1524 = vmatpush2.msra.mxu0 0.0
      %1525 = vmatprep.subr.mxu0 0.0
      %1526 = vmatpush2.msra.mxu0 0.0
      %1527 = vmatprep.subr.mxu0 0.0
      %1528 = vmatpush2.msra.mxu0 0.0
      %1529 = vmatprep.subr.mxu0 0.0
      %1530 = vmatpush2.msra.mxu0 0.0
      %1531 = vmatprep.subr.mxu0 0.0
      %1532 = vmatpush2.msra.mxu0 0.0
      %1533 = vmatprep.subr.mxu0 0.0
      %1534 = vmatpush2.msra.mxu0 0.0
      %1535 = vmatprep.subr.mxu0 0.0
      %1536 = vmatpush2.msra.mxu0 0.0
      %1537 = vmatprep.subr.mxu0 0.0
      %1538 = vmatpush2.msra.mxu0 0.0
      %1539 = vmatprep.subr.mxu0 0.0
      %1540 = vmatpush2.msra.mxu0 0.0
      %1541 = vmatprep.subr.mxu0 0.0
      %1542 = vmatpush2.msra.mxu0 0.0
      %1543 = vmatprep.subr.mxu0 0.0
      %1544 = vmatpush2.msra.mxu0 0.0
      %1545 = vmatprep.subr.mxu0 0.0
      %1546 = vmatpush2.msra.mxu0 0.0
      %1547 = vmatprep.subr.mxu0 0.0
      %1548 = vmatpush2.msra.mxu0 0.0
      %1549 = vmatprep.subr.mxu0 0.0
      %1550 = vmatpush2.msra.mxu0 0.0
      %1551 = vmatprep.subr.mxu0 0.0
      %1552 = vmatpush2.msra.mxu0 0.0
      %1553 = vmatprep.subr.mxu0 0.0
      %1554 = vmatpush2.msra.mxu0 0.0
      %1555 = vmatprep.mubr.f32.mxu0 0.0
      %1556 = vmatmul.mubr.f32.gmra.mxu0 %v907
      %v1557 = vpop.f32.mrf.mxu0
      %v1558 = vadd.f32 0.0, %v1557
      %v1559 = vpop.f32.mrf.mxu0
      %1560 = vmatprep.mubr.f32.mxu0 0.0
      %1561 = vmatmul.mubr.f32.gmra.mxu0 %v910
      %v1562 = vpop.f32.mrf.mxu0
      %v1563 = vadd.f32 0.0, %v1562
      %v1564 = vpop.f32.mrf.mxu0
      %1565 = vmatprep.mubr.f32.mxu0 0.0
      %1566 = vmatmul.mubr.f32.gmra.mxu0 %v913
      %v1567 = vpop.f32.mrf.mxu0
      %v1568 = vadd.f32 0.0, %v1567
      %v1569 = vpop.f32.mrf.mxu0
      %1570 = vmatprep.mubr.f32.mxu0 0.0
      %1571 = vmatmul.mubr.f32.gmra.mxu0 %v916
      %v1572 = vpop.f32.mrf.mxu0
      %v1573 = vadd.f32 0.0, %v1572
      %v1574 = vpop.f32.mrf.mxu0
      %1575 = vmatprep.mubr.f32.mxu0 0.0
      %1576 = vmatmul.mubr.f32.gmra.mxu0 %v919
      %v1577 = vpop.f32.mrf.mxu0
      %v1578 = vadd.f32 0.0, %v1577
      %v1579 = vpop.f32.mrf.mxu0
      %1580 = vmatprep.mubr.f32.mxu0 0.0
      %1581 = vmatmul.mubr.f32.gmra.mxu0 %v922
      %v1582 = vpop.f32.mrf.mxu0
      %v1583 = vadd.f32 0.0, %v1582
      %v1584 = vpop.f32.mrf.mxu0
      %1585 = vmatprep.mubr.f32.mxu0 0.0
      %1586 = vmatmul.mubr.f32.gmra.mxu0 %v925
      %v1587 = vpop.f32.mrf.mxu0
      %v1588 = vadd.f32 0.0, %v1587
      %v1589 = vpop.f32.mrf.mxu0
      %1590 = vmatprep.mubr.f32.mxu0 0.0
      %1591 = vmatmul.mubr.f32.gmra.mxu0 %v928
      %v1592 = vpop.f32.mrf.mxu0
      %v1593 = vadd.f32 0.0, %v1592
      %v1594 = vpop.f32.mrf.mxu0
      %1595 = vmatprep.mubr.f32.mxu0 0.0
      %1596 = vmatmul.mubr.f32.gmra.mxu0 %v931
      %v1597 = vpop.f32.mrf.mxu0
      %v1598 = vadd.f32 0.0, %v1597
      %v1599 = vpop.f32.mrf.mxu0
      %1600 = vmatprep.mubr.f32.mxu0 0.0
      %1601 = vmatmul.mubr.f32.gmra.mxu0 %v934
      %v1602 = vpop.f32.mrf.mxu0
      %v1603 = vadd.f32 0.0, %v1602
      %v1604 = vpop.f32.mrf.mxu0
      %1605 = vmatprep.mubr.f32.mxu0 0.0
      %1606 = vmatmul.mubr.f32.gmra.mxu0 %v937
      %v1607 = vpop.f32.mrf.mxu0
      %v1608 = vadd.f32 0.0, %v1607
      %v1609 = vpop.f32.mrf.mxu0
      %1610 = vmatprep.mubr.f32.mxu0 0.0
      %1611 = vmatmul.mubr.f32.gmra.mxu0 %v940
      %v1612 = vpop.f32.mrf.mxu0
      %v1613 = vadd.f32 0.0, %v1612
      %v1614 = vpop.f32.mrf.mxu0
      %1615 = vmatprep.mubr.f32.mxu0 0.0
      %1616 = vmatmul.mubr.f32.gmra.mxu0 %v943
      %v1617 = vpop.f32.mrf.mxu0
      %v1618 = vadd.f32 0.0, %v1617
      %v1619 = vpop.f32.mrf.mxu0
      %1620 = vmatprep.mubr.f32.mxu0 0.0
      %1621 = vmatmul.mubr.f32.gmra.mxu0 %v946
      %v1622 = vpop.f32.mrf.mxu0
      %v1623 = vadd.f32 0.0, %v1622
      %v1624 = vpop.f32.mrf.mxu0
      %1625 = vmatprep.mubr.f32.mxu0 0.0
      %1626 = vmatmul.mubr.f32.gmra.mxu0 %v949
      %v1627 = vpop.f32.mrf.mxu0
      %v1628 = vadd.f32 0.0, %v1627
      %v1629 = vpop.f32.mrf.mxu0
      %1630 = vmatprep.mubr.f32.mxu0 0.0
      %1631 = vmatmul.mubr.f32.gmra.mxu0 %v952
      %v1632 = vpop.f32.mrf.mxu0
      %v1633 = vadd.f32 0.0, %v1632
      %v1634 = vpop.f32.mrf.mxu0
      %1635 = vmatprep.mubr.f32.mxu0 0.0
      %1636 = vmatmul.mubr.f32.gmra.mxu0 %v955
      %v1637 = vpop.f32.mrf.mxu0
      %v1638 = vadd.f32 0.0, %v1637
      %v1639 = vpop.f32.mrf.mxu0
      %1640 = vmatprep.mubr.f32.mxu0 0.0
      %1641 = vmatmul.mubr.f32.gmra.mxu0 %v958
      %v1642 = vpop.f32.mrf.mxu0
      %v1643 = vadd.f32 0.0, %v1642
      %v1644 = vpop.f32.mrf.mxu0
      %1645 = vmatprep.mubr.f32.mxu0 0.0
      %1646 = vmatmul.mubr.f32.gmra.mxu0 %v961
      %v1647 = vpop.f32.mrf.mxu0
      %v1648 = vadd.f32 0.0, %v1647
      %v1649 = vpop.f32.mrf.mxu0
      %1650 = vmatprep.mubr.f32.mxu0 0.0
      %1651 = vmatmul.mubr.f32.gmra.mxu0 %v964
      %v1652 = vpop.f32.mrf.mxu0
      %v1653 = vadd.f32 0.0, %v1652
      %v1654 = vpop.f32.mrf.mxu0
      %1655 = vmatprep.mubr.f32.mxu0 0.0
      %1656 = vmatmul.mubr.f32.gmra.mxu0 %v967
      %v1657 = vpop.f32.mrf.mxu0
      %v1658 = vadd.f32 0.0, %v1657
      %v1659 = vpop.f32.mrf.mxu0
      %1660 = vmatprep.mubr.f32.mxu0 0.0
      %1661 = vmatmul.mubr.f32.gmra.mxu0 %v970
      %v1662 = vpop.f32.mrf.mxu0
      %v1663 = vadd.f32 0.0, %v1662
      %v1664 = vpop.f32.mrf.mxu0
      %1665 = vmatprep.mubr.f32.mxu0 0.0
      %1666 = vmatmul.mubr.f32.gmra.mxu0 %v973
      %v1667 = vpop.f32.mrf.mxu0
      %v1668 = vadd.f32 0.0, %v1667
      %v1669 = vpop.f32.mrf.mxu0
      %1670 = vmatprep.mubr.f32.mxu0 0.0
      %1671 = vmatmul.mubr.f32.gmra.mxu0 %v976
      %v1672 = vpop.f32.mrf.mxu0
      %v1673 = vadd.f32 0.0, %v1672
      %v1674 = vpop.f32.mrf.mxu0
      %1675 = vmatprep.mubr.f32.mxu0 0.0
      %1676 = vmatmul.mubr.f32.gmra.mxu0 %v979
      %v1677 = vpop.f32.mrf.mxu0
      %v1678 = vadd.f32 0.0, %v1677
      %v1679 = vpop.f32.mrf.mxu0
      %1680 = vmatprep.mubr.f32.mxu0 0.0
      %1681 = vmatmul.mubr.f32.gmra.mxu0 %v982
      %v1682 = vpop.f32.mrf.mxu0
      %v1683 = vadd.f32 0.0, %v1682
      %v1684 = vpop.f32.mrf.mxu0
      %1685 = vmatprep.mubr.f32.mxu0 0.0
      %1686 = vmatmul.mubr.f32.gmra.mxu0 %v985
      %v1687 = vpop.f32.mrf.mxu0
      %v1688 = vadd.f32 0.0, %v1687
      %v1689 = vpop.f32.mrf.mxu0
      %1690 = vmatprep.mubr.f32.mxu0 0.0
      %1691 = vmatmul.mubr.f32.gmra.mxu0 %v988
      %v1692 = vpop.f32.mrf.mxu0
      %v1693 = vadd.f32 0.0, %v1692
      %v1694 = vpop.f32.mrf.mxu0
      %1695 = vmatprep.mubr.f32.mxu0 0.0
      %1696 = vmatmul.mubr.f32.gmra.mxu0 %v991
      %v1697 = vpop.f32.mrf.mxu0
      %v1698 = vadd.f32 0.0, %v1697
      %v1699 = vpop.f32.mrf.mxu0
      %1700 = vmatprep.mubr.f32.mxu0 0.0
      %1701 = vmatmul.mubr.f32.gmra.mxu0 %v994
      %v1702 = vpop.f32.mrf.mxu0
      %v1703 = vadd.f32 0.0, %v1702
      %v1704 = vpop.f32.mrf.mxu0
      %1705 = vmatprep.mubr.f32.mxu0 0.0
      %1706 = vmatmul.mubr.f32.gmra.mxu0 %v1483
      %v1707 = vpop.f32.mrf.mxu0
      %v1708 = vadd.f32 0.0, %v1707
      %v1709 = vpop.f32.mrf.mxu0
      %1710 = vmatprep.mubr.f32.mxu0 0.0
      %1711 = vmatmul.mubr.f32.gmra.mxu0 %v1486
      %v1712 = vpop.f32.mrf.mxu0
      %v1713 = vadd.f32 0.0, %v1712
      %v1714 = vpop.f32.mrf.mxu0
      %1715 = vdwg.mxu0
      %v1716 = vadd.f32 %v1301, %v1558
      %v1717 = vadd.f32 %v1306, %v1563
      %v1718 = vadd.f32 %v1311, %v1568
      %v1719 = vadd.f32 %v1316, %v1573
      %v1720 = vadd.f32 %v1321, %v1578
      %v1721 = vadd.f32 %v1326, %v1583
      %v1722 = vadd.f32 %v1331, %v1588
      %v1723 = vadd.f32 %v1336, %v1593
      %v1724 = vadd.f32 %v1341, %v1598
      %v1725 = vadd.f32 %v1346, %v1603
      %v1726 = vadd.f32 %v1351, %v1608
      %v1727 = vadd.f32 %v1356, %v1613
      %v1728 = vadd.f32 %v1361, %v1618
      %v1729 = vadd.f32 %v1366, %v1623
      %v1730 = vadd.f32 %v1371, %v1628
      %v1731 = vadd.f32 %v1376, %v1633
      %v1732 = vadd.f32 %v1381, %v1638
      %v1733 = vadd.f32 %v1386, %v1643
      %v1734 = vadd.f32 %v1391, %v1648
      %v1735 = vadd.f32 %v1396, %v1653
      %v1736 = vadd.f32 %v1401, %v1658
      %v1737 = vadd.f32 %v1406, %v1663
      %v1738 = vadd.f32 %v1411, %v1668
      %v1739 = vadd.f32 %v1416, %v1673
      %v1740 = vadd.f32 %v1421, %v1678
      %v1741 = vadd.f32 %v1426, %v1683
      %v1742 = vadd.f32 %v1431, %v1688
      %v1743 = vadd.f32 %v1436, %v1693
      %v1744 = vadd.f32 %v1441, %v1698
      %v1745 = vadd.f32 %v1446, %v1703
      %v1746 = vadd.f32 %v1451, %v1708
      %v1747 = vadd.f32 %v1456, %v1713
      %v1749 = vlaneseq
      %v1750 = vshrl.u32 %v1749, 7
      %v1751 = vsub.s32 0, %v1750
      %v1752 = vrot.slane %v410, %v1751
      %v1754 = vadd.f32 %v1716, %v1752
      %v1755 = vadd.f32 %v1717, %v1752
      %v1756 = vadd.f32 %v1718, %v1752
      %v1757 = vadd.f32 %v1719, %v1752
      %v1758 = vadd.f32 %v1720, %v1752
      %v1759 = vadd.f32 %v1721, %v1752
      %v1760 = vadd.f32 %v1722, %v1752
      %v1761 = vadd.f32 %v1723, %v1752
      %v1762 = vadd.f32 %v1724, %v1752
      %v1763 = vadd.f32 %v1725, %v1752
      %v1764 = vadd.f32 %v1726, %v1752
      %v1765 = vadd.f32 %v1727, %v1752
      %v1766 = vadd.f32 %v1728, %v1752
      %v1767 = vadd.f32 %v1729, %v1752
      %v1768 = vadd.f32 %v1730, %v1752
      %v1769 = vadd.f32 %v1731, %v1752
      %v1770 = vadd.f32 %v1732, %v1752
      %v1771 = vadd.f32 %v1733, %v1752
      %v1772 = vadd.f32 %v1734, %v1752
      %v1773 = vadd.f32 %v1735, %v1752
      %v1774 = vadd.f32 %v1736, %v1752
      %v1775 = vadd.f32 %v1737, %v1752
      %v1776 = vadd.f32 %v1738, %v1752
      %v1777 = vadd.f32 %v1739, %v1752
      %v1778 = vadd.f32 %v1740, %v1752
      %v1779 = vadd.f32 %v1741, %v1752
      %v1780 = vadd.f32 %v1742, %v1752
      %v1781 = vadd.f32 %v1743, %v1752
      %v1782 = vadd.f32 %v1744, %v1752
      %v1783 = vadd.f32 %v1745, %v1752
      %v1784 = vadd.f32 %v1746, %v1752
      %v1785 = vadd.f32 %v1747, %v1752
      %v1786 = vmax.f32 %v1754, 0.0
      %v1787 = vmax.f32 %v1755, 0.0
      %v1788 = vmax.f32 %v1756, 0.0
      %v1789 = vmax.f32 %v1757, 0.0
      %v1790 = vmax.f32 %v1758, 0.0
      %v1791 = vmax.f32 %v1759, 0.0
      %v1792 = vmax.f32 %v1760, 0.0
      %v1793 = vmax.f32 %v1761, 0.0
      %v1794 = vmax.f32 %v1762, 0.0
      %v1795 = vmax.f32 %v1763, 0.0
      %v1796 = vmax.f32 %v1764, 0.0
      %v1797 = vmax.f32 %v1765, 0.0
      %v1798 = vmax.f32 %v1766, 0.0
      %v1799 = vmax.f32 %v1767, 0.0
      %v1800 = vmax.f32 %v1768, 0.0
      %v1801 = vmax.f32 %v1769, 0.0
      %v1802 = vmax.f32 %v1770, 0.0
      %v1803 = vmax.f32 %v1771, 0.0
      %v1804 = vmax.f32 %v1772, 0.0
      %v1805 = vmax.f32 %v1773, 0.0
      %v1806 = vmax.f32 %v1774, 0.0
      %v1807 = vmax.f32 %v1775, 0.0
      %v1808 = vmax.f32 %v1776, 0.0
      %v1809 = vmax.f32 %v1777, 0.0
      %v1810 = vmax.f32 %v1778, 0.0
      %v1811 = vmax.f32 %v1779, 0.0
      %v1812 = vmax.f32 %v1780, 0.0
      %v1813 = vmax.f32 %v1781, 0.0
      %v1814 = vmax.f32 %v1782, 0.0
      %v1815 = vmax.f32 %v1783, 0.0
      %v1816 = vmax.f32 %v1784, 0.0
      %v1817 = vmax.f32 %v1785, 0.0
      %v1818 = vld [vmem:[%s3] sm:$0xff]
      %v1819 = vld [vmem:[%s3 + $0x8] sm:$0xff]
      %v1820 = vld [vmem:[%s3 + $0x10] sm:$0xff]
      %v1821 = vld [vmem:[%s3 + $0x18] sm:$0xff]
      %v1822 = vld [vmem:[%s3 + $0x20] sm:$0xff]
      %v1823 = vld [vmem:[%s3 + $0x28] sm:$0xff]
      %v1824 = vld [vmem:[%s3 + $0x30] sm:$0xff]
      %v1825 = vld [vmem:[%s3 + $0x38] sm:$0xff]
      %v1826 = vld [vmem:[%s3 + $0x40] sm:$0xff]
      %v1827 = vld [vmem:[%s3 + $0x48] sm:$0xff]
      %v1828 = vld [vmem:[%s3 + $0x50] sm:$0xff]
      %v1829 = vld [vmem:[%s3 + $0x58] sm:$0xff]
      %v1830 = vld [vmem:[%s3 + $0x60] sm:$0xff]
      %v1831 = vld [vmem:[%s3 + $0x68] sm:$0xff]
      %v1832 = vld [vmem:[%s3 + $0x70] sm:$0xff]
      %v1833 = vld [vmem:[%s3 + $0x78] sm:$0xff]
      %v1834 = vld [vmem:[%s3 + $0x80] sm:$0xff]
      %v1835 = vld [vmem:[%s3 + $0x88] sm:$0xff]
      %v1836 = vld [vmem:[%s3 + $0x90] sm:$0xff]
      %v1837 = vld [vmem:[%s3 + $0x98] sm:$0xff]
      %v1838 = vld [vmem:[%s3 + $0xa0] sm:$0xff]
      %v1839 = vld [vmem:[%s3 + $0xa8] sm:$0xff]
      %v1840 = vld [vmem:[%s3 + $0xb0] sm:$0xff]
      %v1841 = vld [vmem:[%s3 + $0xb8] sm:$0xff]
      %v1842 = vld [vmem:[%s3 + $0xc0] sm:$0xff]
      %v1843 = vld [vmem:[%s3 + $0xc8] sm:$0xff]
      %v1844 = vld [vmem:[%s3 + $0xd0] sm:$0xff]
      %v1845 = vld [vmem:[%s3 + $0xd8] sm:$0xff]
      %v1846 = vld [vmem:[%s3 + $0xe0] sm:$0xff]
      %v1847 = vld [vmem:[%s3 + $0xe8] sm:$0xff]
      %v1848 = vld [vmem:[%s3 + $0xf0] sm:$0xff]
      %v1849 = vld [vmem:[%s3 + $0xf8] sm:$0xff]
      %v1850 = vld [vmem:[%s3 + $0x100] sm:$0xff]
      %v1851 = vld [vmem:[%s3 + $0x108] sm:$0xff]
      %v1852 = vld [vmem:[%s3 + $0x110] sm:$0xff]
      %v1853 = vld [vmem:[%s3 + $0x118] sm:$0xff]
      %vm1854 = vcmask 261120
      %1855 = vst.msk [vmem:[%s411 + $0x1] sm:$0xff] %vm1854, %v1786
      %1856 = vst.msk [vmem:[%s411 + $0x9] sm:$0xff] %vm1854, %v1787
      %1857 = vst.msk [vmem:[%s411 + $0x19] sm:$0xff] %vm1854, %v1788
      %1858 = vst.msk [vmem:[%s411 + $0x21] sm:$0xff] %vm1854, %v1789
      %1859 = vst.msk [vmem:[%s411 + $0x31] sm:$0xff] %vm1854, %v1790
      %1860 = vst.msk [vmem:[%s411 + $0x39] sm:$0xff] %vm1854, %v1791
      %1861 = vst.msk [vmem:[%s411 + $0x49] sm:$0xff] %vm1854, %v1792
      %1862 = vst.msk [vmem:[%s411 + $0x51] sm:$0xff] %vm1854, %v1793
      %1863 = vst.msk [vmem:[%s411 + $0x61] sm:$0xff] %vm1854, %v1794
      %1864 = vst.msk [vmem:[%s411 + $0x69] sm:$0xff] %vm1854, %v1795
      %1865 = vst.msk [vmem:[%s411 + $0x79] sm:$0xff] %vm1854, %v1796
      %1866 = vst.msk [vmem:[%s411 + $0x81] sm:$0xff] %vm1854, %v1797
      %1867 = vst.msk [vmem:[%s411 + $0x91] sm:$0xff] %vm1854, %v1798
      %1868 = vst.msk [vmem:[%s411 + $0x99] sm:$0xff] %vm1854, %v1799
      %1869 = vst.msk [vmem:[%s411 + $0xa9] sm:$0xff] %vm1854, %v1800
      %1870 = vst.msk [vmem:[%s411 + $0xb1] sm:$0xff] %vm1854, %v1801
      %1871 = vst.msk [vmem:[%s411 + $0xc1] sm:$0xff] %vm1854, %v1802
      %1872 = vst.msk [vmem:[%s411 + $0xc9] sm:$0xff] %vm1854, %v1803
      %1873 = vst.msk [vmem:[%s411 + $0xd9] sm:$0xff] %vm1854, %v1804
      %1874 = vst.msk [vmem:[%s411 + $0xe1] sm:$0xff] %vm1854, %v1805
      %1875 = vst.msk [vmem:[%s411 + $0xf1] sm:$0xff] %vm1854, %v1806
      %1876 = vst.msk [vmem:[%s411 + $0xf9] sm:$0xff] %vm1854, %v1807
      %1877 = vst.msk [vmem:[%s411 + $0x109] sm:$0xff] %vm1854, %v1808
      %1878 = vst.msk [vmem:[%s411 + $0x111] sm:$0xff] %vm1854, %v1809
      %1879 = vst.msk [vmem:[%s411 + $0x121] sm:$0xff] %vm1854, %v1810
      %1880 = vst.msk [vmem:[%s411 + $0x129] sm:$0xff] %vm1854, %v1811
      %1881 = vst.msk [vmem:[%s411 + $0x139] sm:$0xff] %vm1854, %v1812
      %1882 = vst.msk [vmem:[%s411 + $0x141] sm:$0xff] %vm1854, %v1813
      %1883 = vst.msk [vmem:[%s411 + $0x151] sm:$0xff] %vm1854, %v1814
      %1884 = vst.msk [vmem:[%s411 + $0x159] sm:$0xff] %vm1854, %v1815
      %1885 = vst.msk [vmem:[%s411 + $0x169] sm:$0xff] %vm1854, %v1816
      %1886 = vst.msk [vmem:[%s411 + $0x171] sm:$0xff] %vm1854, %v1817
      %v1887 = vld [vmem:[#allocation2] sm:$0xff]
      %v1888 = vld [vmem:[#allocation2 + $0x8] sm:$0xff]
      %v1889 = vld [vmem:[#allocation2 + $0x18] sm:$0xff]
      %v1890 = vld [vmem:[#allocation2 + $0x20] sm:$0xff]
      %v1891 = vld [vmem:[#allocation2 + $0x30] sm:$0xff]
      %v1892 = vld [vmem:[#allocation2 + $0x38] sm:$0xff]
      %v1893 = vld [vmem:[#allocation2 + $0x48] sm:$0xff]
      %v1894 = vld [vmem:[#allocation2 + $0x50] sm:$0xff]
      %v1895 = vld [vmem:[#allocation2 + $0x60] sm:$0xff]
      %v1896 = vld [vmem:[#allocation2 + $0x68] sm:$0xff]
      %v1897 = vld [vmem:[#allocation2 + $0x78] sm:$0xff]
      %v1898 = vld [vmem:[#allocation2 + $0x80] sm:$0xff]
      %v1899 = vld [vmem:[#allocation2 + $0x90] sm:$0xff]
      %v1900 = vld [vmem:[#allocation2 + $0x98] sm:$0xff]
      %v1901 = vld [vmem:[#allocation2 + $0xa8] sm:$0xff]
      %v1902 = vld [vmem:[#allocation2 + $0xb0] sm:$0xff]
      %v1903 = vld [vmem:[#allocation2 + $0xc0] sm:$0xff]
      %v1904 = vld [vmem:[#allocation2 + $0xc8] sm:$0xff]
      %v1905 = vld [vmem:[#allocation2 + $0xd8] sm:$0xff]
      %v1906 = vld [vmem:[#allocation2 + $0xe0] sm:$0xff]
      %v1907 = vld [vmem:[#allocation2 + $0xf0] sm:$0xff]
      %v1908 = vld [vmem:[#allocation2 + $0xf8] sm:$0xff]
      %v1909 = vld [vmem:[#allocation2 + $0x108] sm:$0xff]
      %v1910 = vld [vmem:[#allocation2 + $0x110] sm:$0xff]
      %v1911 = vld [vmem:[#allocation2 + $0x120] sm:$0xff]
      %v1912 = vld [vmem:[#allocation2 + $0x128] sm:$0xff]
      %v1913 = vld [vmem:[#allocation2 + $0x138] sm:$0xff]
      %v1914 = vld [vmem:[#allocation2 + $0x140] sm:$0xff]
      %v1915 = vld [vmem:[#allocation2 + $0x150] sm:$0xff]
      %v1916 = vld [vmem:[#allocation2 + $0x158] sm:$0xff]
      %v1917 = vld [vmem:[#allocation2 + $0x168] sm:$0xff]
      %v1918 = vld [vmem:[#allocation2 + $0x170] sm:$0xff]
      %v1919 = vld [vmem:[#allocation2 + $0x180] sm:$0xff]
      %v1920 = vld [vmem:[#allocation2 + $0x188] sm:$0xff]
      %v1921 = vld [vmem:[#allocation2 + $0x198] sm:$0xff]
      %v1922 = vld [vmem:[#allocation2 + $0x1a0] sm:$0xff]
      %v1923 = vld [vmem:[#allocation2 + $0x1] sm:$0xff]
      %v1924 = vld [vmem:[#allocation2 + $0x9] sm:$0xff]
      %v1925 = vld [vmem:[#allocation2 + $0x19] sm:$0xff]
      %v1926 = vld [vmem:[#allocation2 + $0x21] sm:$0xff]
      %v1927 = vld [vmem:[#allocation2 + $0x31] sm:$0xff]
      %v1928 = vld [vmem:[#allocation2 + $0x39] sm:$0xff]
      %v1929 = vld [vmem:[#allocation2 + $0x49] sm:$0xff]
      %v1930 = vld [vmem:[#allocation2 + $0x51] sm:$0xff]
      %v1931 = vld [vmem:[#allocation2 + $0x61] sm:$0xff]
      %v1932 = vld [vmem:[#allocation2 + $0x69] sm:$0xff]
      %v1933 = vld [vmem:[#allocation2 + $0x79] sm:$0xff]
      %v1934 = vld [vmem:[#allocation2 + $0x81] sm:$0xff]
      %v1935 = vld [vmem:[#allocation2 + $0x91] sm:$0xff]
      %v1936 = vld [vmem:[#allocation2 + $0x99] sm:$0xff]
      %v1937 = vld [vmem:[#allocation2 + $0xa9] sm:$0xff]
      %v1938 = vld [vmem:[#allocation2 + $0xb1] sm:$0xff]
      %v1939 = vld [vmem:[#allocation2 + $0xc1] sm:$0xff]
      %v1940 = vld [vmem:[#allocation2 + $0xc9] sm:$0xff]
      %v1941 = vld [vmem:[#allocation2 + $0xd9] sm:$0xff]
      %v1942 = vld [vmem:[#allocation2 + $0xe1] sm:$0xff]
      %v1943 = vld [vmem:[#allocation2 + $0xf1] sm:$0xff]
      %v1944 = vld [vmem:[#allocation2 + $0xf9] sm:$0xff]
      %v1945 = vld [vmem:[#allocation2 + $0x109] sm:$0xff]
      %v1946 = vld [vmem:[#allocation2 + $0x111] sm:$0xff]
      %v1947 = vld [vmem:[#allocation2 + $0x121] sm:$0xff]
      %v1948 = vld [vmem:[#allocation2 + $0x129] sm:$0xff]
      %v1949 = vld [vmem:[#allocation2 + $0x139] sm:$0xff]
      %v1950 = vld [vmem:[#allocation2 + $0x141] sm:$0xff]
      %v1951 = vld [vmem:[#allocation2 + $0x151] sm:$0xff]
      %v1952 = vld [vmem:[#allocation2 + $0x159] sm:$0xff]
      %v1953 = vld [vmem:[#allocation2 + $0x169] sm:$0xff]
      %v1954 = vld [vmem:[#allocation2 + $0x171] sm:$0xff]
      %v1955 = vld [vmem:[#allocation2 + $0x181] sm:$0xff]
      %v1956 = vld [vmem:[#allocation2 + $0x189] sm:$0xff]
      %v1957 = vld [vmem:[#allocation2 + $0x199] sm:$0xff]
      %v1958 = vld [vmem:[#allocation2 + $0x1a1] sm:$0xff]
      %v1959 = vld [vmem:[#allocation2 + $0x2] sm:$0xff]
      %v1960 = vld [vmem:[#allocation2 + $0xa] sm:$0xff]
      %v1961 = vld [vmem:[#allocation2 + $0x1a] sm:$0xff]
      %v1962 = vld [vmem:[#allocation2 + $0x22] sm:$0xff]
      %v1963 = vld [vmem:[#allocation2 + $0x32] sm:$0xff]
      %v1964 = vld [vmem:[#allocation2 + $0x3a] sm:$0xff]
      %v1965 = vld [vmem:[#allocation2 + $0x4a] sm:$0xff]
      %v1966 = vld [vmem:[#allocation2 + $0x52] sm:$0xff]
      %v1967 = vld [vmem:[#allocation2 + $0x62] sm:$0xff]
      %v1968 = vld [vmem:[#allocation2 + $0x6a] sm:$0xff]
      %v1969 = vld [vmem:[#allocation2 + $0x7a] sm:$0xff]
      %v1970 = vld [vmem:[#allocation2 + $0x82] sm:$0xff]
      %v1971 = vld [vmem:[#allocation2 + $0x92] sm:$0xff]
      %v1972 = vld [vmem:[#allocation2 + $0x9a] sm:$0xff]
      %v1973 = vld [vmem:[#allocation2 + $0xaa] sm:$0xff]
      %v1974 = vld [vmem:[#allocation2 + $0xb2] sm:$0xff]
      %v1975 = vld [vmem:[#allocation2 + $0xc2] sm:$0xff]
      %v1976 = vld [vmem:[#allocation2 + $0xca] sm:$0xff]
      %v1977 = vld [vmem:[#allocation2 + $0xda] sm:$0xff]
      %v1978 = vld [vmem:[#allocation2 + $0xe2] sm:$0xff]
      %v1979 = vld [vmem:[#allocation2 + $0xf2] sm:$0xff]
      %v1980 = vld [vmem:[#allocation2 + $0xfa] sm:$0xff]
      %v1981 = vld [vmem:[#allocation2 + $0x10a] sm:$0xff]
      %v1982 = vld [vmem:[#allocation2 + $0x112] sm:$0xff]
      %v1983 = vld [vmem:[#allocation2 + $0x122] sm:$0xff]
      %v1984 = vld [vmem:[#allocation2 + $0x12a] sm:$0xff]
      %v1985 = vld [vmem:[#allocation2 + $0x13a] sm:$0xff]
      %v1986 = vld [vmem:[#allocation2 + $0x142] sm:$0xff]
      %v1987 = vld [vmem:[#allocation2 + $0x152] sm:$0xff]
      %v1988 = vld [vmem:[#allocation2 + $0x15a] sm:$0xff]
      %v1989 = vld [vmem:[#allocation2 + $0x16a] sm:$0xff]
      %v1990 = vld [vmem:[#allocation2 + $0x172] sm:$0xff]
      %v1991 = vld [vmem:[#allocation2 + $0x182] sm:$0xff]
      %v1992 = vld [vmem:[#allocation2 + $0x18a] sm:$0xff]
      %v1993 = vld [vmem:[#allocation2 + $0x19a] sm:$0xff]
      %v1994 = vld [vmem:[#allocation2 + $0x1a2] sm:$0xff]
      %2027 = vrot.lane.b32.xlu0 %v1923, 32
      %v2028 = vpop.permute.xlu0 %2027
      %2029 = vrot.lane.b32.xlu0 %v1924, 32
      %v2030 = vpop.permute.xlu0 %2029
      %2031 = vrot.lane.b32.xlu0 %v1925, 32
      %v2032 = vpop.permute.xlu0 %2031
      %2033 = vrot.lane.b32.xlu0 %v1926, 32
      %v2034 = vpop.permute.xlu0 %2033
      %2035 = vrot.lane.b32.xlu0 %v1927, 32
      %v2036 = vpop.permute.xlu0 %2035
      %2037 = vrot.lane.b32.xlu0 %v1928, 32
      %v2038 = vpop.permute.xlu0 %2037
      %2039 = vrot.lane.b32.xlu0 %v1929, 32
      %v2040 = vpop.permute.xlu0 %2039
      %2041 = vrot.lane.b32.xlu0 %v1930, 32
      %v2042 = vpop.permute.xlu0 %2041
      %2043 = vrot.lane.b32.xlu0 %v1931, 32
      %v2044 = vpop.permute.xlu0 %2043
      %2045 = vrot.lane.b32.xlu0 %v1932, 32
      %v2046 = vpop.permute.xlu0 %2045
      %2047 = vrot.lane.b32.xlu0 %v1933, 32
      %v2048 = vpop.permute.xlu0 %2047
      %2049 = vrot.lane.b32.xlu0 %v1934, 32
      %v2050 = vpop.permute.xlu0 %2049
      %2051 = vrot.lane.b32.xlu0 %v1935, 32
      %v2052 = vpop.permute.xlu0 %2051
      %2053 = vrot.lane.b32.xlu0 %v1936, 32
      %v2054 = vpop.permute.xlu0 %2053
      %2055 = vrot.lane.b32.xlu0 %v1937, 32
      %v2056 = vpop.permute.xlu0 %2055
      %2057 = vrot.lane.b32.xlu0 %v1938, 32
      %v2058 = vpop.permute.xlu0 %2057
      %2059 = vrot.lane.b32.xlu0 %v1939, 32
      %v2060 = vpop.permute.xlu0 %2059
      %2061 = vrot.lane.b32.xlu0 %v1940, 32
      %v2062 = vpop.permute.xlu0 %2061
      %2063 = vrot.lane.b32.xlu0 %v1941, 32
      %v2064 = vpop.permute.xlu0 %2063
      %2065 = vrot.lane.b32.xlu0 %v1942, 32
      %v2066 = vpop.permute.xlu0 %2065
      %2067 = vrot.lane.b32.xlu0 %v1943, 32
      %v2068 = vpop.permute.xlu0 %2067
      %2069 = vrot.lane.b32.xlu0 %v1944, 32
      %v2070 = vpop.permute.xlu0 %2069
      %2071 = vrot.lane.b32.xlu0 %v1945, 32
      %v2072 = vpop.permute.xlu0 %2071
      %2073 = vrot.lane.b32.xlu0 %v1946, 32
      %v2074 = vpop.permute.xlu0 %2073
      %2075 = vrot.lane.b32.xlu0 %v1947, 32
      %v2076 = vpop.permute.xlu0 %2075
      %2077 = vrot.lane.b32.xlu0 %v1948, 32
      %v2078 = vpop.permute.xlu0 %2077
      %2079 = vrot.lane.b32.xlu0 %v1949, 32
      %v2080 = vpop.permute.xlu0 %2079
      %2081 = vrot.lane.b32.xlu0 %v1950, 32
      %v2082 = vpop.permute.xlu0 %2081
      %2083 = vrot.lane.b32.xlu0 %v1951, 32
      %v2084 = vpop.permute.xlu0 %2083
      %2085 = vrot.lane.b32.xlu0 %v1952, 32
      %v2086 = vpop.permute.xlu0 %2085
      %2087 = vrot.lane.b32.xlu0 %v1953, 32
      %v2088 = vpop.permute.xlu0 %2087
      %2089 = vrot.lane.b32.xlu0 %v1954, 32
      %v2090 = vpop.permute.xlu0 %2089
      %2155 = vrot.lane.b32.xlu0 %v1959, 64
      %v2156 = vpop.permute.xlu0 %2155
      %2157 = vrot.lane.b32.xlu0 %v1960, 64
      %v2158 = vpop.permute.xlu0 %2157
      %2159 = vrot.lane.b32.xlu0 %v1961, 64
      %v2160 = vpop.permute.xlu0 %2159
      %2161 = vrot.lane.b32.xlu0 %v1962, 64
      %v2162 = vpop.permute.xlu0 %2161
      %2163 = vrot.lane.b32.xlu0 %v1963, 64
      %v2164 = vpop.permute.xlu0 %2163
      %2165 = vrot.lane.b32.xlu0 %v1964, 64
      %v2166 = vpop.permute.xlu0 %2165
      %2167 = vrot.lane.b32.xlu0 %v1965, 64
      %v2168 = vpop.permute.xlu0 %2167
      %2169 = vrot.lane.b32.xlu0 %v1966, 64
      %v2170 = vpop.permute.xlu0 %2169
      %2171 = vrot.lane.b32.xlu0 %v1967, 64
      %v2172 = vpop.permute.xlu0 %2171
      %2173 = vrot.lane.b32.xlu0 %v1968, 64
      %v2174 = vpop.permute.xlu0 %2173
      %2175 = vrot.lane.b32.xlu0 %v1969, 64
      %v2176 = vpop.permute.xlu0 %2175
      %2177 = vrot.lane.b32.xlu0 %v1970, 64
      %v2178 = vpop.permute.xlu0 %2177
      %2179 = vrot.lane.b32.xlu0 %v1971, 64
      %v2180 = vpop.permute.xlu0 %2179
      %2181 = vrot.lane.b32.xlu0 %v1972, 64
      %v2182 = vpop.permute.xlu0 %2181
      %2183 = vrot.lane.b32.xlu0 %v1973, 64
      %v2184 = vpop.permute.xlu0 %2183
      %2185 = vrot.lane.b32.xlu0 %v1974, 64
      %v2186 = vpop.permute.xlu0 %2185
      %2187 = vrot.lane.b32.xlu0 %v1975, 64
      %v2188 = vpop.permute.xlu0 %2187
      %2189 = vrot.lane.b32.xlu0 %v1976, 64
      %v2190 = vpop.permute.xlu0 %2189
      %2191 = vrot.lane.b32.xlu0 %v1977, 64
      %v2192 = vpop.permute.xlu0 %2191
      %2193 = vrot.lane.b32.xlu0 %v1978, 64
      %v2194 = vpop.permute.xlu0 %2193
      %2195 = vrot.lane.b32.xlu0 %v1979, 64
      %v2196 = vpop.permute.xlu0 %2195
      %2197 = vrot.lane.b32.xlu0 %v1980, 64
      %v2198 = vpop.permute.xlu0 %2197
      %2199 = vrot.lane.b32.xlu0 %v1981, 64
      %v2200 = vpop.permute.xlu0 %2199
      %2201 = vrot.lane.b32.xlu0 %v1982, 64
      %v2202 = vpop.permute.xlu0 %2201
      %2203 = vrot.lane.b32.xlu0 %v1983, 64
      %v2204 = vpop.permute.xlu0 %2203
      %2205 = vrot.lane.b32.xlu0 %v1984, 64
      %v2206 = vpop.permute.xlu0 %2205
      %2207 = vrot.lane.b32.xlu0 %v1985, 64
      %v2208 = vpop.permute.xlu0 %2207
      %2209 = vrot.lane.b32.xlu0 %v1986, 64
      %v2210 = vpop.permute.xlu0 %2209
      %2211 = vrot.lane.b32.xlu0 %v1987, 64
      %v2212 = vpop.permute.xlu0 %2211
      %2213 = vrot.lane.b32.xlu0 %v1988, 64
      %v2214 = vpop.permute.xlu0 %2213
      %2215 = vrot.lane.b32.xlu0 %v1989, 64
      %v2216 = vpop.permute.xlu0 %2215
      %2217 = vrot.lane.b32.xlu0 %v1990, 64
      %v2218 = vpop.permute.xlu0 %2217
      %v2251 = vsel %vm1854, %v1887, %v2028
      %v2252 = vsel %vm1854, %v1888, %v2030
      %v2253 = vsel %vm1854, %v1889, %v2032
      %v2254 = vsel %vm1854, %v1890, %v2034
      %v2255 = vsel %vm1854, %v1891, %v2036
      %v2256 = vsel %vm1854, %v1892, %v2038
      %v2257 = vsel %vm1854, %v1893, %v2040
      %v2258 = vsel %vm1854, %v1894, %v2042
      %v2259 = vsel %vm1854, %v1895, %v2044
      %v2260 = vsel %vm1854, %v1896, %v2046
      %v2261 = vsel %vm1854, %v1897, %v2048
      %v2262 = vsel %vm1854, %v1898, %v2050
      %v2263 = vsel %vm1854, %v1899, %v2052
      %v2264 = vsel %vm1854, %v1900, %v2054
      %v2265 = vsel %vm1854, %v1901, %v2056
      %v2266 = vsel %vm1854, %v1902, %v2058
      %v2267 = vsel %vm1854, %v1903, %v2060
      %v2268 = vsel %vm1854, %v1904, %v2062
      %v2269 = vsel %vm1854, %v1905, %v2064
      %v2270 = vsel %vm1854, %v1906, %v2066
      %v2271 = vsel %vm1854, %v1907, %v2068
      %v2272 = vsel %vm1854, %v1908, %v2070
      %v2273 = vsel %vm1854, %v1909, %v2072
      %v2274 = vsel %vm1854, %v1910, %v2074
      %v2275 = vsel %vm1854, %v1911, %v2076
      %v2276 = vsel %vm1854, %v1912, %v2078
      %v2277 = vsel %vm1854, %v1913, %v2080
      %v2278 = vsel %vm1854, %v1914, %v2082
      %v2279 = vsel %vm1854, %v1915, %v2084
      %v2280 = vsel %vm1854, %v1916, %v2086
      %v2281 = vsel %vm1854, %v1917, %v2088
      %v2282 = vsel %vm1854, %v1918, %v2090
      %v2283 = vsel %vm333, %v2251, %v2156
      %v2284 = vsel %vm333, %v2252, %v2158
      %v2285 = vsel %vm333, %v2253, %v2160
      %v2286 = vsel %vm333, %v2254, %v2162
      %v2287 = vsel %vm333, %v2255, %v2164
      %v2288 = vsel %vm333, %v2256, %v2166
      %v2289 = vsel %vm333, %v2257, %v2168
      %v2290 = vsel %vm333, %v2258, %v2170
      %v2291 = vsel %vm333, %v2259, %v2172
      %v2292 = vsel %vm333, %v2260, %v2174
      %v2293 = vsel %vm333, %v2261, %v2176
      %v2294 = vsel %vm333, %v2262, %v2178
      %v2295 = vsel %vm333, %v2263, %v2180
      %v2296 = vsel %vm333, %v2264, %v2182
      %v2297 = vsel %vm333, %v2265, %v2184
      %v2298 = vsel %vm333, %v2266, %v2186
      %v2299 = vsel %vm333, %v2267, %v2188
      %v2300 = vsel %vm333, %v2268, %v2190
      %v2301 = vsel %vm333, %v2269, %v2192
      %v2302 = vsel %vm333, %v2270, %v2194
      %v2303 = vsel %vm333, %v2271, %v2196
      %v2304 = vsel %vm333, %v2272, %v2198
      %v2305 = vsel %vm333, %v2273, %v2200
      %v2306 = vsel %vm333, %v2274, %v2202
      %v2307 = vsel %vm333, %v2275, %v2204
      %v2308 = vsel %vm333, %v2276, %v2206
      %v2309 = vsel %vm333, %v2277, %v2208
      %v2310 = vsel %vm333, %v2278, %v2210
      %v2311 = vsel %vm333, %v2279, %v2212
      %v2312 = vsel %vm333, %v2280, %v2214
      %v2313 = vsel %vm333, %v2281, %v2216
      %v2314 = vsel %vm333, %v2282, %v2218
      %2317 = vrot.lane.b32.xlu0 %v1955, 32
      %v2318 = vpop.permute.xlu0 %2317
      %2319 = vrot.lane.b32.xlu0 %v1956, 32
      %v2320 = vpop.permute.xlu0 %2319
      %2325 = vrot.lane.b32.xlu0 %v1991, 64
      %v2326 = vpop.permute.xlu0 %2325
      %2327 = vrot.lane.b32.xlu0 %v1992, 64
      %v2328 = vpop.permute.xlu0 %2327
      %v2331 = vsel %vm1854, %v1919, %v2318
      %v2332 = vsel %vm1854, %v1920, %v2320
      %v2333 = vsel %vm333, %v2331, %v2326
      %v2334 = vsel %vm333, %v2332, %v2328
      %vm2335 = vcmask 785408
      %v2337 = vsel %vm2335, %v2285, 0
      %v2340 = vsel %vm2335, %v2286, 0
      %v2343 = vsel %vm2335, %v2287, 0
      %v2346 = vsel %vm2335, %v2288, 0
      %v2349 = vsel %vm2335, %v2289, 0
      %v2352 = vsel %vm2335, %v2290, 0
      %v2355 = vsel %vm2335, %v2291, 0
      %v2358 = vsel %vm2335, %v2292, 0
      %v2361 = vsel %vm2335, %v2293, 0
      %v2364 = vsel %vm2335, %v2294, 0
      %v2367 = vsel %vm2335, %v2295, 0
      %v2370 = vsel %vm2335, %v2296, 0
      %v2373 = vsel %vm2335, %v2297, 0
      %v2376 = vsel %vm2335, %v2298, 0
      %v2379 = vsel %vm2335, %v2299, 0
      %v2382 = vsel %vm2335, %v2300, 0
      %v2385 = vsel %vm2335, %v2301, 0
      %v2388 = vsel %vm2335, %v2302, 0
      %v2391 = vsel %vm2335, %v2303, 0
      %v2394 = vsel %vm2335, %v2304, 0
      %v2397 = vsel %vm2335, %v2305, 0
      %v2400 = vsel %vm2335, %v2306, 0
      %v2403 = vsel %vm2335, %v2307, 0
      %v2406 = vsel %vm2335, %v2308, 0
      %v2409 = vsel %vm2335, %v2309, 0
      %v2412 = vsel %vm2335, %v2310, 0
      %v2415 = vsel %vm2335, %v2311, 0
      %v2418 = vsel %vm2335, %v2312, 0
      %v2421 = vsel %vm2335, %v2313, 0
      %v2424 = vsel %vm2335, %v2314, 0
      %v2427 = vsel %vm2335, %v2333, 0
      %v2430 = vsel %vm2335, %v2334, 0
      %2432 = vmatprep.subr.mxu0 0.0
      %2433 = vmatpush1.msra.mxu0 0.0
      %2434 = vmatprep.subr.mxu0 0.0
      %2435 = vmatpush1.msra.mxu0 0.0
      %2436 = vmatprep.subr.mxu0 0.0
      %2437 = vmatpush1.msra.mxu0 0.0
      %2438 = vmatprep.subr.mxu0 0.0
      %2439 = vmatpush1.msra.mxu0 0.0
      %2440 = vmatprep.subr.mxu0 0.0
      %2441 = vmatpush1.msra.mxu0 %v1841
      %2442 = vmatprep.subr.mxu0 0.0
      %2443 = vmatpush1.msra.mxu0 %v1840
      %2444 = vmatprep.subr.mxu0 0.0
      %2445 = vmatpush1.msra.mxu0 %v1839
      %2446 = vmatprep.subr.mxu0 0.0
      %2447 = vmatpush1.msra.mxu0 %v1838
      %2448 = vmatprep.subr.mxu0 0.0
      %2449 = vmatpush1.msra.mxu0 %v1837
      %2450 = vmatprep.subr.mxu0 0.0
      %2451 = vmatpush1.msra.mxu0 %v1836
      %2452 = vmatprep.subr.mxu0 0.0
      %2453 = vmatpush1.msra.mxu0 %v1835
      %2454 = vmatprep.subr.mxu0 0.0
      %2455 = vmatpush1.msra.mxu0 %v1834
      %2456 = vmatprep.subr.mxu0 0.0
      %2457 = vmatpush1.msra.mxu0 %v1833
      %2458 = vmatprep.subr.mxu0 0.0
      %2459 = vmatpush1.msra.mxu0 %v1832
      %2460 = vmatprep.subr.mxu0 0.0
      %2461 = vmatpush1.msra.mxu0 %v1831
      %2462 = vmatprep.subr.mxu0 0.0
      %2463 = vmatpush1.msra.mxu0 %v1830
      %2464 = vmatprep.subr.mxu0 0.0
      %2465 = vmatpush2.msra.mxu0 0.0
      %2466 = vmatprep.subr.mxu0 0.0
      %2467 = vmatpush2.msra.mxu0 0.0
      %2468 = vmatprep.subr.mxu0 0.0
      %2469 = vmatpush2.msra.mxu0 0.0
      %2470 = vmatprep.subr.mxu0 0.0
      %2471 = vmatpush2.msra.mxu0 0.0
      %2472 = vmatprep.subr.mxu0 0.0
      %2473 = vmatpush2.msra.mxu0 0.0
      %2474 = vmatprep.subr.mxu0 0.0
      %2475 = vmatpush2.msra.mxu0 0.0
      %2476 = vmatprep.subr.mxu0 0.0
      %2477 = vmatpush2.msra.mxu0 0.0
      %2478 = vmatprep.subr.mxu0 0.0
      %2479 = vmatpush2.msra.mxu0 0.0
      %2480 = vmatprep.subr.mxu0 0.0
      %2481 = vmatpush2.msra.mxu0 0.0
      %2482 = vmatprep.subr.mxu0 0.0
      %2483 = vmatpush2.msra.mxu0 0.0
      %2484 = vmatprep.subr.mxu0 0.0
      %2485 = vmatpush2.msra.mxu0 0.0
      %2486 = vmatprep.subr.mxu0 0.0
      %2487 = vmatpush2.msra.mxu0 0.0
      %2488 = vmatprep.subr.mxu0 0.0
      %2489 = vmatpush2.msra.mxu0 0.0
      %2490 = vmatprep.subr.mxu0 0.0
      %2491 = vmatpush2.msra.mxu0 0.0
      %2492 = vmatprep.subr.mxu0 0.0
      %2493 = vmatpush2.msra.mxu0 0.0
      %2494 = vmatprep.subr.mxu0 0.0
      %2495 = vmatpush2.msra.mxu0 0.0
      %2496 = vmatprep.mubr.f32.mxu0 0.0
      %2497 = vmatmul.mubr.f32.gmra.mxu0 %v2337
      %v2498 = vpop.f32.mrf.mxu0
      %v2499 = vadd.f32 0.0, %v2498
      %v2500 = vpop.f32.mrf.mxu0
      %2501 = vmatprep.mubr.f32.mxu0 0.0
      %2502 = vmatmul.mubr.f32.gmra.mxu0 %v2340
      %v2503 = vpop.f32.mrf.mxu0
      %v2504 = vadd.f32 0.0, %v2503
      %v2505 = vpop.f32.mrf.mxu0
      %2506 = vmatprep.mubr.f32.mxu0 0.0
      %2507 = vmatmul.mubr.f32.gmra.mxu0 %v2343
      %v2508 = vpop.f32.mrf.mxu0
      %v2509 = vadd.f32 0.0, %v2508
      %v2510 = vpop.f32.mrf.mxu0
      %2511 = vmatprep.mubr.f32.mxu0 0.0
      %2512 = vmatmul.mubr.f32.gmra.mxu0 %v2346
      %v2513 = vpop.f32.mrf.mxu0
      %v2514 = vadd.f32 0.0, %v2513
      %v2515 = vpop.f32.mrf.mxu0
      %2516 = vmatprep.mubr.f32.mxu0 0.0
      %2517 = vmatmul.mubr.f32.gmra.mxu0 %v2349
      %v2518 = vpop.f32.mrf.mxu0
      %v2519 = vadd.f32 0.0, %v2518
      %v2520 = vpop.f32.mrf.mxu0
      %2521 = vmatprep.mubr.f32.mxu0 0.0
      %2522 = vmatmul.mubr.f32.gmra.mxu0 %v2352
      %v2523 = vpop.f32.mrf.mxu0
      %v2524 = vadd.f32 0.0, %v2523
      %v2525 = vpop.f32.mrf.mxu0
      %2526 = vmatprep.mubr.f32.mxu0 0.0
      %2527 = vmatmul.mubr.f32.gmra.mxu0 %v2355
      %v2528 = vpop.f32.mrf.mxu0
      %v2529 = vadd.f32 0.0, %v2528
      %v2530 = vpop.f32.mrf.mxu0
      %2531 = vmatprep.mubr.f32.mxu0 0.0
      %2532 = vmatmul.mubr.f32.gmra.mxu0 %v2358
      %v2533 = vpop.f32.mrf.mxu0
      %v2534 = vadd.f32 0.0, %v2533
      %v2535 = vpop.f32.mrf.mxu0
      %2536 = vmatprep.mubr.f32.mxu0 0.0
      %2537 = vmatmul.mubr.f32.gmra.mxu0 %v2361
      %v2538 = vpop.f32.mrf.mxu0
      %v2539 = vadd.f32 0.0, %v2538
      %v2540 = vpop.f32.mrf.mxu0
      %2541 = vmatprep.mubr.f32.mxu0 0.0
      %2542 = vmatmul.mubr.f32.gmra.mxu0 %v2364
      %v2543 = vpop.f32.mrf.mxu0
      %v2544 = vadd.f32 0.0, %v2543
      %v2545 = vpop.f32.mrf.mxu0
      %2546 = vmatprep.mubr.f32.mxu0 0.0
      %2547 = vmatmul.mubr.f32.gmra.mxu0 %v2367
      %v2548 = vpop.f32.mrf.mxu0
      %v2549 = vadd.f32 0.0, %v2548
      %v2550 = vpop.f32.mrf.mxu0
      %2551 = vmatprep.mubr.f32.mxu0 0.0
      %2552 = vmatmul.mubr.f32.gmra.mxu0 %v2370
      %v2553 = vpop.f32.mrf.mxu0
      %v2554 = vadd.f32 0.0, %v2553
      %v2555 = vpop.f32.mrf.mxu0
      %2556 = vmatprep.mubr.f32.mxu0 0.0
      %2557 = vmatmul.mubr.f32.gmra.mxu0 %v2373
      %v2558 = vpop.f32.mrf.mxu0
      %v2559 = vadd.f32 0.0, %v2558
      %v2560 = vpop.f32.mrf.mxu0
      %2561 = vmatprep.mubr.f32.mxu0 0.0
      %2562 = vmatmul.mubr.f32.gmra.mxu0 %v2376
      %v2563 = vpop.f32.mrf.mxu0
      %v2564 = vadd.f32 0.0, %v2563
      %v2565 = vpop.f32.mrf.mxu0
      %2566 = vmatprep.mubr.f32.mxu0 0.0
      %2567 = vmatmul.mubr.f32.gmra.mxu0 %v2379
      %v2568 = vpop.f32.mrf.mxu0
      %v2569 = vadd.f32 0.0, %v2568
      %v2570 = vpop.f32.mrf.mxu0
      %2571 = vmatprep.mubr.f32.mxu0 0.0
      %2572 = vmatmul.mubr.f32.gmra.mxu0 %v2382
      %v2573 = vpop.f32.mrf.mxu0
      %v2574 = vadd.f32 0.0, %v2573
      %v2575 = vpop.f32.mrf.mxu0
      %2576 = vmatprep.mubr.f32.mxu0 0.0
      %2577 = vmatmul.mubr.f32.gmra.mxu0 %v2385
      %v2578 = vpop.f32.mrf.mxu0
      %v2579 = vadd.f32 0.0, %v2578
      %v2580 = vpop.f32.mrf.mxu0
      %2581 = vmatprep.mubr.f32.mxu0 0.0
      %2582 = vmatmul.mubr.f32.gmra.mxu0 %v2388
      %v2583 = vpop.f32.mrf.mxu0
      %v2584 = vadd.f32 0.0, %v2583
      %v2585 = vpop.f32.mrf.mxu0
      %2586 = vmatprep.mubr.f32.mxu0 0.0
      %2587 = vmatmul.mubr.f32.gmra.mxu0 %v2391
      %v2588 = vpop.f32.mrf.mxu0
      %v2589 = vadd.f32 0.0, %v2588
      %v2590 = vpop.f32.mrf.mxu0
      %2591 = vmatprep.mubr.f32.mxu0 0.0
      %2592 = vmatmul.mubr.f32.gmra.mxu0 %v2394
      %v2593 = vpop.f32.mrf.mxu0
      %v2594 = vadd.f32 0.0, %v2593
      %v2595 = vpop.f32.mrf.mxu0
      %2596 = vmatprep.mubr.f32.mxu0 0.0
      %2597 = vmatmul.mubr.f32.gmra.mxu0 %v2397
      %v2598 = vpop.f32.mrf.mxu0
      %v2599 = vadd.f32 0.0, %v2598
      %v2600 = vpop.f32.mrf.mxu0
      %2601 = vmatprep.mubr.f32.mxu0 0.0
      %2602 = vmatmul.mubr.f32.gmra.mxu0 %v2400
      %v2603 = vpop.f32.mrf.mxu0
      %v2604 = vadd.f32 0.0, %v2603
      %v2605 = vpop.f32.mrf.mxu0
      %2606 = vmatprep.mubr.f32.mxu0 0.0
      %2607 = vmatmul.mubr.f32.gmra.mxu0 %v2403
      %v2608 = vpop.f32.mrf.mxu0
      %v2609 = vadd.f32 0.0, %v2608
      %v2610 = vpop.f32.mrf.mxu0
      %2611 = vmatprep.mubr.f32.mxu0 0.0
      %2612 = vmatmul.mubr.f32.gmra.mxu0 %v2406
      %v2613 = vpop.f32.mrf.mxu0
      %v2614 = vadd.f32 0.0, %v2613
      %v2615 = vpop.f32.mrf.mxu0
      %2616 = vmatprep.mubr.f32.mxu0 0.0
      %2617 = vmatmul.mubr.f32.gmra.mxu0 %v2409
      %v2618 = vpop.f32.mrf.mxu0
      %v2619 = vadd.f32 0.0, %v2618
      %v2620 = vpop.f32.mrf.mxu0
      %2621 = vmatprep.mubr.f32.mxu0 0.0
      %2622 = vmatmul.mubr.f32.gmra.mxu0 %v2412
      %v2623 = vpop.f32.mrf.mxu0
      %v2624 = vadd.f32 0.0, %v2623
      %v2625 = vpop.f32.mrf.mxu0
      %2626 = vmatprep.mubr.f32.mxu0 0.0
      %2627 = vmatmul.mubr.f32.gmra.mxu0 %v2415
      %v2628 = vpop.f32.mrf.mxu0
      %v2629 = vadd.f32 0.0, %v2628
      %v2630 = vpop.f32.mrf.mxu0
      %2631 = vmatprep.mubr.f32.mxu0 0.0
      %2632 = vmatmul.mubr.f32.gmra.mxu0 %v2418
      %v2633 = vpop.f32.mrf.mxu0
      %v2634 = vadd.f32 0.0, %v2633
      %v2635 = vpop.f32.mrf.mxu0
      %2636 = vmatprep.mubr.f32.mxu0 0.0
      %2637 = vmatmul.mubr.f32.gmra.mxu0 %v2421
      %v2638 = vpop.f32.mrf.mxu0
      %v2639 = vadd.f32 0.0, %v2638
      %v2640 = vpop.f32.mrf.mxu0
      %2641 = vmatprep.mubr.f32.mxu0 0.0
      %2642 = vmatmul.mubr.f32.gmra.mxu0 %v2424
      %v2643 = vpop.f32.mrf.mxu0
      %v2644 = vadd.f32 0.0, %v2643
      %v2645 = vpop.f32.mrf.mxu0
      %2646 = vmatprep.mubr.f32.mxu0 0.0
      %2647 = vmatmul.mubr.f32.gmra.mxu0 %v2427
      %v2648 = vpop.f32.mrf.mxu0
      %v2649 = vadd.f32 0.0, %v2648
      %v2650 = vpop.f32.mrf.mxu0
      %2651 = vmatprep.mubr.f32.mxu0 0.0
      %2652 = vmatmul.mubr.f32.gmra.mxu0 %v2430
      %v2653 = vpop.f32.mrf.mxu0
      %v2654 = vadd.f32 0.0, %v2653
      %v2655 = vpop.f32.mrf.mxu0
      %2656 = vdwg.mxu0
      %v2658 = vsel %vm2335, %v2283, 0
      %v2661 = vsel %vm2335, %v2284, 0
      %2663 = vmatprep.subr.mxu0 0.0
      %2664 = vmatpush1.msra.mxu0 0.0
      %2665 = vmatprep.subr.mxu0 0.0
      %2666 = vmatpush1.msra.mxu0 0.0
      %2667 = vmatprep.subr.mxu0 0.0
      %2668 = vmatpush1.msra.mxu0 0.0
      %2669 = vmatprep.subr.mxu0 0.0
      %2670 = vmatpush1.msra.mxu0 0.0
      %2671 = vmatprep.subr.mxu0 0.0
      %2672 = vmatpush1.msra.mxu0 %v1829
      %2673 = vmatprep.subr.mxu0 0.0
      %2674 = vmatpush1.msra.mxu0 %v1828
      %2675 = vmatprep.subr.mxu0 0.0
      %2676 = vmatpush1.msra.mxu0 %v1827
      %2677 = vmatprep.subr.mxu0 0.0
      %2678 = vmatpush1.msra.mxu0 %v1826
      %2679 = vmatprep.subr.mxu0 0.0
      %2680 = vmatpush1.msra.mxu0 %v1825
      %2681 = vmatprep.subr.mxu0 0.0
      %2682 = vmatpush1.msra.mxu0 %v1824
      %2683 = vmatprep.subr.mxu0 0.0
      %2684 = vmatpush1.msra.mxu0 %v1823
      %2685 = vmatprep.subr.mxu0 0.0
      %2686 = vmatpush1.msra.mxu0 %v1822
      %2687 = vmatprep.subr.mxu0 0.0
      %2688 = vmatpush1.msra.mxu0 %v1821
      %2689 = vmatprep.subr.mxu0 0.0
      %2690 = vmatpush1.msra.mxu0 %v1820
      %2691 = vmatprep.subr.mxu0 0.0
      %2692 = vmatpush1.msra.mxu0 %v1819
      %2693 = vmatprep.subr.mxu0 0.0
      %2694 = vmatpush1.msra.mxu0 %v1818
      %2695 = vmatprep.subr.mxu0 0.0
      %2696 = vmatpush2.msra.mxu0 0.0
      %2697 = vmatprep.subr.mxu0 0.0
      %2698 = vmatpush2.msra.mxu0 0.0
      %2699 = vmatprep.subr.mxu0 0.0
      %2700 = vmatpush2.msra.mxu0 0.0
      %2701 = vmatprep.subr.mxu0 0.0
      %2702 = vmatpush2.msra.mxu0 0.0
      %2703 = vmatprep.subr.mxu0 0.0
      %2704 = vmatpush2.msra.mxu0 0.0
      %2705 = vmatprep.subr.mxu0 0.0
      %2706 = vmatpush2.msra.mxu0 0.0
      %2707 = vmatprep.subr.mxu0 0.0
      %2708 = vmatpush2.msra.mxu0 0.0
      %2709 = vmatprep.subr.mxu0 0.0
      %2710 = vmatpush2.msra.mxu0 0.0
      %2711 = vmatprep.subr.mxu0 0.0
      %2712 = vmatpush2.msra.mxu0 0.0
      %2713 = vmatprep.subr.mxu0 0.0
      %2714 = vmatpush2.msra.mxu0 0.0
      %2715 = vmatprep.subr.mxu0 0.0
      %2716 = vmatpush2.msra.mxu0 0.0
      %2717 = vmatprep.subr.mxu0 0.0
      %2718 = vmatpush2.msra.mxu0 0.0
      %2719 = vmatprep.subr.mxu0 0.0
      %2720 = vmatpush2.msra.mxu0 0.0
      %2721 = vmatprep.subr.mxu0 0.0
      %2722 = vmatpush2.msra.mxu0 0.0
      %2723 = vmatprep.subr.mxu0 0.0
      %2724 = vmatpush2.msra.mxu0 0.0
      %2725 = vmatprep.subr.mxu0 0.0
      %2726 = vmatpush2.msra.mxu0 0.0
      %2727 = vmatprep.mubr.f32.mxu0 0.0
      %2728 = vmatmul.mubr.f32.gmra.mxu0 %v2658
      %v2729 = vpop.f32.mrf.mxu0
      %v2730 = vadd.f32 %v2499, %v2729
      %v2731 = vpop.f32.mrf.mxu0
      %2732 = vmatprep.mubr.f32.mxu0 0.0
      %2733 = vmatmul.mubr.f32.gmra.mxu0 %v2661
      %v2734 = vpop.f32.mrf.mxu0
      %v2735 = vadd.f32 %v2504, %v2734
      %v2736 = vpop.f32.mrf.mxu0
      %2737 = vmatprep.mubr.f32.mxu0 0.0
      %2738 = vmatmul.mubr.f32.gmra.mxu0 %v2337
      %v2739 = vpop.f32.mrf.mxu0
      %v2740 = vadd.f32 %v2509, %v2739
      %v2741 = vpop.f32.mrf.mxu0
      %2742 = vmatprep.mubr.f32.mxu0 0.0
      %2743 = vmatmul.mubr.f32.gmra.mxu0 %v2340
      %v2744 = vpop.f32.mrf.mxu0
      %v2745 = vadd.f32 %v2514, %v2744
      %v2746 = vpop.f32.mrf.mxu0
      %2747 = vmatprep.mubr.f32.mxu0 0.0
      %2748 = vmatmul.mubr.f32.gmra.mxu0 %v2343
      %v2749 = vpop.f32.mrf.mxu0
      %v2750 = vadd.f32 %v2519, %v2749
      %v2751 = vpop.f32.mrf.mxu0
      %2752 = vmatprep.mubr.f32.mxu0 0.0
      %2753 = vmatmul.mubr.f32.gmra.mxu0 %v2346
      %v2754 = vpop.f32.mrf.mxu0
      %v2755 = vadd.f32 %v2524, %v2754
      %v2756 = vpop.f32.mrf.mxu0
      %2757 = vmatprep.mubr.f32.mxu0 0.0
      %2758 = vmatmul.mubr.f32.gmra.mxu0 %v2349
      %v2759 = vpop.f32.mrf.mxu0
      %v2760 = vadd.f32 %v2529, %v2759
      %v2761 = vpop.f32.mrf.mxu0
      %2762 = vmatprep.mubr.f32.mxu0 0.0
      %2763 = vmatmul.mubr.f32.gmra.mxu0 %v2352
      %v2764 = vpop.f32.mrf.mxu0
      %v2765 = vadd.f32 %v2534, %v2764
      %v2766 = vpop.f32.mrf.mxu0
      %2767 = vmatprep.mubr.f32.mxu0 0.0
      %2768 = vmatmul.mubr.f32.gmra.mxu0 %v2355
      %v2769 = vpop.f32.mrf.mxu0
      %v2770 = vadd.f32 %v2539, %v2769
      %v2771 = vpop.f32.mrf.mxu0
      %2772 = vmatprep.mubr.f32.mxu0 0.0
      %2773 = vmatmul.mubr.f32.gmra.mxu0 %v2358
      %v2774 = vpop.f32.mrf.mxu0
      %v2775 = vadd.f32 %v2544, %v2774
      %v2776 = vpop.f32.mrf.mxu0
      %2777 = vmatprep.mubr.f32.mxu0 0.0
      %2778 = vmatmul.mubr.f32.gmra.mxu0 %v2361
      %v2779 = vpop.f32.mrf.mxu0
      %v2780 = vadd.f32 %v2549, %v2779
      %v2781 = vpop.f32.mrf.mxu0
      %2782 = vmatprep.mubr.f32.mxu0 0.0
      %2783 = vmatmul.mubr.f32.gmra.mxu0 %v2364
      %v2784 = vpop.f32.mrf.mxu0
      %v2785 = vadd.f32 %v2554, %v2784
      %v2786 = vpop.f32.mrf.mxu0
      %2787 = vmatprep.mubr.f32.mxu0 0.0
      %2788 = vmatmul.mubr.f32.gmra.mxu0 %v2367
      %v2789 = vpop.f32.mrf.mxu0
      %v2790 = vadd.f32 %v2559, %v2789
      %v2791 = vpop.f32.mrf.mxu0
      %2792 = vmatprep.mubr.f32.mxu0 0.0
      %2793 = vmatmul.mubr.f32.gmra.mxu0 %v2370
      %v2794 = vpop.f32.mrf.mxu0
      %v2795 = vadd.f32 %v2564, %v2794
      %v2796 = vpop.f32.mrf.mxu0
      %2797 = vmatprep.mubr.f32.mxu0 0.0
      %2798 = vmatmul.mubr.f32.gmra.mxu0 %v2373
      %v2799 = vpop.f32.mrf.mxu0
      %v2800 = vadd.f32 %v2569, %v2799
      %v2801 = vpop.f32.mrf.mxu0
      %2802 = vmatprep.mubr.f32.mxu0 0.0
      %2803 = vmatmul.mubr.f32.gmra.mxu0 %v2376
      %v2804 = vpop.f32.mrf.mxu0
      %v2805 = vadd.f32 %v2574, %v2804
      %v2806 = vpop.f32.mrf.mxu0
      %2807 = vmatprep.mubr.f32.mxu0 0.0
      %2808 = vmatmul.mubr.f32.gmra.mxu0 %v2379
      %v2809 = vpop.f32.mrf.mxu0
      %v2810 = vadd.f32 %v2579, %v2809
      %v2811 = vpop.f32.mrf.mxu0
      %2812 = vmatprep.mubr.f32.mxu0 0.0
      %2813 = vmatmul.mubr.f32.gmra.mxu0 %v2382
      %v2814 = vpop.f32.mrf.mxu0
      %v2815 = vadd.f32 %v2584, %v2814
      %v2816 = vpop.f32.mrf.mxu0
      %2817 = vmatprep.mubr.f32.mxu0 0.0
      %2818 = vmatmul.mubr.f32.gmra.mxu0 %v2385
      %v2819 = vpop.f32.mrf.mxu0
      %v2820 = vadd.f32 %v2589, %v2819
      %v2821 = vpop.f32.mrf.mxu0
      %2822 = vmatprep.mubr.f32.mxu0 0.0
      %2823 = vmatmul.mubr.f32.gmra.mxu0 %v2388
      %v2824 = vpop.f32.mrf.mxu0
      %v2825 = vadd.f32 %v2594, %v2824
      %v2826 = vpop.f32.mrf.mxu0
      %2827 = vmatprep.mubr.f32.mxu0 0.0
      %2828 = vmatmul.mubr.f32.gmra.mxu0 %v2391
      %v2829 = vpop.f32.mrf.mxu0
      %v2830 = vadd.f32 %v2599, %v2829
      %v2831 = vpop.f32.mrf.mxu0
      %2832 = vmatprep.mubr.f32.mxu0 0.0
      %2833 = vmatmul.mubr.f32.gmra.mxu0 %v2394
      %v2834 = vpop.f32.mrf.mxu0
      %v2835 = vadd.f32 %v2604, %v2834
      %v2836 = vpop.f32.mrf.mxu0
      %2837 = vmatprep.mubr.f32.mxu0 0.0
      %2838 = vmatmul.mubr.f32.gmra.mxu0 %v2397
      %v2839 = vpop.f32.mrf.mxu0
      %v2840 = vadd.f32 %v2609, %v2839
      %v2841 = vpop.f32.mrf.mxu0
      %2842 = vmatprep.mubr.f32.mxu0 0.0
      %2843 = vmatmul.mubr.f32.gmra.mxu0 %v2400
      %v2844 = vpop.f32.mrf.mxu0
      %v2845 = vadd.f32 %v2614, %v2844
      %v2846 = vpop.f32.mrf.mxu0
      %2847 = vmatprep.mubr.f32.mxu0 0.0
      %2848 = vmatmul.mubr.f32.gmra.mxu0 %v2403
      %v2849 = vpop.f32.mrf.mxu0
      %v2850 = vadd.f32 %v2619, %v2849
      %v2851 = vpop.f32.mrf.mxu0
      %2852 = vmatprep.mubr.f32.mxu0 0.0
      %2853 = vmatmul.mubr.f32.gmra.mxu0 %v2406
      %v2854 = vpop.f32.mrf.mxu0
      %v2855 = vadd.f32 %v2624, %v2854
      %v2856 = vpop.f32.mrf.mxu0
      %2857 = vmatprep.mubr.f32.mxu0 0.0
      %2858 = vmatmul.mubr.f32.gmra.mxu0 %v2409
      %v2859 = vpop.f32.mrf.mxu0
      %v2860 = vadd.f32 %v2629, %v2859
      %v2861 = vpop.f32.mrf.mxu0
      %2862 = vmatprep.mubr.f32.mxu0 0.0
      %2863 = vmatmul.mubr.f32.gmra.mxu0 %v2412
      %v2864 = vpop.f32.mrf.mxu0
      %v2865 = vadd.f32 %v2634, %v2864
      %v2866 = vpop.f32.mrf.mxu0
      %2867 = vmatprep.mubr.f32.mxu0 0.0
      %2868 = vmatmul.mubr.f32.gmra.mxu0 %v2415
      %v2869 = vpop.f32.mrf.mxu0
      %v2870 = vadd.f32 %v2639, %v2869
      %v2871 = vpop.f32.mrf.mxu0
      %2872 = vmatprep.mubr.f32.mxu0 0.0
      %2873 = vmatmul.mubr.f32.gmra.mxu0 %v2418
      %v2874 = vpop.f32.mrf.mxu0
      %v2875 = vadd.f32 %v2644, %v2874
      %v2876 = vpop.f32.mrf.mxu0
      %2877 = vmatprep.mubr.f32.mxu0 0.0
      %2878 = vmatmul.mubr.f32.gmra.mxu0 %v2421
      %v2879 = vpop.f32.mrf.mxu0
      %v2880 = vadd.f32 %v2649, %v2879
      %v2881 = vpop.f32.mrf.mxu0
      %2882 = vmatprep.mubr.f32.mxu0 0.0
      %2883 = vmatmul.mubr.f32.gmra.mxu0 %v2424
      %v2884 = vpop.f32.mrf.mxu0
      %v2885 = vadd.f32 %v2654, %v2884
      %v2886 = vpop.f32.mrf.mxu0
      %2887 = vdwg.mxu0
      %2890 = vrot.lane.b32.xlu0 %v1957, 32
      %v2891 = vpop.permute.xlu0 %2890
      %2892 = vrot.lane.b32.xlu0 %v1958, 32
      %v2893 = vpop.permute.xlu0 %2892
      %2898 = vrot.lane.b32.xlu0 %v1993, 64
      %v2899 = vpop.permute.xlu0 %2898
      %2900 = vrot.lane.b32.xlu0 %v1994, 64
      %v2901 = vpop.permute.xlu0 %2900
      %v2904 = vsel %vm1854, %v1921, %v2891
      %v2905 = vsel %vm1854, %v1922, %v2893
      %v2906 = vsel %vm333, %v2904, %v2899
      %v2907 = vsel %vm333, %v2905, %v2901
      %v2909 = vsel %vm2335, %v2906, 0
      %v2912 = vsel %vm2335, %v2907, 0
      %2914 = vmatprep.subr.mxu0 0.0
      %2915 = vmatpush1.msra.mxu0 0.0
      %2916 = vmatprep.subr.mxu0 0.0
      %2917 = vmatpush1.msra.mxu0 0.0
      %2918 = vmatprep.subr.mxu0 0.0
      %2919 = vmatpush1.msra.mxu0 0.0
      %2920 = vmatprep.subr.mxu0 0.0
      %2921 = vmatpush1.msra.mxu0 0.0
      %2922 = vmatprep.subr.mxu0 0.0
      %2923 = vmatpush1.msra.mxu0 %v1853
      %2924 = vmatprep.subr.mxu0 0.0
      %2925 = vmatpush1.msra.mxu0 %v1852
      %2926 = vmatprep.subr.mxu0 0.0
      %2927 = vmatpush1.msra.mxu0 %v1851
      %2928 = vmatprep.subr.mxu0 0.0
      %2929 = vmatpush1.msra.mxu0 %v1850
      %2930 = vmatprep.subr.mxu0 0.0
      %2931 = vmatpush1.msra.mxu0 %v1849
      %2932 = vmatprep.subr.mxu0 0.0
      %2933 = vmatpush1.msra.mxu0 %v1848
      %2934 = vmatprep.subr.mxu0 0.0
      %2935 = vmatpush1.msra.mxu0 %v1847
      %2936 = vmatprep.subr.mxu0 0.0
      %2937 = vmatpush1.msra.mxu0 %v1846
      %2938 = vmatprep.subr.mxu0 0.0
      %2939 = vmatpush1.msra.mxu0 %v1845
      %2940 = vmatprep.subr.mxu0 0.0
      %2941 = vmatpush1.msra.mxu0 %v1844
      %2942 = vmatprep.subr.mxu0 0.0
      %2943 = vmatpush1.msra.mxu0 %v1843
      %2944 = vmatprep.subr.mxu0 0.0
      %2945 = vmatpush1.msra.mxu0 %v1842
      %2946 = vmatprep.subr.mxu0 0.0
      %2947 = vmatpush2.msra.mxu0 0.0
      %2948 = vmatprep.subr.mxu0 0.0
      %2949 = vmatpush2.msra.mxu0 0.0
      %2950 = vmatprep.subr.mxu0 0.0
      %2951 = vmatpush2.msra.mxu0 0.0
      %2952 = vmatprep.subr.mxu0 0.0
      %2953 = vmatpush2.msra.mxu0 0.0
      %2954 = vmatprep.subr.mxu0 0.0
      %2955 = vmatpush2.msra.mxu0 0.0
      %2956 = vmatprep.subr.mxu0 0.0
      %2957 = vmatpush2.msra.mxu0 0.0
      %2958 = vmatprep.subr.mxu0 0.0
      %2959 = vmatpush2.msra.mxu0 0.0
      %2960 = vmatprep.subr.mxu0 0.0
      %2961 = vmatpush2.msra.mxu0 0.0
      %2962 = vmatprep.subr.mxu0 0.0
      %2963 = vmatpush2.msra.mxu0 0.0
      %2964 = vmatprep.subr.mxu0 0.0
      %2965 = vmatpush2.msra.mxu0 0.0
      %2966 = vmatprep.subr.mxu0 0.0
      %2967 = vmatpush2.msra.mxu0 0.0
      %2968 = vmatprep.subr.mxu0 0.0
      %2969 = vmatpush2.msra.mxu0 0.0
      %2970 = vmatprep.subr.mxu0 0.0
      %2971 = vmatpush2.msra.mxu0 0.0
      %2972 = vmatprep.subr.mxu0 0.0
      %2973 = vmatpush2.msra.mxu0 0.0
      %2974 = vmatprep.subr.mxu0 0.0
      %2975 = vmatpush2.msra.mxu0 0.0
      %2976 = vmatprep.subr.mxu0 0.0
      %2977 = vmatpush2.msra.mxu0 0.0
      %2978 = vmatprep.mubr.f32.mxu0 0.0
      %2979 = vmatmul.mubr.f32.gmra.mxu0 %v2343
      %v2980 = vpop.f32.mrf.mxu0
      %v2981 = vadd.f32 0.0, %v2980
      %v2982 = vpop.f32.mrf.mxu0
      %2983 = vmatprep.mubr.f32.mxu0 0.0
      %2984 = vmatmul.mubr.f32.gmra.mxu0 %v2346
      %v2985 = vpop.f32.mrf.mxu0
      %v2986 = vadd.f32 0.0, %v2985
      %v2987 = vpop.f32.mrf.mxu0
      %2988 = vmatprep.mubr.f32.mxu0 0.0
      %2989 = vmatmul.mubr.f32.gmra.mxu0 %v2349
      %v2990 = vpop.f32.mrf.mxu0
      %v2991 = vadd.f32 0.0, %v2990
      %v2992 = vpop.f32.mrf.mxu0
      %2993 = vmatprep.mubr.f32.mxu0 0.0
      %2994 = vmatmul.mubr.f32.gmra.mxu0 %v2352
      %v2995 = vpop.f32.mrf.mxu0
      %v2996 = vadd.f32 0.0, %v2995
      %v2997 = vpop.f32.mrf.mxu0
      %2998 = vmatprep.mubr.f32.mxu0 0.0
      %2999 = vmatmul.mubr.f32.gmra.mxu0 %v2355
      %v3000 = vpop.f32.mrf.mxu0
      %v3001 = vadd.f32 0.0, %v3000
      %v3002 = vpop.f32.mrf.mxu0
      %3003 = vmatprep.mubr.f32.mxu0 0.0
      %3004 = vmatmul.mubr.f32.gmra.mxu0 %v2358
      %v3005 = vpop.f32.mrf.mxu0
      %v3006 = vadd.f32 0.0, %v3005
      %v3007 = vpop.f32.mrf.mxu0
      %3008 = vmatprep.mubr.f32.mxu0 0.0
      %3009 = vmatmul.mubr.f32.gmra.mxu0 %v2361
      %v3010 = vpop.f32.mrf.mxu0
      %v3011 = vadd.f32 0.0, %v3010
      %v3012 = vpop.f32.mrf.mxu0
      %3013 = vmatprep.mubr.f32.mxu0 0.0
      %3014 = vmatmul.mubr.f32.gmra.mxu0 %v2364
      %v3015 = vpop.f32.mrf.mxu0
      %v3016 = vadd.f32 0.0, %v3015
      %v3017 = vpop.f32.mrf.mxu0
      %3018 = vmatprep.mubr.f32.mxu0 0.0
      %3019 = vmatmul.mubr.f32.gmra.mxu0 %v2367
      %v3020 = vpop.f32.mrf.mxu0
      %v3021 = vadd.f32 0.0, %v3020
      %v3022 = vpop.f32.mrf.mxu0
      %3023 = vmatprep.mubr.f32.mxu0 0.0
      %3024 = vmatmul.mubr.f32.gmra.mxu0 %v2370
      %v3025 = vpop.f32.mrf.mxu0
      %v3026 = vadd.f32 0.0, %v3025
      %v3027 = vpop.f32.mrf.mxu0
      %3028 = vmatprep.mubr.f32.mxu0 0.0
      %3029 = vmatmul.mubr.f32.gmra.mxu0 %v2373
      %v3030 = vpop.f32.mrf.mxu0
      %v3031 = vadd.f32 0.0, %v3030
      %v3032 = vpop.f32.mrf.mxu0
      %3033 = vmatprep.mubr.f32.mxu0 0.0
      %3034 = vmatmul.mubr.f32.gmra.mxu0 %v2376
      %v3035 = vpop.f32.mrf.mxu0
      %v3036 = vadd.f32 0.0, %v3035
      %v3037 = vpop.f32.mrf.mxu0
      %3038 = vmatprep.mubr.f32.mxu0 0.0
      %3039 = vmatmul.mubr.f32.gmra.mxu0 %v2379
      %v3040 = vpop.f32.mrf.mxu0
      %v3041 = vadd.f32 0.0, %v3040
      %v3042 = vpop.f32.mrf.mxu0
      %3043 = vmatprep.mubr.f32.mxu0 0.0
      %3044 = vmatmul.mubr.f32.gmra.mxu0 %v2382
      %v3045 = vpop.f32.mrf.mxu0
      %v3046 = vadd.f32 0.0, %v3045
      %v3047 = vpop.f32.mrf.mxu0
      %3048 = vmatprep.mubr.f32.mxu0 0.0
      %3049 = vmatmul.mubr.f32.gmra.mxu0 %v2385
      %v3050 = vpop.f32.mrf.mxu0
      %v3051 = vadd.f32 0.0, %v3050
      %v3052 = vpop.f32.mrf.mxu0
      %3053 = vmatprep.mubr.f32.mxu0 0.0
      %3054 = vmatmul.mubr.f32.gmra.mxu0 %v2388
      %v3055 = vpop.f32.mrf.mxu0
      %v3056 = vadd.f32 0.0, %v3055
      %v3057 = vpop.f32.mrf.mxu0
      %3058 = vmatprep.mubr.f32.mxu0 0.0
      %3059 = vmatmul.mubr.f32.gmra.mxu0 %v2391
      %v3060 = vpop.f32.mrf.mxu0
      %v3061 = vadd.f32 0.0, %v3060
      %v3062 = vpop.f32.mrf.mxu0
      %3063 = vmatprep.mubr.f32.mxu0 0.0
      %3064 = vmatmul.mubr.f32.gmra.mxu0 %v2394
      %v3065 = vpop.f32.mrf.mxu0
      %v3066 = vadd.f32 0.0, %v3065
      %v3067 = vpop.f32.mrf.mxu0
      %3068 = vmatprep.mubr.f32.mxu0 0.0
      %3069 = vmatmul.mubr.f32.gmra.mxu0 %v2397
      %v3070 = vpop.f32.mrf.mxu0
      %v3071 = vadd.f32 0.0, %v3070
      %v3072 = vpop.f32.mrf.mxu0
      %3073 = vmatprep.mubr.f32.mxu0 0.0
      %3074 = vmatmul.mubr.f32.gmra.mxu0 %v2400
      %v3075 = vpop.f32.mrf.mxu0
      %v3076 = vadd.f32 0.0, %v3075
      %v3077 = vpop.f32.mrf.mxu0
      %3078 = vmatprep.mubr.f32.mxu0 0.0
      %3079 = vmatmul.mubr.f32.gmra.mxu0 %v2403
      %v3080 = vpop.f32.mrf.mxu0
      %v3081 = vadd.f32 0.0, %v3080
      %v3082 = vpop.f32.mrf.mxu0
      %3083 = vmatprep.mubr.f32.mxu0 0.0
      %3084 = vmatmul.mubr.f32.gmra.mxu0 %v2406
      %v3085 = vpop.f32.mrf.mxu0
      %v3086 = vadd.f32 0.0, %v3085
      %v3087 = vpop.f32.mrf.mxu0
      %3088 = vmatprep.mubr.f32.mxu0 0.0
      %3089 = vmatmul.mubr.f32.gmra.mxu0 %v2409
      %v3090 = vpop.f32.mrf.mxu0
      %v3091 = vadd.f32 0.0, %v3090
      %v3092 = vpop.f32.mrf.mxu0
      %3093 = vmatprep.mubr.f32.mxu0 0.0
      %3094 = vmatmul.mubr.f32.gmra.mxu0 %v2412
      %v3095 = vpop.f32.mrf.mxu0
      %v3096 = vadd.f32 0.0, %v3095
      %v3097 = vpop.f32.mrf.mxu0
      %3098 = vmatprep.mubr.f32.mxu0 0.0
      %3099 = vmatmul.mubr.f32.gmra.mxu0 %v2415
      %v3100 = vpop.f32.mrf.mxu0
      %v3101 = vadd.f32 0.0, %v3100
      %v3102 = vpop.f32.mrf.mxu0
      %3103 = vmatprep.mubr.f32.mxu0 0.0
      %3104 = vmatmul.mubr.f32.gmra.mxu0 %v2418
      %v3105 = vpop.f32.mrf.mxu0
      %v3106 = vadd.f32 0.0, %v3105
      %v3107 = vpop.f32.mrf.mxu0
      %3108 = vmatprep.mubr.f32.mxu0 0.0
      %3109 = vmatmul.mubr.f32.gmra.mxu0 %v2421
      %v3110 = vpop.f32.mrf.mxu0
      %v3111 = vadd.f32 0.0, %v3110
      %v3112 = vpop.f32.mrf.mxu0
      %3113 = vmatprep.mubr.f32.mxu0 0.0
      %3114 = vmatmul.mubr.f32.gmra.mxu0 %v2424
      %v3115 = vpop.f32.mrf.mxu0
      %v3116 = vadd.f32 0.0, %v3115
      %v3117 = vpop.f32.mrf.mxu0
      %3118 = vmatprep.mubr.f32.mxu0 0.0
      %3119 = vmatmul.mubr.f32.gmra.mxu0 %v2427
      %v3120 = vpop.f32.mrf.mxu0
      %v3121 = vadd.f32 0.0, %v3120
      %v3122 = vpop.f32.mrf.mxu0
      %3123 = vmatprep.mubr.f32.mxu0 0.0
      %3124 = vmatmul.mubr.f32.gmra.mxu0 %v2430
      %v3125 = vpop.f32.mrf.mxu0
      %v3126 = vadd.f32 0.0, %v3125
      %v3127 = vpop.f32.mrf.mxu0
      %3128 = vmatprep.mubr.f32.mxu0 0.0
      %3129 = vmatmul.mubr.f32.gmra.mxu0 %v2909
      %v3130 = vpop.f32.mrf.mxu0
      %v3131 = vadd.f32 0.0, %v3130
      %v3132 = vpop.f32.mrf.mxu0
      %3133 = vmatprep.mubr.f32.mxu0 0.0
      %3134 = vmatmul.mubr.f32.gmra.mxu0 %v2912
      %v3135 = vpop.f32.mrf.mxu0
      %v3136 = vadd.f32 0.0, %v3135
      %v3137 = vpop.f32.mrf.mxu0
      %3138 = vdwg.mxu0
      %v3139 = vadd.f32 %v2730, %v2981
      %v3140 = vadd.f32 %v2735, %v2986
      %v3141 = vadd.f32 %v2740, %v2991
      %v3142 = vadd.f32 %v2745, %v2996
      %v3143 = vadd.f32 %v2750, %v3001
      %v3144 = vadd.f32 %v2755, %v3006
      %v3145 = vadd.f32 %v2760, %v3011
      %v3146 = vadd.f32 %v2765, %v3016
      %v3147 = vadd.f32 %v2770, %v3021
      %v3148 = vadd.f32 %v2775, %v3026
      %v3149 = vadd.f32 %v2780, %v3031
      %v3150 = vadd.f32 %v2785, %v3036
      %v3151 = vadd.f32 %v2790, %v3041
      %v3152 = vadd.f32 %v2795, %v3046
      %v3153 = vadd.f32 %v2800, %v3051
      %v3154 = vadd.f32 %v2805, %v3056
      %v3155 = vadd.f32 %v2810, %v3061
      %v3156 = vadd.f32 %v2815, %v3066
      %v3157 = vadd.f32 %v2820, %v3071
      %v3158 = vadd.f32 %v2825, %v3076
      %v3159 = vadd.f32 %v2830, %v3081
      %v3160 = vadd.f32 %v2835, %v3086
      %v3161 = vadd.f32 %v2840, %v3091
      %v3162 = vadd.f32 %v2845, %v3096
      %v3163 = vadd.f32 %v2850, %v3101
      %v3164 = vadd.f32 %v2855, %v3106
      %v3165 = vadd.f32 %v2860, %v3111
      %v3166 = vadd.f32 %v2865, %v3116
      %v3167 = vadd.f32 %v2870, %v3121
      %v3168 = vadd.f32 %v2875, %v3126
      %v3169 = vadd.f32 %v2880, %v3131
      %v3170 = vadd.f32 %v2885, %v3136
      %v3171 = vmax.f32 %v3139, 0.0
      %v3172 = vmax.f32 %v3140, 0.0
      %v3173 = vmax.f32 %v3141, 0.0
      %v3174 = vmax.f32 %v3142, 0.0
      %v3175 = vmax.f32 %v3143, 0.0
      %v3176 = vmax.f32 %v3144, 0.0
      %v3177 = vmax.f32 %v3145, 0.0
      %v3178 = vmax.f32 %v3146, 0.0
      %v3179 = vmax.f32 %v3147, 0.0
      %v3180 = vmax.f32 %v3148, 0.0
      %v3181 = vmax.f32 %v3149, 0.0
      %v3182 = vmax.f32 %v3150, 0.0
      %v3183 = vmax.f32 %v3151, 0.0
      %v3184 = vmax.f32 %v3152, 0.0
      %v3185 = vmax.f32 %v3153, 0.0
      %v3186 = vmax.f32 %v3154, 0.0
      %v3187 = vmax.f32 %v3155, 0.0
      %v3188 = vmax.f32 %v3156, 0.0
      %v3189 = vmax.f32 %v3157, 0.0
      %v3190 = vmax.f32 %v3158, 0.0
      %v3191 = vmax.f32 %v3159, 0.0
      %v3192 = vmax.f32 %v3160, 0.0
      %v3193 = vmax.f32 %v3161, 0.0
      %v3194 = vmax.f32 %v3162, 0.0
      %v3195 = vmax.f32 %v3163, 0.0
      %v3196 = vmax.f32 %v3164, 0.0
      %v3197 = vmax.f32 %v3165, 0.0
      %v3198 = vmax.f32 %v3166, 0.0
      %v3199 = vmax.f32 %v3167, 0.0
      %v3200 = vmax.f32 %v3168, 0.0
      %v3201 = vmax.f32 %v3169, 0.0
      %v3202 = vmax.f32 %v3170, 0.0
      %v3203 = vld [vmem:[%s4] sm:$0xff]
      %v3205 = vsel %vm841, %v3171, 0
      %v3208 = vsel %vm841, %v3172, 0
      %v3211 = vsel %vm841, %v3173, 0
      %v3214 = vsel %vm841, %v3174, 0
      %v3217 = vsel %vm841, %v3175, 0
      %v3220 = vsel %vm841, %v3176, 0
      %v3223 = vsel %vm841, %v3177, 0
      %v3226 = vsel %vm841, %v3178, 0
      %v3229 = vsel %vm841, %v3179, 0
      %v3232 = vsel %vm841, %v3180, 0
      %v3235 = vsel %vm841, %v3181, 0
      %v3238 = vsel %vm841, %v3182, 0
      %v3241 = vsel %vm841, %v3183, 0
      %v3244 = vsel %vm841, %v3184, 0
      %v3247 = vsel %vm841, %v3185, 0
      %v3250 = vsel %vm841, %v3186, 0
      %v3253 = vsel %vm841, %v3187, 0
      %v3256 = vsel %vm841, %v3188, 0
      %v3259 = vsel %vm841, %v3189, 0
      %v3262 = vsel %vm841, %v3190, 0
      %v3265 = vsel %vm841, %v3191, 0
      %v3268 = vsel %vm841, %v3192, 0
      %v3271 = vsel %vm841, %v3193, 0
      %v3274 = vsel %vm841, %v3194, 0
      %v3277 = vsel %vm841, %v3195, 0
      %v3280 = vsel %vm841, %v3196, 0
      %v3283 = vsel %vm841, %v3197, 0
      %v3286 = vsel %vm841, %v3198, 0
      %v3289 = vsel %vm841, %v3199, 0
      %v3292 = vsel %vm841, %v3200, 0
      %v3295 = vsel %vm841, %v3201, 0
      %v3298 = vsel %vm841, %v3202, 0
      %3300 = vmatprep.subr.mxu0 0.0
      %3301 = vmatpush1.msra.mxu0 0.0
      %3302 = vmatprep.subr.mxu0 0.0
      %3303 = vmatpush1.msra.mxu0 0.0
      %3304 = vmatprep.subr.mxu0 0.0
      %3305 = vmatpush1.msra.mxu0 0.0
      %3306 = vmatprep.subr.mxu0 0.0
      %3307 = vmatpush1.msra.mxu0 0.0
      %3308 = vmatprep.subr.mxu0 0.0
      %3309 = vmatpush1.msra.mxu0 0.0
      %3310 = vmatprep.subr.mxu0 0.0
      %3311 = vmatpush1.msra.mxu0 0.0
      %3312 = vmatprep.subr.mxu0 0.0
      %3313 = vmatpush1.msra.mxu0 0.0
      %3314 = vmatprep.subr.mxu0 0.0
      %3315 = vmatpush1.msra.mxu0 0.0
      %3316 = vmatprep.subr.mxu0 0.0
      %3317 = vmatpush1.msra.mxu0 0.0
      %3318 = vmatprep.subr.mxu0 0.0
      %3319 = vmatpush1.msra.mxu0 0.0
      %3320 = vmatprep.subr.mxu0 0.0
      %3321 = vmatpush1.msra.mxu0 0.0
      %3322 = vmatprep.subr.mxu0 0.0
      %3323 = vmatpush1.msra.mxu0 0.0
      %3324 = vmatprep.subr.mxu0 0.0
      %3325 = vmatpush1.msra.mxu0 0.0
      %3326 = vmatprep.subr.mxu0 0.0
      %3327 = vmatpush1.msra.mxu0 0.0
      %3328 = vmatprep.subr.mxu0 0.0
      %3329 = vmatpush1.msra.mxu0 0.0
      %3330 = vmatprep.subr.mxu0 0.0
      %3331 = vmatpush1.msra.mxu0 %v3203
      %3332 = vmatprep.subr.mxu0 0.0
      %3333 = vmatpush2.msra.mxu0 0.0
      %3334 = vmatprep.subr.mxu0 0.0
      %3335 = vmatpush2.msra.mxu0 0.0
      %3336 = vmatprep.subr.mxu0 0.0
      %3337 = vmatpush2.msra.mxu0 0.0
      %3338 = vmatprep.subr.mxu0 0.0
      %3339 = vmatpush2.msra.mxu0 0.0
      %3340 = vmatprep.subr.mxu0 0.0
      %3341 = vmatpush2.msra.mxu0 0.0
      %3342 = vmatprep.subr.mxu0 0.0
      %3343 = vmatpush2.msra.mxu0 0.0
      %3344 = vmatprep.subr.mxu0 0.0
      %3345 = vmatpush2.msra.mxu0 0.0
      %3346 = vmatprep.subr.mxu0 0.0
      %3347 = vmatpush2.msra.mxu0 0.0
      %3348 = vmatprep.subr.mxu0 0.0
      %3349 = vmatpush2.msra.mxu0 0.0
      %3350 = vmatprep.subr.mxu0 0.0
      %3351 = vmatpush2.msra.mxu0 0.0
      %3352 = vmatprep.subr.mxu0 0.0
      %3353 = vmatpush2.msra.mxu0 0.0
      %3354 = vmatprep.subr.mxu0 0.0
      %3355 = vmatpush2.msra.mxu0 0.0
      %3356 = vmatprep.subr.mxu0 0.0
      %3357 = vmatpush2.msra.mxu0 0.0
      %3358 = vmatprep.subr.mxu0 0.0
      %3359 = vmatpush2.msra.mxu0 0.0
      %3360 = vmatprep.subr.mxu0 0.0
      %3361 = vmatpush2.msra.mxu0 0.0
      %3362 = vmatprep.subr.mxu0 0.0
      %3363 = vmatpush2.msra.mxu0 0.0
      %3364 = vmatprep.mubr.f32.mxu0 0.0
      %3365 = vmatmul.mubr.f32.gmra.mxu0 %v3205
      %v3366 = vpop.f32.mrf.mxu0
      %v3367 = vadd.f32 0.0, %v3366
      %v3368 = vpop.f32.mrf.mxu0
      %3369 = vmatprep.mubr.f32.mxu0 0.0
      %3370 = vmatmul.mubr.f32.gmra.mxu0 %v3208
      %v3371 = vpop.f32.mrf.mxu0
      %v3372 = vadd.f32 0.0, %v3371
      %v3373 = vpop.f32.mrf.mxu0
      %3374 = vmatprep.mubr.f32.mxu0 0.0
      %3375 = vmatmul.mubr.f32.gmra.mxu0 %v3211
      %v3376 = vpop.f32.mrf.mxu0
      %v3377 = vadd.f32 0.0, %v3376
      %v3378 = vpop.f32.mrf.mxu0
      %3379 = vmatprep.mubr.f32.mxu0 0.0
      %3380 = vmatmul.mubr.f32.gmra.mxu0 %v3214
      %v3381 = vpop.f32.mrf.mxu0
      %v3382 = vadd.f32 0.0, %v3381
      %v3383 = vpop.f32.mrf.mxu0
      %3384 = vmatprep.mubr.f32.mxu0 0.0
      %3385 = vmatmul.mubr.f32.gmra.mxu0 %v3217
      %v3386 = vpop.f32.mrf.mxu0
      %v3387 = vadd.f32 0.0, %v3386
      %v3388 = vpop.f32.mrf.mxu0
      %3389 = vmatprep.mubr.f32.mxu0 0.0
      %3390 = vmatmul.mubr.f32.gmra.mxu0 %v3220
      %v3391 = vpop.f32.mrf.mxu0
      %v3392 = vadd.f32 0.0, %v3391
      %v3393 = vpop.f32.mrf.mxu0
      %3394 = vmatprep.mubr.f32.mxu0 0.0
      %3395 = vmatmul.mubr.f32.gmra.mxu0 %v3223
      %v3396 = vpop.f32.mrf.mxu0
      %v3397 = vadd.f32 0.0, %v3396
      %v3398 = vpop.f32.mrf.mxu0
      %3399 = vmatprep.mubr.f32.mxu0 0.0
      %3400 = vmatmul.mubr.f32.gmra.mxu0 %v3226
      %v3401 = vpop.f32.mrf.mxu0
      %v3402 = vadd.f32 0.0, %v3401
      %v3403 = vpop.f32.mrf.mxu0
      %3404 = vmatprep.mubr.f32.mxu0 0.0
      %3405 = vmatmul.mubr.f32.gmra.mxu0 %v3229
      %v3406 = vpop.f32.mrf.mxu0
      %v3407 = vadd.f32 0.0, %v3406
      %v3408 = vpop.f32.mrf.mxu0
      %3409 = vmatprep.mubr.f32.mxu0 0.0
      %3410 = vmatmul.mubr.f32.gmra.mxu0 %v3232
      %v3411 = vpop.f32.mrf.mxu0
      %v3412 = vadd.f32 0.0, %v3411
      %v3413 = vpop.f32.mrf.mxu0
      %3414 = vmatprep.mubr.f32.mxu0 0.0
      %3415 = vmatmul.mubr.f32.gmra.mxu0 %v3235
      %v3416 = vpop.f32.mrf.mxu0
      %v3417 = vadd.f32 0.0, %v3416
      %v3418 = vpop.f32.mrf.mxu0
      %3419 = vmatprep.mubr.f32.mxu0 0.0
      %3420 = vmatmul.mubr.f32.gmra.mxu0 %v3238
      %v3421 = vpop.f32.mrf.mxu0
      %v3422 = vadd.f32 0.0, %v3421
      %v3423 = vpop.f32.mrf.mxu0
      %3424 = vmatprep.mubr.f32.mxu0 0.0
      %3425 = vmatmul.mubr.f32.gmra.mxu0 %v3241
      %v3426 = vpop.f32.mrf.mxu0
      %v3427 = vadd.f32 0.0, %v3426
      %v3428 = vpop.f32.mrf.mxu0
      %3429 = vmatprep.mubr.f32.mxu0 0.0
      %3430 = vmatmul.mubr.f32.gmra.mxu0 %v3244
      %v3431 = vpop.f32.mrf.mxu0
      %v3432 = vadd.f32 0.0, %v3431
      %v3433 = vpop.f32.mrf.mxu0
      %3434 = vmatprep.mubr.f32.mxu0 0.0
      %3435 = vmatmul.mubr.f32.gmra.mxu0 %v3247
      %v3436 = vpop.f32.mrf.mxu0
      %v3437 = vadd.f32 0.0, %v3436
      %v3438 = vpop.f32.mrf.mxu0
      %3439 = vmatprep.mubr.f32.mxu0 0.0
      %3440 = vmatmul.mubr.f32.gmra.mxu0 %v3250
      %v3441 = vpop.f32.mrf.mxu0
      %v3442 = vadd.f32 0.0, %v3441
      %v3443 = vpop.f32.mrf.mxu0
      %3444 = vmatprep.mubr.f32.mxu0 0.0
      %3445 = vmatmul.mubr.f32.gmra.mxu0 %v3253
      %v3446 = vpop.f32.mrf.mxu0
      %v3447 = vadd.f32 0.0, %v3446
      %v3448 = vpop.f32.mrf.mxu0
      %3449 = vmatprep.mubr.f32.mxu0 0.0
      %3450 = vmatmul.mubr.f32.gmra.mxu0 %v3256
      %v3451 = vpop.f32.mrf.mxu0
      %v3452 = vadd.f32 0.0, %v3451
      %v3453 = vpop.f32.mrf.mxu0
      %3454 = vmatprep.mubr.f32.mxu0 0.0
      %3455 = vmatmul.mubr.f32.gmra.mxu0 %v3259
      %v3456 = vpop.f32.mrf.mxu0
      %v3457 = vadd.f32 0.0, %v3456
      %v3458 = vpop.f32.mrf.mxu0
      %3459 = vmatprep.mubr.f32.mxu0 0.0
      %3460 = vmatmul.mubr.f32.gmra.mxu0 %v3262
      %v3461 = vpop.f32.mrf.mxu0
      %v3462 = vadd.f32 0.0, %v3461
      %v3463 = vpop.f32.mrf.mxu0
      %3464 = vmatprep.mubr.f32.mxu0 0.0
      %3465 = vmatmul.mubr.f32.gmra.mxu0 %v3265
      %v3466 = vpop.f32.mrf.mxu0
      %v3467 = vadd.f32 0.0, %v3466
      %v3468 = vpop.f32.mrf.mxu0
      %3469 = vmatprep.mubr.f32.mxu0 0.0
      %3470 = vmatmul.mubr.f32.gmra.mxu0 %v3268
      %v3471 = vpop.f32.mrf.mxu0
      %v3472 = vadd.f32 0.0, %v3471
      %v3473 = vpop.f32.mrf.mxu0
      %3474 = vmatprep.mubr.f32.mxu0 0.0
      %3475 = vmatmul.mubr.f32.gmra.mxu0 %v3271
      %v3476 = vpop.f32.mrf.mxu0
      %v3477 = vadd.f32 0.0, %v3476
      %v3478 = vpop.f32.mrf.mxu0
      %3479 = vmatprep.mubr.f32.mxu0 0.0
      %3480 = vmatmul.mubr.f32.gmra.mxu0 %v3274
      %v3481 = vpop.f32.mrf.mxu0
      %v3482 = vadd.f32 0.0, %v3481
      %v3483 = vpop.f32.mrf.mxu0
      %3484 = vmatprep.mubr.f32.mxu0 0.0
      %3485 = vmatmul.mubr.f32.gmra.mxu0 %v3277
      %v3486 = vpop.f32.mrf.mxu0
      %v3487 = vadd.f32 0.0, %v3486
      %v3488 = vpop.f32.mrf.mxu0
      %3489 = vmatprep.mubr.f32.mxu0 0.0
      %3490 = vmatmul.mubr.f32.gmra.mxu0 %v3280
      %v3491 = vpop.f32.mrf.mxu0
      %v3492 = vadd.f32 0.0, %v3491
      %v3493 = vpop.f32.mrf.mxu0
      %3494 = vmatprep.mubr.f32.mxu0 0.0
      %3495 = vmatmul.mubr.f32.gmra.mxu0 %v3283
      %v3496 = vpop.f32.mrf.mxu0
      %v3497 = vadd.f32 0.0, %v3496
      %v3498 = vpop.f32.mrf.mxu0
      %3499 = vmatprep.mubr.f32.mxu0 0.0
      %3500 = vmatmul.mubr.f32.gmra.mxu0 %v3286
      %v3501 = vpop.f32.mrf.mxu0
      %v3502 = vadd.f32 0.0, %v3501
      %v3503 = vpop.f32.mrf.mxu0
      %3504 = vmatprep.mubr.f32.mxu0 0.0
      %3505 = vmatmul.mubr.f32.gmra.mxu0 %v3289
      %v3506 = vpop.f32.mrf.mxu0
      %v3507 = vadd.f32 0.0, %v3506
      %v3508 = vpop.f32.mrf.mxu0
      %3509 = vmatprep.mubr.f32.mxu0 0.0
      %3510 = vmatmul.mubr.f32.gmra.mxu0 %v3292
      %v3511 = vpop.f32.mrf.mxu0
      %v3512 = vadd.f32 0.0, %v3511
      %v3513 = vpop.f32.mrf.mxu0
      %3514 = vmatprep.mubr.f32.mxu0 0.0
      %3515 = vmatmul.mubr.f32.gmra.mxu0 %v3295
      %v3516 = vpop.f32.mrf.mxu0
      %v3517 = vadd.f32 0.0, %v3516
      %v3518 = vpop.f32.mrf.mxu0
      %3519 = vmatprep.mubr.f32.mxu0 0.0
      %3520 = vmatmul.mubr.f32.gmra.mxu0 %v3298
      %v3521 = vpop.f32.mrf.mxu0
      %v3522 = vadd.f32 0.0, %v3521
      %v3523 = vpop.f32.mrf.mxu0
      %3524 = vdwg.mxu0
      %v3525 = vadd.f32 %v1754, %v3367
      %v3526 = vadd.f32 %v1755, %v3372
      %v3527 = vadd.f32 %v1756, %v3377
      %v3528 = vadd.f32 %v1757, %v3382
      %v3529 = vadd.f32 %v1758, %v3387
      %v3530 = vadd.f32 %v1759, %v3392
      %v3531 = vadd.f32 %v1760, %v3397
      %v3532 = vadd.f32 %v1761, %v3402
      %v3533 = vadd.f32 %v1762, %v3407
      %v3534 = vadd.f32 %v1763, %v3412
      %v3535 = vadd.f32 %v1764, %v3417
      %v3536 = vadd.f32 %v1765, %v3422
      %v3537 = vadd.f32 %v1766, %v3427
      %v3538 = vadd.f32 %v1767, %v3432
      %v3539 = vadd.f32 %v1768, %v3437
      %v3540 = vadd.f32 %v1769, %v3442
      %v3541 = vadd.f32 %v1770, %v3447
      %v3542 = vadd.f32 %v1771, %v3452
      %v3543 = vadd.f32 %v1772, %v3457
      %v3544 = vadd.f32 %v1773, %v3462
      %v3545 = vadd.f32 %v1774, %v3467
      %v3546 = vadd.f32 %v1775, %v3472
      %v3547 = vadd.f32 %v1776, %v3477
      %v3548 = vadd.f32 %v1777, %v3482
      %v3549 = vadd.f32 %v1778, %v3487
      %v3550 = vadd.f32 %v1779, %v3492
      %v3551 = vadd.f32 %v1780, %v3497
      %v3552 = vadd.f32 %v1781, %v3502
      %v3553 = vadd.f32 %v1782, %v3507
      %v3554 = vadd.f32 %v1783, %v3512
      %v3555 = vadd.f32 %v1784, %v3517
      %v3556 = vadd.f32 %v1785, %v3522
      %v3557 = vmax.f32 %v3525, 0.0
      %v3558 = vmax.f32 %v3526, 0.0
      %v3559 = vmax.f32 %v3527, 0.0
      %v3560 = vmax.f32 %v3528, 0.0
      %v3561 = vmax.f32 %v3529, 0.0
      %v3562 = vmax.f32 %v3530, 0.0
      %v3563 = vmax.f32 %v3531, 0.0
      %v3564 = vmax.f32 %v3532, 0.0
      %v3565 = vmax.f32 %v3533, 0.0
      %v3566 = vmax.f32 %v3534, 0.0
      %v3567 = vmax.f32 %v3535, 0.0
      %v3568 = vmax.f32 %v3536, 0.0
      %v3569 = vmax.f32 %v3537, 0.0
      %v3570 = vmax.f32 %v3538, 0.0
      %v3571 = vmax.f32 %v3539, 0.0
      %v3572 = vmax.f32 %v3540, 0.0
      %v3573 = vmax.f32 %v3541, 0.0
      %v3574 = vmax.f32 %v3542, 0.0
      %v3575 = vmax.f32 %v3543, 0.0
      %v3576 = vmax.f32 %v3544, 0.0
      %v3577 = vmax.f32 %v3545, 0.0
      %v3578 = vmax.f32 %v3546, 0.0
      %v3579 = vmax.f32 %v3547, 0.0
      %v3580 = vmax.f32 %v3548, 0.0
      %v3581 = vmax.f32 %v3549, 0.0
      %v3582 = vmax.f32 %v3550, 0.0
      %v3583 = vmax.f32 %v3551, 0.0
      %v3584 = vmax.f32 %v3552, 0.0
      %v3585 = vmax.f32 %v3553, 0.0
      %v3586 = vmax.f32 %v3554, 0.0
      %v3587 = vmax.f32 %v3555, 0.0
      %v3588 = vmax.f32 %v3556, 0.0
      %s3589 = scalar_lea.vmem %s3, 288
      %v3590 = vld [vmem:[%s3589] sm:$0xff]
      %v3591 = vld [vmem:[%s3589 + $0x8] sm:$0xff]
      %v3592 = vld [vmem:[%s3589 + $0x10] sm:$0xff]
      %v3593 = vld [vmem:[%s3589 + $0x18] sm:$0xff]
      %v3594 = vld [vmem:[%s3589 + $0x20] sm:$0xff]
      %v3595 = vld [vmem:[%s3589 + $0x28] sm:$0xff]
      %v3596 = vld [vmem:[%s3589 + $0x30] sm:$0xff]
      %v3597 = vld [vmem:[%s3589 + $0x38] sm:$0xff]
      %v3598 = vld [vmem:[%s3589 + $0x40] sm:$0xff]
      %v3599 = vld [vmem:[%s3589 + $0x48] sm:$0xff]
      %v3600 = vld [vmem:[%s3589 + $0x50] sm:$0xff]
      %v3601 = vld [vmem:[%s3589 + $0x58] sm:$0xff]
      %v3602 = vld [vmem:[%s3589 + $0x60] sm:$0xff]
      %v3603 = vld [vmem:[%s3589 + $0x68] sm:$0xff]
      %v3604 = vld [vmem:[%s3589 + $0x70] sm:$0xff]
      %v3605 = vld [vmem:[%s3589 + $0x78] sm:$0xff]
      %v3606 = vld [vmem:[%s3589 + $0x80] sm:$0xff]
      %v3607 = vld [vmem:[%s3589 + $0x88] sm:$0xff]
      %v3608 = vld [vmem:[%s3589 + $0x90] sm:$0xff]
      %v3609 = vld [vmem:[%s3589 + $0x98] sm:$0xff]
      %v3610 = vld [vmem:[%s3589 + $0xa0] sm:$0xff]
      %v3611 = vld [vmem:[%s3589 + $0xa8] sm:$0xff]
      %v3612 = vld [vmem:[%s3589 + $0xb0] sm:$0xff]
      %v3613 = vld [vmem:[%s3589 + $0xb8] sm:$0xff]
      %v3614 = vld [vmem:[%s3589 + $0xc0] sm:$0xff]
      %v3615 = vld [vmem:[%s3589 + $0xc8] sm:$0xff]
      %v3616 = vld [vmem:[%s3589 + $0xd0] sm:$0xff]
      %v3617 = vld [vmem:[%s3589 + $0xd8] sm:$0xff]
      %v3618 = vld [vmem:[%s3589 + $0xe0] sm:$0xff]
      %v3619 = vld [vmem:[%s3589 + $0xe8] sm:$0xff]
      %v3620 = vld [vmem:[%s3589 + $0xf0] sm:$0xff]
      %v3621 = vld [vmem:[%s3589 + $0xf8] sm:$0xff]
      %v3622 = vld [vmem:[%s3589 + $0x100] sm:$0xff]
      %v3623 = vld [vmem:[%s3589 + $0x108] sm:$0xff]
      %v3624 = vld [vmem:[%s3589 + $0x110] sm:$0xff]
      %v3625 = vld [vmem:[%s3589 + $0x118] sm:$0xff]
      %3626 = vst.msk [vmem:[%s411 + $0x1] sm:$0xff] %vm1854, %v3557
      %3627 = vst.msk [vmem:[%s411 + $0x9] sm:$0xff] %vm1854, %v3558
      %3628 = vst.msk [vmem:[%s411 + $0x19] sm:$0xff] %vm1854, %v3559
      %3629 = vst.msk [vmem:[%s411 + $0x21] sm:$0xff] %vm1854, %v3560
      %3630 = vst.msk [vmem:[%s411 + $0x31] sm:$0xff] %vm1854, %v3561
      %3631 = vst.msk [vmem:[%s411 + $0x39] sm:$0xff] %vm1854, %v3562
      %3632 = vst.msk [vmem:[%s411 + $0x49] sm:$0xff] %vm1854, %v3563
      %3633 = vst.msk [vmem:[%s411 + $0x51] sm:$0xff] %vm1854, %v3564
      %3634 = vst.msk [vmem:[%s411 + $0x61] sm:$0xff] %vm1854, %v3565
      %3635 = vst.msk [vmem:[%s411 + $0x69] sm:$0xff] %vm1854, %v3566
      %3636 = vst.msk [vmem:[%s411 + $0x79] sm:$0xff] %vm1854, %v3567
      %3637 = vst.msk [vmem:[%s411 + $0x81] sm:$0xff] %vm1854, %v3568
      %3638 = vst.msk [vmem:[%s411 + $0x91] sm:$0xff] %vm1854, %v3569
      %3639 = vst.msk [vmem:[%s411 + $0x99] sm:$0xff] %vm1854, %v3570
      %3640 = vst.msk [vmem:[%s411 + $0xa9] sm:$0xff] %vm1854, %v3571
      %3641 = vst.msk [vmem:[%s411 + $0xb1] sm:$0xff] %vm1854, %v3572
      %3642 = vst.msk [vmem:[%s411 + $0xc1] sm:$0xff] %vm1854, %v3573
      %3643 = vst.msk [vmem:[%s411 + $0xc9] sm:$0xff] %vm1854, %v3574
      %3644 = vst.msk [vmem:[%s411 + $0xd9] sm:$0xff] %vm1854, %v3575
      %3645 = vst.msk [vmem:[%s411 + $0xe1] sm:$0xff] %vm1854, %v3576
      %3646 = vst.msk [vmem:[%s411 + $0xf1] sm:$0xff] %vm1854, %v3577
      %3647 = vst.msk [vmem:[%s411 + $0xf9] sm:$0xff] %vm1854, %v3578
      %3648 = vst.msk [vmem:[%s411 + $0x109] sm:$0xff] %vm1854, %v3579
      %3649 = vst.msk [vmem:[%s411 + $0x111] sm:$0xff] %vm1854, %v3580
      %3650 = vst.msk [vmem:[%s411 + $0x121] sm:$0xff] %vm1854, %v3581
      %3651 = vst.msk [vmem:[%s411 + $0x129] sm:$0xff] %vm1854, %v3582
      %3652 = vst.msk [vmem:[%s411 + $0x139] sm:$0xff] %vm1854, %v3583
      %3653 = vst.msk [vmem:[%s411 + $0x141] sm:$0xff] %vm1854, %v3584
      %3654 = vst.msk [vmem:[%s411 + $0x151] sm:$0xff] %vm1854, %v3585
      %3655 = vst.msk [vmem:[%s411 + $0x159] sm:$0xff] %vm1854, %v3586
      %3656 = vst.msk [vmem:[%s411 + $0x169] sm:$0xff] %vm1854, %v3587
      %3657 = vst.msk [vmem:[%s411 + $0x171] sm:$0xff] %vm1854, %v3588
      %v3658 = vld [vmem:[#allocation2] sm:$0xff]
      %v3659 = vld [vmem:[#allocation2 + $0x8] sm:$0xff]
      %v3660 = vld [vmem:[#allocation2 + $0x18] sm:$0xff]
      %v3661 = vld [vmem:[#allocation2 + $0x20] sm:$0xff]
      %v3662 = vld [vmem:[#allocation2 + $0x30] sm:$0xff]
      %v3663 = vld [vmem:[#allocation2 + $0x38] sm:$0xff]
      %v3664 = vld [vmem:[#allocation2 + $0x48] sm:$0xff]
      %v3665 = vld [vmem:[#allocation2 + $0x50] sm:$0xff]
      %v3666 = vld [vmem:[#allocation2 + $0x60] sm:$0xff]
      %v3667 = vld [vmem:[#allocation2 + $0x68] sm:$0xff]
      %v3668 = vld [vmem:[#allocation2 + $0x78] sm:$0xff]
      %v3669 = vld [vmem:[#allocation2 + $0x80] sm:$0xff]
      %v3670 = vld [vmem:[#allocation2 + $0x90] sm:$0xff]
      %v3671 = vld [vmem:[#allocation2 + $0x98] sm:$0xff]
      %v3672 = vld [vmem:[#allocation2 + $0xa8] sm:$0xff]
      %v3673 = vld [vmem:[#allocation2 + $0xb0] sm:$0xff]
      %v3674 = vld [vmem:[#allocation2 + $0xc0] sm:$0xff]
      %v3675 = vld [vmem:[#allocation2 + $0xc8] sm:$0xff]
      %v3676 = vld [vmem:[#allocation2 + $0xd8] sm:$0xff]
      %v3677 = vld [vmem:[#allocation2 + $0xe0] sm:$0xff]
      %v3678 = vld [vmem:[#allocation2 + $0xf0] sm:$0xff]
      %v3679 = vld [vmem:[#allocation2 + $0xf8] sm:$0xff]
      %v3680 = vld [vmem:[#allocation2 + $0x108] sm:$0xff]
      %v3681 = vld [vmem:[#allocation2 + $0x110] sm:$0xff]
      %v3682 = vld [vmem:[#allocation2 + $0x120] sm:$0xff]
      %v3683 = vld [vmem:[#allocation2 + $0x128] sm:$0xff]
      %v3684 = vld [vmem:[#allocation2 + $0x138] sm:$0xff]
      %v3685 = vld [vmem:[#allocation2 + $0x140] sm:$0xff]
      %v3686 = vld [vmem:[#allocation2 + $0x150] sm:$0xff]
      %v3687 = vld [vmem:[#allocation2 + $0x158] sm:$0xff]
      %v3688 = vld [vmem:[#allocation2 + $0x168] sm:$0xff]
      %v3689 = vld [vmem:[#allocation2 + $0x170] sm:$0xff]
      %v3690 = vld [vmem:[#allocation2 + $0x180] sm:$0xff]
      %v3691 = vld [vmem:[#allocation2 + $0x188] sm:$0xff]
      %v3692 = vld [vmem:[#allocation2 + $0x198] sm:$0xff]
      %v3693 = vld [vmem:[#allocation2 + $0x1a0] sm:$0xff]
      %v3694 = vld [vmem:[#allocation2 + $0x1] sm:$0xff]
      %v3695 = vld [vmem:[#allocation2 + $0x9] sm:$0xff]
      %v3696 = vld [vmem:[#allocation2 + $0x19] sm:$0xff]
      %v3697 = vld [vmem:[#allocation2 + $0x21] sm:$0xff]
      %v3698 = vld [vmem:[#allocation2 + $0x31] sm:$0xff]
      %v3699 = vld [vmem:[#allocation2 + $0x39] sm:$0xff]
      %v3700 = vld [vmem:[#allocation2 + $0x49] sm:$0xff]
      %v3701 = vld [vmem:[#allocation2 + $0x51] sm:$0xff]
      %v3702 = vld [vmem:[#allocation2 + $0x61] sm:$0xff]
      %v3703 = vld [vmem:[#allocation2 + $0x69] sm:$0xff]
      %v3704 = vld [vmem:[#allocation2 + $0x79] sm:$0xff]
      %v3705 = vld [vmem:[#allocation2 + $0x81] sm:$0xff]
      %v3706 = vld [vmem:[#allocation2 + $0x91] sm:$0xff]
      %v3707 = vld [vmem:[#allocation2 + $0x99] sm:$0xff]
      %v3708 = vld [vmem:[#allocation2 + $0xa9] sm:$0xff]
      %v3709 = vld [vmem:[#allocation2 + $0xb1] sm:$0xff]
      %v3710 = vld [vmem:[#allocation2 + $0xc1] sm:$0xff]
      %v3711 = vld [vmem:[#allocation2 + $0xc9] sm:$0xff]
      %v3712 = vld [vmem:[#allocation2 + $0xd9] sm:$0xff]
      %v3713 = vld [vmem:[#allocation2 + $0xe1] sm:$0xff]
      %v3714 = vld [vmem:[#allocation2 + $0xf1] sm:$0xff]
      %v3715 = vld [vmem:[#allocation2 + $0xf9] sm:$0xff]
      %v3716 = vld [vmem:[#allocation2 + $0x109] sm:$0xff]
      %v3717 = vld [vmem:[#allocation2 + $0x111] sm:$0xff]
      %v3718 = vld [vmem:[#allocation2 + $0x121] sm:$0xff]
      %v3719 = vld [vmem:[#allocation2 + $0x129] sm:$0xff]
      %v3720 = vld [vmem:[#allocation2 + $0x139] sm:$0xff]
      %v3721 = vld [vmem:[#allocation2 + $0x141] sm:$0xff]
      %v3722 = vld [vmem:[#allocation2 + $0x151] sm:$0xff]
      %v3723 = vld [vmem:[#allocation2 + $0x159] sm:$0xff]
      %v3724 = vld [vmem:[#allocation2 + $0x169] sm:$0xff]
      %v3725 = vld [vmem:[#allocation2 + $0x171] sm:$0xff]
      %v3726 = vld [vmem:[#allocation2 + $0x181] sm:$0xff]
      %v3727 = vld [vmem:[#allocation2 + $0x189] sm:$0xff]
      %v3728 = vld [vmem:[#allocation2 + $0x199] sm:$0xff]
      %v3729 = vld [vmem:[#allocation2 + $0x1a1] sm:$0xff]
      %v3730 = vld [vmem:[#allocation2 + $0x2] sm:$0xff]
      %v3731 = vld [vmem:[#allocation2 + $0xa] sm:$0xff]
      %v3732 = vld [vmem:[#allocation2 + $0x1a] sm:$0xff]
      %v3733 = vld [vmem:[#allocation2 + $0x22] sm:$0xff]
      %v3734 = vld [vmem:[#allocation2 + $0x32] sm:$0xff]
      %v3735 = vld [vmem:[#allocation2 + $0x3a] sm:$0xff]
      %v3736 = vld [vmem:[#allocation2 + $0x4a] sm:$0xff]
      %v3737 = vld [vmem:[#allocation2 + $0x52] sm:$0xff]
      %v3738 = vld [vmem:[#allocation2 + $0x62] sm:$0xff]
      %v3739 = vld [vmem:[#allocation2 + $0x6a] sm:$0xff]
      %v3740 = vld [vmem:[#allocation2 + $0x7a] sm:$0xff]
      %v3741 = vld [vmem:[#allocation2 + $0x82] sm:$0xff]
      %v3742 = vld [vmem:[#allocation2 + $0x92] sm:$0xff]
      %v3743 = vld [vmem:[#allocation2 + $0x9a] sm:$0xff]
      %v3744 = vld [vmem:[#allocation2 + $0xaa] sm:$0xff]
      %v3745 = vld [vmem:[#allocation2 + $0xb2] sm:$0xff]
      %v3746 = vld [vmem:[#allocation2 + $0xc2] sm:$0xff]
      %v3747 = vld [vmem:[#allocation2 + $0xca] sm:$0xff]
      %v3748 = vld [vmem:[#allocation2 + $0xda] sm:$0xff]
      %v3749 = vld [vmem:[#allocation2 + $0xe2] sm:$0xff]
      %v3750 = vld [vmem:[#allocation2 + $0xf2] sm:$0xff]
      %v3751 = vld [vmem:[#allocation2 + $0xfa] sm:$0xff]
      %v3752 = vld [vmem:[#allocation2 + $0x10a] sm:$0xff]
      %v3753 = vld [vmem:[#allocation2 + $0x112] sm:$0xff]
      %v3754 = vld [vmem:[#allocation2 + $0x122] sm:$0xff]
      %v3755 = vld [vmem:[#allocation2 + $0x12a] sm:$0xff]
      %v3756 = vld [vmem:[#allocation2 + $0x13a] sm:$0xff]
      %v3757 = vld [vmem:[#allocation2 + $0x142] sm:$0xff]
      %v3758 = vld [vmem:[#allocation2 + $0x152] sm:$0xff]
      %v3759 = vld [vmem:[#allocation2 + $0x15a] sm:$0xff]
      %v3760 = vld [vmem:[#allocation2 + $0x16a] sm:$0xff]
      %v3761 = vld [vmem:[#allocation2 + $0x172] sm:$0xff]
      %v3762 = vld [vmem:[#allocation2 + $0x182] sm:$0xff]
      %v3763 = vld [vmem:[#allocation2 + $0x18a] sm:$0xff]
      %v3764 = vld [vmem:[#allocation2 + $0x19a] sm:$0xff]
      %v3765 = vld [vmem:[#allocation2 + $0x1a2] sm:$0xff]
      %3798 = vrot.lane.b32.xlu0 %v3694, 32
      %v3799 = vpop.permute.xlu0 %3798
      %3800 = vrot.lane.b32.xlu0 %v3695, 32
      %v3801 = vpop.permute.xlu0 %3800
      %3802 = vrot.lane.b32.xlu0 %v3696, 32
      %v3803 = vpop.permute.xlu0 %3802
      %3804 = vrot.lane.b32.xlu0 %v3697, 32
      %v3805 = vpop.permute.xlu0 %3804
      %3806 = vrot.lane.b32.xlu0 %v3698, 32
      %v3807 = vpop.permute.xlu0 %3806
      %3808 = vrot.lane.b32.xlu0 %v3699, 32
      %v3809 = vpop.permute.xlu0 %3808
      %3810 = vrot.lane.b32.xlu0 %v3700, 32
      %v3811 = vpop.permute.xlu0 %3810
      %3812 = vrot.lane.b32.xlu0 %v3701, 32
      %v3813 = vpop.permute.xlu0 %3812
      %3814 = vrot.lane.b32.xlu0 %v3702, 32
      %v3815 = vpop.permute.xlu0 %3814
      %3816 = vrot.lane.b32.xlu0 %v3703, 32
      %v3817 = vpop.permute.xlu0 %3816
      %3818 = vrot.lane.b32.xlu0 %v3704, 32
      %v3819 = vpop.permute.xlu0 %3818
      %3820 = vrot.lane.b32.xlu0 %v3705, 32
      %v3821 = vpop.permute.xlu0 %3820
      %3822 = vrot.lane.b32.xlu0 %v3706, 32
      %v3823 = vpop.permute.xlu0 %3822
      %3824 = vrot.lane.b32.xlu0 %v3707, 32
      %v3825 = vpop.permute.xlu0 %3824
      %3826 = vrot.lane.b32.xlu0 %v3708, 32
      %v3827 = vpop.permute.xlu0 %3826
      %3828 = vrot.lane.b32.xlu0 %v3709, 32
      %v3829 = vpop.permute.xlu0 %3828
      %3830 = vrot.lane.b32.xlu0 %v3710, 32
      %v3831 = vpop.permute.xlu0 %3830
      %3832 = vrot.lane.b32.xlu0 %v3711, 32
      %v3833 = vpop.permute.xlu0 %3832
      %3834 = vrot.lane.b32.xlu0 %v3712, 32
      %v3835 = vpop.permute.xlu0 %3834
      %3836 = vrot.lane.b32.xlu0 %v3713, 32
      %v3837 = vpop.permute.xlu0 %3836
      %3838 = vrot.lane.b32.xlu0 %v3714, 32
      %v3839 = vpop.permute.xlu0 %3838
      %3840 = vrot.lane.b32.xlu0 %v3715, 32
      %v3841 = vpop.permute.xlu0 %3840
      %3842 = vrot.lane.b32.xlu0 %v3716, 32
      %v3843 = vpop.permute.xlu0 %3842
      %3844 = vrot.lane.b32.xlu0 %v3717, 32
      %v3845 = vpop.permute.xlu0 %3844
      %3846 = vrot.lane.b32.xlu0 %v3718, 32
      %v3847 = vpop.permute.xlu0 %3846
      %3848 = vrot.lane.b32.xlu0 %v3719, 32
      %v3849 = vpop.permute.xlu0 %3848
      %3850 = vrot.lane.b32.xlu0 %v3720, 32
      %v3851 = vpop.permute.xlu0 %3850
      %3852 = vrot.lane.b32.xlu0 %v3721, 32
      %v3853 = vpop.permute.xlu0 %3852
      %3854 = vrot.lane.b32.xlu0 %v3722, 32
      %v3855 = vpop.permute.xlu0 %3854
      %3856 = vrot.lane.b32.xlu0 %v3723, 32
      %v3857 = vpop.permute.xlu0 %3856
      %3858 = vrot.lane.b32.xlu0 %v3724, 32
      %v3859 = vpop.permute.xlu0 %3858
      %3860 = vrot.lane.b32.xlu0 %v3725, 32
      %v3861 = vpop.permute.xlu0 %3860
      %3926 = vrot.lane.b32.xlu0 %v3730, 64
      %v3927 = vpop.permute.xlu0 %3926
      %3928 = vrot.lane.b32.xlu0 %v3731, 64
      %v3929 = vpop.permute.xlu0 %3928
      %3930 = vrot.lane.b32.xlu0 %v3732, 64
      %v3931 = vpop.permute.xlu0 %3930
      %3932 = vrot.lane.b32.xlu0 %v3733, 64
      %v3933 = vpop.permute.xlu0 %3932
      %3934 = vrot.lane.b32.xlu0 %v3734, 64
      %v3935 = vpop.permute.xlu0 %3934
      %3936 = vrot.lane.b32.xlu0 %v3735, 64
      %v3937 = vpop.permute.xlu0 %3936
      %3938 = vrot.lane.b32.xlu0 %v3736, 64
      %v3939 = vpop.permute.xlu0 %3938
      %3940 = vrot.lane.b32.xlu0 %v3737, 64
      %v3941 = vpop.permute.xlu0 %3940
      %3942 = vrot.lane.b32.xlu0 %v3738, 64
      %v3943 = vpop.permute.xlu0 %3942
      %3944 = vrot.lane.b32.xlu0 %v3739, 64
      %v3945 = vpop.permute.xlu0 %3944
      %3946 = vrot.lane.b32.xlu0 %v3740, 64
      %v3947 = vpop.permute.xlu0 %3946
      %3948 = vrot.lane.b32.xlu0 %v3741, 64
      %v3949 = vpop.permute.xlu0 %3948
      %3950 = vrot.lane.b32.xlu0 %v3742, 64
      %v3951 = vpop.permute.xlu0 %3950
      %3952 = vrot.lane.b32.xlu0 %v3743, 64
      %v3953 = vpop.permute.xlu0 %3952
      %3954 = vrot.lane.b32.xlu0 %v3744, 64
      %v3955 = vpop.permute.xlu0 %3954
      %3956 = vrot.lane.b32.xlu0 %v3745, 64
      %v3957 = vpop.permute.xlu0 %3956
      %3958 = vrot.lane.b32.xlu0 %v3746, 64
      %v3959 = vpop.permute.xlu0 %3958
      %3960 = vrot.lane.b32.xlu0 %v3747, 64
      %v3961 = vpop.permute.xlu0 %3960
      %3962 = vrot.lane.b32.xlu0 %v3748, 64
      %v3963 = vpop.permute.xlu0 %3962
      %3964 = vrot.lane.b32.xlu0 %v3749, 64
      %v3965 = vpop.permute.xlu0 %3964
      %3966 = vrot.lane.b32.xlu0 %v3750, 64
      %v3967 = vpop.permute.xlu0 %3966
      %3968 = vrot.lane.b32.xlu0 %v3751, 64
      %v3969 = vpop.permute.xlu0 %3968
      %3970 = vrot.lane.b32.xlu0 %v3752, 64
      %v3971 = vpop.permute.xlu0 %3970
      %3972 = vrot.lane.b32.xlu0 %v3753, 64
      %v3973 = vpop.permute.xlu0 %3972
      %3974 = vrot.lane.b32.xlu0 %v3754, 64
      %v3975 = vpop.permute.xlu0 %3974
      %3976 = vrot.lane.b32.xlu0 %v3755, 64
      %v3977 = vpop.permute.xlu0 %3976
      %3978 = vrot.lane.b32.xlu0 %v3756, 64
      %v3979 = vpop.permute.xlu0 %3978
      %3980 = vrot.lane.b32.xlu0 %v3757, 64
      %v3981 = vpop.permute.xlu0 %3980
      %3982 = vrot.lane.b32.xlu0 %v3758, 64
      %v3983 = vpop.permute.xlu0 %3982
      %3984 = vrot.lane.b32.xlu0 %v3759, 64
      %v3985 = vpop.permute.xlu0 %3984
      %3986 = vrot.lane.b32.xlu0 %v3760, 64
      %v3987 = vpop.permute.xlu0 %3986
      %3988 = vrot.lane.b32.xlu0 %v3761, 64
      %v3989 = vpop.permute.xlu0 %3988
      %v4022 = vsel %vm1854, %v3658, %v3799
      %v4023 = vsel %vm1854, %v3659, %v3801
      %v4024 = vsel %vm1854, %v3660, %v3803
      %v4025 = vsel %vm1854, %v3661, %v3805
      %v4026 = vsel %vm1854, %v3662, %v3807
      %v4027 = vsel %vm1854, %v3663, %v3809
      %v4028 = vsel %vm1854, %v3664, %v3811
      %v4029 = vsel %vm1854, %v3665, %v3813
      %v4030 = vsel %vm1854, %v3666, %v3815
      %v4031 = vsel %vm1854, %v3667, %v3817
      %v4032 = vsel %vm1854, %v3668, %v3819
      %v4033 = vsel %vm1854, %v3669, %v3821
      %v4034 = vsel %vm1854, %v3670, %v3823
      %v4035 = vsel %vm1854, %v3671, %v3825
      %v4036 = vsel %vm1854, %v3672, %v3827
      %v4037 = vsel %vm1854, %v3673, %v3829
      %v4038 = vsel %vm1854, %v3674, %v3831
      %v4039 = vsel %vm1854, %v3675, %v3833
      %v4040 = vsel %vm1854, %v3676, %v3835
      %v4041 = vsel %vm1854, %v3677, %v3837
      %v4042 = vsel %vm1854, %v3678, %v3839
      %v4043 = vsel %vm1854, %v3679, %v3841
      %v4044 = vsel %vm1854, %v3680, %v3843
      %v4045 = vsel %vm1854, %v3681, %v3845
      %v4046 = vsel %vm1854, %v3682, %v3847
      %v4047 = vsel %vm1854, %v3683, %v3849
      %v4048 = vsel %vm1854, %v3684, %v3851
      %v4049 = vsel %vm1854, %v3685, %v3853
      %v4050 = vsel %vm1854, %v3686, %v3855
      %v4051 = vsel %vm1854, %v3687, %v3857
      %v4052 = vsel %vm1854, %v3688, %v3859
      %v4053 = vsel %vm1854, %v3689, %v3861
      %v4054 = vsel %vm333, %v4022, %v3927
      %v4055 = vsel %vm333, %v4023, %v3929
      %v4056 = vsel %vm333, %v4024, %v3931
      %v4057 = vsel %vm333, %v4025, %v3933
      %v4058 = vsel %vm333, %v4026, %v3935
      %v4059 = vsel %vm333, %v4027, %v3937
      %v4060 = vsel %vm333, %v4028, %v3939
      %v4061 = vsel %vm333, %v4029, %v3941
      %v4062 = vsel %vm333, %v4030, %v3943
      %v4063 = vsel %vm333, %v4031, %v3945
      %v4064 = vsel %vm333, %v4032, %v3947
      %v4065 = vsel %vm333, %v4033, %v3949
      %v4066 = vsel %vm333, %v4034, %v3951
      %v4067 = vsel %vm333, %v4035, %v3953
      %v4068 = vsel %vm333, %v4036, %v3955
      %v4069 = vsel %vm333, %v4037, %v3957
      %v4070 = vsel %vm333, %v4038, %v3959
      %v4071 = vsel %vm333, %v4039, %v3961
      %v4072 = vsel %vm333, %v4040, %v3963
      %v4073 = vsel %vm333, %v4041, %v3965
      %v4074 = vsel %vm333, %v4042, %v3967
      %v4075 = vsel %vm333, %v4043, %v3969
      %v4076 = vsel %vm333, %v4044, %v3971
      %v4077 = vsel %vm333, %v4045, %v3973
      %v4078 = vsel %vm333, %v4046, %v3975
      %v4079 = vsel %vm333, %v4047, %v3977
      %v4080 = vsel %vm333, %v4048, %v3979
      %v4081 = vsel %vm333, %v4049, %v3981
      %v4082 = vsel %vm333, %v4050, %v3983
      %v4083 = vsel %vm333, %v4051, %v3985
      %v4084 = vsel %vm333, %v4052, %v3987
      %v4085 = vsel %vm333, %v4053, %v3989
      %4088 = vrot.lane.b32.xlu0 %v3726, 32
      %v4089 = vpop.permute.xlu0 %4088
      %4090 = vrot.lane.b32.xlu0 %v3727, 32
      %v4091 = vpop.permute.xlu0 %4090
      %4096 = vrot.lane.b32.xlu0 %v3762, 64
      %v4097 = vpop.permute.xlu0 %4096
      %4098 = vrot.lane.b32.xlu0 %v3763, 64
      %v4099 = vpop.permute.xlu0 %4098
      %v4102 = vsel %vm1854, %v3690, %v4089
      %v4103 = vsel %vm1854, %v3691, %v4091
      %v4104 = vsel %vm333, %v4102, %v4097
      %v4105 = vsel %vm333, %v4103, %v4099
      %v4107 = vsel %vm2335, %v4056, 0
      %v4110 = vsel %vm2335, %v4057, 0
      %v4113 = vsel %vm2335, %v4058, 0
      %v4116 = vsel %vm2335, %v4059, 0
      %v4119 = vsel %vm2335, %v4060, 0
      %v4122 = vsel %vm2335, %v4061, 0
      %v4125 = vsel %vm2335, %v4062, 0
      %v4128 = vsel %vm2335, %v4063, 0
      %v4131 = vsel %vm2335, %v4064, 0
      %v4134 = vsel %vm2335, %v4065, 0
      %v4137 = vsel %vm2335, %v4066, 0
      %v4140 = vsel %vm2335, %v4067, 0
      %v4143 = vsel %vm2335, %v4068, 0
      %v4146 = vsel %vm2335, %v4069, 0
      %v4149 = vsel %vm2335, %v4070, 0
      %v4152 = vsel %vm2335, %v4071, 0
      %v4155 = vsel %vm2335, %v4072, 0
      %v4158 = vsel %vm2335, %v4073, 0
      %v4161 = vsel %vm2335, %v4074, 0
      %v4164 = vsel %vm2335, %v4075, 0
      %v4167 = vsel %vm2335, %v4076, 0
      %v4170 = vsel %vm2335, %v4077, 0
      %v4173 = vsel %vm2335, %v4078, 0
      %v4176 = vsel %vm2335, %v4079, 0
      %v4179 = vsel %vm2335, %v4080, 0
      %v4182 = vsel %vm2335, %v4081, 0
      %v4185 = vsel %vm2335, %v4082, 0
      %v4188 = vsel %vm2335, %v4083, 0
      %v4191 = vsel %vm2335, %v4084, 0
      %v4194 = vsel %vm2335, %v4085, 0
      %v4197 = vsel %vm2335, %v4104, 0
      %v4200 = vsel %vm2335, %v4105, 0
      %4202 = vmatprep.subr.mxu0 0.0
      %4203 = vmatpush1.msra.mxu0 0.0
      %4204 = vmatprep.subr.mxu0 0.0
      %4205 = vmatpush1.msra.mxu0 0.0
      %4206 = vmatprep.subr.mxu0 0.0
      %4207 = vmatpush1.msra.mxu0 0.0
      %4208 = vmatprep.subr.mxu0 0.0
      %4209 = vmatpush1.msra.mxu0 0.0
      %4210 = vmatprep.subr.mxu0 0.0
      %4211 = vmatpush1.msra.mxu0 %v3613
      %4212 = vmatprep.subr.mxu0 0.0
      %4213 = vmatpush1.msra.mxu0 %v3612
      %4214 = vmatprep.subr.mxu0 0.0
      %4215 = vmatpush1.msra.mxu0 %v3611
      %4216 = vmatprep.subr.mxu0 0.0
      %4217 = vmatpush1.msra.mxu0 %v3610
      %4218 = vmatprep.subr.mxu0 0.0
      %4219 = vmatpush1.msra.mxu0 %v3609
      %4220 = vmatprep.subr.mxu0 0.0
      %4221 = vmatpush1.msra.mxu0 %v3608
      %4222 = vmatprep.subr.mxu0 0.0
      %4223 = vmatpush1.msra.mxu0 %v3607
      %4224 = vmatprep.subr.mxu0 0.0
      %4225 = vmatpush1.msra.mxu0 %v3606
      %4226 = vmatprep.subr.mxu0 0.0
      %4227 = vmatpush1.msra.mxu0 %v3605
      %4228 = vmatprep.subr.mxu0 0.0
      %4229 = vmatpush1.msra.mxu0 %v3604
      %4230 = vmatprep.subr.mxu0 0.0
      %4231 = vmatpush1.msra.mxu0 %v3603
      %4232 = vmatprep.subr.mxu0 0.0
      %4233 = vmatpush1.msra.mxu0 %v3602
      %4234 = vmatprep.subr.mxu0 0.0
      %4235 = vmatpush2.msra.mxu0 0.0
      %4236 = vmatprep.subr.mxu0 0.0
      %4237 = vmatpush2.msra.mxu0 0.0
      %4238 = vmatprep.subr.mxu0 0.0
      %4239 = vmatpush2.msra.mxu0 0.0
      %4240 = vmatprep.subr.mxu0 0.0
      %4241 = vmatpush2.msra.mxu0 0.0
      %4242 = vmatprep.subr.mxu0 0.0
      %4243 = vmatpush2.msra.mxu0 0.0
      %4244 = vmatprep.subr.mxu0 0.0
      %4245 = vmatpush2.msra.mxu0 0.0
      %4246 = vmatprep.subr.mxu0 0.0
      %4247 = vmatpush2.msra.mxu0 0.0
      %4248 = vmatprep.subr.mxu0 0.0
      %4249 = vmatpush2.msra.mxu0 0.0
      %4250 = vmatprep.subr.mxu0 0.0
      %4251 = vmatpush2.msra.mxu0 0.0
      %4252 = vmatprep.subr.mxu0 0.0
      %4253 = vmatpush2.msra.mxu0 0.0
      %4254 = vmatprep.subr.mxu0 0.0
      %4255 = vmatpush2.msra.mxu0 0.0
      %4256 = vmatprep.subr.mxu0 0.0
      %4257 = vmatpush2.msra.mxu0 0.0
      %4258 = vmatprep.subr.mxu0 0.0
      %4259 = vmatpush2.msra.mxu0 0.0
      %4260 = vmatprep.subr.mxu0 0.0
      %4261 = vmatpush2.msra.mxu0 0.0
      %4262 = vmatprep.subr.mxu0 0.0
      %4263 = vmatpush2.msra.mxu0 0.0
      %4264 = vmatprep.subr.mxu0 0.0
      %4265 = vmatpush2.msra.mxu0 0.0
      %4266 = vmatprep.mubr.f32.mxu0 0.0
      %4267 = vmatmul.mubr.f32.gmra.mxu0 %v4107
      %v4268 = vpop.f32.mrf.mxu0
      %v4269 = vadd.f32 0.0, %v4268
      %v4270 = vpop.f32.mrf.mxu0
      %4271 = vmatprep.mubr.f32.mxu0 0.0
      %4272 = vmatmul.mubr.f32.gmra.mxu0 %v4110
      %v4273 = vpop.f32.mrf.mxu0
      %v4274 = vadd.f32 0.0, %v4273
      %v4275 = vpop.f32.mrf.mxu0
      %4276 = vmatprep.mubr.f32.mxu0 0.0
      %4277 = vmatmul.mubr.f32.gmra.mxu0 %v4113
      %v4278 = vpop.f32.mrf.mxu0
      %v4279 = vadd.f32 0.0, %v4278
      %v4280 = vpop.f32.mrf.mxu0
      %4281 = vmatprep.mubr.f32.mxu0 0.0
      %4282 = vmatmul.mubr.f32.gmra.mxu0 %v4116
      %v4283 = vpop.f32.mrf.mxu0
      %v4284 = vadd.f32 0.0, %v4283
      %v4285 = vpop.f32.mrf.mxu0
      %4286 = vmatprep.mubr.f32.mxu0 0.0
      %4287 = vmatmul.mubr.f32.gmra.mxu0 %v4119
      %v4288 = vpop.f32.mrf.mxu0
      %v4289 = vadd.f32 0.0, %v4288
      %v4290 = vpop.f32.mrf.mxu0
      %4291 = vmatprep.mubr.f32.mxu0 0.0
      %4292 = vmatmul.mubr.f32.gmra.mxu0 %v4122
      %v4293 = vpop.f32.mrf.mxu0
      %v4294 = vadd.f32 0.0, %v4293
      %v4295 = vpop.f32.mrf.mxu0
      %4296 = vmatprep.mubr.f32.mxu0 0.0
      %4297 = vmatmul.mubr.f32.gmra.mxu0 %v4125
      %v4298 = vpop.f32.mrf.mxu0
      %v4299 = vadd.f32 0.0, %v4298
      %v4300 = vpop.f32.mrf.mxu0
      %4301 = vmatprep.mubr.f32.mxu0 0.0
      %4302 = vmatmul.mubr.f32.gmra.mxu0 %v4128
      %v4303 = vpop.f32.mrf.mxu0
      %v4304 = vadd.f32 0.0, %v4303
      %v4305 = vpop.f32.mrf.mxu0
      %4306 = vmatprep.mubr.f32.mxu0 0.0
      %4307 = vmatmul.mubr.f32.gmra.mxu0 %v4131
      %v4308 = vpop.f32.mrf.mxu0
      %v4309 = vadd.f32 0.0, %v4308
      %v4310 = vpop.f32.mrf.mxu0
      %4311 = vmatprep.mubr.f32.mxu0 0.0
      %4312 = vmatmul.mubr.f32.gmra.mxu0 %v4134
      %v4313 = vpop.f32.mrf.mxu0
      %v4314 = vadd.f32 0.0, %v4313
      %v4315 = vpop.f32.mrf.mxu0
      %4316 = vmatprep.mubr.f32.mxu0 0.0
      %4317 = vmatmul.mubr.f32.gmra.mxu0 %v4137
      %v4318 = vpop.f32.mrf.mxu0
      %v4319 = vadd.f32 0.0, %v4318
      %v4320 = vpop.f32.mrf.mxu0
      %4321 = vmatprep.mubr.f32.mxu0 0.0
      %4322 = vmatmul.mubr.f32.gmra.mxu0 %v4140
      %v4323 = vpop.f32.mrf.mxu0
      %v4324 = vadd.f32 0.0, %v4323
      %v4325 = vpop.f32.mrf.mxu0
      %4326 = vmatprep.mubr.f32.mxu0 0.0
      %4327 = vmatmul.mubr.f32.gmra.mxu0 %v4143
      %v4328 = vpop.f32.mrf.mxu0
      %v4329 = vadd.f32 0.0, %v4328
      %v4330 = vpop.f32.mrf.mxu0
      %4331 = vmatprep.mubr.f32.mxu0 0.0
      %4332 = vmatmul.mubr.f32.gmra.mxu0 %v4146
      %v4333 = vpop.f32.mrf.mxu0
      %v4334 = vadd.f32 0.0, %v4333
      %v4335 = vpop.f32.mrf.mxu0
      %4336 = vmatprep.mubr.f32.mxu0 0.0
      %4337 = vmatmul.mubr.f32.gmra.mxu0 %v4149
      %v4338 = vpop.f32.mrf.mxu0
      %v4339 = vadd.f32 0.0, %v4338
      %v4340 = vpop.f32.mrf.mxu0
      %4341 = vmatprep.mubr.f32.mxu0 0.0
      %4342 = vmatmul.mubr.f32.gmra.mxu0 %v4152
      %v4343 = vpop.f32.mrf.mxu0
      %v4344 = vadd.f32 0.0, %v4343
      %v4345 = vpop.f32.mrf.mxu0
      %4346 = vmatprep.mubr.f32.mxu0 0.0
      %4347 = vmatmul.mubr.f32.gmra.mxu0 %v4155
      %v4348 = vpop.f32.mrf.mxu0
      %v4349 = vadd.f32 0.0, %v4348
      %v4350 = vpop.f32.mrf.mxu0
      %4351 = vmatprep.mubr.f32.mxu0 0.0
      %4352 = vmatmul.mubr.f32.gmra.mxu0 %v4158
      %v4353 = vpop.f32.mrf.mxu0
      %v4354 = vadd.f32 0.0, %v4353
      %v4355 = vpop.f32.mrf.mxu0
      %4356 = vmatprep.mubr.f32.mxu0 0.0
      %4357 = vmatmul.mubr.f32.gmra.mxu0 %v4161
      %v4358 = vpop.f32.mrf.mxu0
      %v4359 = vadd.f32 0.0, %v4358
      %v4360 = vpop.f32.mrf.mxu0
      %4361 = vmatprep.mubr.f32.mxu0 0.0
      %4362 = vmatmul.mubr.f32.gmra.mxu0 %v4164
      %v4363 = vpop.f32.mrf.mxu0
      %v4364 = vadd.f32 0.0, %v4363
      %v4365 = vpop.f32.mrf.mxu0
      %4366 = vmatprep.mubr.f32.mxu0 0.0
      %4367 = vmatmul.mubr.f32.gmra.mxu0 %v4167
      %v4368 = vpop.f32.mrf.mxu0
      %v4369 = vadd.f32 0.0, %v4368
      %v4370 = vpop.f32.mrf.mxu0
      %4371 = vmatprep.mubr.f32.mxu0 0.0
      %4372 = vmatmul.mubr.f32.gmra.mxu0 %v4170
      %v4373 = vpop.f32.mrf.mxu0
      %v4374 = vadd.f32 0.0, %v4373
      %v4375 = vpop.f32.mrf.mxu0
      %4376 = vmatprep.mubr.f32.mxu0 0.0
      %4377 = vmatmul.mubr.f32.gmra.mxu0 %v4173
      %v4378 = vpop.f32.mrf.mxu0
      %v4379 = vadd.f32 0.0, %v4378
      %v4380 = vpop.f32.mrf.mxu0
      %4381 = vmatprep.mubr.f32.mxu0 0.0
      %4382 = vmatmul.mubr.f32.gmra.mxu0 %v4176
      %v4383 = vpop.f32.mrf.mxu0
      %v4384 = vadd.f32 0.0, %v4383
      %v4385 = vpop.f32.mrf.mxu0
      %4386 = vmatprep.mubr.f32.mxu0 0.0
      %4387 = vmatmul.mubr.f32.gmra.mxu0 %v4179
      %v4388 = vpop.f32.mrf.mxu0
      %v4389 = vadd.f32 0.0, %v4388
      %v4390 = vpop.f32.mrf.mxu0
      %4391 = vmatprep.mubr.f32.mxu0 0.0
      %4392 = vmatmul.mubr.f32.gmra.mxu0 %v4182
      %v4393 = vpop.f32.mrf.mxu0
      %v4394 = vadd.f32 0.0, %v4393
      %v4395 = vpop.f32.mrf.mxu0
      %4396 = vmatprep.mubr.f32.mxu0 0.0
      %4397 = vmatmul.mubr.f32.gmra.mxu0 %v4185
      %v4398 = vpop.f32.mrf.mxu0
      %v4399 = vadd.f32 0.0, %v4398
      %v4400 = vpop.f32.mrf.mxu0
      %4401 = vmatprep.mubr.f32.mxu0 0.0
      %4402 = vmatmul.mubr.f32.gmra.mxu0 %v4188
      %v4403 = vpop.f32.mrf.mxu0
      %v4404 = vadd.f32 0.0, %v4403
      %v4405 = vpop.f32.mrf.mxu0
      %4406 = vmatprep.mubr.f32.mxu0 0.0
      %4407 = vmatmul.mubr.f32.gmra.mxu0 %v4191
      %v4408 = vpop.f32.mrf.mxu0
      %v4409 = vadd.f32 0.0, %v4408
      %v4410 = vpop.f32.mrf.mxu0
      %4411 = vmatprep.mubr.f32.mxu0 0.0
      %4412 = vmatmul.mubr.f32.gmra.mxu0 %v4194
      %v4413 = vpop.f32.mrf.mxu0
      %v4414 = vadd.f32 0.0, %v4413
      %v4415 = vpop.f32.mrf.mxu0
      %4416 = vmatprep.mubr.f32.mxu0 0.0
      %4417 = vmatmul.mubr.f32.gmra.mxu0 %v4197
      %v4418 = vpop.f32.mrf.mxu0
      %v4419 = vadd.f32 0.0, %v4418
      %v4420 = vpop.f32.mrf.mxu0
      %4421 = vmatprep.mubr.f32.mxu0 0.0
      %4422 = vmatmul.mubr.f32.gmra.mxu0 %v4200
      %v4423 = vpop.f32.mrf.mxu0
      %v4424 = vadd.f32 0.0, %v4423
      %v4425 = vpop.f32.mrf.mxu0
      %4426 = vdwg.mxu0
      %v4428 = vsel %vm2335, %v4054, 0
      %v4431 = vsel %vm2335, %v4055, 0
      %4433 = vmatprep.subr.mxu0 0.0
      %4434 = vmatpush1.msra.mxu0 0.0
      %4435 = vmatprep.subr.mxu0 0.0
      %4436 = vmatpush1.msra.mxu0 0.0
      %4437 = vmatprep.subr.mxu0 0.0
      %4438 = vmatpush1.msra.mxu0 0.0
      %4439 = vmatprep.subr.mxu0 0.0
      %4440 = vmatpush1.msra.mxu0 0.0
      %4441 = vmatprep.subr.mxu0 0.0
      %4442 = vmatpush1.msra.mxu0 %v3601
      %4443 = vmatprep.subr.mxu0 0.0
      %4444 = vmatpush1.msra.mxu0 %v3600
      %4445 = vmatprep.subr.mxu0 0.0
      %4446 = vmatpush1.msra.mxu0 %v3599
      %4447 = vmatprep.subr.mxu0 0.0
      %4448 = vmatpush1.msra.mxu0 %v3598
      %4449 = vmatprep.subr.mxu0 0.0
      %4450 = vmatpush1.msra.mxu0 %v3597
      %4451 = vmatprep.subr.mxu0 0.0
      %4452 = vmatpush1.msra.mxu0 %v3596
      %4453 = vmatprep.subr.mxu0 0.0
      %4454 = vmatpush1.msra.mxu0 %v3595
      %4455 = vmatprep.subr.mxu0 0.0
      %4456 = vmatpush1.msra.mxu0 %v3594
      %4457 = vmatprep.subr.mxu0 0.0
      %4458 = vmatpush1.msra.mxu0 %v3593
      %4459 = vmatprep.subr.mxu0 0.0
      %4460 = vmatpush1.msra.mxu0 %v3592
      %4461 = vmatprep.subr.mxu0 0.0
      %4462 = vmatpush1.msra.mxu0 %v3591
      %4463 = vmatprep.subr.mxu0 0.0
      %4464 = vmatpush1.msra.mxu0 %v3590
      %4465 = vmatprep.subr.mxu0 0.0
      %4466 = vmatpush2.msra.mxu0 0.0
      %4467 = vmatprep.subr.mxu0 0.0
      %4468 = vmatpush2.msra.mxu0 0.0
      %4469 = vmatprep.subr.mxu0 0.0
      %4470 = vmatpush2.msra.mxu0 0.0
      %4471 = vmatprep.subr.mxu0 0.0
      %4472 = vmatpush2.msra.mxu0 0.0
      %4473 = vmatprep.subr.mxu0 0.0
      %4474 = vmatpush2.msra.mxu0 0.0
      %4475 = vmatprep.subr.mxu0 0.0
      %4476 = vmatpush2.msra.mxu0 0.0
      %4477 = vmatprep.subr.mxu0 0.0
      %4478 = vmatpush2.msra.mxu0 0.0
      %4479 = vmatprep.subr.mxu0 0.0
      %4480 = vmatpush2.msra.mxu0 0.0
      %4481 = vmatprep.subr.mxu0 0.0
      %4482 = vmatpush2.msra.mxu0 0.0
      %4483 = vmatprep.subr.mxu0 0.0
      %4484 = vmatpush2.msra.mxu0 0.0
      %4485 = vmatprep.subr.mxu0 0.0
      %4486 = vmatpush2.msra.mxu0 0.0
      %4487 = vmatprep.subr.mxu0 0.0
      %4488 = vmatpush2.msra.mxu0 0.0
      %4489 = vmatprep.subr.mxu0 0.0
      %4490 = vmatpush2.msra.mxu0 0.0
      %4491 = vmatprep.subr.mxu0 0.0
      %4492 = vmatpush2.msra.mxu0 0.0
      %4493 = vmatprep.subr.mxu0 0.0
      %4494 = vmatpush2.msra.mxu0 0.0
      %4495 = vmatprep.subr.mxu0 0.0
      %4496 = vmatpush2.msra.mxu0 0.0
      %4497 = vmatprep.mubr.f32.mxu0 0.0
      %4498 = vmatmul.mubr.f32.gmra.mxu0 %v4428
      %v4499 = vpop.f32.mrf.mxu0
      %v4500 = vadd.f32 %v4269, %v4499
      %v4501 = vpop.f32.mrf.mxu0
      %4502 = vmatprep.mubr.f32.mxu0 0.0
      %4503 = vmatmul.mubr.f32.gmra.mxu0 %v4431
      %v4504 = vpop.f32.mrf.mxu0
      %v4505 = vadd.f32 %v4274, %v4504
      %v4506 = vpop.f32.mrf.mxu0
      %4507 = vmatprep.mubr.f32.mxu0 0.0
      %4508 = vmatmul.mubr.f32.gmra.mxu0 %v4107
      %v4509 = vpop.f32.mrf.mxu0
      %v4510 = vadd.f32 %v4279, %v4509
      %v4511 = vpop.f32.mrf.mxu0
      %4512 = vmatprep.mubr.f32.mxu0 0.0
      %4513 = vmatmul.mubr.f32.gmra.mxu0 %v4110
      %v4514 = vpop.f32.mrf.mxu0
      %v4515 = vadd.f32 %v4284, %v4514
      %v4516 = vpop.f32.mrf.mxu0
      %4517 = vmatprep.mubr.f32.mxu0 0.0
      %4518 = vmatmul.mubr.f32.gmra.mxu0 %v4113
      %v4519 = vpop.f32.mrf.mxu0
      %v4520 = vadd.f32 %v4289, %v4519
      %v4521 = vpop.f32.mrf.mxu0
      %4522 = vmatprep.mubr.f32.mxu0 0.0
      %4523 = vmatmul.mubr.f32.gmra.mxu0 %v4116
      %v4524 = vpop.f32.mrf.mxu0
      %v4525 = vadd.f32 %v4294, %v4524
      %v4526 = vpop.f32.mrf.mxu0
      %4527 = vmatprep.mubr.f32.mxu0 0.0
      %4528 = vmatmul.mubr.f32.gmra.mxu0 %v4119
      %v4529 = vpop.f32.mrf.mxu0
      %v4530 = vadd.f32 %v4299, %v4529
      %v4531 = vpop.f32.mrf.mxu0
      %4532 = vmatprep.mubr.f32.mxu0 0.0
      %4533 = vmatmul.mubr.f32.gmra.mxu0 %v4122
      %v4534 = vpop.f32.mrf.mxu0
      %v4535 = vadd.f32 %v4304, %v4534
      %v4536 = vpop.f32.mrf.mxu0
      %4537 = vmatprep.mubr.f32.mxu0 0.0
      %4538 = vmatmul.mubr.f32.gmra.mxu0 %v4125
      %v4539 = vpop.f32.mrf.mxu0
      %v4540 = vadd.f32 %v4309, %v4539
      %v4541 = vpop.f32.mrf.mxu0
      %4542 = vmatprep.mubr.f32.mxu0 0.0
      %4543 = vmatmul.mubr.f32.gmra.mxu0 %v4128
      %v4544 = vpop.f32.mrf.mxu0
      %v4545 = vadd.f32 %v4314, %v4544
      %v4546 = vpop.f32.mrf.mxu0
      %4547 = vmatprep.mubr.f32.mxu0 0.0
      %4548 = vmatmul.mubr.f32.gmra.mxu0 %v4131
      %v4549 = vpop.f32.mrf.mxu0
      %v4550 = vadd.f32 %v4319, %v4549
      %v4551 = vpop.f32.mrf.mxu0
      %4552 = vmatprep.mubr.f32.mxu0 0.0
      %4553 = vmatmul.mubr.f32.gmra.mxu0 %v4134
      %v4554 = vpop.f32.mrf.mxu0
      %v4555 = vadd.f32 %v4324, %v4554
      %v4556 = vpop.f32.mrf.mxu0
      %4557 = vmatprep.mubr.f32.mxu0 0.0
      %4558 = vmatmul.mubr.f32.gmra.mxu0 %v4137
      %v4559 = vpop.f32.mrf.mxu0
      %v4560 = vadd.f32 %v4329, %v4559
      %v4561 = vpop.f32.mrf.mxu0
      %4562 = vmatprep.mubr.f32.mxu0 0.0
      %4563 = vmatmul.mubr.f32.gmra.mxu0 %v4140
      %v4564 = vpop.f32.mrf.mxu0
      %v4565 = vadd.f32 %v4334, %v4564
      %v4566 = vpop.f32.mrf.mxu0
      %4567 = vmatprep.mubr.f32.mxu0 0.0
      %4568 = vmatmul.mubr.f32.gmra.mxu0 %v4143
      %v4569 = vpop.f32.mrf.mxu0
      %v4570 = vadd.f32 %v4339, %v4569
      %v4571 = vpop.f32.mrf.mxu0
      %4572 = vmatprep.mubr.f32.mxu0 0.0
      %4573 = vmatmul.mubr.f32.gmra.mxu0 %v4146
      %v4574 = vpop.f32.mrf.mxu0
      %v4575 = vadd.f32 %v4344, %v4574
      %v4576 = vpop.f32.mrf.mxu0
      %4577 = vmatprep.mubr.f32.mxu0 0.0
      %4578 = vmatmul.mubr.f32.gmra.mxu0 %v4149
      %v4579 = vpop.f32.mrf.mxu0
      %v4580 = vadd.f32 %v4349, %v4579
      %v4581 = vpop.f32.mrf.mxu0
      %4582 = vmatprep.mubr.f32.mxu0 0.0
      %4583 = vmatmul.mubr.f32.gmra.mxu0 %v4152
      %v4584 = vpop.f32.mrf.mxu0
      %v4585 = vadd.f32 %v4354, %v4584
      %v4586 = vpop.f32.mrf.mxu0
      %4587 = vmatprep.mubr.f32.mxu0 0.0
      %4588 = vmatmul.mubr.f32.gmra.mxu0 %v4155
      %v4589 = vpop.f32.mrf.mxu0
      %v4590 = vadd.f32 %v4359, %v4589
      %v4591 = vpop.f32.mrf.mxu0
      %4592 = vmatprep.mubr.f32.mxu0 0.0
      %4593 = vmatmul.mubr.f32.gmra.mxu0 %v4158
      %v4594 = vpop.f32.mrf.mxu0
      %v4595 = vadd.f32 %v4364, %v4594
      %v4596 = vpop.f32.mrf.mxu0
      %4597 = vmatprep.mubr.f32.mxu0 0.0
      %4598 = vmatmul.mubr.f32.gmra.mxu0 %v4161
      %v4599 = vpop.f32.mrf.mxu0
      %v4600 = vadd.f32 %v4369, %v4599
      %v4601 = vpop.f32.mrf.mxu0
      %4602 = vmatprep.mubr.f32.mxu0 0.0
      %4603 = vmatmul.mubr.f32.gmra.mxu0 %v4164
      %v4604 = vpop.f32.mrf.mxu0
      %v4605 = vadd.f32 %v4374, %v4604
      %v4606 = vpop.f32.mrf.mxu0
      %4607 = vmatprep.mubr.f32.mxu0 0.0
      %4608 = vmatmul.mubr.f32.gmra.mxu0 %v4167
      %v4609 = vpop.f32.mrf.mxu0
      %v4610 = vadd.f32 %v4379, %v4609
      %v4611 = vpop.f32.mrf.mxu0
      %4612 = vmatprep.mubr.f32.mxu0 0.0
      %4613 = vmatmul.mubr.f32.gmra.mxu0 %v4170
      %v4614 = vpop.f32.mrf.mxu0
      %v4615 = vadd.f32 %v4384, %v4614
      %v4616 = vpop.f32.mrf.mxu0
      %4617 = vmatprep.mubr.f32.mxu0 0.0
      %4618 = vmatmul.mubr.f32.gmra.mxu0 %v4173
      %v4619 = vpop.f32.mrf.mxu0
      %v4620 = vadd.f32 %v4389, %v4619
      %v4621 = vpop.f32.mrf.mxu0
      %4622 = vmatprep.mubr.f32.mxu0 0.0
      %4623 = vmatmul.mubr.f32.gmra.mxu0 %v4176
      %v4624 = vpop.f32.mrf.mxu0
      %v4625 = vadd.f32 %v4394, %v4624
      %v4626 = vpop.f32.mrf.mxu0
      %4627 = vmatprep.mubr.f32.mxu0 0.0
      %4628 = vmatmul.mubr.f32.gmra.mxu0 %v4179
      %v4629 = vpop.f32.mrf.mxu0
      %v4630 = vadd.f32 %v4399, %v4629
      %v4631 = vpop.f32.mrf.mxu0
      %4632 = vmatprep.mubr.f32.mxu0 0.0
      %4633 = vmatmul.mubr.f32.gmra.mxu0 %v4182
      %v4634 = vpop.f32.mrf.mxu0
      %v4635 = vadd.f32 %v4404, %v4634
      %v4636 = vpop.f32.mrf.mxu0
      %4637 = vmatprep.mubr.f32.mxu0 0.0
      %4638 = vmatmul.mubr.f32.gmra.mxu0 %v4185
      %v4639 = vpop.f32.mrf.mxu0
      %v4640 = vadd.f32 %v4409, %v4639
      %v4641 = vpop.f32.mrf.mxu0
      %4642 = vmatprep.mubr.f32.mxu0 0.0
      %4643 = vmatmul.mubr.f32.gmra.mxu0 %v4188
      %v4644 = vpop.f32.mrf.mxu0
      %v4645 = vadd.f32 %v4414, %v4644
      %v4646 = vpop.f32.mrf.mxu0
      %4647 = vmatprep.mubr.f32.mxu0 0.0
      %4648 = vmatmul.mubr.f32.gmra.mxu0 %v4191
      %v4649 = vpop.f32.mrf.mxu0
      %v4650 = vadd.f32 %v4419, %v4649
      %v4651 = vpop.f32.mrf.mxu0
      %4652 = vmatprep.mubr.f32.mxu0 0.0
      %4653 = vmatmul.mubr.f32.gmra.mxu0 %v4194
      %v4654 = vpop.f32.mrf.mxu0
      %v4655 = vadd.f32 %v4424, %v4654
      %v4656 = vpop.f32.mrf.mxu0
      %4657 = vdwg.mxu0
      %4660 = vrot.lane.b32.xlu0 %v3728, 32
      %v4661 = vpop.permute.xlu0 %4660
      %4662 = vrot.lane.b32.xlu0 %v3729, 32
      %v4663 = vpop.permute.xlu0 %4662
      %4668 = vrot.lane.b32.xlu0 %v3764, 64
      %v4669 = vpop.permute.xlu0 %4668
      %4670 = vrot.lane.b32.xlu0 %v3765, 64
      %v4671 = vpop.permute.xlu0 %4670
      %v4674 = vsel %vm1854, %v3692, %v4661
      %v4675 = vsel %vm1854, %v3693, %v4663
      %v4676 = vsel %vm333, %v4674, %v4669
      %v4677 = vsel %vm333, %v4675, %v4671
      %v4679 = vsel %vm2335, %v4676, 0
      %v4682 = vsel %vm2335, %v4677, 0
      %4684 = vmatprep.subr.mxu0 0.0
      %4685 = vmatpush1.msra.mxu0 0.0
      %4686 = vmatprep.subr.mxu0 0.0
      %4687 = vmatpush1.msra.mxu0 0.0
      %4688 = vmatprep.subr.mxu0 0.0
      %4689 = vmatpush1.msra.mxu0 0.0
      %4690 = vmatprep.subr.mxu0 0.0
      %4691 = vmatpush1.msra.mxu0 0.0
      %4692 = vmatprep.subr.mxu0 0.0
      %4693 = vmatpush1.msra.mxu0 %v3625
      %4694 = vmatprep.subr.mxu0 0.0
      %4695 = vmatpush1.msra.mxu0 %v3624
      %4696 = vmatprep.subr.mxu0 0.0
      %4697 = vmatpush1.msra.mxu0 %v3623
      %4698 = vmatprep.subr.mxu0 0.0
      %4699 = vmatpush1.msra.mxu0 %v3622
      %4700 = vmatprep.subr.mxu0 0.0
      %4701 = vmatpush1.msra.mxu0 %v3621
      %4702 = vmatprep.subr.mxu0 0.0
      %4703 = vmatpush1.msra.mxu0 %v3620
      %4704 = vmatprep.subr.mxu0 0.0
      %4705 = vmatpush1.msra.mxu0 %v3619
      %4706 = vmatprep.subr.mxu0 0.0
      %4707 = vmatpush1.msra.mxu0 %v3618
      %4708 = vmatprep.subr.mxu0 0.0
      %4709 = vmatpush1.msra.mxu0 %v3617
      %4710 = vmatprep.subr.mxu0 0.0
      %4711 = vmatpush1.msra.mxu0 %v3616
      %4712 = vmatprep.subr.mxu0 0.0
      %4713 = vmatpush1.msra.mxu0 %v3615
      %4714 = vmatprep.subr.mxu0 0.0
      %4715 = vmatpush1.msra.mxu0 %v3614
      %4716 = vmatprep.subr.mxu0 0.0
      %4717 = vmatpush2.msra.mxu0 0.0
      %4718 = vmatprep.subr.mxu0 0.0
      %4719 = vmatpush2.msra.mxu0 0.0
      %4720 = vmatprep.subr.mxu0 0.0
      %4721 = vmatpush2.msra.mxu0 0.0
      %4722 = vmatprep.subr.mxu0 0.0
      %4723 = vmatpush2.msra.mxu0 0.0
      %4724 = vmatprep.subr.mxu0 0.0
      %4725 = vmatpush2.msra.mxu0 0.0
      %4726 = vmatprep.subr.mxu0 0.0
      %4727 = vmatpush2.msra.mxu0 0.0
      %4728 = vmatprep.subr.mxu0 0.0
      %4729 = vmatpush2.msra.mxu0 0.0
      %4730 = vmatprep.subr.mxu0 0.0
      %4731 = vmatpush2.msra.mxu0 0.0
      %4732 = vmatprep.subr.mxu0 0.0
      %4733 = vmatpush2.msra.mxu0 0.0
      %4734 = vmatprep.subr.mxu0 0.0
      %4735 = vmatpush2.msra.mxu0 0.0
      %4736 = vmatprep.subr.mxu0 0.0
      %4737 = vmatpush2.msra.mxu0 0.0
      %4738 = vmatprep.subr.mxu0 0.0
      %4739 = vmatpush2.msra.mxu0 0.0
      %4740 = vmatprep.subr.mxu0 0.0
      %4741 = vmatpush2.msra.mxu0 0.0
      %4742 = vmatprep.subr.mxu0 0.0
      %4743 = vmatpush2.msra.mxu0 0.0
      %4744 = vmatprep.subr.mxu0 0.0
      %4745 = vmatpush2.msra.mxu0 0.0
      %4746 = vmatprep.subr.mxu0 0.0
      %4747 = vmatpush2.msra.mxu0 0.0
      %4748 = vmatprep.mubr.f32.mxu0 0.0
      %4749 = vmatmul.mubr.f32.gmra.mxu0 %v4113
      %v4750 = vpop.f32.mrf.mxu0
      %v4751 = vadd.f32 0.0, %v4750
      %v4752 = vpop.f32.mrf.mxu0
      %4753 = vmatprep.mubr.f32.mxu0 0.0
      %4754 = vmatmul.mubr.f32.gmra.mxu0 %v4116
      %v4755 = vpop.f32.mrf.mxu0
      %v4756 = vadd.f32 0.0, %v4755
      %v4757 = vpop.f32.mrf.mxu0
      %4758 = vmatprep.mubr.f32.mxu0 0.0
      %4759 = vmatmul.mubr.f32.gmra.mxu0 %v4119
      %v4760 = vpop.f32.mrf.mxu0
      %v4761 = vadd.f32 0.0, %v4760
      %v4762 = vpop.f32.mrf.mxu0
      %4763 = vmatprep.mubr.f32.mxu0 0.0
      %4764 = vmatmul.mubr.f32.gmra.mxu0 %v4122
      %v4765 = vpop.f32.mrf.mxu0
      %v4766 = vadd.f32 0.0, %v4765
      %v4767 = vpop.f32.mrf.mxu0
      %4768 = vmatprep.mubr.f32.mxu0 0.0
      %4769 = vmatmul.mubr.f32.gmra.mxu0 %v4125
      %v4770 = vpop.f32.mrf.mxu0
      %v4771 = vadd.f32 0.0, %v4770
      %v4772 = vpop.f32.mrf.mxu0
      %4773 = vmatprep.mubr.f32.mxu0 0.0
      %4774 = vmatmul.mubr.f32.gmra.mxu0 %v4128
      %v4775 = vpop.f32.mrf.mxu0
      %v4776 = vadd.f32 0.0, %v4775
      %v4777 = vpop.f32.mrf.mxu0
      %4778 = vmatprep.mubr.f32.mxu0 0.0
      %4779 = vmatmul.mubr.f32.gmra.mxu0 %v4131
      %v4780 = vpop.f32.mrf.mxu0
      %v4781 = vadd.f32 0.0, %v4780
      %v4782 = vpop.f32.mrf.mxu0
      %4783 = vmatprep.mubr.f32.mxu0 0.0
      %4784 = vmatmul.mubr.f32.gmra.mxu0 %v4134
      %v4785 = vpop.f32.mrf.mxu0
      %v4786 = vadd.f32 0.0, %v4785
      %v4787 = vpop.f32.mrf.mxu0
      %4788 = vmatprep.mubr.f32.mxu0 0.0
      %4789 = vmatmul.mubr.f32.gmra.mxu0 %v4137
      %v4790 = vpop.f32.mrf.mxu0
      %v4791 = vadd.f32 0.0, %v4790
      %v4792 = vpop.f32.mrf.mxu0
      %4793 = vmatprep.mubr.f32.mxu0 0.0
      %4794 = vmatmul.mubr.f32.gmra.mxu0 %v4140
      %v4795 = vpop.f32.mrf.mxu0
      %v4796 = vadd.f32 0.0, %v4795
      %v4797 = vpop.f32.mrf.mxu0
      %4798 = vmatprep.mubr.f32.mxu0 0.0
      %4799 = vmatmul.mubr.f32.gmra.mxu0 %v4143
      %v4800 = vpop.f32.mrf.mxu0
      %v4801 = vadd.f32 0.0, %v4800
      %v4802 = vpop.f32.mrf.mxu0
      %4803 = vmatprep.mubr.f32.mxu0 0.0
      %4804 = vmatmul.mubr.f32.gmra.mxu0 %v4146
      %v4805 = vpop.f32.mrf.mxu0
      %v4806 = vadd.f32 0.0, %v4805
      %v4807 = vpop.f32.mrf.mxu0
      %4808 = vmatprep.mubr.f32.mxu0 0.0
      %4809 = vmatmul.mubr.f32.gmra.mxu0 %v4149
      %v4810 = vpop.f32.mrf.mxu0
      %v4811 = vadd.f32 0.0, %v4810
      %v4812 = vpop.f32.mrf.mxu0
      %4813 = vmatprep.mubr.f32.mxu0 0.0
      %4814 = vmatmul.mubr.f32.gmra.mxu0 %v4152
      %v4815 = vpop.f32.mrf.mxu0
      %v4816 = vadd.f32 0.0, %v4815
      %v4817 = vpop.f32.mrf.mxu0
      %4818 = vmatprep.mubr.f32.mxu0 0.0
      %4819 = vmatmul.mubr.f32.gmra.mxu0 %v4155
      %v4820 = vpop.f32.mrf.mxu0
      %v4821 = vadd.f32 0.0, %v4820
      %v4822 = vpop.f32.mrf.mxu0
      %4823 = vmatprep.mubr.f32.mxu0 0.0
      %4824 = vmatmul.mubr.f32.gmra.mxu0 %v4158
      %v4825 = vpop.f32.mrf.mxu0
      %v4826 = vadd.f32 0.0, %v4825
      %v4827 = vpop.f32.mrf.mxu0
      %4828 = vmatprep.mubr.f32.mxu0 0.0
      %4829 = vmatmul.mubr.f32.gmra.mxu0 %v4161
      %v4830 = vpop.f32.mrf.mxu0
      %v4831 = vadd.f32 0.0, %v4830
      %v4832 = vpop.f32.mrf.mxu0
      %4833 = vmatprep.mubr.f32.mxu0 0.0
      %4834 = vmatmul.mubr.f32.gmra.mxu0 %v4164
      %v4835 = vpop.f32.mrf.mxu0
      %v4836 = vadd.f32 0.0, %v4835
      %v4837 = vpop.f32.mrf.mxu0
      %4838 = vmatprep.mubr.f32.mxu0 0.0
      %4839 = vmatmul.mubr.f32.gmra.mxu0 %v4167
      %v4840 = vpop.f32.mrf.mxu0
      %v4841 = vadd.f32 0.0, %v4840
      %v4842 = vpop.f32.mrf.mxu0
      %4843 = vmatprep.mubr.f32.mxu0 0.0
      %4844 = vmatmul.mubr.f32.gmra.mxu0 %v4170
      %v4845 = vpop.f32.mrf.mxu0
      %v4846 = vadd.f32 0.0, %v4845
      %v4847 = vpop.f32.mrf.mxu0
      %4848 = vmatprep.mubr.f32.mxu0 0.0
      %4849 = vmatmul.mubr.f32.gmra.mxu0 %v4173
      %v4850 = vpop.f32.mrf.mxu0
      %v4851 = vadd.f32 0.0, %v4850
      %v4852 = vpop.f32.mrf.mxu0
      %4853 = vmatprep.mubr.f32.mxu0 0.0
      %4854 = vmatmul.mubr.f32.gmra.mxu0 %v4176
      %v4855 = vpop.f32.mrf.mxu0
      %v4856 = vadd.f32 0.0, %v4855
      %v4857 = vpop.f32.mrf.mxu0
      %4858 = vmatprep.mubr.f32.mxu0 0.0
      %4859 = vmatmul.mubr.f32.gmra.mxu0 %v4179
      %v4860 = vpop.f32.mrf.mxu0
      %v4861 = vadd.f32 0.0, %v4860
      %v4862 = vpop.f32.mrf.mxu0
      %4863 = vmatprep.mubr.f32.mxu0 0.0
      %4864 = vmatmul.mubr.f32.gmra.mxu0 %v4182
      %v4865 = vpop.f32.mrf.mxu0
      %v4866 = vadd.f32 0.0, %v4865
      %v4867 = vpop.f32.mrf.mxu0
      %4868 = vmatprep.mubr.f32.mxu0 0.0
      %4869 = vmatmul.mubr.f32.gmra.mxu0 %v4185
      %v4870 = vpop.f32.mrf.mxu0
      %v4871 = vadd.f32 0.0, %v4870
      %v4872 = vpop.f32.mrf.mxu0
      %4873 = vmatprep.mubr.f32.mxu0 0.0
      %4874 = vmatmul.mubr.f32.gmra.mxu0 %v4188
      %v4875 = vpop.f32.mrf.mxu0
      %v4876 = vadd.f32 0.0, %v4875
      %v4877 = vpop.f32.mrf.mxu0
      %4878 = vmatprep.mubr.f32.mxu0 0.0
      %4879 = vmatmul.mubr.f32.gmra.mxu0 %v4191
      %v4880 = vpop.f32.mrf.mxu0
      %v4881 = vadd.f32 0.0, %v4880
      %v4882 = vpop.f32.mrf.mxu0
      %4883 = vmatprep.mubr.f32.mxu0 0.0
      %4884 = vmatmul.mubr.f32.gmra.mxu0 %v4194
      %v4885 = vpop.f32.mrf.mxu0
      %v4886 = vadd.f32 0.0, %v4885
      %v4887 = vpop.f32.mrf.mxu0
      %4888 = vmatprep.mubr.f32.mxu0 0.0
      %4889 = vmatmul.mubr.f32.gmra.mxu0 %v4197
      %v4890 = vpop.f32.mrf.mxu0
      %v4891 = vadd.f32 0.0, %v4890
      %v4892 = vpop.f32.mrf.mxu0
      %4893 = vmatprep.mubr.f32.mxu0 0.0
      %4894 = vmatmul.mubr.f32.gmra.mxu0 %v4200
      %v4895 = vpop.f32.mrf.mxu0
      %v4896 = vadd.f32 0.0, %v4895
      %v4897 = vpop.f32.mrf.mxu0
      %4898 = vmatprep.mubr.f32.mxu0 0.0
      %4899 = vmatmul.mubr.f32.gmra.mxu0 %v4679
      %v4900 = vpop.f32.mrf.mxu0
      %v4901 = vadd.f32 0.0, %v4900
      %v4902 = vpop.f32.mrf.mxu0
      %4903 = vmatprep.mubr.f32.mxu0 0.0
      %4904 = vmatmul.mubr.f32.gmra.mxu0 %v4682
      %v4905 = vpop.f32.mrf.mxu0
      %v4906 = vadd.f32 0.0, %v4905
      %v4907 = vpop.f32.mrf.mxu0
      %4908 = vdwg.mxu0
      %v4909 = vadd.f32 %v4500, %v4751
      %v4910 = vadd.f32 %v4505, %v4756
      %v4911 = vadd.f32 %v4510, %v4761
      %v4912 = vadd.f32 %v4515, %v4766
      %v4913 = vadd.f32 %v4520, %v4771
      %v4914 = vadd.f32 %v4525, %v4776
      %v4915 = vadd.f32 %v4530, %v4781
      %v4916 = vadd.f32 %v4535, %v4786
      %v4917 = vadd.f32 %v4540, %v4791
      %v4918 = vadd.f32 %v4545, %v4796
      %v4919 = vadd.f32 %v4550, %v4801
      %v4920 = vadd.f32 %v4555, %v4806
      %v4921 = vadd.f32 %v4560, %v4811
      %v4922 = vadd.f32 %v4565, %v4816
      %v4923 = vadd.f32 %v4570, %v4821
      %v4924 = vadd.f32 %v4575, %v4826
      %v4925 = vadd.f32 %v4580, %v4831
      %v4926 = vadd.f32 %v4585, %v4836
      %v4927 = vadd.f32 %v4590, %v4841
      %v4928 = vadd.f32 %v4595, %v4846
      %v4929 = vadd.f32 %v4600, %v4851
      %v4930 = vadd.f32 %v4605, %v4856
      %v4931 = vadd.f32 %v4610, %v4861
      %v4932 = vadd.f32 %v4615, %v4866
      %v4933 = vadd.f32 %v4620, %v4871
      %v4934 = vadd.f32 %v4625, %v4876
      %v4935 = vadd.f32 %v4630, %v4881
      %v4936 = vadd.f32 %v4635, %v4886
      %v4937 = vadd.f32 %v4640, %v4891
      %v4938 = vadd.f32 %v4645, %v4896
      %v4939 = vadd.f32 %v4650, %v4901
      %v4940 = vadd.f32 %v4655, %v4906
      %v4941 = vmax.f32 %v4909, 0.0
      %v4942 = vmax.f32 %v4910, 0.0
      %v4943 = vmax.f32 %v4911, 0.0
      %v4944 = vmax.f32 %v4912, 0.0
      %v4945 = vmax.f32 %v4913, 0.0
      %v4946 = vmax.f32 %v4914, 0.0
      %v4947 = vmax.f32 %v4915, 0.0
      %v4948 = vmax.f32 %v4916, 0.0
      %v4949 = vmax.f32 %v4917, 0.0
      %v4950 = vmax.f32 %v4918, 0.0
      %v4951 = vmax.f32 %v4919, 0.0
      %v4952 = vmax.f32 %v4920, 0.0
      %v4953 = vmax.f32 %v4921, 0.0
      %v4954 = vmax.f32 %v4922, 0.0
      %v4955 = vmax.f32 %v4923, 0.0
      %v4956 = vmax.f32 %v4924, 0.0
      %v4957 = vmax.f32 %v4925, 0.0
      %v4958 = vmax.f32 %v4926, 0.0
      %v4959 = vmax.f32 %v4927, 0.0
      %v4960 = vmax.f32 %v4928, 0.0
      %v4961 = vmax.f32 %v4929, 0.0
      %v4962 = vmax.f32 %v4930, 0.0
      %v4963 = vmax.f32 %v4931, 0.0
      %v4964 = vmax.f32 %v4932, 0.0
      %v4965 = vmax.f32 %v4933, 0.0
      %v4966 = vmax.f32 %v4934, 0.0
      %v4967 = vmax.f32 %v4935, 0.0
      %v4968 = vmax.f32 %v4936, 0.0
      %v4969 = vmax.f32 %v4937, 0.0
      %v4970 = vmax.f32 %v4938, 0.0
      %v4971 = vmax.f32 %v4939, 0.0
      %v4972 = vmax.f32 %v4940, 0.0
      %s4973 = scalar_lea.vmem %s4, 8
      %v4974 = vld [vmem:[%s4973] sm:$0xff]
      %v4976 = vsel %vm841, %v4941, 0
      %v4979 = vsel %vm841, %v4942, 0
      %v4982 = vsel %vm841, %v4943, 0
      %v4985 = vsel %vm841, %v4944, 0
      %v4988 = vsel %vm841, %v4945, 0
      %v4991 = vsel %vm841, %v4946, 0
      %v4994 = vsel %vm841, %v4947, 0
      %v4997 = vsel %vm841, %v4948, 0
      %v5000 = vsel %vm841, %v4949, 0
      %v5003 = vsel %vm841, %v4950, 0
      %v5006 = vsel %vm841, %v4951, 0
      %v5009 = vsel %vm841, %v4952, 0
      %v5012 = vsel %vm841, %v4953, 0
      %v5015 = vsel %vm841, %v4954, 0
      %v5018 = vsel %vm841, %v4955, 0
      %v5021 = vsel %vm841, %v4956, 0
      %v5024 = vsel %vm841, %v4957, 0
      %v5027 = vsel %vm841, %v4958, 0
      %v5030 = vsel %vm841, %v4959, 0
      %v5033 = vsel %vm841, %v4960, 0
      %v5036 = vsel %vm841, %v4961, 0
      %v5039 = vsel %vm841, %v4962, 0
      %v5042 = vsel %vm841, %v4963, 0
      %v5045 = vsel %vm841, %v4964, 0
      %v5048 = vsel %vm841, %v4965, 0
      %v5051 = vsel %vm841, %v4966, 0
      %v5054 = vsel %vm841, %v4967, 0
      %v5057 = vsel %vm841, %v4968, 0
      %v5060 = vsel %vm841, %v4969, 0
      %v5063 = vsel %vm841, %v4970, 0
      %v5066 = vsel %vm841, %v4971, 0
      %v5069 = vsel %vm841, %v4972, 0
      %5071 = vmatprep.subr.mxu0 0.0
      %5072 = vmatpush1.msra.mxu0 0.0
      %5073 = vmatprep.subr.mxu0 0.0
      %5074 = vmatpush1.msra.mxu0 0.0
      %5075 = vmatprep.subr.mxu0 0.0
      %5076 = vmatpush1.msra.mxu0 0.0
      %5077 = vmatprep.subr.mxu0 0.0
      %5078 = vmatpush1.msra.mxu0 0.0
      %5079 = vmatprep.subr.mxu0 0.0
      %5080 = vmatpush1.msra.mxu0 0.0
      %5081 = vmatprep.subr.mxu0 0.0
      %5082 = vmatpush1.msra.mxu0 0.0
      %5083 = vmatprep.subr.mxu0 0.0
      %5084 = vmatpush1.msra.mxu0 0.0
      %5085 = vmatprep.subr.mxu0 0.0
      %5086 = vmatpush1.msra.mxu0 0.0
      %5087 = vmatprep.subr.mxu0 0.0
      %5088 = vmatpush1.msra.mxu0 0.0
      %5089 = vmatprep.subr.mxu0 0.0
      %5090 = vmatpush1.msra.mxu0 0.0
      %5091 = vmatprep.subr.mxu0 0.0
      %5092 = vmatpush1.msra.mxu0 0.0
      %5093 = vmatprep.subr.mxu0 0.0
      %5094 = vmatpush1.msra.mxu0 0.0
      %5095 = vmatprep.subr.mxu0 0.0
      %5096 = vmatpush1.msra.mxu0 0.0
      %5097 = vmatprep.subr.mxu0 0.0
      %5098 = vmatpush1.msra.mxu0 0.0
      %5099 = vmatprep.subr.mxu0 0.0
      %5100 = vmatpush1.msra.mxu0 0.0
      %5101 = vmatprep.subr.mxu0 0.0
      %5102 = vmatpush1.msra.mxu0 %v4974
      %5103 = vmatprep.subr.mxu0 0.0
      %5104 = vmatpush2.msra.mxu0 0.0
      %5105 = vmatprep.subr.mxu0 0.0
      %5106 = vmatpush2.msra.mxu0 0.0
      %5107 = vmatprep.subr.mxu0 0.0
      %5108 = vmatpush2.msra.mxu0 0.0
      %5109 = vmatprep.subr.mxu0 0.0
      %5110 = vmatpush2.msra.mxu0 0.0
      %5111 = vmatprep.subr.mxu0 0.0
      %5112 = vmatpush2.msra.mxu0 0.0
      %5113 = vmatprep.subr.mxu0 0.0
      %5114 = vmatpush2.msra.mxu0 0.0
      %5115 = vmatprep.subr.mxu0 0.0
      %5116 = vmatpush2.msra.mxu0 0.0
      %5117 = vmatprep.subr.mxu0 0.0
      %5118 = vmatpush2.msra.mxu0 0.0
      %5119 = vmatprep.subr.mxu0 0.0
      %5120 = vmatpush2.msra.mxu0 0.0
      %5121 = vmatprep.subr.mxu0 0.0
      %5122 = vmatpush2.msra.mxu0 0.0
      %5123 = vmatprep.subr.mxu0 0.0
      %5124 = vmatpush2.msra.mxu0 0.0
      %5125 = vmatprep.subr.mxu0 0.0
      %5126 = vmatpush2.msra.mxu0 0.0
      %5127 = vmatprep.subr.mxu0 0.0
      %5128 = vmatpush2.msra.mxu0 0.0
      %5129 = vmatprep.subr.mxu0 0.0
      %5130 = vmatpush2.msra.mxu0 0.0
      %5131 = vmatprep.subr.mxu0 0.0
      %5132 = vmatpush2.msra.mxu0 0.0
      %5133 = vmatprep.subr.mxu0 0.0
      %5134 = vmatpush2.msra.mxu0 0.0
      %5135 = vmatprep.mubr.f32.mxu0 0.0
      %5136 = vmatmul.mubr.f32.gmra.mxu0 %v4976
      %v5137 = vpop.f32.mrf.mxu0
      %v5138 = vadd.f32 0.0, %v5137
      %v5139 = vpop.f32.mrf.mxu0
      %5140 = vmatprep.mubr.f32.mxu0 0.0
      %5141 = vmatmul.mubr.f32.gmra.mxu0 %v4979
      %v5142 = vpop.f32.mrf.mxu0
      %v5143 = vadd.f32 0.0, %v5142
      %v5144 = vpop.f32.mrf.mxu0
      %5145 = vmatprep.mubr.f32.mxu0 0.0
      %5146 = vmatmul.mubr.f32.gmra.mxu0 %v4982
      %v5147 = vpop.f32.mrf.mxu0
      %v5148 = vadd.f32 0.0, %v5147
      %v5149 = vpop.f32.mrf.mxu0
      %5150 = vmatprep.mubr.f32.mxu0 0.0
      %5151 = vmatmul.mubr.f32.gmra.mxu0 %v4985
      %v5152 = vpop.f32.mrf.mxu0
      %v5153 = vadd.f32 0.0, %v5152
      %v5154 = vpop.f32.mrf.mxu0
      %5155 = vmatprep.mubr.f32.mxu0 0.0
      %5156 = vmatmul.mubr.f32.gmra.mxu0 %v4988
      %v5157 = vpop.f32.mrf.mxu0
      %v5158 = vadd.f32 0.0, %v5157
      %v5159 = vpop.f32.mrf.mxu0
      %5160 = vmatprep.mubr.f32.mxu0 0.0
      %5161 = vmatmul.mubr.f32.gmra.mxu0 %v4991
      %v5162 = vpop.f32.mrf.mxu0
      %v5163 = vadd.f32 0.0, %v5162
      %v5164 = vpop.f32.mrf.mxu0
      %5165 = vmatprep.mubr.f32.mxu0 0.0
      %5166 = vmatmul.mubr.f32.gmra.mxu0 %v4994
      %v5167 = vpop.f32.mrf.mxu0
      %v5168 = vadd.f32 0.0, %v5167
      %v5169 = vpop.f32.mrf.mxu0
      %5170 = vmatprep.mubr.f32.mxu0 0.0
      %5171 = vmatmul.mubr.f32.gmra.mxu0 %v4997
      %v5172 = vpop.f32.mrf.mxu0
      %v5173 = vadd.f32 0.0, %v5172
      %v5174 = vpop.f32.mrf.mxu0
      %5175 = vmatprep.mubr.f32.mxu0 0.0
      %5176 = vmatmul.mubr.f32.gmra.mxu0 %v5000
      %v5177 = vpop.f32.mrf.mxu0
      %v5178 = vadd.f32 0.0, %v5177
      %v5179 = vpop.f32.mrf.mxu0
      %5180 = vmatprep.mubr.f32.mxu0 0.0
      %5181 = vmatmul.mubr.f32.gmra.mxu0 %v5003
      %v5182 = vpop.f32.mrf.mxu0
      %v5183 = vadd.f32 0.0, %v5182
      %v5184 = vpop.f32.mrf.mxu0
      %5185 = vmatprep.mubr.f32.mxu0 0.0
      %5186 = vmatmul.mubr.f32.gmra.mxu0 %v5006
      %v5187 = vpop.f32.mrf.mxu0
      %v5188 = vadd.f32 0.0, %v5187
      %v5189 = vpop.f32.mrf.mxu0
      %5190 = vmatprep.mubr.f32.mxu0 0.0
      %5191 = vmatmul.mubr.f32.gmra.mxu0 %v5009
      %v5192 = vpop.f32.mrf.mxu0
      %v5193 = vadd.f32 0.0, %v5192
      %v5194 = vpop.f32.mrf.mxu0
      %5195 = vmatprep.mubr.f32.mxu0 0.0
      %5196 = vmatmul.mubr.f32.gmra.mxu0 %v5012
      %v5197 = vpop.f32.mrf.mxu0
      %v5198 = vadd.f32 0.0, %v5197
      %v5199 = vpop.f32.mrf.mxu0
      %5200 = vmatprep.mubr.f32.mxu0 0.0
      %5201 = vmatmul.mubr.f32.gmra.mxu0 %v5015
      %v5202 = vpop.f32.mrf.mxu0
      %v5203 = vadd.f32 0.0, %v5202
      %v5204 = vpop.f32.mrf.mxu0
      %5205 = vmatprep.mubr.f32.mxu0 0.0
      %5206 = vmatmul.mubr.f32.gmra.mxu0 %v5018
      %v5207 = vpop.f32.mrf.mxu0
      %v5208 = vadd.f32 0.0, %v5207
      %v5209 = vpop.f32.mrf.mxu0
      %5210 = vmatprep.mubr.f32.mxu0 0.0
      %5211 = vmatmul.mubr.f32.gmra.mxu0 %v5021
      %v5212 = vpop.f32.mrf.mxu0
      %v5213 = vadd.f32 0.0, %v5212
      %v5214 = vpop.f32.mrf.mxu0
      %5215 = vmatprep.mubr.f32.mxu0 0.0
      %5216 = vmatmul.mubr.f32.gmra.mxu0 %v5024
      %v5217 = vpop.f32.mrf.mxu0
      %v5218 = vadd.f32 0.0, %v5217
      %v5219 = vpop.f32.mrf.mxu0
      %5220 = vmatprep.mubr.f32.mxu0 0.0
      %5221 = vmatmul.mubr.f32.gmra.mxu0 %v5027
      %v5222 = vpop.f32.mrf.mxu0
      %v5223 = vadd.f32 0.0, %v5222
      %v5224 = vpop.f32.mrf.mxu0
      %5225 = vmatprep.mubr.f32.mxu0 0.0
      %5226 = vmatmul.mubr.f32.gmra.mxu0 %v5030
      %v5227 = vpop.f32.mrf.mxu0
      %v5228 = vadd.f32 0.0, %v5227
      %v5229 = vpop.f32.mrf.mxu0
      %5230 = vmatprep.mubr.f32.mxu0 0.0
      %5231 = vmatmul.mubr.f32.gmra.mxu0 %v5033
      %v5232 = vpop.f32.mrf.mxu0
      %v5233 = vadd.f32 0.0, %v5232
      %v5234 = vpop.f32.mrf.mxu0
      %5235 = vmatprep.mubr.f32.mxu0 0.0
      %5236 = vmatmul.mubr.f32.gmra.mxu0 %v5036
      %v5237 = vpop.f32.mrf.mxu0
      %v5238 = vadd.f32 0.0, %v5237
      %v5239 = vpop.f32.mrf.mxu0
      %5240 = vmatprep.mubr.f32.mxu0 0.0
      %5241 = vmatmul.mubr.f32.gmra.mxu0 %v5039
      %v5242 = vpop.f32.mrf.mxu0
      %v5243 = vadd.f32 0.0, %v5242
      %v5244 = vpop.f32.mrf.mxu0
      %5245 = vmatprep.mubr.f32.mxu0 0.0
      %5246 = vmatmul.mubr.f32.gmra.mxu0 %v5042
      %v5247 = vpop.f32.mrf.mxu0
      %v5248 = vadd.f32 0.0, %v5247
      %v5249 = vpop.f32.mrf.mxu0
      %5250 = vmatprep.mubr.f32.mxu0 0.0
      %5251 = vmatmul.mubr.f32.gmra.mxu0 %v5045
      %v5252 = vpop.f32.mrf.mxu0
      %v5253 = vadd.f32 0.0, %v5252
      %v5254 = vpop.f32.mrf.mxu0
      %5255 = vmatprep.mubr.f32.mxu0 0.0
      %5256 = vmatmul.mubr.f32.gmra.mxu0 %v5048
      %v5257 = vpop.f32.mrf.mxu0
      %v5258 = vadd.f32 0.0, %v5257
      %v5259 = vpop.f32.mrf.mxu0
      %5260 = vmatprep.mubr.f32.mxu0 0.0
      %5261 = vmatmul.mubr.f32.gmra.mxu0 %v5051
      %v5262 = vpop.f32.mrf.mxu0
      %v5263 = vadd.f32 0.0, %v5262
      %v5264 = vpop.f32.mrf.mxu0
      %5265 = vmatprep.mubr.f32.mxu0 0.0
      %5266 = vmatmul.mubr.f32.gmra.mxu0 %v5054
      %v5267 = vpop.f32.mrf.mxu0
      %v5268 = vadd.f32 0.0, %v5267
      %v5269 = vpop.f32.mrf.mxu0
      %5270 = vmatprep.mubr.f32.mxu0 0.0
      %5271 = vmatmul.mubr.f32.gmra.mxu0 %v5057
      %v5272 = vpop.f32.mrf.mxu0
      %v5273 = vadd.f32 0.0, %v5272
      %v5274 = vpop.f32.mrf.mxu0
      %5275 = vmatprep.mubr.f32.mxu0 0.0
      %5276 = vmatmul.mubr.f32.gmra.mxu0 %v5060
      %v5277 = vpop.f32.mrf.mxu0
      %v5278 = vadd.f32 0.0, %v5277
      %v5279 = vpop.f32.mrf.mxu0
      %5280 = vmatprep.mubr.f32.mxu0 0.0
      %5281 = vmatmul.mubr.f32.gmra.mxu0 %v5063
      %v5282 = vpop.f32.mrf.mxu0
      %v5283 = vadd.f32 0.0, %v5282
      %v5284 = vpop.f32.mrf.mxu0
      %5285 = vmatprep.mubr.f32.mxu0 0.0
      %5286 = vmatmul.mubr.f32.gmra.mxu0 %v5066
      %v5287 = vpop.f32.mrf.mxu0
      %v5288 = vadd.f32 0.0, %v5287
      %v5289 = vpop.f32.mrf.mxu0
      %5290 = vmatprep.mubr.f32.mxu0 0.0
      %5291 = vmatmul.mubr.f32.gmra.mxu0 %v5069
      %v5292 = vpop.f32.mrf.mxu0
      %v5293 = vadd.f32 0.0, %v5292
      %v5294 = vpop.f32.mrf.mxu0
      %5295 = vdwg.mxu0
      %v5296 = vadd.f32 %v3525, %v5138
      %v5297 = vadd.f32 %v3526, %v5143
      %v5298 = vadd.f32 %v3527, %v5148
      %v5299 = vadd.f32 %v3528, %v5153
      %v5300 = vadd.f32 %v3529, %v5158
      %v5301 = vadd.f32 %v3530, %v5163
      %v5302 = vadd.f32 %v3531, %v5168
      %v5303 = vadd.f32 %v3532, %v5173
      %v5304 = vadd.f32 %v3533, %v5178
      %v5305 = vadd.f32 %v3534, %v5183
      %v5306 = vadd.f32 %v3535, %v5188
      %v5307 = vadd.f32 %v3536, %v5193
      %v5308 = vadd.f32 %v3537, %v5198
      %v5309 = vadd.f32 %v3538, %v5203
      %v5310 = vadd.f32 %v3539, %v5208
      %v5311 = vadd.f32 %v3540, %v5213
      %v5312 = vadd.f32 %v3541, %v5218
      %v5313 = vadd.f32 %v3542, %v5223
      %v5314 = vadd.f32 %v3543, %v5228
      %v5315 = vadd.f32 %v3544, %v5233
      %v5316 = vadd.f32 %v3545, %v5238
      %v5317 = vadd.f32 %v3546, %v5243
      %v5318 = vadd.f32 %v3547, %v5248
      %v5319 = vadd.f32 %v3548, %v5253
      %v5320 = vadd.f32 %v3549, %v5258
      %v5321 = vadd.f32 %v3550, %v5263
      %v5322 = vadd.f32 %v3551, %v5268
      %v5323 = vadd.f32 %v3552, %v5273
      %v5324 = vadd.f32 %v3553, %v5278
      %v5325 = vadd.f32 %v3554, %v5283
      %v5326 = vadd.f32 %v3555, %v5288
      %v5327 = vadd.f32 %v3556, %v5293
      %v5328 = vmax.f32 %v5296, 0.0
      %v5329 = vmax.f32 %v5297, 0.0
      %v5330 = vmax.f32 %v5298, 0.0
      %v5331 = vmax.f32 %v5299, 0.0
      %v5332 = vmax.f32 %v5300, 0.0
      %v5333 = vmax.f32 %v5301, 0.0
      %v5334 = vmax.f32 %v5302, 0.0
      %v5335 = vmax.f32 %v5303, 0.0
      %v5336 = vmax.f32 %v5304, 0.0
      %v5337 = vmax.f32 %v5305, 0.0
      %v5338 = vmax.f32 %v5306, 0.0
      %v5339 = vmax.f32 %v5307, 0.0
      %v5340 = vmax.f32 %v5308, 0.0
      %v5341 = vmax.f32 %v5309, 0.0
      %v5342 = vmax.f32 %v5310, 0.0
      %v5343 = vmax.f32 %v5311, 0.0
      %v5344 = vmax.f32 %v5312, 0.0
      %v5345 = vmax.f32 %v5313, 0.0
      %v5346 = vmax.f32 %v5314, 0.0
      %v5347 = vmax.f32 %v5315, 0.0
      %v5348 = vmax.f32 %v5316, 0.0
      %v5349 = vmax.f32 %v5317, 0.0
      %v5350 = vmax.f32 %v5318, 0.0
      %v5351 = vmax.f32 %v5319, 0.0
      %v5352 = vmax.f32 %v5320, 0.0
      %v5353 = vmax.f32 %v5321, 0.0
      %v5354 = vmax.f32 %v5322, 0.0
      %v5355 = vmax.f32 %v5323, 0.0
      %v5356 = vmax.f32 %v5324, 0.0
      %v5357 = vmax.f32 %v5325, 0.0
      %v5358 = vmax.f32 %v5326, 0.0
      %v5359 = vmax.f32 %v5327, 0.0
      %v5360 = vld [vmem:[%s6] sm:$0x1]
      %5361 = vst.msk [vmem:[%s411 + $0x1] sm:$0xff] %vm1854, %v5328
      %5362 = vst.msk [vmem:[%s411 + $0x9] sm:$0xff] %vm1854, %v5329
      %5363 = vst.msk [vmem:[%s411 + $0x19] sm:$0xff] %vm1854, %v5330
      %5364 = vst.msk [vmem:[%s411 + $0x21] sm:$0xff] %vm1854, %v5331
      %5365 = vst.msk [vmem:[%s411 + $0x31] sm:$0xff] %vm1854, %v5332
      %5366 = vst.msk [vmem:[%s411 + $0x39] sm:$0xff] %vm1854, %v5333
      %5367 = vst.msk [vmem:[%s411 + $0x49] sm:$0xff] %vm1854, %v5334
      %5368 = vst.msk [vmem:[%s411 + $0x51] sm:$0xff] %vm1854, %v5335
      %5369 = vst.msk [vmem:[%s411 + $0x61] sm:$0xff] %vm1854, %v5336
      %5370 = vst.msk [vmem:[%s411 + $0x69] sm:$0xff] %vm1854, %v5337
      %5371 = vst.msk [vmem:[%s411 + $0x79] sm:$0xff] %vm1854, %v5338
      %5372 = vst.msk [vmem:[%s411 + $0x81] sm:$0xff] %vm1854, %v5339
      %5373 = vst.msk [vmem:[%s411 + $0x91] sm:$0xff] %vm1854, %v5340
      %5374 = vst.msk [vmem:[%s411 + $0x99] sm:$0xff] %vm1854, %v5341
      %5375 = vst.msk [vmem:[%s411 + $0xa9] sm:$0xff] %vm1854, %v5342
      %5376 = vst.msk [vmem:[%s411 + $0xb1] sm:$0xff] %vm1854, %v5343
      %5377 = vst.msk [vmem:[%s411 + $0xc1] sm:$0xff] %vm1854, %v5344
      %5378 = vst.msk [vmem:[%s411 + $0xc9] sm:$0xff] %vm1854, %v5345
      %5379 = vst.msk [vmem:[%s411 + $0xd9] sm:$0xff] %vm1854, %v5346
      %5380 = vst.msk [vmem:[%s411 + $0xe1] sm:$0xff] %vm1854, %v5347
      %5381 = vst.msk [vmem:[%s411 + $0xf1] sm:$0xff] %vm1854, %v5348
      %5382 = vst.msk [vmem:[%s411 + $0xf9] sm:$0xff] %vm1854, %v5349
      %5383 = vst.msk [vmem:[%s411 + $0x109] sm:$0xff] %vm1854, %v5350
      %5384 = vst.msk [vmem:[%s411 + $0x111] sm:$0xff] %vm1854, %v5351
      %5385 = vst.msk [vmem:[%s411 + $0x121] sm:$0xff] %vm1854, %v5352
      %5386 = vst.msk [vmem:[%s411 + $0x129] sm:$0xff] %vm1854, %v5353
      %5387 = vst.msk [vmem:[%s411 + $0x139] sm:$0xff] %vm1854, %v5354
      %5388 = vst.msk [vmem:[%s411 + $0x141] sm:$0xff] %vm1854, %v5355
      %5389 = vst.msk [vmem:[%s411 + $0x151] sm:$0xff] %vm1854, %v5356
      %5390 = vst.msk [vmem:[%s411 + $0x159] sm:$0xff] %vm1854, %v5357
      %5391 = vst.msk [vmem:[%s411 + $0x169] sm:$0xff] %vm1854, %v5358
      %5392 = vst.msk [vmem:[%s411 + $0x171] sm:$0xff] %vm1854, %v5359
      %v5393 = vld [vmem:[#allocation2] sm:$0xff]
      %v5394 = vld [vmem:[#allocation2 + $0x8] sm:$0xff]
      %v5395 = vld [vmem:[#allocation2 + $0x18] sm:$0xff]
      %v5396 = vld [vmem:[#allocation2 + $0x20] sm:$0xff]
      %v5397 = vld [vmem:[#allocation2 + $0x30] sm:$0xff]
      %v5398 = vld [vmem:[#allocation2 + $0x38] sm:$0xff]
      %v5399 = vld [vmem:[#allocation2 + $0x48] sm:$0xff]
      %v5400 = vld [vmem:[#allocation2 + $0x50] sm:$0xff]
      %v5401 = vld [vmem:[#allocation2 + $0x60] sm:$0xff]
      %v5402 = vld [vmem:[#allocation2 + $0x68] sm:$0xff]
      %v5403 = vld [vmem:[#allocation2 + $0x78] sm:$0xff]
      %v5404 = vld [vmem:[#allocation2 + $0x80] sm:$0xff]
      %v5405 = vld [vmem:[#allocation2 + $0x90] sm:$0xff]
      %v5406 = vld [vmem:[#allocation2 + $0x98] sm:$0xff]
      %v5407 = vld [vmem:[#allocation2 + $0xa8] sm:$0xff]
      %v5408 = vld [vmem:[#allocation2 + $0xb0] sm:$0xff]
      %v5409 = vld [vmem:[#allocation2 + $0xc0] sm:$0xff]
      %v5410 = vld [vmem:[#allocation2 + $0xc8] sm:$0xff]
      %v5411 = vld [vmem:[#allocation2 + $0xd8] sm:$0xff]
      %v5412 = vld [vmem:[#allocation2 + $0xe0] sm:$0xff]
      %v5413 = vld [vmem:[#allocation2 + $0xf0] sm:$0xff]
      %v5414 = vld [vmem:[#allocation2 + $0xf8] sm:$0xff]
      %v5415 = vld [vmem:[#allocation2 + $0x108] sm:$0xff]
      %v5416 = vld [vmem:[#allocation2 + $0x110] sm:$0xff]
      %v5417 = vld [vmem:[#allocation2 + $0x120] sm:$0xff]
      %v5418 = vld [vmem:[#allocation2 + $0x128] sm:$0xff]
      %v5419 = vld [vmem:[#allocation2 + $0x138] sm:$0xff]
      %v5420 = vld [vmem:[#allocation2 + $0x140] sm:$0xff]
      %v5421 = vld [vmem:[#allocation2 + $0x150] sm:$0xff]
      %v5422 = vld [vmem:[#allocation2 + $0x158] sm:$0xff]
      %v5423 = vld [vmem:[#allocation2 + $0x168] sm:$0xff]
      %v5424 = vld [vmem:[#allocation2 + $0x170] sm:$0xff]
      %v5425 = vld [vmem:[#allocation2 + $0x180] sm:$0xff]
      %v5426 = vld [vmem:[#allocation2 + $0x188] sm:$0xff]
      %v5427 = vld [vmem:[#allocation2 + $0x198] sm:$0xff]
      %v5428 = vld [vmem:[#allocation2 + $0x1a0] sm:$0xff]
      %v5429 = vld [vmem:[#allocation2 + $0x1] sm:$0xff]
      %v5430 = vld [vmem:[#allocation2 + $0x9] sm:$0xff]
      %v5431 = vld [vmem:[#allocation2 + $0x19] sm:$0xff]
      %v5432 = vld [vmem:[#allocation2 + $0x21] sm:$0xff]
      %v5433 = vld [vmem:[#allocation2 + $0x31] sm:$0xff]
      %v5434 = vld [vmem:[#allocation2 + $0x39] sm:$0xff]
      %v5435 = vld [vmem:[#allocation2 + $0x49] sm:$0xff]
      %v5436 = vld [vmem:[#allocation2 + $0x51] sm:$0xff]
      %v5437 = vld [vmem:[#allocation2 + $0x61] sm:$0xff]
      %v5438 = vld [vmem:[#allocation2 + $0x69] sm:$0xff]
      %v5439 = vld [vmem:[#allocation2 + $0x79] sm:$0xff]
      %v5440 = vld [vmem:[#allocation2 + $0x81] sm:$0xff]
      %v5441 = vld [vmem:[#allocation2 + $0x91] sm:$0xff]
      %v5442 = vld [vmem:[#allocation2 + $0x99] sm:$0xff]
      %v5443 = vld [vmem:[#allocation2 + $0xa9] sm:$0xff]
      %v5444 = vld [vmem:[#allocation2 + $0xb1] sm:$0xff]
      %v5445 = vld [vmem:[#allocation2 + $0xc1] sm:$0xff]
      %v5446 = vld [vmem:[#allocation2 + $0xc9] sm:$0xff]
      %v5447 = vld [vmem:[#allocation2 + $0xd9] sm:$0xff]
      %v5448 = vld [vmem:[#allocation2 + $0xe1] sm:$0xff]
      %v5449 = vld [vmem:[#allocation2 + $0xf1] sm:$0xff]
      %v5450 = vld [vmem:[#allocation2 + $0xf9] sm:$0xff]
      %v5451 = vld [vmem:[#allocation2 + $0x109] sm:$0xff]
      %v5452 = vld [vmem:[#allocation2 + $0x111] sm:$0xff]
      %v5453 = vld [vmem:[#allocation2 + $0x121] sm:$0xff]
      %v5454 = vld [vmem:[#allocation2 + $0x129] sm:$0xff]
      %v5455 = vld [vmem:[#allocation2 + $0x139] sm:$0xff]
      %v5456 = vld [vmem:[#allocation2 + $0x141] sm:$0xff]
      %v5457 = vld [vmem:[#allocation2 + $0x151] sm:$0xff]
      %v5458 = vld [vmem:[#allocation2 + $0x159] sm:$0xff]
      %v5459 = vld [vmem:[#allocation2 + $0x169] sm:$0xff]
      %v5460 = vld [vmem:[#allocation2 + $0x171] sm:$0xff]
      %v5461 = vld [vmem:[#allocation2 + $0x181] sm:$0xff]
      %v5462 = vld [vmem:[#allocation2 + $0x189] sm:$0xff]
      %v5463 = vld [vmem:[#allocation2 + $0x199] sm:$0xff]
      %v5464 = vld [vmem:[#allocation2 + $0x1a1] sm:$0xff]
      %v5465 = vld [vmem:[#allocation2 + $0x2] sm:$0xff]
      %v5466 = vld [vmem:[#allocation2 + $0xa] sm:$0xff]
      %v5467 = vld [vmem:[#allocation2 + $0x1a] sm:$0xff]
      %v5468 = vld [vmem:[#allocation2 + $0x22] sm:$0xff]
      %v5469 = vld [vmem:[#allocation2 + $0x32] sm:$0xff]
      %v5470 = vld [vmem:[#allocation2 + $0x3a] sm:$0xff]
      %v5471 = vld [vmem:[#allocation2 + $0x4a] sm:$0xff]
      %v5472 = vld [vmem:[#allocation2 + $0x52] sm:$0xff]
      %v5473 = vld [vmem:[#allocation2 + $0x62] sm:$0xff]
      %v5474 = vld [vmem:[#allocation2 + $0x6a] sm:$0xff]
      %v5475 = vld [vmem:[#allocation2 + $0x7a] sm:$0xff]
      %v5476 = vld [vmem:[#allocation2 + $0x82] sm:$0xff]
      %v5477 = vld [vmem:[#allocation2 + $0x92] sm:$0xff]
      %v5478 = vld [vmem:[#allocation2 + $0x9a] sm:$0xff]
      %v5479 = vld [vmem:[#allocation2 + $0xaa] sm:$0xff]
      %v5480 = vld [vmem:[#allocation2 + $0xb2] sm:$0xff]
      %v5481 = vld [vmem:[#allocation2 + $0xc2] sm:$0xff]
      %v5482 = vld [vmem:[#allocation2 + $0xca] sm:$0xff]
      %v5483 = vld [vmem:[#allocation2 + $0xda] sm:$0xff]
      %v5484 = vld [vmem:[#allocation2 + $0xe2] sm:$0xff]
      %v5485 = vld [vmem:[#allocation2 + $0xf2] sm:$0xff]
      %v5486 = vld [vmem:[#allocation2 + $0xfa] sm:$0xff]
      %v5487 = vld [vmem:[#allocation2 + $0x10a] sm:$0xff]
      %v5488 = vld [vmem:[#allocation2 + $0x112] sm:$0xff]
      %v5489 = vld [vmem:[#allocation2 + $0x122] sm:$0xff]
      %v5490 = vld [vmem:[#allocation2 + $0x12a] sm:$0xff]
      %v5491 = vld [vmem:[#allocation2 + $0x13a] sm:$0xff]
      %v5492 = vld [vmem:[#allocation2 + $0x142] sm:$0xff]
      %v5493 = vld [vmem:[#allocation2 + $0x152] sm:$0xff]
      %v5494 = vld [vmem:[#allocation2 + $0x15a] sm:$0xff]
      %v5495 = vld [vmem:[#allocation2 + $0x16a] sm:$0xff]
      %v5496 = vld [vmem:[#allocation2 + $0x172] sm:$0xff]
      %v5497 = vld [vmem:[#allocation2 + $0x182] sm:$0xff]
      %v5498 = vld [vmem:[#allocation2 + $0x18a] sm:$0xff]
      %v5499 = vld [vmem:[#allocation2 + $0x19a] sm:$0xff]
      %v5500 = vld [vmem:[#allocation2 + $0x1a2] sm:$0xff]
      %5533 = vrot.lane.b32.xlu0 %v5429, 32
      %v5534 = vpop.permute.xlu0 %5533
      %5535 = vrot.lane.b32.xlu0 %v5430, 32
      %v5536 = vpop.permute.xlu0 %5535
      %5537 = vrot.lane.b32.xlu0 %v5431, 32
      %v5538 = vpop.permute.xlu0 %5537
      %5539 = vrot.lane.b32.xlu0 %v5432, 32
      %v5540 = vpop.permute.xlu0 %5539
      %5541 = vrot.lane.b32.xlu0 %v5433, 32
      %v5542 = vpop.permute.xlu0 %5541
      %5543 = vrot.lane.b32.xlu0 %v5434, 32
      %v5544 = vpop.permute.xlu0 %5543
      %5545 = vrot.lane.b32.xlu0 %v5435, 32
      %v5546 = vpop.permute.xlu0 %5545
      %5547 = vrot.lane.b32.xlu0 %v5436, 32
      %v5548 = vpop.permute.xlu0 %5547
      %5549 = vrot.lane.b32.xlu0 %v5437, 32
      %v5550 = vpop.permute.xlu0 %5549
      %5551 = vrot.lane.b32.xlu0 %v5438, 32
      %v5552 = vpop.permute.xlu0 %5551
      %5553 = vrot.lane.b32.xlu0 %v5439, 32
      %v5554 = vpop.permute.xlu0 %5553
      %5555 = vrot.lane.b32.xlu0 %v5440, 32
      %v5556 = vpop.permute.xlu0 %5555
      %5557 = vrot.lane.b32.xlu0 %v5441, 32
      %v5558 = vpop.permute.xlu0 %5557
      %5559 = vrot.lane.b32.xlu0 %v5442, 32
      %v5560 = vpop.permute.xlu0 %5559
      %5561 = vrot.lane.b32.xlu0 %v5443, 32
      %v5562 = vpop.permute.xlu0 %5561
      %5563 = vrot.lane.b32.xlu0 %v5444, 32
      %v5564 = vpop.permute.xlu0 %5563
      %5565 = vrot.lane.b32.xlu0 %v5445, 32
      %v5566 = vpop.permute.xlu0 %5565
      %5567 = vrot.lane.b32.xlu0 %v5446, 32
      %v5568 = vpop.permute.xlu0 %5567
      %5569 = vrot.lane.b32.xlu0 %v5447, 32
      %v5570 = vpop.permute.xlu0 %5569
      %5571 = vrot.lane.b32.xlu0 %v5448, 32
      %v5572 = vpop.permute.xlu0 %5571
      %5573 = vrot.lane.b32.xlu0 %v5449, 32
      %v5574 = vpop.permute.xlu0 %5573
      %5575 = vrot.lane.b32.xlu0 %v5450, 32
      %v5576 = vpop.permute.xlu0 %5575
      %5577 = vrot.lane.b32.xlu0 %v5451, 32
      %v5578 = vpop.permute.xlu0 %5577
      %5579 = vrot.lane.b32.xlu0 %v5452, 32
      %v5580 = vpop.permute.xlu0 %5579
      %5581 = vrot.lane.b32.xlu0 %v5453, 32
      %v5582 = vpop.permute.xlu0 %5581
      %5583 = vrot.lane.b32.xlu0 %v5454, 32
      %v5584 = vpop.permute.xlu0 %5583
      %5585 = vrot.lane.b32.xlu0 %v5455, 32
      %v5586 = vpop.permute.xlu0 %5585
      %5587 = vrot.lane.b32.xlu0 %v5456, 32
      %v5588 = vpop.permute.xlu0 %5587
      %5589 = vrot.lane.b32.xlu0 %v5457, 32
      %v5590 = vpop.permute.xlu0 %5589
      %5591 = vrot.lane.b32.xlu0 %v5458, 32
      %v5592 = vpop.permute.xlu0 %5591
      %5593 = vrot.lane.b32.xlu0 %v5459, 32
      %v5594 = vpop.permute.xlu0 %5593
      %5595 = vrot.lane.b32.xlu0 %v5460, 32
      %v5596 = vpop.permute.xlu0 %5595
      %5661 = vrot.lane.b32.xlu0 %v5465, 64
      %v5662 = vpop.permute.xlu0 %5661
      %5663 = vrot.lane.b32.xlu0 %v5466, 64
      %v5664 = vpop.permute.xlu0 %5663
      %5665 = vrot.lane.b32.xlu0 %v5467, 64
      %v5666 = vpop.permute.xlu0 %5665
      %5667 = vrot.lane.b32.xlu0 %v5468, 64
      %v5668 = vpop.permute.xlu0 %5667
      %5669 = vrot.lane.b32.xlu0 %v5469, 64
      %v5670 = vpop.permute.xlu0 %5669
      %5671 = vrot.lane.b32.xlu0 %v5470, 64
      %v5672 = vpop.permute.xlu0 %5671
      %5673 = vrot.lane.b32.xlu0 %v5471, 64
      %v5674 = vpop.permute.xlu0 %5673
      %5675 = vrot.lane.b32.xlu0 %v5472, 64
      %v5676 = vpop.permute.xlu0 %5675
      %5677 = vrot.lane.b32.xlu0 %v5473, 64
      %v5678 = vpop.permute.xlu0 %5677
      %5679 = vrot.lane.b32.xlu0 %v5474, 64
      %v5680 = vpop.permute.xlu0 %5679
      %5681 = vrot.lane.b32.xlu0 %v5475, 64
      %v5682 = vpop.permute.xlu0 %5681
      %5683 = vrot.lane.b32.xlu0 %v5476, 64
      %v5684 = vpop.permute.xlu0 %5683
      %5685 = vrot.lane.b32.xlu0 %v5477, 64
      %v5686 = vpop.permute.xlu0 %5685
      %5687 = vrot.lane.b32.xlu0 %v5478, 64
      %v5688 = vpop.permute.xlu0 %5687
      %5689 = vrot.lane.b32.xlu0 %v5479, 64
      %v5690 = vpop.permute.xlu0 %5689
      %5691 = vrot.lane.b32.xlu0 %v5480, 64
      %v5692 = vpop.permute.xlu0 %5691
      %5693 = vrot.lane.b32.xlu0 %v5481, 64
      %v5694 = vpop.permute.xlu0 %5693
      %5695 = vrot.lane.b32.xlu0 %v5482, 64
      %v5696 = vpop.permute.xlu0 %5695
      %5697 = vrot.lane.b32.xlu0 %v5483, 64
      %v5698 = vpop.permute.xlu0 %5697
      %5699 = vrot.lane.b32.xlu0 %v5484, 64
      %v5700 = vpop.permute.xlu0 %5699
      %5701 = vrot.lane.b32.xlu0 %v5485, 64
      %v5702 = vpop.permute.xlu0 %5701
      %5703 = vrot.lane.b32.xlu0 %v5486, 64
      %v5704 = vpop.permute.xlu0 %5703
      %5705 = vrot.lane.b32.xlu0 %v5487, 64
      %v5706 = vpop.permute.xlu0 %5705
      %5707 = vrot.lane.b32.xlu0 %v5488, 64
      %v5708 = vpop.permute.xlu0 %5707
      %5709 = vrot.lane.b32.xlu0 %v5489, 64
      %v5710 = vpop.permute.xlu0 %5709
      %5711 = vrot.lane.b32.xlu0 %v5490, 64
      %v5712 = vpop.permute.xlu0 %5711
      %5713 = vrot.lane.b32.xlu0 %v5491, 64
      %v5714 = vpop.permute.xlu0 %5713
      %5715 = vrot.lane.b32.xlu0 %v5492, 64
      %v5716 = vpop.permute.xlu0 %5715
      %5717 = vrot.lane.b32.xlu0 %v5493, 64
      %v5718 = vpop.permute.xlu0 %5717
      %5719 = vrot.lane.b32.xlu0 %v5494, 64
      %v5720 = vpop.permute.xlu0 %5719
      %5721 = vrot.lane.b32.xlu0 %v5495, 64
      %v5722 = vpop.permute.xlu0 %5721
      %5723 = vrot.lane.b32.xlu0 %v5496, 64
      %v5724 = vpop.permute.xlu0 %5723
      %v5757 = vsel %vm1854, %v5393, %v5534
      %v5758 = vsel %vm1854, %v5394, %v5536
      %v5759 = vsel %vm1854, %v5395, %v5538
      %v5760 = vsel %vm1854, %v5396, %v5540
      %v5761 = vsel %vm1854, %v5397, %v5542
      %v5762 = vsel %vm1854, %v5398, %v5544
      %v5763 = vsel %vm1854, %v5399, %v5546
      %v5764 = vsel %vm1854, %v5400, %v5548
      %v5765 = vsel %vm1854, %v5401, %v5550
      %v5766 = vsel %vm1854, %v5402, %v5552
      %v5767 = vsel %vm1854, %v5403, %v5554
      %v5768 = vsel %vm1854, %v5404, %v5556
      %v5769 = vsel %vm1854, %v5405, %v5558
      %v5770 = vsel %vm1854, %v5406, %v5560
      %v5771 = vsel %vm1854, %v5407, %v5562
      %v5772 = vsel %vm1854, %v5408, %v5564
      %v5773 = vsel %vm1854, %v5409, %v5566
      %v5774 = vsel %vm1854, %v5410, %v5568
      %v5775 = vsel %vm1854, %v5411, %v5570
      %v5776 = vsel %vm1854, %v5412, %v5572
      %v5777 = vsel %vm1854, %v5413, %v5574
      %v5778 = vsel %vm1854, %v5414, %v5576
      %v5779 = vsel %vm1854, %v5415, %v5578
      %v5780 = vsel %vm1854, %v5416, %v5580
      %v5781 = vsel %vm1854, %v5417, %v5582
      %v5782 = vsel %vm1854, %v5418, %v5584
      %v5783 = vsel %vm1854, %v5419, %v5586
      %v5784 = vsel %vm1854, %v5420, %v5588
      %v5785 = vsel %vm1854, %v5421, %v5590
      %v5786 = vsel %vm1854, %v5422, %v5592
      %v5787 = vsel %vm1854, %v5423, %v5594
      %v5788 = vsel %vm1854, %v5424, %v5596
      %v5789 = vsel %vm333, %v5757, %v5662
      %v5790 = vsel %vm333, %v5758, %v5664
      %v5791 = vsel %vm333, %v5759, %v5666
      %v5792 = vsel %vm333, %v5760, %v5668
      %v5793 = vsel %vm333, %v5761, %v5670
      %v5794 = vsel %vm333, %v5762, %v5672
      %v5795 = vsel %vm333, %v5763, %v5674
      %v5796 = vsel %vm333, %v5764, %v5676
      %v5797 = vsel %vm333, %v5765, %v5678
      %v5798 = vsel %vm333, %v5766, %v5680
      %v5799 = vsel %vm333, %v5767, %v5682
      %v5800 = vsel %vm333, %v5768, %v5684
      %v5801 = vsel %vm333, %v5769, %v5686
      %v5802 = vsel %vm333, %v5770, %v5688
      %v5803 = vsel %vm333, %v5771, %v5690
      %v5804 = vsel %vm333, %v5772, %v5692
      %v5805 = vsel %vm333, %v5773, %v5694
      %v5806 = vsel %vm333, %v5774, %v5696
      %v5807 = vsel %vm333, %v5775, %v5698
      %v5808 = vsel %vm333, %v5776, %v5700
      %v5809 = vsel %vm333, %v5777, %v5702
      %v5810 = vsel %vm333, %v5778, %v5704
      %v5811 = vsel %vm333, %v5779, %v5706
      %v5812 = vsel %vm333, %v5780, %v5708
      %v5813 = vsel %vm333, %v5781, %v5710
      %v5814 = vsel %vm333, %v5782, %v5712
      %v5815 = vsel %vm333, %v5783, %v5714
      %v5816 = vsel %vm333, %v5784, %v5716
      %v5817 = vsel %vm333, %v5785, %v5718
      %v5818 = vsel %vm333, %v5786, %v5720
      %v5819 = vsel %vm333, %v5787, %v5722
      %v5820 = vsel %vm333, %v5788, %v5724
      %v5821 = vld [vmem:[%s5] sm:$0xff]
      %v5822 = vld [vmem:[%s5 + $0x8] sm:$0xff]
      %v5823 = vld [vmem:[%s5 + $0x10] sm:$0xff]
      %v5824 = vld [vmem:[%s5 + $0x18] sm:$0xff]
      %v5825 = vld [vmem:[%s5 + $0x20] sm:$0xff]
      %v5826 = vld [vmem:[%s5 + $0x28] sm:$0xff]
      %v5827 = vld [vmem:[%s5 + $0x30] sm:$0xff]
      %v5828 = vld [vmem:[%s5 + $0x38] sm:$0xff]
      %v5829 = vld [vmem:[%s5 + $0x40] sm:$0xff]
      %v5830 = vld [vmem:[%s5 + $0x48] sm:$0xff]
      %v5831 = vld [vmem:[%s5 + $0x50] sm:$0xff]
      %v5832 = vld [vmem:[%s5 + $0x58] sm:$0xff]
      %5835 = vrot.lane.b32.xlu0 %v5461, 32
      %v5836 = vpop.permute.xlu0 %5835
      %5837 = vrot.lane.b32.xlu0 %v5462, 32
      %v5838 = vpop.permute.xlu0 %5837
      %5843 = vrot.lane.b32.xlu0 %v5497, 64
      %v5844 = vpop.permute.xlu0 %5843
      %5845 = vrot.lane.b32.xlu0 %v5498, 64
      %v5846 = vpop.permute.xlu0 %5845
      %v5849 = vsel %vm1854, %v5425, %v5836
      %v5850 = vsel %vm1854, %v5426, %v5838
      %v5851 = vsel %vm333, %v5849, %v5844
      %v5852 = vsel %vm333, %v5850, %v5846
      %s5853 = scalar_lea.vmem %s5, 96
      %v5854 = vld [vmem:[%s5853] sm:$0xff]
      %v5855 = vld [vmem:[%s5853 + $0x8] sm:$0xff]
      %v5856 = vld [vmem:[%s5853 + $0x10] sm:$0xff]
      %v5857 = vld [vmem:[%s5853 + $0x18] sm:$0xff]
      %v5858 = vld [vmem:[%s5853 + $0x20] sm:$0xff]
      %v5859 = vld [vmem:[%s5853 + $0x28] sm:$0xff]
      %v5860 = vld [vmem:[%s5853 + $0x30] sm:$0xff]
      %v5861 = vld [vmem:[%s5853 + $0x38] sm:$0xff]
      %v5862 = vld [vmem:[%s5853 + $0x40] sm:$0xff]
      %v5863 = vld [vmem:[%s5853 + $0x48] sm:$0xff]
      %v5864 = vld [vmem:[%s5853 + $0x50] sm:$0xff]
      %v5865 = vld [vmem:[%s5853 + $0x58] sm:$0xff]
      %v5867 = vsel %vm2335, %v5791, 0
      %v5870 = vsel %vm2335, %v5792, 0
      %v5873 = vsel %vm2335, %v5793, 0
      %v5876 = vsel %vm2335, %v5794, 0
      %v5879 = vsel %vm2335, %v5795, 0
      %v5882 = vsel %vm2335, %v5796, 0
      %v5885 = vsel %vm2335, %v5797, 0
      %v5888 = vsel %vm2335, %v5798, 0
      %v5891 = vsel %vm2335, %v5799, 0
      %v5894 = vsel %vm2335, %v5800, 0
      %v5897 = vsel %vm2335, %v5801, 0
      %v5900 = vsel %vm2335, %v5802, 0
      %v5903 = vsel %vm2335, %v5803, 0
      %v5906 = vsel %vm2335, %v5804, 0
      %v5909 = vsel %vm2335, %v5805, 0
      %v5912 = vsel %vm2335, %v5806, 0
      %v5915 = vsel %vm2335, %v5807, 0
      %v5918 = vsel %vm2335, %v5808, 0
      %v5921 = vsel %vm2335, %v5809, 0
      %v5924 = vsel %vm2335, %v5810, 0
      %v5927 = vsel %vm2335, %v5811, 0
      %v5930 = vsel %vm2335, %v5812, 0
      %v5933 = vsel %vm2335, %v5813, 0
      %v5936 = vsel %vm2335, %v5814, 0
      %v5939 = vsel %vm2335, %v5815, 0
      %v5942 = vsel %vm2335, %v5816, 0
      %v5945 = vsel %vm2335, %v5817, 0
      %v5948 = vsel %vm2335, %v5818, 0
      %v5951 = vsel %vm2335, %v5819, 0
      %v5954 = vsel %vm2335, %v5820, 0
      %v5957 = vsel %vm2335, %v5851, 0
      %v5960 = vsel %vm2335, %v5852, 0
      %5962 = vmatprep.subr.mxu0 0.0
      %5963 = vmatpush1.msra.mxu0 0.0
      %5964 = vmatprep.subr.mxu0 0.0
      %5965 = vmatpush1.msra.mxu0 0.0
      %5966 = vmatprep.subr.mxu0 0.0
      %5967 = vmatpush1.msra.mxu0 0.0
      %5968 = vmatprep.subr.mxu0 0.0
      %5969 = vmatpush1.msra.mxu0 0.0
      %5970 = vmatprep.subr.mxu0 0.0
      %5971 = vmatpush1.msra.mxu0 %v5865
      %5972 = vmatprep.subr.mxu0 0.0
      %5973 = vmatpush1.msra.mxu0 %v5864
      %5974 = vmatprep.subr.mxu0 0.0
      %5975 = vmatpush1.msra.mxu0 %v5863
      %5976 = vmatprep.subr.mxu0 0.0
      %5977 = vmatpush1.msra.mxu0 %v5862
      %5978 = vmatprep.subr.mxu0 0.0
      %5979 = vmatpush1.msra.mxu0 %v5861
      %5980 = vmatprep.subr.mxu0 0.0
      %5981 = vmatpush1.msra.mxu0 %v5860
      %5982 = vmatprep.subr.mxu0 0.0
      %5983 = vmatpush1.msra.mxu0 %v5859
      %5984 = vmatprep.subr.mxu0 0.0
      %5985 = vmatpush1.msra.mxu0 %v5858
      %5986 = vmatprep.subr.mxu0 0.0
      %5987 = vmatpush1.msra.mxu0 %v5857
      %5988 = vmatprep.subr.mxu0 0.0
      %5989 = vmatpush1.msra.mxu0 %v5856
      %5990 = vmatprep.subr.mxu0 0.0
      %5991 = vmatpush1.msra.mxu0 %v5855
      %5992 = vmatprep.subr.mxu0 0.0
      %5993 = vmatpush1.msra.mxu0 %v5854
      %5994 = vmatprep.subr.mxu0 0.0
      %5995 = vmatpush2.msra.mxu0 0.0
      %5996 = vmatprep.subr.mxu0 0.0
      %5997 = vmatpush2.msra.mxu0 0.0
      %5998 = vmatprep.subr.mxu0 0.0
      %5999 = vmatpush2.msra.mxu0 0.0
      %6000 = vmatprep.subr.mxu0 0.0
      %6001 = vmatpush2.msra.mxu0 0.0
      %6002 = vmatprep.subr.mxu0 0.0
      %6003 = vmatpush2.msra.mxu0 0.0
      %6004 = vmatprep.subr.mxu0 0.0
      %6005 = vmatpush2.msra.mxu0 0.0
      %6006 = vmatprep.subr.mxu0 0.0
      %6007 = vmatpush2.msra.mxu0 0.0
      %6008 = vmatprep.subr.mxu0 0.0
      %6009 = vmatpush2.msra.mxu0 0.0
      %6010 = vmatprep.subr.mxu0 0.0
      %6011 = vmatpush2.msra.mxu0 0.0
      %6012 = vmatprep.subr.mxu0 0.0
      %6013 = vmatpush2.msra.mxu0 0.0
      %6014 = vmatprep.subr.mxu0 0.0
      %6015 = vmatpush2.msra.mxu0 0.0
      %6016 = vmatprep.subr.mxu0 0.0
      %6017 = vmatpush2.msra.mxu0 0.0
      %6018 = vmatprep.subr.mxu0 0.0
      %6019 = vmatpush2.msra.mxu0 0.0
      %6020 = vmatprep.subr.mxu0 0.0
      %6021 = vmatpush2.msra.mxu0 0.0
      %6022 = vmatprep.subr.mxu0 0.0
      %6023 = vmatpush2.msra.mxu0 0.0
      %6024 = vmatprep.subr.mxu0 0.0
      %6025 = vmatpush2.msra.mxu0 0.0
      %6026 = vmatprep.mubr.f32.mxu0 0.0
      %6027 = vmatmul.mubr.f32.gmra.mxu0 %v5867
      %v6028 = vpop.f32.mrf.mxu0
      %v6029 = vadd.f32 0.0, %v6028
      %v6030 = vpop.f32.mrf.mxu0
      %6031 = vmatprep.mubr.f32.mxu0 0.0
      %6032 = vmatmul.mubr.f32.gmra.mxu0 %v5870
      %v6033 = vpop.f32.mrf.mxu0
      %v6034 = vadd.f32 0.0, %v6033
      %v6035 = vpop.f32.mrf.mxu0
      %6036 = vmatprep.mubr.f32.mxu0 0.0
      %6037 = vmatmul.mubr.f32.gmra.mxu0 %v5873
      %v6038 = vpop.f32.mrf.mxu0
      %v6039 = vadd.f32 0.0, %v6038
      %v6040 = vpop.f32.mrf.mxu0
      %6041 = vmatprep.mubr.f32.mxu0 0.0
      %6042 = vmatmul.mubr.f32.gmra.mxu0 %v5876
      %v6043 = vpop.f32.mrf.mxu0
      %v6044 = vadd.f32 0.0, %v6043
      %v6045 = vpop.f32.mrf.mxu0
      %6046 = vmatprep.mubr.f32.mxu0 0.0
      %6047 = vmatmul.mubr.f32.gmra.mxu0 %v5879
      %v6048 = vpop.f32.mrf.mxu0
      %v6049 = vadd.f32 0.0, %v6048
      %v6050 = vpop.f32.mrf.mxu0
      %6051 = vmatprep.mubr.f32.mxu0 0.0
      %6052 = vmatmul.mubr.f32.gmra.mxu0 %v5882
      %v6053 = vpop.f32.mrf.mxu0
      %v6054 = vadd.f32 0.0, %v6053
      %v6055 = vpop.f32.mrf.mxu0
      %6056 = vmatprep.mubr.f32.mxu0 0.0
      %6057 = vmatmul.mubr.f32.gmra.mxu0 %v5885
      %v6058 = vpop.f32.mrf.mxu0
      %v6059 = vadd.f32 0.0, %v6058
      %v6060 = vpop.f32.mrf.mxu0
      %6061 = vmatprep.mubr.f32.mxu0 0.0
      %6062 = vmatmul.mubr.f32.gmra.mxu0 %v5888
      %v6063 = vpop.f32.mrf.mxu0
      %v6064 = vadd.f32 0.0, %v6063
      %v6065 = vpop.f32.mrf.mxu0
      %6066 = vmatprep.mubr.f32.mxu0 0.0
      %6067 = vmatmul.mubr.f32.gmra.mxu0 %v5891
      %v6068 = vpop.f32.mrf.mxu0
      %v6069 = vadd.f32 0.0, %v6068
      %v6070 = vpop.f32.mrf.mxu0
      %6071 = vmatprep.mubr.f32.mxu0 0.0
      %6072 = vmatmul.mubr.f32.gmra.mxu0 %v5894
      %v6073 = vpop.f32.mrf.mxu0
      %v6074 = vadd.f32 0.0, %v6073
      %v6075 = vpop.f32.mrf.mxu0
      %6076 = vmatprep.mubr.f32.mxu0 0.0
      %6077 = vmatmul.mubr.f32.gmra.mxu0 %v5897
      %v6078 = vpop.f32.mrf.mxu0
      %v6079 = vadd.f32 0.0, %v6078
      %v6080 = vpop.f32.mrf.mxu0
      %6081 = vmatprep.mubr.f32.mxu0 0.0
      %6082 = vmatmul.mubr.f32.gmra.mxu0 %v5900
      %v6083 = vpop.f32.mrf.mxu0
      %v6084 = vadd.f32 0.0, %v6083
      %v6085 = vpop.f32.mrf.mxu0
      %6086 = vmatprep.mubr.f32.mxu0 0.0
      %6087 = vmatmul.mubr.f32.gmra.mxu0 %v5903
      %v6088 = vpop.f32.mrf.mxu0
      %v6089 = vadd.f32 0.0, %v6088
      %v6090 = vpop.f32.mrf.mxu0
      %6091 = vmatprep.mubr.f32.mxu0 0.0
      %6092 = vmatmul.mubr.f32.gmra.mxu0 %v5906
      %v6093 = vpop.f32.mrf.mxu0
      %v6094 = vadd.f32 0.0, %v6093
      %v6095 = vpop.f32.mrf.mxu0
      %6096 = vmatprep.mubr.f32.mxu0 0.0
      %6097 = vmatmul.mubr.f32.gmra.mxu0 %v5909
      %v6098 = vpop.f32.mrf.mxu0
      %v6099 = vadd.f32 0.0, %v6098
      %v6100 = vpop.f32.mrf.mxu0
      %6101 = vmatprep.mubr.f32.mxu0 0.0
      %6102 = vmatmul.mubr.f32.gmra.mxu0 %v5912
      %v6103 = vpop.f32.mrf.mxu0
      %v6104 = vadd.f32 0.0, %v6103
      %v6105 = vpop.f32.mrf.mxu0
      %6106 = vmatprep.mubr.f32.mxu0 0.0
      %6107 = vmatmul.mubr.f32.gmra.mxu0 %v5915
      %v6108 = vpop.f32.mrf.mxu0
      %v6109 = vadd.f32 0.0, %v6108
      %v6110 = vpop.f32.mrf.mxu0
      %6111 = vmatprep.mubr.f32.mxu0 0.0
      %6112 = vmatmul.mubr.f32.gmra.mxu0 %v5918
      %v6113 = vpop.f32.mrf.mxu0
      %v6114 = vadd.f32 0.0, %v6113
      %v6115 = vpop.f32.mrf.mxu0
      %6116 = vmatprep.mubr.f32.mxu0 0.0
      %6117 = vmatmul.mubr.f32.gmra.mxu0 %v5921
      %v6118 = vpop.f32.mrf.mxu0
      %v6119 = vadd.f32 0.0, %v6118
      %v6120 = vpop.f32.mrf.mxu0
      %6121 = vmatprep.mubr.f32.mxu0 0.0
      %6122 = vmatmul.mubr.f32.gmra.mxu0 %v5924
      %v6123 = vpop.f32.mrf.mxu0
      %v6124 = vadd.f32 0.0, %v6123
      %v6125 = vpop.f32.mrf.mxu0
      %6126 = vmatprep.mubr.f32.mxu0 0.0
      %6127 = vmatmul.mubr.f32.gmra.mxu0 %v5927
      %v6128 = vpop.f32.mrf.mxu0
      %v6129 = vadd.f32 0.0, %v6128
      %v6130 = vpop.f32.mrf.mxu0
      %6131 = vmatprep.mubr.f32.mxu0 0.0
      %6132 = vmatmul.mubr.f32.gmra.mxu0 %v5930
      %v6133 = vpop.f32.mrf.mxu0
      %v6134 = vadd.f32 0.0, %v6133
      %v6135 = vpop.f32.mrf.mxu0
      %6136 = vmatprep.mubr.f32.mxu0 0.0
      %6137 = vmatmul.mubr.f32.gmra.mxu0 %v5933
      %v6138 = vpop.f32.mrf.mxu0
      %v6139 = vadd.f32 0.0, %v6138
      %v6140 = vpop.f32.mrf.mxu0
      %6141 = vmatprep.mubr.f32.mxu0 0.0
      %6142 = vmatmul.mubr.f32.gmra.mxu0 %v5936
      %v6143 = vpop.f32.mrf.mxu0
      %v6144 = vadd.f32 0.0, %v6143
      %v6145 = vpop.f32.mrf.mxu0
      %6146 = vmatprep.mubr.f32.mxu0 0.0
      %6147 = vmatmul.mubr.f32.gmra.mxu0 %v5939
      %v6148 = vpop.f32.mrf.mxu0
      %v6149 = vadd.f32 0.0, %v6148
      %v6150 = vpop.f32.mrf.mxu0
      %6151 = vmatprep.mubr.f32.mxu0 0.0
      %6152 = vmatmul.mubr.f32.gmra.mxu0 %v5942
      %v6153 = vpop.f32.mrf.mxu0
      %v6154 = vadd.f32 0.0, %v6153
      %v6155 = vpop.f32.mrf.mxu0
      %6156 = vmatprep.mubr.f32.mxu0 0.0
      %6157 = vmatmul.mubr.f32.gmra.mxu0 %v5945
      %v6158 = vpop.f32.mrf.mxu0
      %v6159 = vadd.f32 0.0, %v6158
      %v6160 = vpop.f32.mrf.mxu0
      %6161 = vmatprep.mubr.f32.mxu0 0.0
      %6162 = vmatmul.mubr.f32.gmra.mxu0 %v5948
      %v6163 = vpop.f32.mrf.mxu0
      %v6164 = vadd.f32 0.0, %v6163
      %v6165 = vpop.f32.mrf.mxu0
      %6166 = vmatprep.mubr.f32.mxu0 0.0
      %6167 = vmatmul.mubr.f32.gmra.mxu0 %v5951
      %v6168 = vpop.f32.mrf.mxu0
      %v6169 = vadd.f32 0.0, %v6168
      %v6170 = vpop.f32.mrf.mxu0
      %6171 = vmatprep.mubr.f32.mxu0 0.0
      %6172 = vmatmul.mubr.f32.gmra.mxu0 %v5954
      %v6173 = vpop.f32.mrf.mxu0
      %v6174 = vadd.f32 0.0, %v6173
      %v6175 = vpop.f32.mrf.mxu0
      %6176 = vmatprep.mubr.f32.mxu0 0.0
      %6177 = vmatmul.mubr.f32.gmra.mxu0 %v5957
      %v6178 = vpop.f32.mrf.mxu0
      %v6179 = vadd.f32 0.0, %v6178
      %v6180 = vpop.f32.mrf.mxu0
      %6181 = vmatprep.mubr.f32.mxu0 0.0
      %6182 = vmatmul.mubr.f32.gmra.mxu0 %v5960
      %v6183 = vpop.f32.mrf.mxu0
      %v6184 = vadd.f32 0.0, %v6183
      %v6185 = vpop.f32.mrf.mxu0
      %6186 = vdwg.mxu0
      %v6188 = vsel %vm2335, %v5789, 0
      %v6191 = vsel %vm2335, %v5790, 0
      %6193 = vmatprep.subr.mxu0 0.0
      %6194 = vmatpush1.msra.mxu0 0.0
      %6195 = vmatprep.subr.mxu0 0.0
      %6196 = vmatpush1.msra.mxu0 0.0
      %6197 = vmatprep.subr.mxu0 0.0
      %6198 = vmatpush1.msra.mxu0 0.0
      %6199 = vmatprep.subr.mxu0 0.0
      %6200 = vmatpush1.msra.mxu0 0.0
      %6201 = vmatprep.subr.mxu0 0.0
      %6202 = vmatpush1.msra.mxu0 %v5832
      %6203 = vmatprep.subr.mxu0 0.0
      %6204 = vmatpush1.msra.mxu0 %v5831
      %6205 = vmatprep.subr.mxu0 0.0
      %6206 = vmatpush1.msra.mxu0 %v5830
      %6207 = vmatprep.subr.mxu0 0.0
      %6208 = vmatpush1.msra.mxu0 %v5829
      %6209 = vmatprep.subr.mxu0 0.0
      %6210 = vmatpush1.msra.mxu0 %v5828
      %6211 = vmatprep.subr.mxu0 0.0
      %6212 = vmatpush1.msra.mxu0 %v5827
      %6213 = vmatprep.subr.mxu0 0.0
      %6214 = vmatpush1.msra.mxu0 %v5826
      %6215 = vmatprep.subr.mxu0 0.0
      %6216 = vmatpush1.msra.mxu0 %v5825
      %6217 = vmatprep.subr.mxu0 0.0
      %6218 = vmatpush1.msra.mxu0 %v5824
      %6219 = vmatprep.subr.mxu0 0.0
      %6220 = vmatpush1.msra.mxu0 %v5823
      %6221 = vmatprep.subr.mxu0 0.0
      %6222 = vmatpush1.msra.mxu0 %v5822
      %6223 = vmatprep.subr.mxu0 0.0
      %6224 = vmatpush1.msra.mxu0 %v5821
      %6225 = vmatprep.subr.mxu0 0.0
      %6226 = vmatpush2.msra.mxu0 0.0
      %6227 = vmatprep.subr.mxu0 0.0
      %6228 = vmatpush2.msra.mxu0 0.0
      %6229 = vmatprep.subr.mxu0 0.0
      %6230 = vmatpush2.msra.mxu0 0.0
      %6231 = vmatprep.subr.mxu0 0.0
      %6232 = vmatpush2.msra.mxu0 0.0
      %6233 = vmatprep.subr.mxu0 0.0
      %6234 = vmatpush2.msra.mxu0 0.0
      %6235 = vmatprep.subr.mxu0 0.0
      %6236 = vmatpush2.msra.mxu0 0.0
      %6237 = vmatprep.subr.mxu0 0.0
      %6238 = vmatpush2.msra.mxu0 0.0
      %6239 = vmatprep.subr.mxu0 0.0
      %6240 = vmatpush2.msra.mxu0 0.0
      %6241 = vmatprep.subr.mxu0 0.0
      %6242 = vmatpush2.msra.mxu0 0.0
      %6243 = vmatprep.subr.mxu0 0.0
      %6244 = vmatpush2.msra.mxu0 0.0
      %6245 = vmatprep.subr.mxu0 0.0
      %6246 = vmatpush2.msra.mxu0 0.0
      %6247 = vmatprep.subr.mxu0 0.0
      %6248 = vmatpush2.msra.mxu0 0.0
      %6249 = vmatprep.subr.mxu0 0.0
      %6250 = vmatpush2.msra.mxu0 0.0
      %6251 = vmatprep.subr.mxu0 0.0
      %6252 = vmatpush2.msra.mxu0 0.0
      %6253 = vmatprep.subr.mxu0 0.0
      %6254 = vmatpush2.msra.mxu0 0.0
      %6255 = vmatprep.subr.mxu0 0.0
      %6256 = vmatpush2.msra.mxu0 0.0
      %6257 = vmatprep.mubr.f32.mxu0 0.0
      %6258 = vmatmul.mubr.f32.gmra.mxu0 %v6188
      %v6259 = vpop.f32.mrf.mxu0
      %v6260 = vadd.f32 %v6029, %v6259
      %v6261 = vpop.f32.mrf.mxu0
      %6262 = vmatprep.mubr.f32.mxu0 0.0
      %6263 = vmatmul.mubr.f32.gmra.mxu0 %v6191
      %v6264 = vpop.f32.mrf.mxu0
      %v6265 = vadd.f32 %v6034, %v6264
      %v6266 = vpop.f32.mrf.mxu0
      %6267 = vmatprep.mubr.f32.mxu0 0.0
      %6268 = vmatmul.mubr.f32.gmra.mxu0 %v5867
      %v6269 = vpop.f32.mrf.mxu0
      %v6270 = vadd.f32 %v6039, %v6269
      %v6271 = vpop.f32.mrf.mxu0
      %6272 = vmatprep.mubr.f32.mxu0 0.0
      %6273 = vmatmul.mubr.f32.gmra.mxu0 %v5870
      %v6274 = vpop.f32.mrf.mxu0
      %v6275 = vadd.f32 %v6044, %v6274
      %v6276 = vpop.f32.mrf.mxu0
      %6277 = vmatprep.mubr.f32.mxu0 0.0
      %6278 = vmatmul.mubr.f32.gmra.mxu0 %v5873
      %v6279 = vpop.f32.mrf.mxu0
      %v6280 = vadd.f32 %v6049, %v6279
      %v6281 = vpop.f32.mrf.mxu0
      %6282 = vmatprep.mubr.f32.mxu0 0.0
      %6283 = vmatmul.mubr.f32.gmra.mxu0 %v5876
      %v6284 = vpop.f32.mrf.mxu0
      %v6285 = vadd.f32 %v6054, %v6284
      %v6286 = vpop.f32.mrf.mxu0
      %6287 = vmatprep.mubr.f32.mxu0 0.0
      %6288 = vmatmul.mubr.f32.gmra.mxu0 %v5879
      %v6289 = vpop.f32.mrf.mxu0
      %v6290 = vadd.f32 %v6059, %v6289
      %v6291 = vpop.f32.mrf.mxu0
      %6292 = vmatprep.mubr.f32.mxu0 0.0
      %6293 = vmatmul.mubr.f32.gmra.mxu0 %v5882
      %v6294 = vpop.f32.mrf.mxu0
      %v6295 = vadd.f32 %v6064, %v6294
      %v6296 = vpop.f32.mrf.mxu0
      %6297 = vmatprep.mubr.f32.mxu0 0.0
      %6298 = vmatmul.mubr.f32.gmra.mxu0 %v5885
      %v6299 = vpop.f32.mrf.mxu0
      %v6300 = vadd.f32 %v6069, %v6299
      %v6301 = vpop.f32.mrf.mxu0
      %6302 = vmatprep.mubr.f32.mxu0 0.0
      %6303 = vmatmul.mubr.f32.gmra.mxu0 %v5888
      %v6304 = vpop.f32.mrf.mxu0
      %v6305 = vadd.f32 %v6074, %v6304
      %v6306 = vpop.f32.mrf.mxu0
      %6307 = vmatprep.mubr.f32.mxu0 0.0
      %6308 = vmatmul.mubr.f32.gmra.mxu0 %v5891
      %v6309 = vpop.f32.mrf.mxu0
      %v6310 = vadd.f32 %v6079, %v6309
      %v6311 = vpop.f32.mrf.mxu0
      %6312 = vmatprep.mubr.f32.mxu0 0.0
      %6313 = vmatmul.mubr.f32.gmra.mxu0 %v5894
      %v6314 = vpop.f32.mrf.mxu0
      %v6315 = vadd.f32 %v6084, %v6314
      %v6316 = vpop.f32.mrf.mxu0
      %6317 = vmatprep.mubr.f32.mxu0 0.0
      %6318 = vmatmul.mubr.f32.gmra.mxu0 %v5897
      %v6319 = vpop.f32.mrf.mxu0
      %v6320 = vadd.f32 %v6089, %v6319
      %v6321 = vpop.f32.mrf.mxu0
      %6322 = vmatprep.mubr.f32.mxu0 0.0
      %6323 = vmatmul.mubr.f32.gmra.mxu0 %v5900
      %v6324 = vpop.f32.mrf.mxu0
      %v6325 = vadd.f32 %v6094, %v6324
      %v6326 = vpop.f32.mrf.mxu0
      %6327 = vmatprep.mubr.f32.mxu0 0.0
      %6328 = vmatmul.mubr.f32.gmra.mxu0 %v5903
      %v6329 = vpop.f32.mrf.mxu0
      %v6330 = vadd.f32 %v6099, %v6329
      %v6331 = vpop.f32.mrf.mxu0
      %6332 = vmatprep.mubr.f32.mxu0 0.0
      %6333 = vmatmul.mubr.f32.gmra.mxu0 %v5906
      %v6334 = vpop.f32.mrf.mxu0
      %v6335 = vadd.f32 %v6104, %v6334
      %v6336 = vpop.f32.mrf.mxu0
      %6337 = vmatprep.mubr.f32.mxu0 0.0
      %6338 = vmatmul.mubr.f32.gmra.mxu0 %v5909
      %v6339 = vpop.f32.mrf.mxu0
      %v6340 = vadd.f32 %v6109, %v6339
      %v6341 = vpop.f32.mrf.mxu0
      %6342 = vmatprep.mubr.f32.mxu0 0.0
      %6343 = vmatmul.mubr.f32.gmra.mxu0 %v5912
      %v6344 = vpop.f32.mrf.mxu0
      %v6345 = vadd.f32 %v6114, %v6344
      %v6346 = vpop.f32.mrf.mxu0
      %6347 = vmatprep.mubr.f32.mxu0 0.0
      %6348 = vmatmul.mubr.f32.gmra.mxu0 %v5915
      %v6349 = vpop.f32.mrf.mxu0
      %v6350 = vadd.f32 %v6119, %v6349
      %v6351 = vpop.f32.mrf.mxu0
      %6352 = vmatprep.mubr.f32.mxu0 0.0
      %6353 = vmatmul.mubr.f32.gmra.mxu0 %v5918
      %v6354 = vpop.f32.mrf.mxu0
      %v6355 = vadd.f32 %v6124, %v6354
      %v6356 = vpop.f32.mrf.mxu0
      %6357 = vmatprep.mubr.f32.mxu0 0.0
      %6358 = vmatmul.mubr.f32.gmra.mxu0 %v5921
      %v6359 = vpop.f32.mrf.mxu0
      %v6360 = vadd.f32 %v6129, %v6359
      %v6361 = vpop.f32.mrf.mxu0
      %6362 = vmatprep.mubr.f32.mxu0 0.0
      %6363 = vmatmul.mubr.f32.gmra.mxu0 %v5924
      %v6364 = vpop.f32.mrf.mxu0
      %v6365 = vadd.f32 %v6134, %v6364
      %v6366 = vpop.f32.mrf.mxu0
      %6367 = vmatprep.mubr.f32.mxu0 0.0
      %6368 = vmatmul.mubr.f32.gmra.mxu0 %v5927
      %v6369 = vpop.f32.mrf.mxu0
      %v6370 = vadd.f32 %v6139, %v6369
      %v6371 = vpop.f32.mrf.mxu0
      %6372 = vmatprep.mubr.f32.mxu0 0.0
      %6373 = vmatmul.mubr.f32.gmra.mxu0 %v5930
      %v6374 = vpop.f32.mrf.mxu0
      %v6375 = vadd.f32 %v6144, %v6374
      %v6376 = vpop.f32.mrf.mxu0
      %6377 = vmatprep.mubr.f32.mxu0 0.0
      %6378 = vmatmul.mubr.f32.gmra.mxu0 %v5933
      %v6379 = vpop.f32.mrf.mxu0
      %v6380 = vadd.f32 %v6149, %v6379
      %v6381 = vpop.f32.mrf.mxu0
      %6382 = vmatprep.mubr.f32.mxu0 0.0
      %6383 = vmatmul.mubr.f32.gmra.mxu0 %v5936
      %v6384 = vpop.f32.mrf.mxu0
      %v6385 = vadd.f32 %v6154, %v6384
      %v6386 = vpop.f32.mrf.mxu0
      %6387 = vmatprep.mubr.f32.mxu0 0.0
      %6388 = vmatmul.mubr.f32.gmra.mxu0 %v5939
      %v6389 = vpop.f32.mrf.mxu0
      %v6390 = vadd.f32 %v6159, %v6389
      %v6391 = vpop.f32.mrf.mxu0
      %6392 = vmatprep.mubr.f32.mxu0 0.0
      %6393 = vmatmul.mubr.f32.gmra.mxu0 %v5942
      %v6394 = vpop.f32.mrf.mxu0
      %v6395 = vadd.f32 %v6164, %v6394
      %v6396 = vpop.f32.mrf.mxu0
      %6397 = vmatprep.mubr.f32.mxu0 0.0
      %6398 = vmatmul.mubr.f32.gmra.mxu0 %v5945
      %v6399 = vpop.f32.mrf.mxu0
      %v6400 = vadd.f32 %v6169, %v6399
      %v6401 = vpop.f32.mrf.mxu0
      %6402 = vmatprep.mubr.f32.mxu0 0.0
      %6403 = vmatmul.mubr.f32.gmra.mxu0 %v5948
      %v6404 = vpop.f32.mrf.mxu0
      %v6405 = vadd.f32 %v6174, %v6404
      %v6406 = vpop.f32.mrf.mxu0
      %6407 = vmatprep.mubr.f32.mxu0 0.0
      %6408 = vmatmul.mubr.f32.gmra.mxu0 %v5951
      %v6409 = vpop.f32.mrf.mxu0
      %v6410 = vadd.f32 %v6179, %v6409
      %v6411 = vpop.f32.mrf.mxu0
      %6412 = vmatprep.mubr.f32.mxu0 0.0
      %6413 = vmatmul.mubr.f32.gmra.mxu0 %v5954
      %v6414 = vpop.f32.mrf.mxu0
      %v6415 = vadd.f32 %v6184, %v6414
      %v6416 = vpop.f32.mrf.mxu0
      %6417 = vdwg.mxu0
      %6420 = vrot.lane.b32.xlu0 %v5463, 32
      %v6421 = vpop.permute.xlu0 %6420
      %6422 = vrot.lane.b32.xlu0 %v5464, 32
      %v6423 = vpop.permute.xlu0 %6422
      %6428 = vrot.lane.b32.xlu0 %v5499, 64
      %v6429 = vpop.permute.xlu0 %6428
      %6430 = vrot.lane.b32.xlu0 %v5500, 64
      %v6431 = vpop.permute.xlu0 %6430
      %v6434 = vsel %vm1854, %v5427, %v6421
      %v6435 = vsel %vm1854, %v5428, %v6423
      %v6436 = vsel %vm333, %v6434, %v6429
      %v6437 = vsel %vm333, %v6435, %v6431
      %s6438 = scalar_lea.vmem %s5, 192
      %v6439 = vld [vmem:[%s6438] sm:$0xff]
      %v6440 = vld [vmem:[%s6438 + $0x8] sm:$0xff]
      %v6441 = vld [vmem:[%s6438 + $0x10] sm:$0xff]
      %v6442 = vld [vmem:[%s6438 + $0x18] sm:$0xff]
      %v6443 = vld [vmem:[%s6438 + $0x20] sm:$0xff]
      %v6444 = vld [vmem:[%s6438 + $0x28] sm:$0xff]
      %v6445 = vld [vmem:[%s6438 + $0x30] sm:$0xff]
      %v6446 = vld [vmem:[%s6438 + $0x38] sm:$0xff]
      %v6447 = vld [vmem:[%s6438 + $0x40] sm:$0xff]
      %v6448 = vld [vmem:[%s6438 + $0x48] sm:$0xff]
      %v6449 = vld [vmem:[%s6438 + $0x50] sm:$0xff]
      %v6450 = vld [vmem:[%s6438 + $0x58] sm:$0xff]
      %v6452 = vsel %vm2335, %v6436, 0
      %v6455 = vsel %vm2335, %v6437, 0
      %6457 = vmatprep.subr.mxu0 0.0
      %6458 = vmatpush1.msra.mxu0 0.0
      %6459 = vmatprep.subr.mxu0 0.0
      %6460 = vmatpush1.msra.mxu0 0.0
      %6461 = vmatprep.subr.mxu0 0.0
      %6462 = vmatpush1.msra.mxu0 0.0
      %6463 = vmatprep.subr.mxu0 0.0
      %6464 = vmatpush1.msra.mxu0 0.0
      %6465 = vmatprep.subr.mxu0 0.0
      %6466 = vmatpush1.msra.mxu0 %v6450
      %6467 = vmatprep.subr.mxu0 0.0
      %6468 = vmatpush1.msra.mxu0 %v6449
      %6469 = vmatprep.subr.mxu0 0.0
      %6470 = vmatpush1.msra.mxu0 %v6448
      %6471 = vmatprep.subr.mxu0 0.0
      %6472 = vmatpush1.msra.mxu0 %v6447
      %6473 = vmatprep.subr.mxu0 0.0
      %6474 = vmatpush1.msra.mxu0 %v6446
      %6475 = vmatprep.subr.mxu0 0.0
      %6476 = vmatpush1.msra.mxu0 %v6445
      %6477 = vmatprep.subr.mxu0 0.0
      %6478 = vmatpush1.msra.mxu0 %v6444
      %6479 = vmatprep.subr.mxu0 0.0
      %6480 = vmatpush1.msra.mxu0 %v6443
      %6481 = vmatprep.subr.mxu0 0.0
      %6482 = vmatpush1.msra.mxu0 %v6442
      %6483 = vmatprep.subr.mxu0 0.0
      %6484 = vmatpush1.msra.mxu0 %v6441
      %6485 = vmatprep.subr.mxu0 0.0
      %6486 = vmatpush1.msra.mxu0 %v6440
      %6487 = vmatprep.subr.mxu0 0.0
      %6488 = vmatpush1.msra.mxu0 %v6439
      %6489 = vmatprep.subr.mxu0 0.0
      %6490 = vmatpush2.msra.mxu0 0.0
      %6491 = vmatprep.subr.mxu0 0.0
      %6492 = vmatpush2.msra.mxu0 0.0
      %6493 = vmatprep.subr.mxu0 0.0
      %6494 = vmatpush2.msra.mxu0 0.0
      %6495 = vmatprep.subr.mxu0 0.0
      %6496 = vmatpush2.msra.mxu0 0.0
      %6497 = vmatprep.subr.mxu0 0.0
      %6498 = vmatpush2.msra.mxu0 0.0
      %6499 = vmatprep.subr.mxu0 0.0
      %6500 = vmatpush2.msra.mxu0 0.0
      %6501 = vmatprep.subr.mxu0 0.0
      %6502 = vmatpush2.msra.mxu0 0.0
      %6503 = vmatprep.subr.mxu0 0.0
      %6504 = vmatpush2.msra.mxu0 0.0
      %6505 = vmatprep.subr.mxu0 0.0
      %6506 = vmatpush2.msra.mxu0 0.0
      %6507 = vmatprep.subr.mxu0 0.0
      %6508 = vmatpush2.msra.mxu0 0.0
      %6509 = vmatprep.subr.mxu0 0.0
      %6510 = vmatpush2.msra.mxu0 0.0
      %6511 = vmatprep.subr.mxu0 0.0
      %6512 = vmatpush2.msra.mxu0 0.0
      %6513 = vmatprep.subr.mxu0 0.0
      %6514 = vmatpush2.msra.mxu0 0.0
      %6515 = vmatprep.subr.mxu0 0.0
      %6516 = vmatpush2.msra.mxu0 0.0
      %6517 = vmatprep.subr.mxu0 0.0
      %6518 = vmatpush2.msra.mxu0 0.0
      %6519 = vmatprep.subr.mxu0 0.0
      %6520 = vmatpush2.msra.mxu0 0.0
      %6521 = vmatprep.mubr.f32.mxu0 0.0
      %6522 = vmatmul.mubr.f32.gmra.mxu0 %v5873
      %v6523 = vpop.f32.mrf.mxu0
      %v6524 = vadd.f32 0.0, %v6523
      %v6525 = vpop.f32.mrf.mxu0
      %6526 = vmatprep.mubr.f32.mxu0 0.0
      %6527 = vmatmul.mubr.f32.gmra.mxu0 %v5876
      %v6528 = vpop.f32.mrf.mxu0
      %v6529 = vadd.f32 0.0, %v6528
      %v6530 = vpop.f32.mrf.mxu0
      %6531 = vmatprep.mubr.f32.mxu0 0.0
      %6532 = vmatmul.mubr.f32.gmra.mxu0 %v5879
      %v6533 = vpop.f32.mrf.mxu0
      %v6534 = vadd.f32 0.0, %v6533
      %v6535 = vpop.f32.mrf.mxu0
      %6536 = vmatprep.mubr.f32.mxu0 0.0
      %6537 = vmatmul.mubr.f32.gmra.mxu0 %v5882
      %v6538 = vpop.f32.mrf.mxu0
      %v6539 = vadd.f32 0.0, %v6538
      %v6540 = vpop.f32.mrf.mxu0
      %6541 = vmatprep.mubr.f32.mxu0 0.0
      %6542 = vmatmul.mubr.f32.gmra.mxu0 %v5885
      %v6543 = vpop.f32.mrf.mxu0
      %v6544 = vadd.f32 0.0, %v6543
      %v6545 = vpop.f32.mrf.mxu0
      %6546 = vmatprep.mubr.f32.mxu0 0.0
      %6547 = vmatmul.mubr.f32.gmra.mxu0 %v5888
      %v6548 = vpop.f32.mrf.mxu0
      %v6549 = vadd.f32 0.0, %v6548
      %v6550 = vpop.f32.mrf.mxu0
      %6551 = vmatprep.mubr.f32.mxu0 0.0
      %6552 = vmatmul.mubr.f32.gmra.mxu0 %v5891
      %v6553 = vpop.f32.mrf.mxu0
      %v6554 = vadd.f32 0.0, %v6553
      %v6555 = vpop.f32.mrf.mxu0
      %6556 = vmatprep.mubr.f32.mxu0 0.0
      %6557 = vmatmul.mubr.f32.gmra.mxu0 %v5894
      %v6558 = vpop.f32.mrf.mxu0
      %v6559 = vadd.f32 0.0, %v6558
      %v6560 = vpop.f32.mrf.mxu0
      %6561 = vmatprep.mubr.f32.mxu0 0.0
      %6562 = vmatmul.mubr.f32.gmra.mxu0 %v5897
      %v6563 = vpop.f32.mrf.mxu0
      %v6564 = vadd.f32 0.0, %v6563
      %v6565 = vpop.f32.mrf.mxu0
      %6566 = vmatprep.mubr.f32.mxu0 0.0
      %6567 = vmatmul.mubr.f32.gmra.mxu0 %v5900
      %v6568 = vpop.f32.mrf.mxu0
      %v6569 = vadd.f32 0.0, %v6568
      %v6570 = vpop.f32.mrf.mxu0
      %6571 = vmatprep.mubr.f32.mxu0 0.0
      %6572 = vmatmul.mubr.f32.gmra.mxu0 %v5903
      %v6573 = vpop.f32.mrf.mxu0
      %v6574 = vadd.f32 0.0, %v6573
      %v6575 = vpop.f32.mrf.mxu0
      %6576 = vmatprep.mubr.f32.mxu0 0.0
      %6577 = vmatmul.mubr.f32.gmra.mxu0 %v5906
      %v6578 = vpop.f32.mrf.mxu0
      %v6579 = vadd.f32 0.0, %v6578
      %v6580 = vpop.f32.mrf.mxu0
      %6581 = vmatprep.mubr.f32.mxu0 0.0
      %6582 = vmatmul.mubr.f32.gmra.mxu0 %v5909
      %v6583 = vpop.f32.mrf.mxu0
      %v6584 = vadd.f32 0.0, %v6583
      %v6585 = vpop.f32.mrf.mxu0
      %6586 = vmatprep.mubr.f32.mxu0 0.0
      %6587 = vmatmul.mubr.f32.gmra.mxu0 %v5912
      %v6588 = vpop.f32.mrf.mxu0
      %v6589 = vadd.f32 0.0, %v6588
      %v6590 = vpop.f32.mrf.mxu0
      %6591 = vmatprep.mubr.f32.mxu0 0.0
      %6592 = vmatmul.mubr.f32.gmra.mxu0 %v5915
      %v6593 = vpop.f32.mrf.mxu0
      %v6594 = vadd.f32 0.0, %v6593
      %v6595 = vpop.f32.mrf.mxu0
      %6596 = vmatprep.mubr.f32.mxu0 0.0
      %6597 = vmatmul.mubr.f32.gmra.mxu0 %v5918
      %v6598 = vpop.f32.mrf.mxu0
      %v6599 = vadd.f32 0.0, %v6598
      %v6600 = vpop.f32.mrf.mxu0
      %6601 = vmatprep.mubr.f32.mxu0 0.0
      %6602 = vmatmul.mubr.f32.gmra.mxu0 %v5921
      %v6603 = vpop.f32.mrf.mxu0
      %v6604 = vadd.f32 0.0, %v6603
      %v6605 = vpop.f32.mrf.mxu0
      %6606 = vmatprep.mubr.f32.mxu0 0.0
      %6607 = vmatmul.mubr.f32.gmra.mxu0 %v5924
      %v6608 = vpop.f32.mrf.mxu0
      %v6609 = vadd.f32 0.0, %v6608
      %v6610 = vpop.f32.mrf.mxu0
      %6611 = vmatprep.mubr.f32.mxu0 0.0
      %6612 = vmatmul.mubr.f32.gmra.mxu0 %v5927
      %v6613 = vpop.f32.mrf.mxu0
      %v6614 = vadd.f32 0.0, %v6613
      %v6615 = vpop.f32.mrf.mxu0
      %6616 = vmatprep.mubr.f32.mxu0 0.0
      %6617 = vmatmul.mubr.f32.gmra.mxu0 %v5930
      %v6618 = vpop.f32.mrf.mxu0
      %v6619 = vadd.f32 0.0, %v6618
      %v6620 = vpop.f32.mrf.mxu0
      %6621 = vmatprep.mubr.f32.mxu0 0.0
      %6622 = vmatmul.mubr.f32.gmra.mxu0 %v5933
      %v6623 = vpop.f32.mrf.mxu0
      %v6624 = vadd.f32 0.0, %v6623
      %v6625 = vpop.f32.mrf.mxu0
      %6626 = vmatprep.mubr.f32.mxu0 0.0
      %6627 = vmatmul.mubr.f32.gmra.mxu0 %v5936
      %v6628 = vpop.f32.mrf.mxu0
      %v6629 = vadd.f32 0.0, %v6628
      %v6630 = vpop.f32.mrf.mxu0
      %6631 = vmatprep.mubr.f32.mxu0 0.0
      %6632 = vmatmul.mubr.f32.gmra.mxu0 %v5939
      %v6633 = vpop.f32.mrf.mxu0
      %v6634 = vadd.f32 0.0, %v6633
      %v6635 = vpop.f32.mrf.mxu0
      %6636 = vmatprep.mubr.f32.mxu0 0.0
      %6637 = vmatmul.mubr.f32.gmra.mxu0 %v5942
      %v6638 = vpop.f32.mrf.mxu0
      %v6639 = vadd.f32 0.0, %v6638
      %v6640 = vpop.f32.mrf.mxu0
      %6641 = vmatprep.mubr.f32.mxu0 0.0
      %6642 = vmatmul.mubr.f32.gmra.mxu0 %v5945
      %v6643 = vpop.f32.mrf.mxu0
      %v6644 = vadd.f32 0.0, %v6643
      %v6645 = vpop.f32.mrf.mxu0
      %6646 = vmatprep.mubr.f32.mxu0 0.0
      %6647 = vmatmul.mubr.f32.gmra.mxu0 %v5948
      %v6648 = vpop.f32.mrf.mxu0
      %v6649 = vadd.f32 0.0, %v6648
      %v6650 = vpop.f32.mrf.mxu0
      %6651 = vmatprep.mubr.f32.mxu0 0.0
      %6652 = vmatmul.mubr.f32.gmra.mxu0 %v5951
      %v6653 = vpop.f32.mrf.mxu0
      %v6654 = vadd.f32 0.0, %v6653
      %v6655 = vpop.f32.mrf.mxu0
      %6656 = vmatprep.mubr.f32.mxu0 0.0
      %6657 = vmatmul.mubr.f32.gmra.mxu0 %v5954
      %v6658 = vpop.f32.mrf.mxu0
      %v6659 = vadd.f32 0.0, %v6658
      %v6660 = vpop.f32.mrf.mxu0
      %6661 = vmatprep.mubr.f32.mxu0 0.0
      %6662 = vmatmul.mubr.f32.gmra.mxu0 %v5957
      %v6663 = vpop.f32.mrf.mxu0
      %v6664 = vadd.f32 0.0, %v6663
      %v6665 = vpop.f32.mrf.mxu0
      %6666 = vmatprep.mubr.f32.mxu0 0.0
      %6667 = vmatmul.mubr.f32.gmra.mxu0 %v5960
      %v6668 = vpop.f32.mrf.mxu0
      %v6669 = vadd.f32 0.0, %v6668
      %v6670 = vpop.f32.mrf.mxu0
      %6671 = vmatprep.mubr.f32.mxu0 0.0
      %6672 = vmatmul.mubr.f32.gmra.mxu0 %v6452
      %v6673 = vpop.f32.mrf.mxu0
      %v6674 = vadd.f32 0.0, %v6673
      %v6675 = vpop.f32.mrf.mxu0
      %6676 = vmatprep.mubr.f32.mxu0 0.0
      %6677 = vmatmul.mubr.f32.gmra.mxu0 %v6455
      %v6678 = vpop.f32.mrf.mxu0
      %v6679 = vadd.f32 0.0, %v6678
      %v6680 = vpop.f32.mrf.mxu0
      %6681 = vdwg.mxu0
      %v6682 = vadd.f32 %v6260, %v6524
      %v6683 = vadd.f32 %v6265, %v6529
      %v6684 = vadd.f32 %v6270, %v6534
      %v6685 = vadd.f32 %v6275, %v6539
      %v6686 = vadd.f32 %v6280, %v6544
      %v6687 = vadd.f32 %v6285, %v6549
      %v6688 = vadd.f32 %v6290, %v6554
      %v6689 = vadd.f32 %v6295, %v6559
      %v6690 = vadd.f32 %v6300, %v6564
      %v6691 = vadd.f32 %v6305, %v6569
      %v6692 = vadd.f32 %v6310, %v6574
      %v6693 = vadd.f32 %v6315, %v6579
      %v6694 = vadd.f32 %v6320, %v6584
      %v6695 = vadd.f32 %v6325, %v6589
      %v6696 = vadd.f32 %v6330, %v6594
      %v6697 = vadd.f32 %v6335, %v6599
      %v6698 = vadd.f32 %v6340, %v6604
      %v6699 = vadd.f32 %v6345, %v6609
      %v6700 = vadd.f32 %v6350, %v6614
      %v6701 = vadd.f32 %v6355, %v6619
      %v6702 = vadd.f32 %v6360, %v6624
      %v6703 = vadd.f32 %v6365, %v6629
      %v6704 = vadd.f32 %v6370, %v6634
      %v6705 = vadd.f32 %v6375, %v6639
      %v6706 = vadd.f32 %v6380, %v6644
      %v6707 = vadd.f32 %v6385, %v6649
      %v6708 = vadd.f32 %v6390, %v6654
      %v6709 = vadd.f32 %v6395, %v6659
      %v6710 = vadd.f32 %v6400, %v6664
      %v6711 = vadd.f32 %v6405, %v6669
      %v6712 = vadd.f32 %v6410, %v6674
      %v6713 = vadd.f32 %v6415, %v6679
      %v6715 = vlaneseq
      %v6716 = vshrl.u32 %v6715, 7
      %v6717 = vsub.s32 0, %v6716
      %v6718 = vrot.slane %v5360, %v6717
      %v6720 = vadd.f32 %v6682, %v6718
      %v6721 = vadd.f32 %v6683, %v6718
      %v6722 = vadd.f32 %v6684, %v6718
      %v6723 = vadd.f32 %v6685, %v6718
      %v6724 = vadd.f32 %v6686, %v6718
      %v6725 = vadd.f32 %v6687, %v6718
      %v6726 = vadd.f32 %v6688, %v6718
      %v6727 = vadd.f32 %v6689, %v6718
      %v6728 = vadd.f32 %v6690, %v6718
      %v6729 = vadd.f32 %v6691, %v6718
      %v6730 = vadd.f32 %v6692, %v6718
      %v6731 = vadd.f32 %v6693, %v6718
      %v6732 = vadd.f32 %v6694, %v6718
      %v6733 = vadd.f32 %v6695, %v6718
      %v6734 = vadd.f32 %v6696, %v6718
      %v6735 = vadd.f32 %v6697, %v6718
      %v6736 = vadd.f32 %v6698, %v6718
      %v6737 = vadd.f32 %v6699, %v6718
      %v6738 = vadd.f32 %v6700, %v6718
      %v6739 = vadd.f32 %v6701, %v6718
      %v6740 = vadd.f32 %v6702, %v6718
      %v6741 = vadd.f32 %v6703, %v6718
      %v6742 = vadd.f32 %v6704, %v6718
      %v6743 = vadd.f32 %v6705, %v6718
      %v6744 = vadd.f32 %v6706, %v6718
      %v6745 = vadd.f32 %v6707, %v6718
      %v6746 = vadd.f32 %v6708, %v6718
      %v6747 = vadd.f32 %v6709, %v6718
      %v6748 = vadd.f32 %v6710, %v6718
      %v6749 = vadd.f32 %v6711, %v6718
      %v6750 = vadd.f32 %v6712, %v6718
      %v6751 = vadd.f32 %v6713, %v6718
      %v6752 = vmax.f32 %v6720, 0.0
      %v6753 = vmax.f32 %v6721, 0.0
      %v6754 = vmax.f32 %v6722, 0.0
      %v6755 = vmax.f32 %v6723, 0.0
      %v6756 = vmax.f32 %v6724, 0.0
      %v6757 = vmax.f32 %v6725, 0.0
      %v6758 = vmax.f32 %v6726, 0.0
      %v6759 = vmax.f32 %v6727, 0.0
      %v6760 = vmax.f32 %v6728, 0.0
      %v6761 = vmax.f32 %v6729, 0.0
      %v6762 = vmax.f32 %v6730, 0.0
      %v6763 = vmax.f32 %v6731, 0.0
      %v6764 = vmax.f32 %v6732, 0.0
      %v6765 = vmax.f32 %v6733, 0.0
      %v6766 = vmax.f32 %v6734, 0.0
      %v6767 = vmax.f32 %v6735, 0.0
      %v6768 = vmax.f32 %v6736, 0.0
      %v6769 = vmax.f32 %v6737, 0.0
      %v6770 = vmax.f32 %v6738, 0.0
      %v6771 = vmax.f32 %v6739, 0.0
      %v6772 = vmax.f32 %v6740, 0.0
      %v6773 = vmax.f32 %v6741, 0.0
      %v6774 = vmax.f32 %v6742, 0.0
      %v6775 = vmax.f32 %v6743, 0.0
      %v6776 = vmax.f32 %v6744, 0.0
      %v6777 = vmax.f32 %v6745, 0.0
      %v6778 = vmax.f32 %v6746, 0.0
      %v6779 = vmax.f32 %v6747, 0.0
      %v6780 = vmax.f32 %v6748, 0.0
      %v6781 = vmax.f32 %v6749, 0.0
      %v6782 = vmax.f32 %v6750, 0.0
      %v6783 = vmax.f32 %v6751, 0.0
      %v6784 = vld [vmem:[%s8] sm:$0x1]
      %6785 = vst.msk [vmem:[%s411 + $0x1] sm:$0xff] %vm333, %v6752
      %6786 = vst.msk [vmem:[%s411 + $0x9] sm:$0xff] %vm333, %v6753
      %6787 = vst.msk [vmem:[%s411 + $0x19] sm:$0xff] %vm333, %v6754
      %6788 = vst.msk [vmem:[%s411 + $0x21] sm:$0xff] %vm333, %v6755
      %6789 = vst.msk [vmem:[%s411 + $0x31] sm:$0xff] %vm333, %v6756
      %6790 = vst.msk [vmem:[%s411 + $0x39] sm:$0xff] %vm333, %v6757
      %6791 = vst.msk [vmem:[%s411 + $0x49] sm:$0xff] %vm333, %v6758
      %6792 = vst.msk [vmem:[%s411 + $0x51] sm:$0xff] %vm333, %v6759
      %6793 = vst.msk [vmem:[%s411 + $0x61] sm:$0xff] %vm333, %v6760
      %6794 = vst.msk [vmem:[%s411 + $0x69] sm:$0xff] %vm333, %v6761
      %6795 = vst.msk [vmem:[%s411 + $0x79] sm:$0xff] %vm333, %v6762
      %6796 = vst.msk [vmem:[%s411 + $0x81] sm:$0xff] %vm333, %v6763
      %6797 = vst.msk [vmem:[%s411 + $0x91] sm:$0xff] %vm333, %v6764
      %6798 = vst.msk [vmem:[%s411 + $0x99] sm:$0xff] %vm333, %v6765
      %6799 = vst.msk [vmem:[%s411 + $0xa9] sm:$0xff] %vm333, %v6766
      %6800 = vst.msk [vmem:[%s411 + $0xb1] sm:$0xff] %vm333, %v6767
      %6801 = vst.msk [vmem:[%s411 + $0xc1] sm:$0xff] %vm333, %v6768
      %6802 = vst.msk [vmem:[%s411 + $0xc9] sm:$0xff] %vm333, %v6769
      %6803 = vst.msk [vmem:[%s411 + $0xd9] sm:$0xff] %vm333, %v6770
      %6804 = vst.msk [vmem:[%s411 + $0xe1] sm:$0xff] %vm333, %v6771
      %6805 = vst.msk [vmem:[%s411 + $0xf1] sm:$0xff] %vm333, %v6772
      %6806 = vst.msk [vmem:[%s411 + $0xf9] sm:$0xff] %vm333, %v6773
      %6807 = vst.msk [vmem:[%s411 + $0x109] sm:$0xff] %vm333, %v6774
      %6808 = vst.msk [vmem:[%s411 + $0x111] sm:$0xff] %vm333, %v6775
      %6809 = vst.msk [vmem:[%s411 + $0x121] sm:$0xff] %vm333, %v6776
      %6810 = vst.msk [vmem:[%s411 + $0x129] sm:$0xff] %vm333, %v6777
      %6811 = vst.msk [vmem:[%s411 + $0x139] sm:$0xff] %vm333, %v6778
      %6812 = vst.msk [vmem:[%s411 + $0x141] sm:$0xff] %vm333, %v6779
      %6813 = vst.msk [vmem:[%s411 + $0x151] sm:$0xff] %vm333, %v6780
      %6814 = vst.msk [vmem:[%s411 + $0x159] sm:$0xff] %vm333, %v6781
      %6815 = vst.msk [vmem:[%s411 + $0x169] sm:$0xff] %vm333, %v6782
      %6816 = vst.msk [vmem:[%s411 + $0x171] sm:$0xff] %vm333, %v6783
      %v6817 = vld [vmem:[#allocation2] sm:$0xff]
      %v6818 = vld [vmem:[#allocation2 + $0x8] sm:$0xff]
      %v6819 = vld [vmem:[#allocation2 + $0x18] sm:$0xff]
      %v6820 = vld [vmem:[#allocation2 + $0x20] sm:$0xff]
      %v6821 = vld [vmem:[#allocation2 + $0x30] sm:$0xff]
      %v6822 = vld [vmem:[#allocation2 + $0x38] sm:$0xff]
      %v6823 = vld [vmem:[#allocation2 + $0x48] sm:$0xff]
      %v6824 = vld [vmem:[#allocation2 + $0x50] sm:$0xff]
      %v6825 = vld [vmem:[#allocation2 + $0x60] sm:$0xff]
      %v6826 = vld [vmem:[#allocation2 + $0x68] sm:$0xff]
      %v6827 = vld [vmem:[#allocation2 + $0x78] sm:$0xff]
      %v6828 = vld [vmem:[#allocation2 + $0x80] sm:$0xff]
      %v6829 = vld [vmem:[#allocation2 + $0x90] sm:$0xff]
      %v6830 = vld [vmem:[#allocation2 + $0x98] sm:$0xff]
      %v6831 = vld [vmem:[#allocation2 + $0xa8] sm:$0xff]
      %v6832 = vld [vmem:[#allocation2 + $0xb0] sm:$0xff]
      %v6833 = vld [vmem:[#allocation2 + $0xc0] sm:$0xff]
      %v6834 = vld [vmem:[#allocation2 + $0xc8] sm:$0xff]
      %v6835 = vld [vmem:[#allocation2 + $0xd8] sm:$0xff]
      %v6836 = vld [vmem:[#allocation2 + $0xe0] sm:$0xff]
      %v6837 = vld [vmem:[#allocation2 + $0xf0] sm:$0xff]
      %v6838 = vld [vmem:[#allocation2 + $0xf8] sm:$0xff]
      %v6839 = vld [vmem:[#allocation2 + $0x108] sm:$0xff]
      %v6840 = vld [vmem:[#allocation2 + $0x110] sm:$0xff]
      %v6841 = vld [vmem:[#allocation2 + $0x120] sm:$0xff]
      %v6842 = vld [vmem:[#allocation2 + $0x128] sm:$0xff]
      %v6843 = vld [vmem:[#allocation2 + $0x138] sm:$0xff]
      %v6844 = vld [vmem:[#allocation2 + $0x140] sm:$0xff]
      %v6845 = vld [vmem:[#allocation2 + $0x150] sm:$0xff]
      %v6846 = vld [vmem:[#allocation2 + $0x158] sm:$0xff]
      %v6847 = vld [vmem:[#allocation2 + $0x168] sm:$0xff]
      %v6848 = vld [vmem:[#allocation2 + $0x170] sm:$0xff]
      %v6849 = vld [vmem:[#allocation2 + $0x180] sm:$0xff]
      %v6850 = vld [vmem:[#allocation2 + $0x188] sm:$0xff]
      %v6851 = vld [vmem:[#allocation2 + $0x198] sm:$0xff]
      %v6852 = vld [vmem:[#allocation2 + $0x1a0] sm:$0xff]
      %v6853 = vld [vmem:[#allocation2 + $0x1] sm:$0xff]
      %v6854 = vld [vmem:[#allocation2 + $0x9] sm:$0xff]
      %v6855 = vld [vmem:[#allocation2 + $0x19] sm:$0xff]
      %v6856 = vld [vmem:[#allocation2 + $0x21] sm:$0xff]
      %v6857 = vld [vmem:[#allocation2 + $0x31] sm:$0xff]
      %v6858 = vld [vmem:[#allocation2 + $0x39] sm:$0xff]
      %v6859 = vld [vmem:[#allocation2 + $0x49] sm:$0xff]
      %v6860 = vld [vmem:[#allocation2 + $0x51] sm:$0xff]
      %v6861 = vld [vmem:[#allocation2 + $0x61] sm:$0xff]
      %v6862 = vld [vmem:[#allocation2 + $0x69] sm:$0xff]
      %v6863 = vld [vmem:[#allocation2 + $0x79] sm:$0xff]
      %v6864 = vld [vmem:[#allocation2 + $0x81] sm:$0xff]
      %v6865 = vld [vmem:[#allocation2 + $0x91] sm:$0xff]
      %v6866 = vld [vmem:[#allocation2 + $0x99] sm:$0xff]
      %v6867 = vld [vmem:[#allocation2 + $0xa9] sm:$0xff]
      %v6868 = vld [vmem:[#allocation2 + $0xb1] sm:$0xff]
      %v6869 = vld [vmem:[#allocation2 + $0xc1] sm:$0xff]
      %v6870 = vld [vmem:[#allocation2 + $0xc9] sm:$0xff]
      %v6871 = vld [vmem:[#allocation2 + $0xd9] sm:$0xff]
      %v6872 = vld [vmem:[#allocation2 + $0xe1] sm:$0xff]
      %v6873 = vld [vmem:[#allocation2 + $0xf1] sm:$0xff]
      %v6874 = vld [vmem:[#allocation2 + $0xf9] sm:$0xff]
      %v6875 = vld [vmem:[#allocation2 + $0x109] sm:$0xff]
      %v6876 = vld [vmem:[#allocation2 + $0x111] sm:$0xff]
      %v6877 = vld [vmem:[#allocation2 + $0x121] sm:$0xff]
      %v6878 = vld [vmem:[#allocation2 + $0x129] sm:$0xff]
      %v6879 = vld [vmem:[#allocation2 + $0x139] sm:$0xff]
      %v6880 = vld [vmem:[#allocation2 + $0x141] sm:$0xff]
      %v6881 = vld [vmem:[#allocation2 + $0x151] sm:$0xff]
      %v6882 = vld [vmem:[#allocation2 + $0x159] sm:$0xff]
      %v6883 = vld [vmem:[#allocation2 + $0x169] sm:$0xff]
      %v6884 = vld [vmem:[#allocation2 + $0x171] sm:$0xff]
      %v6885 = vld [vmem:[#allocation2 + $0x181] sm:$0xff]
      %v6886 = vld [vmem:[#allocation2 + $0x189] sm:$0xff]
      %v6887 = vld [vmem:[#allocation2 + $0x199] sm:$0xff]
      %v6888 = vld [vmem:[#allocation2 + $0x1a1] sm:$0xff]
      %v6889 = vld [vmem:[#allocation2 + $0x2] sm:$0xff]
      %v6890 = vld [vmem:[#allocation2 + $0xa] sm:$0xff]
      %v6891 = vld [vmem:[#allocation2 + $0x1a] sm:$0xff]
      %v6892 = vld [vmem:[#allocation2 + $0x22] sm:$0xff]
      %v6893 = vld [vmem:[#allocation2 + $0x32] sm:$0xff]
      %v6894 = vld [vmem:[#allocation2 + $0x3a] sm:$0xff]
      %v6895 = vld [vmem:[#allocation2 + $0x4a] sm:$0xff]
      %v6896 = vld [vmem:[#allocation2 + $0x52] sm:$0xff]
      %v6897 = vld [vmem:[#allocation2 + $0x62] sm:$0xff]
      %v6898 = vld [vmem:[#allocation2 + $0x6a] sm:$0xff]
      %v6899 = vld [vmem:[#allocation2 + $0x7a] sm:$0xff]
      %v6900 = vld [vmem:[#allocation2 + $0x82] sm:$0xff]
      %v6901 = vld [vmem:[#allocation2 + $0x92] sm:$0xff]
      %v6902 = vld [vmem:[#allocation2 + $0x9a] sm:$0xff]
      %v6903 = vld [vmem:[#allocation2 + $0xaa] sm:$0xff]
      %v6904 = vld [vmem:[#allocation2 + $0xb2] sm:$0xff]
      %v6905 = vld [vmem:[#allocation2 + $0xc2] sm:$0xff]
      %v6906 = vld [vmem:[#allocation2 + $0xca] sm:$0xff]
      %v6907 = vld [vmem:[#allocation2 + $0xda] sm:$0xff]
      %v6908 = vld [vmem:[#allocation2 + $0xe2] sm:$0xff]
      %v6909 = vld [vmem:[#allocation2 + $0xf2] sm:$0xff]
      %v6910 = vld [vmem:[#allocation2 + $0xfa] sm:$0xff]
      %v6911 = vld [vmem:[#allocation2 + $0x10a] sm:$0xff]
      %v6912 = vld [vmem:[#allocation2 + $0x112] sm:$0xff]
      %v6913 = vld [vmem:[#allocation2 + $0x122] sm:$0xff]
      %v6914 = vld [vmem:[#allocation2 + $0x12a] sm:$0xff]
      %v6915 = vld [vmem:[#allocation2 + $0x13a] sm:$0xff]
      %v6916 = vld [vmem:[#allocation2 + $0x142] sm:$0xff]
      %v6917 = vld [vmem:[#allocation2 + $0x152] sm:$0xff]
      %v6918 = vld [vmem:[#allocation2 + $0x15a] sm:$0xff]
      %v6919 = vld [vmem:[#allocation2 + $0x16a] sm:$0xff]
      %v6920 = vld [vmem:[#allocation2 + $0x172] sm:$0xff]
      %v6921 = vld [vmem:[#allocation2 + $0x182] sm:$0xff]
      %v6922 = vld [vmem:[#allocation2 + $0x18a] sm:$0xff]
      %v6923 = vld [vmem:[#allocation2 + $0x19a] sm:$0xff]
      %v6924 = vld [vmem:[#allocation2 + $0x1a2] sm:$0xff]
      %6957 = vrot.lane.b32.xlu0 %v6853, 64
      %v6958 = vpop.permute.xlu0 %6957
      %6959 = vrot.lane.b32.xlu0 %v6854, 64
      %v6960 = vpop.permute.xlu0 %6959
      %6961 = vrot.lane.b32.xlu0 %v6855, 64
      %v6962 = vpop.permute.xlu0 %6961
      %6963 = vrot.lane.b32.xlu0 %v6856, 64
      %v6964 = vpop.permute.xlu0 %6963
      %6965 = vrot.lane.b32.xlu0 %v6857, 64
      %v6966 = vpop.permute.xlu0 %6965
      %6967 = vrot.lane.b32.xlu0 %v6858, 64
      %v6968 = vpop.permute.xlu0 %6967
      %6969 = vrot.lane.b32.xlu0 %v6859, 64
      %v6970 = vpop.permute.xlu0 %6969
      %6971 = vrot.lane.b32.xlu0 %v6860, 64
      %v6972 = vpop.permute.xlu0 %6971
      %6973 = vrot.lane.b32.xlu0 %v6861, 64
      %v6974 = vpop.permute.xlu0 %6973
      %6975 = vrot.lane.b32.xlu0 %v6862, 64
      %v6976 = vpop.permute.xlu0 %6975
      %6977 = vrot.lane.b32.xlu0 %v6863, 64
      %v6978 = vpop.permute.xlu0 %6977
      %6979 = vrot.lane.b32.xlu0 %v6864, 64
      %v6980 = vpop.permute.xlu0 %6979
      %6981 = vrot.lane.b32.xlu0 %v6865, 64
      %v6982 = vpop.permute.xlu0 %6981
      %6983 = vrot.lane.b32.xlu0 %v6866, 64
      %v6984 = vpop.permute.xlu0 %6983
      %6985 = vrot.lane.b32.xlu0 %v6867, 64
      %v6986 = vpop.permute.xlu0 %6985
      %6987 = vrot.lane.b32.xlu0 %v6868, 64
      %v6988 = vpop.permute.xlu0 %6987
      %6989 = vrot.lane.b32.xlu0 %v6869, 64
      %v6990 = vpop.permute.xlu0 %6989
      %6991 = vrot.lane.b32.xlu0 %v6870, 64
      %v6992 = vpop.permute.xlu0 %6991
      %6993 = vrot.lane.b32.xlu0 %v6871, 64
      %v6994 = vpop.permute.xlu0 %6993
      %6995 = vrot.lane.b32.xlu0 %v6872, 64
      %v6996 = vpop.permute.xlu0 %6995
      %6997 = vrot.lane.b32.xlu0 %v6873, 64
      %v6998 = vpop.permute.xlu0 %6997
      %6999 = vrot.lane.b32.xlu0 %v6874, 64
      %v7000 = vpop.permute.xlu0 %6999
      %7001 = vrot.lane.b32.xlu0 %v6875, 64
      %v7002 = vpop.permute.xlu0 %7001
      %7003 = vrot.lane.b32.xlu0 %v6876, 64
      %v7004 = vpop.permute.xlu0 %7003
      %7005 = vrot.lane.b32.xlu0 %v6877, 64
      %v7006 = vpop.permute.xlu0 %7005
      %7007 = vrot.lane.b32.xlu0 %v6878, 64
      %v7008 = vpop.permute.xlu0 %7007
      %7009 = vrot.lane.b32.xlu0 %v6879, 64
      %v7010 = vpop.permute.xlu0 %7009
      %7011 = vrot.lane.b32.xlu0 %v6880, 64
      %v7012 = vpop.permute.xlu0 %7011
      %7013 = vrot.lane.b32.xlu0 %v6881, 64
      %v7014 = vpop.permute.xlu0 %7013
      %7015 = vrot.lane.b32.xlu0 %v6882, 64
      %v7016 = vpop.permute.xlu0 %7015
      %7017 = vrot.lane.b32.xlu0 %v6883, 64
      %v7018 = vpop.permute.xlu0 %7017
      %7019 = vrot.lane.b32.xlu0 %v6884, 64
      %v7020 = vpop.permute.xlu0 %7019
      %v7053 = vsel %vm333, %v6817, %v6958
      %v7054 = vsel %vm333, %v6818, %v6960
      %v7055 = vsel %vm333, %v6819, %v6962
      %v7056 = vsel %vm333, %v6820, %v6964
      %v7057 = vsel %vm333, %v6821, %v6966
      %v7058 = vsel %vm333, %v6822, %v6968
      %v7059 = vsel %vm333, %v6823, %v6970
      %v7060 = vsel %vm333, %v6824, %v6972
      %v7061 = vsel %vm333, %v6825, %v6974
      %v7062 = vsel %vm333, %v6826, %v6976
      %v7063 = vsel %vm333, %v6827, %v6978
      %v7064 = vsel %vm333, %v6828, %v6980
      %v7065 = vsel %vm333, %v6829, %v6982
      %v7066 = vsel %vm333, %v6830, %v6984
      %v7067 = vsel %vm333, %v6831, %v6986
      %v7068 = vsel %vm333, %v6832, %v6988
      %v7069 = vsel %vm333, %v6833, %v6990
      %v7070 = vsel %vm333, %v6834, %v6992
      %v7071 = vsel %vm333, %v6835, %v6994
      %v7072 = vsel %vm333, %v6836, %v6996
      %v7073 = vsel %vm333, %v6837, %v6998
      %v7074 = vsel %vm333, %v6838, %v7000
      %v7075 = vsel %vm333, %v6839, %v7002
      %v7076 = vsel %vm333, %v6840, %v7004
      %v7077 = vsel %vm333, %v6841, %v7006
      %v7078 = vsel %vm333, %v6842, %v7008
      %v7079 = vsel %vm333, %v6843, %v7010
      %v7080 = vsel %vm333, %v6844, %v7012
      %v7081 = vsel %vm333, %v6845, %v7014
      %v7082 = vsel %vm333, %v6846, %v7016
      %v7083 = vsel %vm333, %v6847, %v7018
      %v7084 = vsel %vm333, %v6848, %v7020
      %v7085 = vld [vmem:[%s7] sm:$0xff]
      %v7086 = vld [vmem:[%s7 + $0x8] sm:$0xff]
      %v7087 = vld [vmem:[%s7 + $0x10] sm:$0xff]
      %v7088 = vld [vmem:[%s7 + $0x18] sm:$0xff]
      %v7089 = vld [vmem:[%s7 + $0x20] sm:$0xff]
      %v7090 = vld [vmem:[%s7 + $0x28] sm:$0xff]
      %v7091 = vld [vmem:[%s7 + $0x30] sm:$0xff]
      %v7092 = vld [vmem:[%s7 + $0x38] sm:$0xff]
      %v7093 = vld [vmem:[%s7 + $0x40] sm:$0xff]
      %v7094 = vld [vmem:[%s7 + $0x48] sm:$0xff]
      %v7095 = vld [vmem:[%s7 + $0x50] sm:$0xff]
      %v7096 = vld [vmem:[%s7 + $0x58] sm:$0xff]
      %v7097 = vld [vmem:[%s7 + $0x60] sm:$0xff]
      %v7098 = vld [vmem:[%s7 + $0x68] sm:$0xff]
      %v7099 = vld [vmem:[%s7 + $0x70] sm:$0xff]
      %v7100 = vld [vmem:[%s7 + $0x78] sm:$0xff]
      %v7101 = vld [vmem:[%s7 + $0x80] sm:$0xff]
      %v7102 = vld [vmem:[%s7 + $0x88] sm:$0xff]
      %v7103 = vld [vmem:[%s7 + $0x90] sm:$0xff]
      %v7104 = vld [vmem:[%s7 + $0x98] sm:$0xff]
      %v7105 = vld [vmem:[%s7 + $0xa0] sm:$0xff]
      %v7106 = vld [vmem:[%s7 + $0xa8] sm:$0xff]
      %v7107 = vld [vmem:[%s7 + $0xb0] sm:$0xff]
      %v7108 = vld [vmem:[%s7 + $0xb8] sm:$0xff]
      %7111 = vrot.lane.b32.xlu0 %v6885, 64
      %v7112 = vpop.permute.xlu0 %7111
      %7113 = vrot.lane.b32.xlu0 %v6886, 64
      %v7114 = vpop.permute.xlu0 %7113
      %v7117 = vsel %vm333, %v6849, %v7112
      %v7118 = vsel %vm333, %v6850, %v7114
      %s7119 = scalar_lea.vmem %s7, 192
      %v7120 = vld [vmem:[%s7119] sm:$0xff]
      %v7121 = vld [vmem:[%s7119 + $0x8] sm:$0xff]
      %v7122 = vld [vmem:[%s7119 + $0x10] sm:$0xff]
      %v7123 = vld [vmem:[%s7119 + $0x18] sm:$0xff]
      %v7124 = vld [vmem:[%s7119 + $0x20] sm:$0xff]
      %v7125 = vld [vmem:[%s7119 + $0x28] sm:$0xff]
      %v7126 = vld [vmem:[%s7119 + $0x30] sm:$0xff]
      %v7127 = vld [vmem:[%s7119 + $0x38] sm:$0xff]
      %v7128 = vld [vmem:[%s7119 + $0x40] sm:$0xff]
      %v7129 = vld [vmem:[%s7119 + $0x48] sm:$0xff]
      %v7130 = vld [vmem:[%s7119 + $0x50] sm:$0xff]
      %v7131 = vld [vmem:[%s7119 + $0x58] sm:$0xff]
      %v7132 = vld [vmem:[%s7119 + $0x60] sm:$0xff]
      %v7133 = vld [vmem:[%s7119 + $0x68] sm:$0xff]
      %v7134 = vld [vmem:[%s7119 + $0x70] sm:$0xff]
      %v7135 = vld [vmem:[%s7119 + $0x78] sm:$0xff]
      %v7136 = vld [vmem:[%s7119 + $0x80] sm:$0xff]
      %v7137 = vld [vmem:[%s7119 + $0x88] sm:$0xff]
      %v7138 = vld [vmem:[%s7119 + $0x90] sm:$0xff]
      %v7139 = vld [vmem:[%s7119 + $0x98] sm:$0xff]
      %v7140 = vld [vmem:[%s7119 + $0xa0] sm:$0xff]
      %v7141 = vld [vmem:[%s7119 + $0xa8] sm:$0xff]
      %v7142 = vld [vmem:[%s7119 + $0xb0] sm:$0xff]
      %v7143 = vld [vmem:[%s7119 + $0xb8] sm:$0xff]
      %v7145 = vsel %vm333, %v6891, 0
      %v7148 = vsel %vm333, %v6892, 0
      %v7151 = vsel %vm333, %v6893, 0
      %v7154 = vsel %vm333, %v6894, 0
      %v7157 = vsel %vm333, %v6895, 0
      %v7160 = vsel %vm333, %v6896, 0
      %v7163 = vsel %vm333, %v6897, 0
      %v7166 = vsel %vm333, %v6898, 0
      %v7169 = vsel %vm333, %v6899, 0
      %v7172 = vsel %vm333, %v6900, 0
      %v7175 = vsel %vm333, %v6901, 0
      %v7178 = vsel %vm333, %v6902, 0
      %v7181 = vsel %vm333, %v6903, 0
      %v7184 = vsel %vm333, %v6904, 0
      %v7187 = vsel %vm333, %v6905, 0
      %v7190 = vsel %vm333, %v6906, 0
      %v7193 = vsel %vm333, %v6907, 0
      %v7196 = vsel %vm333, %v6908, 0
      %v7199 = vsel %vm333, %v6909, 0
      %v7202 = vsel %vm333, %v6910, 0
      %v7205 = vsel %vm333, %v6911, 0
      %v7208 = vsel %vm333, %v6912, 0
      %v7211 = vsel %vm333, %v6913, 0
      %v7214 = vsel %vm333, %v6914, 0
      %v7217 = vsel %vm333, %v6915, 0
      %v7220 = vsel %vm333, %v6916, 0
      %v7223 = vsel %vm333, %v6917, 0
      %v7226 = vsel %vm333, %v6918, 0
      %v7229 = vsel %vm333, %v6919, 0
      %v7232 = vsel %vm333, %v6920, 0
      %v7235 = vsel %vm333, %v6921, 0
      %v7238 = vsel %vm333, %v6922, 0
      %7240 = vmatprep.subr.mxu0 0.0
      %7241 = vmatpush1.msra.mxu0 %v7135
      %7242 = vmatprep.subr.mxu0 0.0
      %7243 = vmatpush1.msra.mxu0 %v7134
      %7244 = vmatprep.subr.mxu0 0.0
      %7245 = vmatpush1.msra.mxu0 %v7133
      %7246 = vmatprep.subr.mxu0 0.0
      %7247 = vmatpush1.msra.mxu0 %v7132
      %7248 = vmatprep.subr.mxu0 0.0
      %7249 = vmatpush1.msra.mxu0 %v7131
      %7250 = vmatprep.subr.mxu0 0.0
      %7251 = vmatpush1.msra.mxu0 %v7130
      %7252 = vmatprep.subr.mxu0 0.0
      %7253 = vmatpush1.msra.mxu0 %v7129
      %7254 = vmatprep.subr.mxu0 0.0
      %7255 = vmatpush1.msra.mxu0 %v7128
      %7256 = vmatprep.subr.mxu0 0.0
      %7257 = vmatpush1.msra.mxu0 %v7127
      %7258 = vmatprep.subr.mxu0 0.0
      %7259 = vmatpush1.msra.mxu0 %v7126
      %7260 = vmatprep.subr.mxu0 0.0
      %7261 = vmatpush1.msra.mxu0 %v7125
      %7262 = vmatprep.subr.mxu0 0.0
      %7263 = vmatpush1.msra.mxu0 %v7124
      %7264 = vmatprep.subr.mxu0 0.0
      %7265 = vmatpush1.msra.mxu0 %v7123
      %7266 = vmatprep.subr.mxu0 0.0
      %7267 = vmatpush1.msra.mxu0 %v7122
      %7268 = vmatprep.subr.mxu0 0.0
      %7269 = vmatpush1.msra.mxu0 %v7121
      %7270 = vmatprep.subr.mxu0 0.0
      %7271 = vmatpush1.msra.mxu0 %v7120
      %7272 = vmatprep.subr.mxu0 0.0
      %7273 = vmatpush2.msra.mxu0 0.0
      %7274 = vmatprep.subr.mxu0 0.0
      %7275 = vmatpush2.msra.mxu0 0.0
      %7276 = vmatprep.subr.mxu0 0.0
      %7277 = vmatpush2.msra.mxu0 0.0
      %7278 = vmatprep.subr.mxu0 0.0
      %7279 = vmatpush2.msra.mxu0 0.0
      %7280 = vmatprep.subr.mxu0 0.0
      %7281 = vmatpush2.msra.mxu0 0.0
      %7282 = vmatprep.subr.mxu0 0.0
      %7283 = vmatpush2.msra.mxu0 0.0
      %7284 = vmatprep.subr.mxu0 0.0
      %7285 = vmatpush2.msra.mxu0 0.0
      %7286 = vmatprep.subr.mxu0 0.0
      %7287 = vmatpush2.msra.mxu0 0.0
      %7288 = vmatprep.subr.mxu0 0.0
      %7289 = vmatpush2.msra.mxu0 %v7143
      %7290 = vmatprep.subr.mxu0 0.0
      %7291 = vmatpush2.msra.mxu0 %v7142
      %7292 = vmatprep.subr.mxu0 0.0
      %7293 = vmatpush2.msra.mxu0 %v7141
      %7294 = vmatprep.subr.mxu0 0.0
      %7295 = vmatpush2.msra.mxu0 %v7140
      %7296 = vmatprep.subr.mxu0 0.0
      %7297 = vmatpush2.msra.mxu0 %v7139
      %7298 = vmatprep.subr.mxu0 0.0
      %7299 = vmatpush2.msra.mxu0 %v7138
      %7300 = vmatprep.subr.mxu0 0.0
      %7301 = vmatpush2.msra.mxu0 %v7137
      %7302 = vmatprep.subr.mxu0 0.0
      %7303 = vmatpush2.msra.mxu0 %v7136
      %7304 = vmatprep.mubr.f32.mxu0 %v7145
      %7305 = vmatmul.mubr.f32.gmra.mxu0 %v7055
      %v7306 = vpop.f32.mrf.mxu0
      %v7307 = vadd.f32 0.0, %v7306
      %v7308 = vpop.f32.mrf.mxu0
      %7309 = vmatprep.mubr.f32.mxu0 %v7148
      %7310 = vmatmul.mubr.f32.gmra.mxu0 %v7056
      %v7311 = vpop.f32.mrf.mxu0
      %v7312 = vadd.f32 0.0, %v7311
      %v7313 = vpop.f32.mrf.mxu0
      %7314 = vmatprep.mubr.f32.mxu0 %v7151
      %7315 = vmatmul.mubr.f32.gmra.mxu0 %v7057
      %v7316 = vpop.f32.mrf.mxu0
      %v7317 = vadd.f32 0.0, %v7316
      %v7318 = vpop.f32.mrf.mxu0
      %7319 = vmatprep.mubr.f32.mxu0 %v7154
      %7320 = vmatmul.mubr.f32.gmra.mxu0 %v7058
      %v7321 = vpop.f32.mrf.mxu0
      %v7322 = vadd.f32 0.0, %v7321
      %v7323 = vpop.f32.mrf.mxu0
      %7324 = vmatprep.mubr.f32.mxu0 %v7157
      %7325 = vmatmul.mubr.f32.gmra.mxu0 %v7059
      %v7326 = vpop.f32.mrf.mxu0
      %v7327 = vadd.f32 0.0, %v7326
      %v7328 = vpop.f32.mrf.mxu0
      %7329 = vmatprep.mubr.f32.mxu0 %v7160
      %7330 = vmatmul.mubr.f32.gmra.mxu0 %v7060
      %v7331 = vpop.f32.mrf.mxu0
      %v7332 = vadd.f32 0.0, %v7331
      %v7333 = vpop.f32.mrf.mxu0
      %7334 = vmatprep.mubr.f32.mxu0 %v7163
      %7335 = vmatmul.mubr.f32.gmra.mxu0 %v7061
      %v7336 = vpop.f32.mrf.mxu0
      %v7337 = vadd.f32 0.0, %v7336
      %v7338 = vpop.f32.mrf.mxu0
      %7339 = vmatprep.mubr.f32.mxu0 %v7166
      %7340 = vmatmul.mubr.f32.gmra.mxu0 %v7062
      %v7341 = vpop.f32.mrf.mxu0
      %v7342 = vadd.f32 0.0, %v7341
      %v7343 = vpop.f32.mrf.mxu0
      %7344 = vmatprep.mubr.f32.mxu0 %v7169
      %7345 = vmatmul.mubr.f32.gmra.mxu0 %v7063
      %v7346 = vpop.f32.mrf.mxu0
      %v7347 = vadd.f32 0.0, %v7346
      %v7348 = vpop.f32.mrf.mxu0
      %7349 = vmatprep.mubr.f32.mxu0 %v7172
      %7350 = vmatmul.mubr.f32.gmra.mxu0 %v7064
      %v7351 = vpop.f32.mrf.mxu0
      %v7352 = vadd.f32 0.0, %v7351
      %v7353 = vpop.f32.mrf.mxu0
      %7354 = vmatprep.mubr.f32.mxu0 %v7175
      %7355 = vmatmul.mubr.f32.gmra.mxu0 %v7065
      %v7356 = vpop.f32.mrf.mxu0
      %v7357 = vadd.f32 0.0, %v7356
      %v7358 = vpop.f32.mrf.mxu0
      %7359 = vmatprep.mubr.f32.mxu0 %v7178
      %7360 = vmatmul.mubr.f32.gmra.mxu0 %v7066
      %v7361 = vpop.f32.mrf.mxu0
      %v7362 = vadd.f32 0.0, %v7361
      %v7363 = vpop.f32.mrf.mxu0
      %7364 = vmatprep.mubr.f32.mxu0 %v7181
      %7365 = vmatmul.mubr.f32.gmra.mxu0 %v7067
      %v7366 = vpop.f32.mrf.mxu0
      %v7367 = vadd.f32 0.0, %v7366
      %v7368 = vpop.f32.mrf.mxu0
      %7369 = vmatprep.mubr.f32.mxu0 %v7184
      %7370 = vmatmul.mubr.f32.gmra.mxu0 %v7068
      %v7371 = vpop.f32.mrf.mxu0
      %v7372 = vadd.f32 0.0, %v7371
      %v7373 = vpop.f32.mrf.mxu0
      %7374 = vmatprep.mubr.f32.mxu0 %v7187
      %7375 = vmatmul.mubr.f32.gmra.mxu0 %v7069
      %v7376 = vpop.f32.mrf.mxu0
      %v7377 = vadd.f32 0.0, %v7376
      %v7378 = vpop.f32.mrf.mxu0
      %7379 = vmatprep.mubr.f32.mxu0 %v7190
      %7380 = vmatmul.mubr.f32.gmra.mxu0 %v7070
      %v7381 = vpop.f32.mrf.mxu0
      %v7382 = vadd.f32 0.0, %v7381
      %v7383 = vpop.f32.mrf.mxu0
      %7384 = vmatprep.mubr.f32.mxu0 %v7193
      %7385 = vmatmul.mubr.f32.gmra.mxu0 %v7071
      %v7386 = vpop.f32.mrf.mxu0
      %v7387 = vadd.f32 0.0, %v7386
      %v7388 = vpop.f32.mrf.mxu0
      %7389 = vmatprep.mubr.f32.mxu0 %v7196
      %7390 = vmatmul.mubr.f32.gmra.mxu0 %v7072
      %v7391 = vpop.f32.mrf.mxu0
      %v7392 = vadd.f32 0.0, %v7391
      %v7393 = vpop.f32.mrf.mxu0
      %7394 = vmatprep.mubr.f32.mxu0 %v7199
      %7395 = vmatmul.mubr.f32.gmra.mxu0 %v7073
      %v7396 = vpop.f32.mrf.mxu0
      %v7397 = vadd.f32 0.0, %v7396
      %v7398 = vpop.f32.mrf.mxu0
      %7399 = vmatprep.mubr.f32.mxu0 %v7202
      %7400 = vmatmul.mubr.f32.gmra.mxu0 %v7074
      %v7401 = vpop.f32.mrf.mxu0
      %v7402 = vadd.f32 0.0, %v7401
      %v7403 = vpop.f32.mrf.mxu0
      %7404 = vmatprep.mubr.f32.mxu0 %v7205
      %7405 = vmatmul.mubr.f32.gmra.mxu0 %v7075
      %v7406 = vpop.f32.mrf.mxu0
      %v7407 = vadd.f32 0.0, %v7406
      %v7408 = vpop.f32.mrf.mxu0
      %7409 = vmatprep.mubr.f32.mxu0 %v7208
      %7410 = vmatmul.mubr.f32.gmra.mxu0 %v7076
      %v7411 = vpop.f32.mrf.mxu0
      %v7412 = vadd.f32 0.0, %v7411
      %v7413 = vpop.f32.mrf.mxu0
      %7414 = vmatprep.mubr.f32.mxu0 %v7211
      %7415 = vmatmul.mubr.f32.gmra.mxu0 %v7077
      %v7416 = vpop.f32.mrf.mxu0
      %v7417 = vadd.f32 0.0, %v7416
      %v7418 = vpop.f32.mrf.mxu0
      %7419 = vmatprep.mubr.f32.mxu0 %v7214
      %7420 = vmatmul.mubr.f32.gmra.mxu0 %v7078
      %v7421 = vpop.f32.mrf.mxu0
      %v7422 = vadd.f32 0.0, %v7421
      %v7423 = vpop.f32.mrf.mxu0
      %7424 = vmatprep.mubr.f32.mxu0 %v7217
      %7425 = vmatmul.mubr.f32.gmra.mxu0 %v7079
      %v7426 = vpop.f32.mrf.mxu0
      %v7427 = vadd.f32 0.0, %v7426
      %v7428 = vpop.f32.mrf.mxu0
      %7429 = vmatprep.mubr.f32.mxu0 %v7220
      %7430 = vmatmul.mubr.f32.gmra.mxu0 %v7080
      %v7431 = vpop.f32.mrf.mxu0
      %v7432 = vadd.f32 0.0, %v7431
      %v7433 = vpop.f32.mrf.mxu0
      %7434 = vmatprep.mubr.f32.mxu0 %v7223
      %7435 = vmatmul.mubr.f32.gmra.mxu0 %v7081
      %v7436 = vpop.f32.mrf.mxu0
      %v7437 = vadd.f32 0.0, %v7436
      %v7438 = vpop.f32.mrf.mxu0
      %7439 = vmatprep.mubr.f32.mxu0 %v7226
      %7440 = vmatmul.mubr.f32.gmra.mxu0 %v7082
      %v7441 = vpop.f32.mrf.mxu0
      %v7442 = vadd.f32 0.0, %v7441
      %v7443 = vpop.f32.mrf.mxu0
      %7444 = vmatprep.mubr.f32.mxu0 %v7229
      %7445 = vmatmul.mubr.f32.gmra.mxu0 %v7083
      %v7446 = vpop.f32.mrf.mxu0
      %v7447 = vadd.f32 0.0, %v7446
      %v7448 = vpop.f32.mrf.mxu0
      %7449 = vmatprep.mubr.f32.mxu0 %v7232
      %7450 = vmatmul.mubr.f32.gmra.mxu0 %v7084
      %v7451 = vpop.f32.mrf.mxu0
      %v7452 = vadd.f32 0.0, %v7451
      %v7453 = vpop.f32.mrf.mxu0
      %7454 = vmatprep.mubr.f32.mxu0 %v7235
      %7455 = vmatmul.mubr.f32.gmra.mxu0 %v7117
      %v7456 = vpop.f32.mrf.mxu0
      %v7457 = vadd.f32 0.0, %v7456
      %v7458 = vpop.f32.mrf.mxu0
      %7459 = vmatprep.mubr.f32.mxu0 %v7238
      %7460 = vmatmul.mubr.f32.gmra.mxu0 %v7118
      %v7461 = vpop.f32.mrf.mxu0
      %v7462 = vadd.f32 0.0, %v7461
      %v7463 = vpop.f32.mrf.mxu0
      %7464 = vdwg.mxu0
      %v7466 = vsel %vm333, %v6889, 0
      %v7469 = vsel %vm333, %v6890, 0
      %7471 = vmatprep.subr.mxu0 0.0
      %7472 = vmatpush1.msra.mxu0 %v7100
      %7473 = vmatprep.subr.mxu0 0.0
      %7474 = vmatpush1.msra.mxu0 %v7099
      %7475 = vmatprep.subr.mxu0 0.0
      %7476 = vmatpush1.msra.mxu0 %v7098
      %7477 = vmatprep.subr.mxu0 0.0
      %7478 = vmatpush1.msra.mxu0 %v7097
      %7479 = vmatprep.subr.mxu0 0.0
      %7480 = vmatpush1.msra.mxu0 %v7096
      %7481 = vmatprep.subr.mxu0 0.0
      %7482 = vmatpush1.msra.mxu0 %v7095
      %7483 = vmatprep.subr.mxu0 0.0
      %7484 = vmatpush1.msra.mxu0 %v7094
      %7485 = vmatprep.subr.mxu0 0.0
      %7486 = vmatpush1.msra.mxu0 %v7093
      %7487 = vmatprep.subr.mxu0 0.0
      %7488 = vmatpush1.msra.mxu0 %v7092
      %7489 = vmatprep.subr.mxu0 0.0
      %7490 = vmatpush1.msra.mxu0 %v7091
      %7491 = vmatprep.subr.mxu0 0.0
      %7492 = vmatpush1.msra.mxu0 %v7090
      %7493 = vmatprep.subr.mxu0 0.0
      %7494 = vmatpush1.msra.mxu0 %v7089
      %7495 = vmatprep.subr.mxu0 0.0
      %7496 = vmatpush1.msra.mxu0 %v7088
      %7497 = vmatprep.subr.mxu0 0.0
      %7498 = vmatpush1.msra.mxu0 %v7087
      %7499 = vmatprep.subr.mxu0 0.0
      %7500 = vmatpush1.msra.mxu0 %v7086
      %7501 = vmatprep.subr.mxu0 0.0
      %7502 = vmatpush1.msra.mxu0 %v7085
      %7503 = vmatprep.subr.mxu0 0.0
      %7504 = vmatpush2.msra.mxu0 0.0
      %7505 = vmatprep.subr.mxu0 0.0
      %7506 = vmatpush2.msra.mxu0 0.0
      %7507 = vmatprep.subr.mxu0 0.0
      %7508 = vmatpush2.msra.mxu0 0.0
      %7509 = vmatprep.subr.mxu0 0.0
      %7510 = vmatpush2.msra.mxu0 0.0
      %7511 = vmatprep.subr.mxu0 0.0
      %7512 = vmatpush2.msra.mxu0 0.0
      %7513 = vmatprep.subr.mxu0 0.0
      %7514 = vmatpush2.msra.mxu0 0.0
      %7515 = vmatprep.subr.mxu0 0.0
      %7516 = vmatpush2.msra.mxu0 0.0
      %7517 = vmatprep.subr.mxu0 0.0
      %7518 = vmatpush2.msra.mxu0 0.0
      %7519 = vmatprep.subr.mxu0 0.0
      %7520 = vmatpush2.msra.mxu0 %v7108
      %7521 = vmatprep.subr.mxu0 0.0
      %7522 = vmatpush2.msra.mxu0 %v7107
      %7523 = vmatprep.subr.mxu0 0.0
      %7524 = vmatpush2.msra.mxu0 %v7106
      %7525 = vmatprep.subr.mxu0 0.0
      %7526 = vmatpush2.msra.mxu0 %v7105
      %7527 = vmatprep.subr.mxu0 0.0
      %7528 = vmatpush2.msra.mxu0 %v7104
      %7529 = vmatprep.subr.mxu0 0.0
      %7530 = vmatpush2.msra.mxu0 %v7103
      %7531 = vmatprep.subr.mxu0 0.0
      %7532 = vmatpush2.msra.mxu0 %v7102
      %7533 = vmatprep.subr.mxu0 0.0
      %7534 = vmatpush2.msra.mxu0 %v7101
      %7535 = vmatprep.mubr.f32.mxu0 %v7466
      %7536 = vmatmul.mubr.f32.gmra.mxu0 %v7053
      %v7537 = vpop.f32.mrf.mxu0
      %v7538 = vadd.f32 %v7307, %v7537
      %v7539 = vpop.f32.mrf.mxu0
      %7540 = vmatprep.mubr.f32.mxu0 %v7469
      %7541 = vmatmul.mubr.f32.gmra.mxu0 %v7054
      %v7542 = vpop.f32.mrf.mxu0
      %v7543 = vadd.f32 %v7312, %v7542
      %v7544 = vpop.f32.mrf.mxu0
      %7545 = vmatprep.mubr.f32.mxu0 %v7145
      %7546 = vmatmul.mubr.f32.gmra.mxu0 %v7055
      %v7547 = vpop.f32.mrf.mxu0
      %v7548 = vadd.f32 %v7317, %v7547
      %v7549 = vpop.f32.mrf.mxu0
      %7550 = vmatprep.mubr.f32.mxu0 %v7148
      %7551 = vmatmul.mubr.f32.gmra.mxu0 %v7056
      %v7552 = vpop.f32.mrf.mxu0
      %v7553 = vadd.f32 %v7322, %v7552
      %v7554 = vpop.f32.mrf.mxu0
      %7555 = vmatprep.mubr.f32.mxu0 %v7151
      %7556 = vmatmul.mubr.f32.gmra.mxu0 %v7057
      %v7557 = vpop.f32.mrf.mxu0
      %v7558 = vadd.f32 %v7327, %v7557
      %v7559 = vpop.f32.mrf.mxu0
      %7560 = vmatprep.mubr.f32.mxu0 %v7154
      %7561 = vmatmul.mubr.f32.gmra.mxu0 %v7058
      %v7562 = vpop.f32.mrf.mxu0
      %v7563 = vadd.f32 %v7332, %v7562
      %v7564 = vpop.f32.mrf.mxu0
      %7565 = vmatprep.mubr.f32.mxu0 %v7157
      %7566 = vmatmul.mubr.f32.gmra.mxu0 %v7059
      %v7567 = vpop.f32.mrf.mxu0
      %v7568 = vadd.f32 %v7337, %v7567
      %v7569 = vpop.f32.mrf.mxu0
      %7570 = vmatprep.mubr.f32.mxu0 %v7160
      %7571 = vmatmul.mubr.f32.gmra.mxu0 %v7060
      %v7572 = vpop.f32.mrf.mxu0
      %v7573 = vadd.f32 %v7342, %v7572
      %v7574 = vpop.f32.mrf.mxu0
      %7575 = vmatprep.mubr.f32.mxu0 %v7163
      %7576 = vmatmul.mubr.f32.gmra.mxu0 %v7061
      %v7577 = vpop.f32.mrf.mxu0
      %v7578 = vadd.f32 %v7347, %v7577
      %v7579 = vpop.f32.mrf.mxu0
      %7580 = vmatprep.mubr.f32.mxu0 %v7166
      %7581 = vmatmul.mubr.f32.gmra.mxu0 %v7062
      %v7582 = vpop.f32.mrf.mxu0
      %v7583 = vadd.f32 %v7352, %v7582
      %v7584 = vpop.f32.mrf.mxu0
      %7585 = vmatprep.mubr.f32.mxu0 %v7169
      %7586 = vmatmul.mubr.f32.gmra.mxu0 %v7063
      %v7587 = vpop.f32.mrf.mxu0
      %v7588 = vadd.f32 %v7357, %v7587
      %v7589 = vpop.f32.mrf.mxu0
      %7590 = vmatprep.mubr.f32.mxu0 %v7172
      %7591 = vmatmul.mubr.f32.gmra.mxu0 %v7064
      %v7592 = vpop.f32.mrf.mxu0
      %v7593 = vadd.f32 %v7362, %v7592
      %v7594 = vpop.f32.mrf.mxu0
      %7595 = vmatprep.mubr.f32.mxu0 %v7175
      %7596 = vmatmul.mubr.f32.gmra.mxu0 %v7065
      %v7597 = vpop.f32.mrf.mxu0
      %v7598 = vadd.f32 %v7367, %v7597
      %v7599 = vpop.f32.mrf.mxu0
      %7600 = vmatprep.mubr.f32.mxu0 %v7178
      %7601 = vmatmul.mubr.f32.gmra.mxu0 %v7066
      %v7602 = vpop.f32.mrf.mxu0
      %v7603 = vadd.f32 %v7372, %v7602
      %v7604 = vpop.f32.mrf.mxu0
      %7605 = vmatprep.mubr.f32.mxu0 %v7181
      %7606 = vmatmul.mubr.f32.gmra.mxu0 %v7067
      %v7607 = vpop.f32.mrf.mxu0
      %v7608 = vadd.f32 %v7377, %v7607
      %v7609 = vpop.f32.mrf.mxu0
      %7610 = vmatprep.mubr.f32.mxu0 %v7184
      %7611 = vmatmul.mubr.f32.gmra.mxu0 %v7068
      %v7612 = vpop.f32.mrf.mxu0
      %v7613 = vadd.f32 %v7382, %v7612
      %v7614 = vpop.f32.mrf.mxu0
      %7615 = vmatprep.mubr.f32.mxu0 %v7187
      %7616 = vmatmul.mubr.f32.gmra.mxu0 %v7069
      %v7617 = vpop.f32.mrf.mxu0
      %v7618 = vadd.f32 %v7387, %v7617
      %v7619 = vpop.f32.mrf.mxu0
      %7620 = vmatprep.mubr.f32.mxu0 %v7190
      %7621 = vmatmul.mubr.f32.gmra.mxu0 %v7070
      %v7622 = vpop.f32.mrf.mxu0
      %v7623 = vadd.f32 %v7392, %v7622
      %v7624 = vpop.f32.mrf.mxu0
      %7625 = vmatprep.mubr.f32.mxu0 %v7193
      %7626 = vmatmul.mubr.f32.gmra.mxu0 %v7071
      %v7627 = vpop.f32.mrf.mxu0
      %v7628 = vadd.f32 %v7397, %v7627
      %v7629 = vpop.f32.mrf.mxu0
      %7630 = vmatprep.mubr.f32.mxu0 %v7196
      %7631 = vmatmul.mubr.f32.gmra.mxu0 %v7072
      %v7632 = vpop.f32.mrf.mxu0
      %v7633 = vadd.f32 %v7402, %v7632
      %v7634 = vpop.f32.mrf.mxu0
      %7635 = vmatprep.mubr.f32.mxu0 %v7199
      %7636 = vmatmul.mubr.f32.gmra.mxu0 %v7073
      %v7637 = vpop.f32.mrf.mxu0
      %v7638 = vadd.f32 %v7407, %v7637
      %v7639 = vpop.f32.mrf.mxu0
      %7640 = vmatprep.mubr.f32.mxu0 %v7202
      %7641 = vmatmul.mubr.f32.gmra.mxu0 %v7074
      %v7642 = vpop.f32.mrf.mxu0
      %v7643 = vadd.f32 %v7412, %v7642
      %v7644 = vpop.f32.mrf.mxu0
      %7645 = vmatprep.mubr.f32.mxu0 %v7205
      %7646 = vmatmul.mubr.f32.gmra.mxu0 %v7075
      %v7647 = vpop.f32.mrf.mxu0
      %v7648 = vadd.f32 %v7417, %v7647
      %v7649 = vpop.f32.mrf.mxu0
      %7650 = vmatprep.mubr.f32.mxu0 %v7208
      %7651 = vmatmul.mubr.f32.gmra.mxu0 %v7076
      %v7652 = vpop.f32.mrf.mxu0
      %v7653 = vadd.f32 %v7422, %v7652
      %v7654 = vpop.f32.mrf.mxu0
      %7655 = vmatprep.mubr.f32.mxu0 %v7211
      %7656 = vmatmul.mubr.f32.gmra.mxu0 %v7077
      %v7657 = vpop.f32.mrf.mxu0
      %v7658 = vadd.f32 %v7427, %v7657
      %v7659 = vpop.f32.mrf.mxu0
      %7660 = vmatprep.mubr.f32.mxu0 %v7214
      %7661 = vmatmul.mubr.f32.gmra.mxu0 %v7078
      %v7662 = vpop.f32.mrf.mxu0
      %v7663 = vadd.f32 %v7432, %v7662
      %v7664 = vpop.f32.mrf.mxu0
      %7665 = vmatprep.mubr.f32.mxu0 %v7217
      %7666 = vmatmul.mubr.f32.gmra.mxu0 %v7079
      %v7667 = vpop.f32.mrf.mxu0
      %v7668 = vadd.f32 %v7437, %v7667
      %v7669 = vpop.f32.mrf.mxu0
      %7670 = vmatprep.mubr.f32.mxu0 %v7220
      %7671 = vmatmul.mubr.f32.gmra.mxu0 %v7080
      %v7672 = vpop.f32.mrf.mxu0
      %v7673 = vadd.f32 %v7442, %v7672
      %v7674 = vpop.f32.mrf.mxu0
      %7675 = vmatprep.mubr.f32.mxu0 %v7223
      %7676 = vmatmul.mubr.f32.gmra.mxu0 %v7081
      %v7677 = vpop.f32.mrf.mxu0
      %v7678 = vadd.f32 %v7447, %v7677
      %v7679 = vpop.f32.mrf.mxu0
      %7680 = vmatprep.mubr.f32.mxu0 %v7226
      %7681 = vmatmul.mubr.f32.gmra.mxu0 %v7082
      %v7682 = vpop.f32.mrf.mxu0
      %v7683 = vadd.f32 %v7452, %v7682
      %v7684 = vpop.f32.mrf.mxu0
      %7685 = vmatprep.mubr.f32.mxu0 %v7229
      %7686 = vmatmul.mubr.f32.gmra.mxu0 %v7083
      %v7687 = vpop.f32.mrf.mxu0
      %v7688 = vadd.f32 %v7457, %v7687
      %v7689 = vpop.f32.mrf.mxu0
      %7690 = vmatprep.mubr.f32.mxu0 %v7232
      %7691 = vmatmul.mubr.f32.gmra.mxu0 %v7084
      %v7692 = vpop.f32.mrf.mxu0
      %v7693 = vadd.f32 %v7462, %v7692
      %v7694 = vpop.f32.mrf.mxu0
      %7695 = vdwg.mxu0
      %7698 = vrot.lane.b32.xlu0 %v6887, 64
      %v7699 = vpop.permute.xlu0 %7698
      %7700 = vrot.lane.b32.xlu0 %v6888, 64
      %v7701 = vpop.permute.xlu0 %7700
      %v7704 = vsel %vm333, %v6851, %v7699
      %v7705 = vsel %vm333, %v6852, %v7701
      %s7706 = scalar_lea.vmem %s7, 384
      %v7707 = vld [vmem:[%s7706] sm:$0xff]
      %v7708 = vld [vmem:[%s7706 + $0x8] sm:$0xff]
      %v7709 = vld [vmem:[%s7706 + $0x10] sm:$0xff]
      %v7710 = vld [vmem:[%s7706 + $0x18] sm:$0xff]
      %v7711 = vld [vmem:[%s7706 + $0x20] sm:$0xff]
      %v7712 = vld [vmem:[%s7706 + $0x28] sm:$0xff]
      %v7713 = vld [vmem:[%s7706 + $0x30] sm:$0xff]
      %v7714 = vld [vmem:[%s7706 + $0x38] sm:$0xff]
      %v7715 = vld [vmem:[%s7706 + $0x40] sm:$0xff]
      %v7716 = vld [vmem:[%s7706 + $0x48] sm:$0xff]
      %v7717 = vld [vmem:[%s7706 + $0x50] sm:$0xff]
      %v7718 = vld [vmem:[%s7706 + $0x58] sm:$0xff]
      %v7719 = vld [vmem:[%s7706 + $0x60] sm:$0xff]
      %v7720 = vld [vmem:[%s7706 + $0x68] sm:$0xff]
      %v7721 = vld [vmem:[%s7706 + $0x70] sm:$0xff]
      %v7722 = vld [vmem:[%s7706 + $0x78] sm:$0xff]
      %v7723 = vld [vmem:[%s7706 + $0x80] sm:$0xff]
      %v7724 = vld [vmem:[%s7706 + $0x88] sm:$0xff]
      %v7725 = vld [vmem:[%s7706 + $0x90] sm:$0xff]
      %v7726 = vld [vmem:[%s7706 + $0x98] sm:$0xff]
      %v7727 = vld [vmem:[%s7706 + $0xa0] sm:$0xff]
      %v7728 = vld [vmem:[%s7706 + $0xa8] sm:$0xff]
      %v7729 = vld [vmem:[%s7706 + $0xb0] sm:$0xff]
      %v7730 = vld [vmem:[%s7706 + $0xb8] sm:$0xff]
      %v7732 = vsel %vm333, %v6923, 0
      %v7735 = vsel %vm333, %v6924, 0
      %7737 = vmatprep.subr.mxu0 0.0
      %7738 = vmatpush1.msra.mxu0 %v7722
      %7739 = vmatprep.subr.mxu0 0.0
      %7740 = vmatpush1.msra.mxu0 %v7721
      %7741 = vmatprep.subr.mxu0 0.0
      %7742 = vmatpush1.msra.mxu0 %v7720
      %7743 = vmatprep.subr.mxu0 0.0
      %7744 = vmatpush1.msra.mxu0 %v7719
      %7745 = vmatprep.subr.mxu0 0.0
      %7746 = vmatpush1.msra.mxu0 %v7718
      %7747 = vmatprep.subr.mxu0 0.0
      %7748 = vmatpush1.msra.mxu0 %v7717
      %7749 = vmatprep.subr.mxu0 0.0
      %7750 = vmatpush1.msra.mxu0 %v7716
      %7751 = vmatprep.subr.mxu0 0.0
      %7752 = vmatpush1.msra.mxu0 %v7715
      %7753 = vmatprep.subr.mxu0 0.0
      %7754 = vmatpush1.msra.mxu0 %v7714
      %7755 = vmatprep.subr.mxu0 0.0
      %7756 = vmatpush1.msra.mxu0 %v7713
      %7757 = vmatprep.subr.mxu0 0.0
      %7758 = vmatpush1.msra.mxu0 %v7712
      %7759 = vmatprep.subr.mxu0 0.0
      %7760 = vmatpush1.msra.mxu0 %v7711
      %7761 = vmatprep.subr.mxu0 0.0
      %7762 = vmatpush1.msra.mxu0 %v7710
      %7763 = vmatprep.subr.mxu0 0.0
      %7764 = vmatpush1.msra.mxu0 %v7709
      %7765 = vmatprep.subr.mxu0 0.0
      %7766 = vmatpush1.msra.mxu0 %v7708
      %7767 = vmatprep.subr.mxu0 0.0
      %7768 = vmatpush1.msra.mxu0 %v7707
      %7769 = vmatprep.subr.mxu0 0.0
      %7770 = vmatpush2.msra.mxu0 0.0
      %7771 = vmatprep.subr.mxu0 0.0
      %7772 = vmatpush2.msra.mxu0 0.0
      %7773 = vmatprep.subr.mxu0 0.0
      %7774 = vmatpush2.msra.mxu0 0.0
      %7775 = vmatprep.subr.mxu0 0.0
      %7776 = vmatpush2.msra.mxu0 0.0
      %7777 = vmatprep.subr.mxu0 0.0
      %7778 = vmatpush2.msra.mxu0 0.0
      %7779 = vmatprep.subr.mxu0 0.0
      %7780 = vmatpush2.msra.mxu0 0.0
      %7781 = vmatprep.subr.mxu0 0.0
      %7782 = vmatpush2.msra.mxu0 0.0
      %7783 = vmatprep.subr.mxu0 0.0
      %7784 = vmatpush2.msra.mxu0 0.0
      %7785 = vmatprep.subr.mxu0 0.0
      %7786 = vmatpush2.msra.mxu0 %v7730
      %7787 = vmatprep.subr.mxu0 0.0
      %7788 = vmatpush2.msra.mxu0 %v7729
      %7789 = vmatprep.subr.mxu0 0.0
      %7790 = vmatpush2.msra.mxu0 %v7728
      %7791 = vmatprep.subr.mxu0 0.0
      %7792 = vmatpush2.msra.mxu0 %v7727
      %7793 = vmatprep.subr.mxu0 0.0
      %7794 = vmatpush2.msra.mxu0 %v7726
      %7795 = vmatprep.subr.mxu0 0.0
      %7796 = vmatpush2.msra.mxu0 %v7725
      %7797 = vmatprep.subr.mxu0 0.0
      %7798 = vmatpush2.msra.mxu0 %v7724
      %7799 = vmatprep.subr.mxu0 0.0
      %7800 = vmatpush2.msra.mxu0 %v7723
      %7801 = vmatprep.mubr.f32.mxu0 %v7151
      %7802 = vmatmul.mubr.f32.gmra.mxu0 %v7057
      %v7803 = vpop.f32.mrf.mxu0
      %v7804 = vadd.f32 0.0, %v7803
      %v7805 = vpop.f32.mrf.mxu0
      %7806 = vmatprep.mubr.f32.mxu0 %v7154
      %7807 = vmatmul.mubr.f32.gmra.mxu0 %v7058
      %v7808 = vpop.f32.mrf.mxu0
      %v7809 = vadd.f32 0.0, %v7808
      %v7810 = vpop.f32.mrf.mxu0
      %7811 = vmatprep.mubr.f32.mxu0 %v7157
      %7812 = vmatmul.mubr.f32.gmra.mxu0 %v7059
      %v7813 = vpop.f32.mrf.mxu0
      %v7814 = vadd.f32 0.0, %v7813
      %v7815 = vpop.f32.mrf.mxu0
      %7816 = vmatprep.mubr.f32.mxu0 %v7160
      %7817 = vmatmul.mubr.f32.gmra.mxu0 %v7060
      %v7818 = vpop.f32.mrf.mxu0
      %v7819 = vadd.f32 0.0, %v7818
      %v7820 = vpop.f32.mrf.mxu0
      %7821 = vmatprep.mubr.f32.mxu0 %v7163
      %7822 = vmatmul.mubr.f32.gmra.mxu0 %v7061
      %v7823 = vpop.f32.mrf.mxu0
      %v7824 = vadd.f32 0.0, %v7823
      %v7825 = vpop.f32.mrf.mxu0
      %7826 = vmatprep.mubr.f32.mxu0 %v7166
      %7827 = vmatmul.mubr.f32.gmra.mxu0 %v7062
      %v7828 = vpop.f32.mrf.mxu0
      %v7829 = vadd.f32 0.0, %v7828
      %v7830 = vpop.f32.mrf.mxu0
      %7831 = vmatprep.mubr.f32.mxu0 %v7169
      %7832 = vmatmul.mubr.f32.gmra.mxu0 %v7063
      %v7833 = vpop.f32.mrf.mxu0
      %v7834 = vadd.f32 0.0, %v7833
      %v7835 = vpop.f32.mrf.mxu0
      %7836 = vmatprep.mubr.f32.mxu0 %v7172
      %7837 = vmatmul.mubr.f32.gmra.mxu0 %v7064
      %v7838 = vpop.f32.mrf.mxu0
      %v7839 = vadd.f32 0.0, %v7838
      %v7840 = vpop.f32.mrf.mxu0
      %7841 = vmatprep.mubr.f32.mxu0 %v7175
      %7842 = vmatmul.mubr.f32.gmra.mxu0 %v7065
      %v7843 = vpop.f32.mrf.mxu0
      %v7844 = vadd.f32 0.0, %v7843
      %v7845 = vpop.f32.mrf.mxu0
      %7846 = vmatprep.mubr.f32.mxu0 %v7178
      %7847 = vmatmul.mubr.f32.gmra.mxu0 %v7066
      %v7848 = vpop.f32.mrf.mxu0
      %v7849 = vadd.f32 0.0, %v7848
      %v7850 = vpop.f32.mrf.mxu0
      %7851 = vmatprep.mubr.f32.mxu0 %v7181
      %7852 = vmatmul.mubr.f32.gmra.mxu0 %v7067
      %v7853 = vpop.f32.mrf.mxu0
      %v7854 = vadd.f32 0.0, %v7853
      %v7855 = vpop.f32.mrf.mxu0
      %7856 = vmatprep.mubr.f32.mxu0 %v7184
      %7857 = vmatmul.mubr.f32.gmra.mxu0 %v7068
      %v7858 = vpop.f32.mrf.mxu0
      %v7859 = vadd.f32 0.0, %v7858
      %v7860 = vpop.f32.mrf.mxu0
      %7861 = vmatprep.mubr.f32.mxu0 %v7187
      %7862 = vmatmul.mubr.f32.gmra.mxu0 %v7069
      %v7863 = vpop.f32.mrf.mxu0
      %v7864 = vadd.f32 0.0, %v7863
      %v7865 = vpop.f32.mrf.mxu0
      %7866 = vmatprep.mubr.f32.mxu0 %v7190
      %7867 = vmatmul.mubr.f32.gmra.mxu0 %v7070
      %v7868 = vpop.f32.mrf.mxu0
      %v7869 = vadd.f32 0.0, %v7868
      %v7870 = vpop.f32.mrf.mxu0
      %7871 = vmatprep.mubr.f32.mxu0 %v7193
      %7872 = vmatmul.mubr.f32.gmra.mxu0 %v7071
      %v7873 = vpop.f32.mrf.mxu0
      %v7874 = vadd.f32 0.0, %v7873
      %v7875 = vpop.f32.mrf.mxu0
      %7876 = vmatprep.mubr.f32.mxu0 %v7196
      %7877 = vmatmul.mubr.f32.gmra.mxu0 %v7072
      %v7878 = vpop.f32.mrf.mxu0
      %v7879 = vadd.f32 0.0, %v7878
      %v7880 = vpop.f32.mrf.mxu0
      %7881 = vmatprep.mubr.f32.mxu0 %v7199
      %7882 = vmatmul.mubr.f32.gmra.mxu0 %v7073
      %v7883 = vpop.f32.mrf.mxu0
      %v7884 = vadd.f32 0.0, %v7883
      %v7885 = vpop.f32.mrf.mxu0
      %7886 = vmatprep.mubr.f32.mxu0 %v7202
      %7887 = vmatmul.mubr.f32.gmra.mxu0 %v7074
      %v7888 = vpop.f32.mrf.mxu0
      %v7889 = vadd.f32 0.0, %v7888
      %v7890 = vpop.f32.mrf.mxu0
      %7891 = vmatprep.mubr.f32.mxu0 %v7205
      %7892 = vmatmul.mubr.f32.gmra.mxu0 %v7075
      %v7893 = vpop.f32.mrf.mxu0
      %v7894 = vadd.f32 0.0, %v7893
      %v7895 = vpop.f32.mrf.mxu0
      %7896 = vmatprep.mubr.f32.mxu0 %v7208
      %7897 = vmatmul.mubr.f32.gmra.mxu0 %v7076
      %v7898 = vpop.f32.mrf.mxu0
      %v7899 = vadd.f32 0.0, %v7898
      %v7900 = vpop.f32.mrf.mxu0
      %7901 = vmatprep.mubr.f32.mxu0 %v7211
      %7902 = vmatmul.mubr.f32.gmra.mxu0 %v7077
      %v7903 = vpop.f32.mrf.mxu0
      %v7904 = vadd.f32 0.0, %v7903
      %v7905 = vpop.f32.mrf.mxu0
      %7906 = vmatprep.mubr.f32.mxu0 %v7214
      %7907 = vmatmul.mubr.f32.gmra.mxu0 %v7078
      %v7908 = vpop.f32.mrf.mxu0
      %v7909 = vadd.f32 0.0, %v7908
      %v7910 = vpop.f32.mrf.mxu0
      %7911 = vmatprep.mubr.f32.mxu0 %v7217
      %7912 = vmatmul.mubr.f32.gmra.mxu0 %v7079
      %v7913 = vpop.f32.mrf.mxu0
      %v7914 = vadd.f32 0.0, %v7913
      %v7915 = vpop.f32.mrf.mxu0
      %7916 = vmatprep.mubr.f32.mxu0 %v7220
      %7917 = vmatmul.mubr.f32.gmra.mxu0 %v7080
      %v7918 = vpop.f32.mrf.mxu0
      %v7919 = vadd.f32 0.0, %v7918
      %v7920 = vpop.f32.mrf.mxu0
      %7921 = vmatprep.mubr.f32.mxu0 %v7223
      %7922 = vmatmul.mubr.f32.gmra.mxu0 %v7081
      %v7923 = vpop.f32.mrf.mxu0
      %v7924 = vadd.f32 0.0, %v7923
      %v7925 = vpop.f32.mrf.mxu0
      %7926 = vmatprep.mubr.f32.mxu0 %v7226
      %7927 = vmatmul.mubr.f32.gmra.mxu0 %v7082
      %v7928 = vpop.f32.mrf.mxu0
      %v7929 = vadd.f32 0.0, %v7928
      %v7930 = vpop.f32.mrf.mxu0
      %7931 = vmatprep.mubr.f32.mxu0 %v7229
      %7932 = vmatmul.mubr.f32.gmra.mxu0 %v7083
      %v7933 = vpop.f32.mrf.mxu0
      %v7934 = vadd.f32 0.0, %v7933
      %v7935 = vpop.f32.mrf.mxu0
      %7936 = vmatprep.mubr.f32.mxu0 %v7232
      %7937 = vmatmul.mubr.f32.gmra.mxu0 %v7084
      %v7938 = vpop.f32.mrf.mxu0
      %v7939 = vadd.f32 0.0, %v7938
      %v7940 = vpop.f32.mrf.mxu0
      %7941 = vmatprep.mubr.f32.mxu0 %v7235
      %7942 = vmatmul.mubr.f32.gmra.mxu0 %v7117
      %v7943 = vpop.f32.mrf.mxu0
      %v7944 = vadd.f32 0.0, %v7943
      %v7945 = vpop.f32.mrf.mxu0
      %7946 = vmatprep.mubr.f32.mxu0 %v7238
      %7947 = vmatmul.mubr.f32.gmra.mxu0 %v7118
      %v7948 = vpop.f32.mrf.mxu0
      %v7949 = vadd.f32 0.0, %v7948
      %v7950 = vpop.f32.mrf.mxu0
      %7951 = vmatprep.mubr.f32.mxu0 %v7732
      %7952 = vmatmul.mubr.f32.gmra.mxu0 %v7704
      %v7953 = vpop.f32.mrf.mxu0
      %v7954 = vadd.f32 0.0, %v7953
      %v7955 = vpop.f32.mrf.mxu0
      %7956 = vmatprep.mubr.f32.mxu0 %v7735
      %7957 = vmatmul.mubr.f32.gmra.mxu0 %v7705
      %v7958 = vpop.f32.mrf.mxu0
      %v7959 = vadd.f32 0.0, %v7958
      %v7960 = vpop.f32.mrf.mxu0
      %7961 = vdwg.mxu0
      %v7962 = vadd.f32 %v7538, %v7804
      %v7963 = vadd.f32 %v7543, %v7809
      %v7964 = vadd.f32 %v7548, %v7814
      %v7965 = vadd.f32 %v7553, %v7819
      %v7966 = vadd.f32 %v7558, %v7824
      %v7967 = vadd.f32 %v7563, %v7829
      %v7968 = vadd.f32 %v7568, %v7834
      %v7969 = vadd.f32 %v7573, %v7839
      %v7970 = vadd.f32 %v7578, %v7844
      %v7971 = vadd.f32 %v7583, %v7849
      %v7972 = vadd.f32 %v7588, %v7854
      %v7973 = vadd.f32 %v7593, %v7859
      %v7974 = vadd.f32 %v7598, %v7864
      %v7975 = vadd.f32 %v7603, %v7869
      %v7976 = vadd.f32 %v7608, %v7874
      %v7977 = vadd.f32 %v7613, %v7879
      %v7978 = vadd.f32 %v7618, %v7884
      %v7979 = vadd.f32 %v7623, %v7889
      %v7980 = vadd.f32 %v7628, %v7894
      %v7981 = vadd.f32 %v7633, %v7899
      %v7982 = vadd.f32 %v7638, %v7904
      %v7983 = vadd.f32 %v7643, %v7909
      %v7984 = vadd.f32 %v7648, %v7914
      %v7985 = vadd.f32 %v7653, %v7919
      %v7986 = vadd.f32 %v7658, %v7924
      %v7987 = vadd.f32 %v7663, %v7929
      %v7988 = vadd.f32 %v7668, %v7934
      %v7989 = vadd.f32 %v7673, %v7939
      %v7990 = vadd.f32 %v7678, %v7944
      %v7991 = vadd.f32 %v7683, %v7949
      %v7992 = vadd.f32 %v7688, %v7954
      %v7993 = vadd.f32 %v7693, %v7959
      %v7995 = vlaneseq
      %v7996 = vshrl.u32 %v7995, 7
      %v7997 = vsub.s32 0, %v7996
      %v7998 = vrot.slane %v6784, %v7997
      %v8000 = vadd.f32 %v7962, %v7998
      %v8001 = vadd.f32 %v7963, %v7998
      %v8002 = vadd.f32 %v7964, %v7998
      %v8003 = vadd.f32 %v7965, %v7998
      %v8004 = vadd.f32 %v7966, %v7998
      %v8005 = vadd.f32 %v7967, %v7998
      %v8006 = vadd.f32 %v7968, %v7998
      %v8007 = vadd.f32 %v7969, %v7998
      %v8008 = vadd.f32 %v7970, %v7998
      %v8009 = vadd.f32 %v7971, %v7998
      %v8010 = vadd.f32 %v7972, %v7998
      %v8011 = vadd.f32 %v7973, %v7998
      %v8012 = vadd.f32 %v7974, %v7998
      %v8013 = vadd.f32 %v7975, %v7998
      %v8014 = vadd.f32 %v7976, %v7998
      %v8015 = vadd.f32 %v7977, %v7998
      %v8016 = vadd.f32 %v7978, %v7998
      %v8017 = vadd.f32 %v7979, %v7998
      %v8018 = vadd.f32 %v7980, %v7998
      %v8019 = vadd.f32 %v7981, %v7998
      %v8020 = vadd.f32 %v7982, %v7998
      %v8021 = vadd.f32 %v7983, %v7998
      %v8022 = vadd.f32 %v7984, %v7998
      %v8023 = vadd.f32 %v7985, %v7998
      %v8024 = vadd.f32 %v7986, %v7998
      %v8025 = vadd.f32 %v7987, %v7998
      %v8026 = vadd.f32 %v7988, %v7998
      %v8027 = vadd.f32 %v7989, %v7998
      %v8028 = vadd.f32 %v7990, %v7998
      %v8029 = vadd.f32 %v7991, %v7998
      %v8030 = vadd.f32 %v7992, %v7998
      %v8031 = vadd.f32 %v7993, %v7998
      %vm8032 = vcmask 392192
      %8033 = vst.msk [vmem:[%s332] sm:$0xff] %vm8032, %v8000
      %8034 = vst.msk [vmem:[%s332 + $0x8] sm:$0xff] %vm8032, %v8001
      %8035 = vst.msk [vmem:[%s332 + $0x10] sm:$0xff] %vm8032, %v8002
      %8036 = vst.msk [vmem:[%s332 + $0x18] sm:$0xff] %vm8032, %v8003
      %8037 = vst.msk [vmem:[%s332 + $0x20] sm:$0xff] %vm8032, %v8004
      %8038 = vst.msk [vmem:[%s332 + $0x28] sm:$0xff] %vm8032, %v8005
      %8039 = vst.msk [vmem:[%s332 + $0x30] sm:$0xff] %vm8032, %v8006
      %8040 = vst.msk [vmem:[%s332 + $0x38] sm:$0xff] %vm8032, %v8007
      %8041 = vst.msk [vmem:[%s332 + $0x40] sm:$0xff] %vm8032, %v8008
      %8042 = vst.msk [vmem:[%s332 + $0x48] sm:$0xff] %vm8032, %v8009
      %8043 = vst.msk [vmem:[%s332 + $0x50] sm:$0xff] %vm8032, %v8010
      %8044 = vst.msk [vmem:[%s332 + $0x58] sm:$0xff] %vm8032, %v8011
      %8045 = vst.msk [vmem:[%s332 + $0x60] sm:$0xff] %vm8032, %v8012
      %8046 = vst.msk [vmem:[%s332 + $0x68] sm:$0xff] %vm8032, %v8013
      %8047 = vst.msk [vmem:[%s332 + $0x70] sm:$0xff] %vm8032, %v8014
      %8048 = vst.msk [vmem:[%s332 + $0x78] sm:$0xff] %vm8032, %v8015
      %8049 = vst.msk [vmem:[%s332 + $0x80] sm:$0xff] %vm8032, %v8016
      %8050 = vst.msk [vmem:[%s332 + $0x88] sm:$0xff] %vm8032, %v8017
      %8051 = vst.msk [vmem:[%s332 + $0x90] sm:$0xff] %vm8032, %v8018
      %8052 = vst.msk [vmem:[%s332 + $0x98] sm:$0xff] %vm8032, %v8019
      %8053 = vst.msk [vmem:[%s332 + $0xa0] sm:$0xff] %vm8032, %v8020
      %8054 = vst.msk [vmem:[%s332 + $0xa8] sm:$0xff] %vm8032, %v8021
      %8055 = vst.msk [vmem:[%s332 + $0xb0] sm:$0xff] %vm8032, %v8022
      %8056 = vst.msk [vmem:[%s332 + $0xb8] sm:$0xff] %vm8032, %v8023
      %8057 = vst.msk [vmem:[%s332 + $0xc0] sm:$0xff] %vm8032, %v8024
      %8058 = vst.msk [vmem:[%s332 + $0xc8] sm:$0xff] %vm8032, %v8025
      %8059 = vst.msk [vmem:[%s332 + $0xd0] sm:$0xff] %vm8032, %v8026
      %8060 = vst.msk [vmem:[%s332 + $0xd8] sm:$0xff] %vm8032, %v8027
      %8061 = vst.msk [vmem:[%s332 + $0xe0] sm:$0xff] %vm8032, %v8028
      %8062 = vst.msk [vmem:[%s332 + $0xe8] sm:$0xff] %vm8032, %v8029
      %8063 = vst.msk [vmem:[%s332 + $0xf0] sm:$0xff] %vm8032, %v8030
      %8064 = vst.msk [vmem:[%s332 + $0xf8] sm:$0xff] %vm8032, %v8031
      %p8065 = scmp.lt.s32.totalorder %s20, 1
      %s8066 = scalar_select %p8065, %s20, 1
      %s8067 = smul.addr %s8066, 32
      %s8068 = smul.addr %s8067, 8
      %s8069 = scalar_lea.vmem %s9, %s8068
      // Predicated region
      $region57: #{decoder_forward.1} parent=55 // pred_check
        %p8070 = pneg %p232
      $region58: #{decoder_forward.1} parent=55 // pred_check_branch
        %8072 = sbr.rel (%p8070) target = $region60
      $region59: #{decoder_forward.1} parent=55 // pred_region
        _
      $region60: #{decoder_forward.1} parent=55 // pred_fallthru
        _
    $region56: #{decoder_forward.1} parent=5 // pred_fallthru
      _
    %p8073 = scmp.le.s32.totalorder 2, %s15
    // Predicated region
    $region61: #{decoder_forward.1} parent=5 // pred_check
      %p8074 = pneg %p8073
    $region62: #{decoder_forward.1} parent=5 // pred_check_branch
      %8076 = sbr.rel (%p8074) target = $region64
    $region63: #{decoder_forward.1} parent=5 // pred_region
      %s8077 = ssub.s32 %s15, 2
      // Predicated region
      $region65: #{decoder_forward.1} parent=63 // pred_check
        %p8078 = pneg %p238
      $region66: #{decoder_forward.1} parent=63 // pred_check_branch
        %8080 = sbr.rel (%p8078) target = $region68
      $region67: #{decoder_forward.1} parent=63 // pred_region
        %p8081 = scmp.lt.s32.totalorder %s21, 1
        %s8082 = scalar_select %p8081, %s21, 1
        %s8083 = smul.addr %s8082, 32
        %s8084 = smul.addr %s8083, 8
        %s8085 = scalar_lea.vmem %s9, %s8084
      $region68: #{decoder_forward.1} parent=63 // pred_fallthru
        _
    $region64: #{decoder_forward.1} parent=5 // pred_fallthru
      _
  $region6: #{decoder_forward.1} parent=0 // loop_footer
    %s19 = sadd.s32 1, %s15
  $region7: #{decoder_forward.1} parent=0 // loop_footer_branch
    %14 = sbr.rel target = $region3
  $region8: #{decoder_forward.1} parent=0 // loop_exit
    _

</llo_original>
